<compile_context>
chip_gen: v6e
topology: v6e:2x2x1
jax: 0.10.0
libtpu: 0.0.40
codegen_flags: <defaults>
</compile_context>

<pallas_src>
import numpy as np
import jax
import jax.numpy as jnp
from jax.experimental import pallas as pl
from jax.experimental.pallas import tpu as pltpu

HIDDEN = 128          # GRU hidden size (matches the PyTorch module)
NUM_LAYERS = 4        # GRU layers
N_LIN_OUT = 6         # linear_relu_stack output width
N_GRU_OUT = 2         # gru_linear output width
N_OUT = 2             # final mlp output width


def combined_kernel(x_ref, seq_ref, w1_ref, b1_ref, tail_ref,
                    wih0_ref, gbias_ref, nbias_ref, wstack_hbm,
                    out_ref,
                    gx0_buf, w_vmem, dma_sem):
    T, B = seq_ref.shape
    H = HIDDEN
    L = NUM_LAYERS
    H2, H3 = 2 * H, 3 * H

    # Stream the bf16 recurrent / inter-layer weight stack HBM -> VMEM; the copy overlaps
    # the layer-0 gate fill and the MLP head below.
    wcp = pltpu.make_async_copy(wstack_hbm, w_vmem, dma_sem.at[0])
    wcp.start()

    # ---------- GRU layer 0 input projection for every timestep (scalar input -> VPU outer
    # product). bih0 + bhh0_{r,z} are pre-folded into gbias[0]; bhh0_n stays in nbias[0]. ----------
    seq = seq_ref[...]                                                   # (T, B)
    gx0_buf[...] = (seq[:, :, None] * wih0_ref[...][None, :, :]
                    + gbias_ref[0:1, :][None, :, :])                     # (T, B, 3H)

    # ---------- MLP head (independent of the recurrence; overlaps the weight DMA).
    # Output heads pre-folded in the wrapper: out = relu(x@W1+b1)@W2' + h_last@Wg' + b'. ----------
    x = x_ref[...]
    h1 = jnp.maximum(
        jnp.dot(x, w1_ref[...], preferred_element_type=jnp.float32) + b1_ref[...], 0.0)
    head_acc = (jnp.dot(h1, tail_ref[0:256, :], preferred_element_type=jnp.float32)
                + tail_ref[256 + H:256 + H + 1, :])                      # (B, 2)

    # Hoisted bias broadcasts (JAX does not CSE broadcast_in_dim inside the unrolled loop).
    nb = [jnp.broadcast_to(nbias_ref[k:k + 1, :], (B, H)) for k in range(L)]
    gb = [jnp.broadcast_to(gbias_ref[k:k + 1, :], (B, H3)) for k in range(1, L)]

    wcp.wait()                                   # bf16 weight stack now resident in VMEM

    # ---------- Wavefront over (layer k, timestep t): all cells with k + t == s are independent,
    # so the serial chain is T+L-1 steps instead of L*T. PyTorch GRU convention:
    #   r,z = sigmoid(gx_{r,z} + gh_{r,z});  n = tanh(gx_n + r*(gh_n + bhh_n));  h = (1-z)*n + z*h
    # with sigmoid(v) == 0.5*(tanh(0.5*v)+1) (single EUP op per fused r|z block). ----------
    h = [jnp.zeros((B, H), jnp.float32) for _ in range(L)]
    for s in range(T + L - 1):                   # static unroll
        h_new = list(h)
        for k in range(max(0, s - T + 1), min(L, s + 1)):
            t = s - k
            if k == 0:
                gx = gx0_buf[t]                                          # (B, 3H), bias folded
            else:
                # h[k-1] is h_{k-1, t} from the previous wavefront step (snapshot semantics).
                gx = jnp.dot(h[k - 1].astype(jnp.bfloat16), w_vmem[L - 1 + k],
                             preferred_element_type=jnp.float32) + gb[k - 1]
            gh = jnp.dot(h[k].astype(jnp.bfloat16), w_vmem[k],
                         preferred_element_type=jnp.float32)             # (B, 3H)
            rz = 0.5 * (jnp.tanh(0.5 * (gx[:, 0:H2] + gh[:, 0:H2])) + 1.0)
            r = rz[:, 0:H]
            z = rz[:, H:H2]
            n = jnp.tanh(gx[:, H2:H3] + r * (gh[:, H2:H3] + nb[k]))
            h_new[k] = (1.0 - z) * n + z * h[k]
        h = h_new

    # ---------- gru_linear on the last hidden state, folded through mlp (Wg' = Wg @ Wm[6:8]). ----------
    out_ref[...] = (head_acc
                    + jnp.dot(h[L - 1], tail_ref[256:256 + H, :],
                              preferred_element_type=jnp.float32)).astype(out_ref.dtype)


def pack_params(p):
    """One-time parameter prep: bias folding, head folding, packing, bf16 cast."""
    H = HIDDEN

    def fold(bih, bhh):
        # Fold bhh_{r,z} into the input-side bias; bhh_n must stay inside r*(gh_n + bhh_n).
        return (bih + jnp.concatenate(
            [bhh[:, 0:2 * H], jnp.zeros((1, H), jnp.float32)], axis=1))[0]

    gbias = jnp.stack([fold(p["bih0"], p["bhh0"])]
                      + [fold(p["bih"][k], p["bhh"][k]) for k in range(NUM_LAYERS - 1)])  # (L, 3H)
    nbias = jnp.stack([p["bhh0"][0, 2 * H:]]
                      + [p["bhh"][k][0, 2 * H:] for k in range(NUM_LAYERS - 1)])          # (L, H)
    # Weight stack order: [whh_0..3, wih_1..3], bf16 for the MXU.
    wstack = jnp.stack([p["whh0"]] + [p["whh"][k] for k in range(NUM_LAYERS - 1)]
                       + [p["wih"][k] for k in range(NUM_LAYERS - 1)]).astype(jnp.bfloat16)

    # Fold the two heads + final mlp into one tail GEMM (mathematically exact):
    #   out = relu(x@W1+b1) @ (W2@Wm[:6]) + h_last @ (Wg@Wm[6:8]) + (b2@Wm[:6] + bg@Wm[6:8] + bm)
    w2m = p["w2"] @ p["wm"][:N_LIN_OUT]                                   # (256, 2)
    wgm = p["wg"] @ p["wm"][N_LIN_OUT:]                                   # (H, 2)
    bout = p["b2"] @ p["wm"][:N_LIN_OUT] + p["bg"] @ p["wm"][N_LIN_OUT:] + p["bm"]  # (1, 2)
    tail = jnp.concatenate([w2m, wgm, bout], axis=0)                      # (256 + H + 1, 2)

    return {"w1": p["w1"], "b1": p["b1"], "tail": tail,
            "wih0": p["wih0"], "gbias": gbias, "nbias": nbias, "wstack": wstack}


def default_combined(x, seq, packed):
    """x: (B, D) f32, seq: (B, T, 1) f32 -> (B, 2) f32 (eval-mode forward)."""
    B, D = x.shape
    _, T, _ = seq.shape
    H = HIDDEN
    L = NUM_LAYERS

    # Pad batch to a full sublane (8): padded rows compute garbage and are sliced off,
    # but every vreg / MXU row is occupied.
    B_pad = max(8, -(-B // 8) * 8)
    if B_pad != B:
        x = jnp.pad(x, ((0, B_pad - B), (0, 0)))
        seq = jnp.pad(seq, ((0, B_pad - B), (0, 0), (0, 0)))
    # TODO(synk): once the serving batch gives B_pad >= 16, add a batch grid axis with
    # dimension_semantics=("parallel",) so v7x's second TensorCore takes half the batch;
    # below that the cross-core split costs more than it saves.

    seq_tb = jnp.transpose(seq[:, :, 0], (1, 0))                          # (T, B_pad) time-major

    args = (x, seq_tb, packed["w1"], packed["b1"], packed["tail"],
            packed["wih0"], packed["gbias"], packed["nbias"], packed["wstack"])

    flops = 2 * (B_pad * D * 256 + B_pad * 256 * N_OUT
                 + L * T * B_pad * H * 3 * H                 # recurrent gh matmuls
                 + (L - 1) * T * B_pad * H * 3 * H           # inter-layer gx matmuls
                 + B_pad * H * N_OUT)
    transcendentals = L * T * B_pad * 3 * H
    bytes_accessed = int(4 * (sum(int(a.size) for a in args[:-1]) + B_pad * N_OUT)
                         + 2 * int(args[-1].size))

    vmem = pl.BlockSpec(memory_space=pltpu.MemorySpace.VMEM)
    out = pl.pallas_call(
        combined_kernel,
        out_shape=jax.ShapeDtypeStruct((B_pad, N_OUT), jnp.float32),
        in_specs=[vmem] * 8 + [pl.BlockSpec(memory_space=pl.ANY)],       # weight stack stays in HBM
        out_specs=vmem,
        scratch_shapes=[
            pltpu.VMEM((T, B_pad, 3 * H), jnp.float32),                  # gx0_buf: layer-0 gate proj
            pltpu.VMEM((2 * L - 1, H, 3 * H), jnp.bfloat16),             # w_vmem : [whh0..3, wih1..3]
            pltpu.SemaphoreType.DMA((1,)),
        ],
        compiler_params=pltpu.CompilerParams(vmem_limit_bytes=8 * 1024 * 1024),
        cost_estimate=pl.CostEstimate(flops=int(flops),
                                      transcendentals=int(transcendentals),
                                      bytes_accessed=int(bytes_accessed)),
    )(*args)
    return out[:B]


def init_params(key, D, H=HIDDEN):
    ks = jax.random.split(key, 16)

    def u(k, shape, fan_in):
        b = 1.0 / np.sqrt(fan_in)
        return jax.random.uniform(k, shape, jnp.float32, -b, b)

    return {
        "w1":   u(ks[0],  (D, 256), D),
        "b1":   u(ks[1],  (1, 256), D),
        "w2":   u(ks[2],  (256, N_LIN_OUT), 256),
        "b2":   u(ks[3],  (1, N_LIN_OUT), 256),
        # GRU layer 0 (input size 1). PyTorch stores (3H, in); we store (in, 3H).
        "wih0": u(ks[4],  (1, 3 * H), H),
        "whh0": u(ks[5],  (H, 3 * H), H),
        "bih0": u(ks[6],  (1, 3 * H), H),
        "bhh0": u(ks[7],  (1, 3 * H), H),
        # GRU layers 1..3, stacked on a leading axis.
        "wih":  u(ks[8],  (NUM_LAYERS - 1, H, 3 * H), H),
        "whh":  u(ks[9],  (NUM_LAYERS - 1, H, 3 * H), H),
        "bih":  u(ks[10], (NUM_LAYERS - 1, 1, 3 * H), H),
        "bhh":  u(ks[11], (NUM_LAYERS - 1, 1, 3 * H), H),
        "wg":   u(ks[12], (H, N_GRU_OUT), H),
        "bg":   u(ks[13], (1, N_GRU_OUT), H),
        "wm":   u(ks[14], (N_LIN_OUT + N_GRU_OUT, N_OUT), N_LIN_OUT + N_GRU_OUT),
        "bm":   u(ks[15], (1, N_OUT), N_LIN_OUT + N_GRU_OUT),
    }


def reference_forward(x, seq, p):
    """Pure numpy reference of the eval-mode PyTorch forward."""
    f = lambda a: np.asarray(a, np.float32)
    x = f(x)
    seq2 = f(seq)[:, :, 0]                                                # (B, T)
    h1 = np.maximum(x @ f(p["w1"]) + f(p["b1"]), 0.0)
    lin = h1 @ f(p["w2"]) + f(p["b2"])
    B, T = seq2.shape
    H = HIDDEN
    sig = lambda v: 1.0 / (1.0 + np.exp(-v))

    def gru_layer(inp, wih, whh, bih, bhh):
        h = np.zeros((B, H), np.float32)
        outs = []
        for t in range(T):
            gx = inp[:, t, :] @ wih + bih
            gh = h @ whh + bhh
            r = sig(gx[:, :H] + gh[:, :H])
            z = sig(gx[:, H:2 * H] + gh[:, H:2 * H])
            n = np.tanh(gx[:, 2 * H:] + r * gh[:, 2 * H:])
            h = (1.0 - z) * n + z * h
            outs.append(h)
        return np.stack(outs, axis=1)                                     # (B, T, H)

    out = gru_layer(seq2[:, :, None], f(p["wih0"]), f(p["whh0"]), f(p["bih0"]), f(p["bhh0"]))
    for k in range(NUM_LAYERS - 1):
        out = gru_layer(out, f(p["wih"])[k], f(p["whh"])[k], f(p["bih"])[k], f(p["bhh"])[k])
    gl = out[:, -1, :] @ f(p["wg"]) + f(p["bg"])
    logit = np.concatenate([lin, gl], axis=1)
    return logit @ f(p["wm"]) + f(p["bm"])


if __name__ == "__main__":
    B, D, T = 2, 32, 8        # small shapes: batch=2, input_shape=32, seq length=8 (feature dim 1)
    key = jax.random.PRNGKey(0)
    kx, kseq, kp = jax.random.split(key, 3)
    x = jax.random.normal(kx, (B, D), jnp.float32)
    seq = jax.random.normal(kseq, (B, T, 1), jnp.float32)
    params = init_params(kp, D)
    packed = pack_params(params)

    out = default_combined(x, seq, packed)
    out = jax.block_until_ready(out)

    ref = reference_forward(np.asarray(x), np.asarray(seq), params)
    assert out.shape == (B, N_OUT)
    # bf16 operands (f32 accumulation) in the recurrence -> loose tolerance.
    np.testing.assert_allclose(np.asarray(out), ref, atol=3e-2, rtol=3e-2)
    print("KERNEL_OK")
</pallas_src>

<mosaic_0001>
module attributes {stable_mosaic.version = 11 : i64} {
  func.func @combined_kernel(%arg0: memref<8x32xf32, #tpu.memory_space<vmem>>, %arg1: memref<8x8xf32, #tpu.memory_space<vmem>>, %arg2: memref<32x256xf32, #tpu.memory_space<vmem>>, %arg3: memref<1x256xf32, #tpu.memory_space<vmem>>, %arg4: memref<385x2xf32, #tpu.memory_space<vmem>>, %arg5: memref<1x384xf32, #tpu.memory_space<vmem>>, %arg6: memref<4x384xf32, #tpu.memory_space<vmem>>, %arg7: memref<4x128xf32, #tpu.memory_space<vmem>>, %arg8: memref<7x128x384xbf16, #tpu.memory_space<any>>, %arg9: memref<8x2xf32, #tpu.memory_space<vmem>>, %arg10: memref<8x8x384xf32, #tpu.memory_space<vmem>>, %arg11: memref<7x128x384xbf16, #tpu.memory_space<vmem>>, %arg12: memref<1x!tpu.dma_semaphore, #tpu.memory_space<semaphore_mem>>) attributes {dimension_semantics = [], scalar_prefetch = 0 : i64, scratch_operands = 3 : i64, tpu.core_type = #tpu.core_type<tc>} {
    %c0_i32 = arith.constant 0 : i32
    %0 = tpu.memref_slice %arg12[%c0_i32] : memref<1x!tpu.dma_semaphore, #tpu.memory_space<semaphore_mem>> -> memref<1x!tpu.dma_semaphore, #tpu.memory_space<semaphore_mem>>
    %1 = tpu.memref_squeeze %0 : memref<1x!tpu.dma_semaphore, #tpu.memory_space<semaphore_mem>> -> memref<!tpu.dma_semaphore, #tpu.memory_space<semaphore_mem>>
    tpu.enqueue_dma source(%arg8 : memref<7x128x384xbf16, #tpu.memory_space<any>>) target(%arg11 : memref<7x128x384xbf16, #tpu.memory_space<vmem>>) target_semaphore(%1 : memref<!tpu.dma_semaphore, #tpu.memory_space<semaphore_mem>>)
    %c0 = arith.constant 0 : index
    %c0_0 = arith.constant 0 : index
    %2 = vector.load %arg1[%c0, %c0_0] : memref<8x8xf32, #tpu.memory_space<vmem>>, vector<8x8xf32>
    %3 = vector.shape_cast %2 : vector<8x8xf32> to vector<8x8x1xf32>
    %c0_1 = arith.constant 0 : index
    %c0_2 = arith.constant 0 : index
    %4 = vector.load %arg5[%c0_1, %c0_2] : memref<1x384xf32, #tpu.memory_space<vmem>>, vector<1x384xf32>
    %5 = vector.shape_cast %4 : vector<1x384xf32> to vector<1x1x384xf32>
    %6 = vector.broadcast %3 : vector<8x8x1xf32> to vector<8x8x384xf32>
    %7 = vector.broadcast %5 : vector<1x1x384xf32> to vector<8x8x384xf32>
    %8 = arith.mulf %6, %7 : vector<8x8x384xf32>
    %c0_3 = arith.constant 0 : index
    %c0_4 = arith.constant 0 : index
    %9 = vector.load %arg6[%c0_3, %c0_4] : memref<4x384xf32, #tpu.memory_space<vmem>>, vector<1x384xf32>
    %10 = vector.shape_cast %9 : vector<1x384xf32> to vector<1x1x384xf32>
    %11 = vector.broadcast %10 : vector<1x1x384xf32> to vector<8x8x384xf32>
    %12 = arith.addf %8, %11 : vector<8x8x384xf32>
    %c0_5 = arith.constant 0 : index
    %c0_6 = arith.constant 0 : index
    %c0_7 = arith.constant 0 : index
    %13 = vector.load %arg10[%c0_5, %c0_6, %c0_7] : memref<8x8x384xf32, #tpu.memory_space<vmem>>, vector<8x8x384xf32>
    tpu.vector_store %arg10[%c0_5, %c0_6, %c0_7], %12 {strides = array<i32>} : memref<8x8x384xf32, #tpu.memory_space<vmem>>, vector<8x8x384xf32>,
    %c0_8 = arith.constant 0 : index
    %c0_9 = arith.constant 0 : index
    %14 = vector.load %arg0[%c0_8, %c0_9] : memref<8x32xf32, #tpu.memory_space<vmem>>, vector<8x32xf32>
    %c0_10 = arith.constant 0 : index
    %c0_11 = arith.constant 0 : index
    %15 = vector.load %arg2[%c0_10, %c0_11] : memref<32x256xf32, #tpu.memory_space<vmem>>, vector<32x256xf32>
    %cst = arith.constant dense<0.000000e+00> : vector<8x256xf32>
    %16 = tpu.matmul %14, %15, %cst {dimension_numbers = #tpu.dot_dimension_numbers<[1], [0], [0], [1], [0, 0, 1, 1], [], []>} : vector<8x32xf32>, vector<32x256xf32>, vector<8x256xf32> -> vector<8x256xf32>
    %c0_12 = arith.constant 0 : index
    %c0_13 = arith.constant 0 : index
    %17 = vector.load %arg3[%c0_12, %c0_13] : memref<1x256xf32, #tpu.memory_space<vmem>>, vector<1x256xf32>
    %18 = vector.broadcast %17 : vector<1x256xf32> to vector<8x256xf32>
    %19 = arith.addf %16, %18 : vector<8x256xf32>
    %cst_14 = arith.constant 0.000000e+00 : f32
    %20 = vector.broadcast %cst_14 : f32 to vector<8x256xf32>
    %21 = arith.maximumf %19, %20 : vector<8x256xf32>
    %c0_15 = arith.constant 0 : index
    %c0_16 = arith.constant 0 : index
    %22 = vector.load %arg4[%c0_15, %c0_16] : memref<385x2xf32, #tpu.memory_space<vmem>>, vector<256x2xf32>
    %cst_17 = arith.constant dense<0.000000e+00> : vector<8x2xf32>
    %23 = tpu.matmul %21, %22, %cst_17 {dimension_numbers = #tpu.dot_dimension_numbers<[1], [0], [0], [1], [0, 0, 1, 1], [], []>} : vector<8x256xf32>, vector<256x2xf32>, vector<8x2xf32> -> vector<8x2xf32>
    %c384 = arith.constant 384 : index
    %c0_18 = arith.constant 0 : index
    %24 = vector.load %arg4[%c384, %c0_18] : memref<385x2xf32, #tpu.memory_space<vmem>>, vector<1x2xf32>
    %25 = vector.broadcast %24 : vector<1x2xf32> to vector<8x2xf32>
    %26 = arith.addf %23, %25 : vector<8x2xf32>
    %c0_19 = arith.constant 0 : index
    %c0_20 = arith.constant 0 : index
    %27 = vector.load %arg7[%c0_19, %c0_20] : memref<4x128xf32, #tpu.memory_space<vmem>>, vector<1x128xf32>
    %28 = vector.shape_cast %27 : vector<1x128xf32> to vector<1x128xf32>
    %29 = vector.broadcast %28 : vector<1x128xf32> to vector<8x128xf32>
    %c1 = arith.constant 1 : index
    %c0_21 = arith.constant 0 : index
    %30 = vector.load %arg7[%c1, %c0_21] : memref<4x128xf32, #tpu.memory_space<vmem>>, vector<1x128xf32>
    %31 = vector.shape_cast %30 : vector<1x128xf32> to vector<1x128xf32>
    %32 = vector.broadcast %31 : vector<1x128xf32> to vector<8x128xf32>
    %c2 = arith.constant 2 : index
    %c0_22 = arith.constant 0 : index
    %33 = vector.load %arg7[%c2, %c0_22] : memref<4x128xf32, #tpu.memory_space<vmem>>, vector<1x128xf32>
    %34 = vector.shape_cast %33 : vector<1x128xf32> to vector<1x128xf32>
    %35 = vector.broadcast %34 : vector<1x128xf32> to vector<8x128xf32>
    %c3 = arith.constant 3 : index
    %c0_23 = arith.constant 0 : index
    %36 = vector.load %arg7[%c3, %c0_23] : memref<4x128xf32, #tpu.memory_space<vmem>>, vector<1x128xf32>
    %37 = vector.shape_cast %36 : vector<1x128xf32> to vector<1x128xf32>
    %38 = vector.broadcast %37 : vector<1x128xf32> to vector<8x128xf32>
    %c1_24 = arith.constant 1 : index
    %c0_25 = arith.constant 0 : index
    %39 = vector.load %arg6[%c1_24, %c0_25] : memref<4x384xf32, #tpu.memory_space<vmem>>, vector<1x384xf32>
    %40 = vector.shape_cast %39 : vector<1x384xf32> to vector<1x384xf32>
    %41 = vector.broadcast %40 : vector<1x384xf32> to vector<8x384xf32>
    %c2_26 = arith.constant 2 : index
    %c0_27 = arith.constant 0 : index
    %42 = vector.load %arg6[%c2_26, %c0_27] : memref<4x384xf32, #tpu.memory_space<vmem>>, vector<1x384xf32>
    %43 = vector.shape_cast %42 : vector<1x384xf32> to vector<1x384xf32>
    %44 = vector.broadcast %43 : vector<1x384xf32> to vector<8x384xf32>
    %c3_28 = arith.constant 3 : index
    %c0_29 = arith.constant 0 : index
    %45 = vector.load %arg6[%c3_28, %c0_29] : memref<4x384xf32, #tpu.memory_space<vmem>>, vector<1x384xf32>
    %46 = vector.shape_cast %45 : vector<1x384xf32> to vector<1x384xf32>
    %47 = vector.broadcast %46 : vector<1x384xf32> to vector<8x384xf32>
    %c0_i32_30 = arith.constant 0 : i32
    %48 = tpu.memref_slice %arg12[%c0_i32_30] : memref<1x!tpu.dma_semaphore, #tpu.memory_space<semaphore_mem>> -> memref<1x!tpu.dma_semaphore, #tpu.memory_space<semaphore_mem>>
    %49 = tpu.memref_squeeze %48 : memref<1x!tpu.dma_semaphore, #tpu.memory_space<semaphore_mem>> -> memref<!tpu.dma_semaphore, #tpu.memory_space<semaphore_mem>>
    tpu.wait_dma2 semaphore(%49 : memref<!tpu.dma_semaphore, #tpu.memory_space<semaphore_mem>>) src(%arg8 : memref<7x128x384xbf16, #tpu.memory_space<any>>) dst(%arg11 : memref<7x128x384xbf16, #tpu.memory_space<vmem>>)
    %cst_31 = arith.constant 0.000000e+00 : f32
    %50 = vector.broadcast %cst_31 : f32 to vector<8x128xf32>
    %cst_32 = arith.constant 0.000000e+00 : f32
    %51 = vector.broadcast %cst_32 : f32 to vector<8x128xf32>
    %cst_33 = arith.constant 0.000000e+00 : f32
    %52 = vector.broadcast %cst_33 : f32 to vector<8x128xf32>
    %cst_34 = arith.constant 0.000000e+00 : f32
    %53 = vector.broadcast %cst_34 : f32 to vector<8x128xf32>
    %c0_35 = arith.constant 0 : index
    %c0_36 = arith.constant 0 : index
    %c0_37 = arith.constant 0 : index
    %54 = vector.load %arg10[%c0_35, %c0_36, %c0_37] : memref<8x8x384xf32, #tpu.memory_space<vmem>>, vector<1x8x384xf32>
    %55 = vector.shape_cast %54 : vector<1x8x384xf32> to vector<8x384xf32>
    %56 = arith.truncf %50 : vector<8x128xf32> to vector<8x128xbf16>
    %c0_38 = arith.constant 0 : index
    %c0_39 = arith.constant 0 : index
    %c0_40 = arith.constant 0 : index
    %57 = vector.load %arg11[%c0_38, %c0_39, %c0_40] : memref<7x128x384xbf16, #tpu.memory_space<vmem>>, vector<1x128x384xbf16>
    %58 = vector.shape_cast %57 : vector<1x128x384xbf16> to vector<128x384xbf16>
    %cst_41 = arith.constant dense<0.000000e+00> : vector<8x384xf32>
    %59 = tpu.matmul %56, %58, %cst_41 {dimension_numbers = #tpu.dot_dimension_numbers<[1], [0], [0], [1], [0, 0, 1, 1], [], []>} : vector<8x128xbf16>, vector<128x384xbf16>, vector<8x384xf32> -> vector<8x384xf32>
    %60 = vector.extract_strided_slice %55 {offsets = [0, 0], sizes = [8, 256], strides = [1, 1]} : vector<8x384xf32> to vector<8x256xf32>
    %61 = vector.extract_strided_slice %59 {offsets = [0, 0], sizes = [8, 256], strides = [1, 1]} : vector<8x384xf32> to vector<8x256xf32>
    %62 = arith.addf %60, %61 : vector<8x256xf32>
    %cst_42 = arith.constant 5.000000e-01 : f32
    %63 = vector.broadcast %cst_42 : f32 to vector<8x256xf32>
    %64 = arith.mulf %63, %62 : vector<8x256xf32>
    %65 = math.tanh %64 : vector<8x256xf32>
    %cst_43 = arith.constant 1.000000e+00 : f32
    %66 = vector.broadcast %cst_43 : f32 to vector<8x256xf32>
    %67 = arith.addf %65, %66 : vector<8x256xf32>
    %cst_44 = arith.constant 5.000000e-01 : f32
    %68 = vector.broadcast %cst_44 : f32 to vector<8x256xf32>
    %69 = arith.mulf %68, %67 : vector<8x256xf32>
    %70 = vector.extract_strided_slice %69 {offsets = [0, 0], sizes = [8, 128], strides = [1, 1]} : vector<8x256xf32> to vector<8x128xf32>
    %71 = vector.extract_strided_slice %69 {offsets = [0, 128], sizes = [8, 128], strides = [1, 1]} : vector<8x256xf32> to vector<8x128xf32>
    %72 = vector.extract_strided_slice %55 {offsets = [0, 256], sizes = [8, 128], strides = [1, 1]} : vector<8x384xf32> to vector<8x128xf32>
    %73 = vector.extract_strided_slice %59 {offsets = [0, 256], sizes = [8, 128], strides = [1, 1]} : vector<8x384xf32> to vector<8x128xf32>
    %74 = arith.addf %73, %29 : vector<8x128xf32>
    %75 = arith.mulf %70, %74 : vector<8x128xf32>
    %76 = arith.addf %72, %75 : vector<8x128xf32>
    %77 = math.tanh %76 : vector<8x128xf32>
    %cst_45 = arith.constant 1.000000e+00 : f32
    %78 = vector.broadcast %cst_45 : f32 to vector<8x128xf32>
    %79 = arith.subf %78, %71 : vector<8x128xf32>
    %80 = arith.mulf %79, %77 : vector<8x128xf32>
    %81 = arith.mulf %71, %50 : vector<8x128xf32>
    %82 = arith.addf %80, %81 : vector<8x128xf32>
    %c1_46 = arith.constant 1 : index
    %c0_47 = arith.constant 0 : index
    %c0_48 = arith.constant 0 : index
    %83 = vector.load %arg10[%c1_46, %c0_47, %c0_48] : memref<8x8x384xf32, #tpu.memory_space<vmem>>, vector<1x8x384xf32>
    %84 = vector.shape_cast %83 : vector<1x8x384xf32> to vector<8x384xf32>
    %85 = arith.truncf %82 : vector<8x128xf32> to vector<8x128xbf16>
    %c0_49 = arith.constant 0 : index
    %c0_50 = arith.constant 0 : index
    %c0_51 = arith.constant 0 : index
    %86 = vector.load %arg11[%c0_49, %c0_50, %c0_51] : memref<7x128x384xbf16, #tpu.memory_space<vmem>>, vector<1x128x384xbf16>
    %87 = vector.shape_cast %86 : vector<1x128x384xbf16> to vector<128x384xbf16>
    %cst_52 = arith.constant dense<0.000000e+00> : vector<8x384xf32>
    %88 = tpu.matmul %85, %87, %cst_52 {dimension_numbers = #tpu.dot_dimension_numbers<[1], [0], [0], [1], [0, 0, 1, 1], [], []>} : vector<8x128xbf16>, vector<128x384xbf16>, vector<8x384xf32> -> vector<8x384xf32>
    %89 = vector.extract_strided_slice %84 {offsets = [0, 0], sizes = [8, 256], strides = [1, 1]} : vector<8x384xf32> to vector<8x256xf32>
    %90 = vector.extract_strided_slice %88 {offsets = [0, 0], sizes = [8, 256], strides = [1, 1]} : vector<8x384xf32> to vector<8x256xf32>
    %91 = arith.addf %89, %90 : vector<8x256xf32>
    %cst_53 = arith.constant 5.000000e-01 : f32
    %92 = vector.broadcast %cst_53 : f32 to vector<8x256xf32>
    %93 = arith.mulf %92, %91 : vector<8x256xf32>
    %94 = math.tanh %93 : vector<8x256xf32>
    %cst_54 = arith.constant 1.000000e+00 : f32
    %95 = vector.broadcast %cst_54 : f32 to vector<8x256xf32>
    %96 = arith.addf %94, %95 : vector<8x256xf32>
    %cst_55 = arith.constant 5.000000e-01 : f32
    %97 = vector.broadcast %cst_55 : f32 to vector<8x256xf32>
    %98 = arith.mulf %97, %96 : vector<8x256xf32>
    %99 = vector.extract_strided_slice %98 {offsets = [0, 0], sizes = [8, 128], strides = [1, 1]} : vector<8x256xf32> to vector<8x128xf32>
    %100 = vector.extract_strided_slice %98 {offsets = [0, 128], sizes = [8, 128], strides = [1, 1]} : vector<8x256xf32> to vector<8x128xf32>
    %101 = vector.extract_strided_slice %84 {offsets = [0, 256], sizes = [8, 128], strides = [1, 1]} : vector<8x384xf32> to vector<8x128xf32>
    %102 = vector.extract_strided_slice %88 {offsets = [0, 256], sizes = [8, 128], strides = [1, 1]} : vector<8x384xf32> to vector<8x128xf32>
    %103 = arith.addf %102, %29 : vector<8x128xf32>
    %104 = arith.mulf %99, %103 : vector<8x128xf32>
    %105 = arith.addf %101, %104 : vector<8x128xf32>
    %106 = math.tanh %105 : vector<8x128xf32>
    %cst_56 = arith.constant 1.000000e+00 : f32
    %107 = vector.broadcast %cst_56 : f32 to vector<8x128xf32>
    %108 = arith.subf %107, %100 : vector<8x128xf32>
    %109 = arith.mulf %108, %106 : vector<8x128xf32>
    %110 = arith.mulf %100, %82 : vector<8x128xf32>
    %111 = arith.addf %109, %110 : vector<8x128xf32>
    %112 = arith.truncf %82 : vector<8x128xf32> to vector<8x128xbf16>
    %c4 = arith.constant 4 : index
    %c0_57 = arith.constant 0 : index
    %c0_58 = arith.constant 0 : index
    %113 = vector.load %arg11[%c4, %c0_57, %c0_58] : memref<7x128x384xbf16, #tpu.memory_space<vmem>>, vector<1x128x384xbf16>
    %114 = vector.shape_cast %113 : vector<1x128x384xbf16> to vector<128x384xbf16>
    %cst_59 = arith.constant dense<0.000000e+00> : vector<8x384xf32>
    %115 = tpu.matmul %112, %114, %cst_59 {dimension_numbers = #tpu.dot_dimension_numbers<[1], [0], [0], [1], [0, 0, 1, 1], [], []>} : vector<8x128xbf16>, vector<128x384xbf16>, vector<8x384xf32> -> vector<8x384xf32>
    %116 = arith.addf %115, %41 : vector<8x384xf32>
    %117 = arith.truncf %51 : vector<8x128xf32> to vector<8x128xbf16>
    %c1_60 = arith.constant 1 : index
    %c0_61 = arith.constant 0 : index
    %c0_62 = arith.constant 0 : index
    %118 = vector.load %arg11[%c1_60, %c0_61, %c0_62] : memref<7x128x384xbf16, #tpu.memory_space<vmem>>, vector<1x128x384xbf16>
    %119 = vector.shape_cast %118 : vector<1x128x384xbf16> to vector<128x384xbf16>
    %cst_63 = arith.constant dense<0.000000e+00> : vector<8x384xf32>
    %120 = tpu.matmul %117, %119, %cst_63 {dimension_numbers = #tpu.dot_dimension_numbers<[1], [0], [0], [1], [0, 0, 1, 1], [], []>} : vector<8x128xbf16>, vector<128x384xbf16>, vector<8x384xf32> -> vector<8x384xf32>
    %121 = vector.extract_strided_slice %116 {offsets = [0, 0], sizes = [8, 256], strides = [1, 1]} : vector<8x384xf32> to vector<8x256xf32>
    %122 = vector.extract_strided_slice %120 {offsets = [0, 0], sizes = [8, 256], strides = [1, 1]} : vector<8x384xf32> to vector<8x256xf32>
    %123 = arith.addf %121, %122 : vector<8x256xf32>
    %cst_64 = arith.constant 5.000000e-01 : f32
    %124 = vector.broadcast %cst_64 : f32 to vector<8x256xf32>
    %125 = arith.mulf %124, %123 : vector<8x256xf32>
    %126 = math.tanh %125 : vector<8x256xf32>
    %cst_65 = arith.constant 1.000000e+00 : f32
    %127 = vector.broadcast %cst_65 : f32 to vector<8x256xf32>
    %128 = arith.addf %126, %127 : vector<8x256xf32>
    %cst_66 = arith.constant 5.000000e-01 : f32
    %129 = vector.broadcast %cst_66 : f32 to vector<8x256xf32>
    %130 = arith.mulf %129, %128 : vector<8x256xf32>
    %131 = vector.extract_strided_slice %130 {offsets = [0, 0], sizes = [8, 128], strides = [1, 1]} : vector<8x256xf32> to vector<8x128xf32>
    %132 = vector.extract_strided_slice %130 {offsets = [0, 128], sizes = [8, 128], strides = [1, 1]} : vector<8x256xf32> to vector<8x128xf32>
    %133 = vector.extract_strided_slice %116 {offsets = [0, 256], sizes = [8, 128], strides = [1, 1]} : vector<8x384xf32> to vector<8x128xf32>
    %134 = vector.extract_strided_slice %120 {offsets = [0, 256], sizes = [8, 128], strides = [1, 1]} : vector<8x384xf32> to vector<8x128xf32>
    %135 = arith.addf %134, %32 : vector<8x128xf32>
    %136 = arith.mulf %131, %135 : vector<8x128xf32>
    %137 = arith.addf %133, %136 : vector<8x128xf32>
    %138 = math.tanh %137 : vector<8x128xf32>
    %cst_67 = arith.constant 1.000000e+00 : f32
    %139 = vector.broadcast %cst_67 : f32 to vector<8x128xf32>
    %140 = arith.subf %139, %132 : vector<8x128xf32>
    %141 = arith.mulf %140, %138 : vector<8x128xf32>
    %142 = arith.mulf %132, %51 : vector<8x128xf32>
    %143 = arith.addf %141, %142 : vector<8x128xf32>
    %c2_68 = arith.constant 2 : index
    %c0_69 = arith.constant 0 : index
    %c0_70 = arith.constant 0 : index
    %144 = vector.load %arg10[%c2_68, %c0_69, %c0_70] : memref<8x8x384xf32, #tpu.memory_space<vmem>>, vector<1x8x384xf32>
    %145 = vector.shape_cast %144 : vector<1x8x384xf32> to vector<8x384xf32>
    %146 = arith.truncf %111 : vector<8x128xf32> to vector<8x128xbf16>
    %c0_71 = arith.constant 0 : index
    %c0_72 = arith.constant 0 : index
    %c0_73 = arith.constant 0 : index
    %147 = vector.load %arg11[%c0_71, %c0_72, %c0_73] : memref<7x128x384xbf16, #tpu.memory_space<vmem>>, vector<1x128x384xbf16>
    %148 = vector.shape_cast %147 : vector<1x128x384xbf16> to vector<128x384xbf16>
    %cst_74 = arith.constant dense<0.000000e+00> : vector<8x384xf32>
    %149 = tpu.matmul %146, %148, %cst_74 {dimension_numbers = #tpu.dot_dimension_numbers<[1], [0], [0], [1], [0, 0, 1, 1], [], []>} : vector<8x128xbf16>, vector<128x384xbf16>, vector<8x384xf32> -> vector<8x384xf32>
    %150 = vector.extract_strided_slice %145 {offsets = [0, 0], sizes = [8, 256], strides = [1, 1]} : vector<8x384xf32> to vector<8x256xf32>
    %151 = vector.extract_strided_slice %149 {offsets = [0, 0], sizes = [8, 256], strides = [1, 1]} : vector<8x384xf32> to vector<8x256xf32>
    %152 = arith.addf %150, %151 : vector<8x256xf32>
    %cst_75 = arith.constant 5.000000e-01 : f32
    %153 = vector.broadcast %cst_75 : f32 to vector<8x256xf32>
    %154 = arith.mulf %153, %152 : vector<8x256xf32>
    %155 = math.tanh %154 : vector<8x256xf32>
    %cst_76 = arith.constant 1.000000e+00 : f32
    %156 = vector.broadcast %cst_76 : f32 to vector<8x256xf32>
    %157 = arith.addf %155, %156 : vector<8x256xf32>
    %cst_77 = arith.constant 5.000000e-01 : f32
    %158 = vector.broadcast %cst_77 : f32 to vector<8x256xf32>
    %159 = arith.mulf %158, %157 : vector<8x256xf32>
    %160 = vector.extract_strided_slice %159 {offsets = [0, 0], sizes = [8, 128], strides = [1, 1]} : vector<8x256xf32> to vector<8x128xf32>
    %161 = vector.extract_strided_slice %159 {offsets = [0, 128], sizes = [8, 128], strides = [1, 1]} : vector<8x256xf32> to vector<8x128xf32>
    %162 = vector.extract_strided_slice %145 {offsets = [0, 256], sizes = [8, 128], strides = [1, 1]} : vector<8x384xf32> to vector<8x128xf32>
    %163 = vector.extract_strided_slice %149 {offsets = [0, 256], sizes = [8, 128], strides = [1, 1]} : vector<8x384xf32> to vector<8x128xf32>
    %164 = arith.addf %163, %29 : vector<8x128xf32>
    %165 = arith.mulf %160, %164 : vector<8x128xf32>
    %166 = arith.addf %162, %165 : vector<8x128xf32>
    %167 = math.tanh %166 : vector<8x128xf32>
    %cst_78 = arith.constant 1.000000e+00 : f32
    %168 = vector.broadcast %cst_78 : f32 to vector<8x128xf32>
    %169 = arith.subf %168, %161 : vector<8x128xf32>
    %170 = arith.mulf %169, %167 : vector<8x128xf32>
    %171 = arith.mulf %161, %111 : vector<8x128xf32>
    %172 = arith.addf %170, %171 : vector<8x128xf32>
    %173 = arith.truncf %111 : vector<8x128xf32> to vector<8x128xbf16>
    %c4_79 = arith.constant 4 : index
    %c0_80 = arith.constant 0 : index
    %c0_81 = arith.constant 0 : index
    %174 = vector.load %arg11[%c4_79, %c0_80, %c0_81] : memref<7x128x384xbf16, #tpu.memory_space<vmem>>, vector<1x128x384xbf16>
    %175 = vector.shape_cast %174 : vector<1x128x384xbf16> to vector<128x384xbf16>
    %cst_82 = arith.constant dense<0.000000e+00> : vector<8x384xf32>
    %176 = tpu.matmul %173, %175, %cst_82 {dimension_numbers = #tpu.dot_dimension_numbers<[1], [0], [0], [1], [0, 0, 1, 1], [], []>} : vector<8x128xbf16>, vector<128x384xbf16>, vector<8x384xf32> -> vector<8x384xf32>
    %177 = arith.addf %176, %41 : vector<8x384xf32>
    %178 = arith.truncf %143 : vector<8x128xf32> to vector<8x128xbf16>
    %c1_83 = arith.constant 1 : index
    %c0_84 = arith.constant 0 : index
    %c0_85 = arith.constant 0 : index
    %179 = vector.load %arg11[%c1_83, %c0_84, %c0_85] : memref<7x128x384xbf16, #tpu.memory_space<vmem>>, vector<1x128x384xbf16>
    %180 = vector.shape_cast %179 : vector<1x128x384xbf16> to vector<128x384xbf16>
    %cst_86 = arith.constant dense<0.000000e+00> : vector<8x384xf32>
    %181 = tpu.matmul %178, %180, %cst_86 {dimension_numbers = #tpu.dot_dimension_numbers<[1], [0], [0], [1], [0, 0, 1, 1], [], []>} : vector<8x128xbf16>, vector<128x384xbf16>, vector<8x384xf32> -> vector<8x384xf32>
    %182 = vector.extract_strided_slice %177 {offsets = [0, 0], sizes = [8, 256], strides = [1, 1]} : vector<8x384xf32> to vector<8x256xf32>
    %183 = vector.extract_strided_slice %181 {offsets = [0, 0], sizes = [8, 256], strides = [1, 1]} : vector<8x384xf32> to vector<8x256xf32>
    %184 = arith.addf %182, %183 : vector<8x256xf32>
    %cst_87 = arith.constant 5.000000e-01 : f32
    %185 = vector.broadcast %cst_87 : f32 to vector<8x256xf32>
    %186 = arith.mulf %185, %184 : vector<8x256xf32>
    %187 = math.tanh %186 : vector<8x256xf32>
    %cst_88 = arith.constant 1.000000e+00 : f32
    %188 = vector.broadcast %cst_88 : f32 to vector<8x256xf32>
    %189 = arith.addf %187, %188 : vector<8x256xf32>
    %cst_89 = arith.constant 5.000000e-01 : f32
    %190 = vector.broadcast %cst_89 : f32 to vector<8x256xf32>
    %191 = arith.mulf %190, %189 : vector<8x256xf32>
    %192 = vector.extract_strided_slice %191 {offsets = [0, 0], sizes = [8, 128], strides = [1, 1]} : vector<8x256xf32> to vector<8x128xf32>
    %193 = vector.extract_strided_slice %191 {offsets = [0, 128], sizes = [8, 128], strides = [1, 1]} : vector<8x256xf32> to vector<8x128xf32>
    %194 = vector.extract_strided_slice %177 {offsets = [0, 256], sizes = [8, 128], strides = [1, 1]} : vector<8x384xf32> to vector<8x128xf32>
    %195 = vector.extract_strided_slice %181 {offsets = [0, 256], sizes = [8, 128], strides = [1, 1]} : vector<8x384xf32> to vector<8x128xf32>
    %196 = arith.addf %195, %32 : vector<8x128xf32>
    %197 = arith.mulf %192, %196 : vector<8x128xf32>
    %198 = arith.addf %194, %197 : vector<8x128xf32>
    %199 = math.tanh %198 : vector<8x128xf32>
    %cst_90 = arith.constant 1.000000e+00 : f32
    %200 = vector.broadcast %cst_90 : f32 to vector<8x128xf32>
    %201 = arith.subf %200, %193 : vector<8x128xf32>
    %202 = arith.mulf %201, %199 : vector<8x128xf32>
    %203 = arith.mulf %193, %143 : vector<8x128xf32>
    %204 = arith.addf %202, %203 : vector<8x128xf32>
    %205 = arith.truncf %143 : vector<8x128xf32> to vector<8x128xbf16>
    %c5 = arith.constant 5 : index
    %c0_91 = arith.constant 0 : index
    %c0_92 = arith.constant 0 : index
    %206 = vector.load %arg11[%c5, %c0_91, %c0_92] : memref<7x128x384xbf16, #tpu.memory_space<vmem>>, vector<1x128x384xbf16>
    %207 = vector.shape_cast %206 : vector<1x128x384xbf16> to vector<128x384xbf16>
    %cst_93 = arith.constant dense<0.000000e+00> : vector<8x384xf32>
    %208 = tpu.matmul %205, %207, %cst_93 {dimension_numbers = #tpu.dot_dimension_numbers<[1], [0], [0], [1], [0, 0, 1, 1], [], []>} : vector<8x128xbf16>, vector<128x384xbf16>, vector<8x384xf32> -> vector<8x384xf32>
    %209 = arith.addf %208, %44 : vector<8x384xf32>
    %210 = arith.truncf %52 : vector<8x128xf32> to vector<8x128xbf16>
    %c2_94 = arith.constant 2 : index
    %c0_95 = arith.constant 0 : index
    %c0_96 = arith.constant 0 : index
    %211 = vector.load %arg11[%c2_94, %c0_95, %c0_96] : memref<7x128x384xbf16, #tpu.memory_space<vmem>>, vector<1x128x384xbf16>
    %212 = vector.shape_cast %211 : vector<1x128x384xbf16> to vector<128x384xbf16>
    %cst_97 = arith.constant dense<0.000000e+00> : vector<8x384xf32>
    %213 = tpu.matmul %210, %212, %cst_97 {dimension_numbers = #tpu.dot_dimension_numbers<[1], [0], [0], [1], [0, 0, 1, 1], [], []>} : vector<8x128xbf16>, vector<128x384xbf16>, vector<8x384xf32> -> vector<8x384xf32>
    %214 = vector.extract_strided_slice %209 {offsets = [0, 0], sizes = [8, 256], strides = [1, 1]} : vector<8x384xf32> to vector<8x256xf32>
    %215 = vector.extract_strided_slice %213 {offsets = [0, 0], sizes = [8, 256], strides = [1, 1]} : vector<8x384xf32> to vector<8x256xf32>
    %216 = arith.addf %214, %215 : vector<8x256xf32>
    %cst_98 = arith.constant 5.000000e-01 : f32
    %217 = vector.broadcast %cst_98 : f32 to vector<8x256xf32>
    %218 = arith.mulf %217, %216 : vector<8x256xf32>
    %219 = math.tanh %218 : vector<8x256xf32>
    %cst_99 = arith.constant 1.000000e+00 : f32
    %220 = vector.broadcast %cst_99 : f32 to vector<8x256xf32>
    %221 = arith.addf %219, %220 : vector<8x256xf32>
    %cst_100 = arith.constant 5.000000e-01 : f32
    %222 = vector.broadcast %cst_100 : f32 to vector<8x256xf32>
    %223 = arith.mulf %222, %221 : vector<8x256xf32>
    %224 = vector.extract_strided_slice %223 {offsets = [0, 0], sizes = [8, 128], strides = [1, 1]} : vector<8x256xf32> to vector<8x128xf32>
    %225 = vector.extract_strided_slice %223 {offsets = [0, 128], sizes = [8, 128], strides = [1, 1]} : vector<8x256xf32> to vector<8x128xf32>
    %226 = vector.extract_strided_slice %209 {offsets = [0, 256], sizes = [8, 128], strides = [1, 1]} : vector<8x384xf32> to vector<8x128xf32>
    %227 = vector.extract_strided_slice %213 {offsets = [0, 256], sizes = [8, 128], strides = [1, 1]} : vector<8x384xf32> to vector<8x128xf32>
    %228 = arith.addf %227, %35 : vector<8x128xf32>
    %229 = arith.mulf %224, %228 : vector<8x128xf32>
    %230 = arith.addf %226, %229 : vector<8x128xf32>
    %231 = math.tanh %230 : vector<8x128xf32>
    %cst_101 = arith.constant 1.000000e+00 : f32
    %232 = vector.broadcast %cst_101 : f32 to vector<8x128xf32>
    %233 = arith.subf %232, %225 : vector<8x128xf32>
    %234 = arith.mulf %233, %231 : vector<8x128xf32>
    %235 = arith.mulf %225, %52 : vector<8x128xf32>
    %236 = arith.addf %234, %235 : vector<8x128xf32>
    %c3_102 = arith.constant 3 : index
    %c0_103 = arith.constant 0 : index
    %c0_104 = arith.constant 0 : index
    %237 = vector.load %arg10[%c3_102, %c0_103, %c0_104] : memref<8x8x384xf32, #tpu.memory_space<vmem>>, vector<1x8x384xf32>
    %238 = vector.shape_cast %237 : vector<1x8x384xf32> to vector<8x384xf32>
    %239 = arith.truncf %172 : vector<8x128xf32> to vector<8x128xbf16>
    %c0_105 = arith.constant 0 : index
    %c0_106 = arith.constant 0 : index
    %c0_107 = arith.constant 0 : index
    %240 = vector.load %arg11[%c0_105, %c0_106, %c0_107] : memref<7x128x384xbf16, #tpu.memory_space<vmem>>, vector<1x128x384xbf16>
    %241 = vector.shape_cast %240 : vector<1x128x384xbf16> to vector<128x384xbf16>
    %cst_108 = arith.constant dense<0.000000e+00> : vector<8x384xf32>
    %242 = tpu.matmul %239, %241, %cst_108 {dimension_numbers = #tpu.dot_dimension_numbers<[1], [0], [0], [1], [0, 0, 1, 1], [], []>} : vector<8x128xbf16>, vector<128x384xbf16>, vector<8x384xf32> -> vector<8x384xf32>
    %243 = vector.extract_strided_slice %238 {offsets = [0, 0], sizes = [8, 256], strides = [1, 1]} : vector<8x384xf32> to vector<8x256xf32>
    %244 = vector.extract_strided_slice %242 {offsets = [0, 0], sizes = [8, 256], strides = [1, 1]} : vector<8x384xf32> to vector<8x256xf32>
    %245 = arith.addf %243, %244 : vector<8x256xf32>
    %cst_109 = arith.constant 5.000000e-01 : f32
    %246 = vector.broadcast %cst_109 : f32 to vector<8x256xf32>
    %247 = arith.mulf %246, %245 : vector<8x256xf32>
    %248 = math.tanh %247 : vector<8x256xf32>
    %cst_110 = arith.constant 1.000000e+00 : f32
    %249 = vector.broadcast %cst_110 : f32 to vector<8x256xf32>
    %250 = arith.addf %248, %249 : vector<8x256xf32>
    %cst_111 = arith.constant 5.000000e-01 : f32
    %251 = vector.broadcast %cst_111 : f32 to vector<8x256xf32>
    %252 = arith.mulf %251, %250 : vector<8x256xf32>
    %253 = vector.extract_strided_slice %252 {offsets = [0, 0], sizes = [8, 128], strides = [1, 1]} : vector<8x256xf32> to vector<8x128xf32>
    %254 = vector.extract_strided_slice %252 {offsets = [0, 128], sizes = [8, 128], strides = [1, 1]} : vector<8x256xf32> to vector<8x128xf32>
    %255 = vector.extract_strided_slice %238 {offsets = [0, 256], sizes = [8, 128], strides = [1, 1]} : vector<8x384xf32> to vector<8x128xf32>
    %256 = vector.extract_strided_slice %242 {offsets = [0, 256], sizes = [8, 128], strides = [1, 1]} : vector<8x384xf32> to vector<8x128xf32>
    %257 = arith.addf %256, %29 : vector<8x128xf32>
    %258 = arith.mulf %253, %257 : vector<8x128xf32>
    %259 = arith.addf %255, %258 : vector<8x128xf32>
    %260 = math.tanh %259 : vector<8x128xf32>
    %cst_112 = arith.constant 1.000000e+00 : f32
    %261 = vector.broadcast %cst_112 : f32 to vector<8x128xf32>
    %262 = arith.subf %261, %254 : vector<8x128xf32>
    %263 = arith.mulf %262, %260 : vector<8x128xf32>
    %264 = arith.mulf %254, %172 : vector<8x128xf32>
    %265 = arith.addf %263, %264 : vector<8x128xf32>
    %266 = arith.truncf %172 : vector<8x128xf32> to vector<8x128xbf16>
    %c4_113 = arith.constant 4 : index
    %c0_114 = arith.constant 0 : index
    %c0_115 = arith.constant 0 : index
    %267 = vector.load %arg11[%c4_113, %c0_114, %c0_115] : memref<7x128x384xbf16, #tpu.memory_space<vmem>>, vector<1x128x384xbf16>
    %268 = vector.shape_cast %267 : vector<1x128x384xbf16> to vector<128x384xbf16>
    %cst_116 = arith.constant dense<0.000000e+00> : vector<8x384xf32>
    %269 = tpu.matmul %266, %268, %cst_116 {dimension_numbers = #tpu.dot_dimension_numbers<[1], [0], [0], [1], [0, 0, 1, 1], [], []>} : vector<8x128xbf16>, vector<128x384xbf16>, vector<8x384xf32> -> vector<8x384xf32>
    %270 = arith.addf %269, %41 : vector<8x384xf32>
    %271 = arith.truncf %204 : vector<8x128xf32> to vector<8x128xbf16>
    %c1_117 = arith.constant 1 : index
    %c0_118 = arith.constant 0 : index
    %c0_119 = arith.constant 0 : index
    %272 = vector.load %arg11[%c1_117, %c0_118, %c0_119] : memref<7x128x384xbf16, #tpu.memory_space<vmem>>, vector<1x128x384xbf16>
    %273 = vector.shape_cast %272 : vector<1x128x384xbf16> to vector<128x384xbf16>
    %cst_120 = arith.constant dense<0.000000e+00> : vector<8x384xf32>
    %274 = tpu.matmul %271, %273, %cst_120 {dimension_numbers = #tpu.dot_dimension_numbers<[1], [0], [0], [1], [0, 0, 1, 1], [], []>} : vector<8x128xbf16>, vector<128x384xbf16>, vector<8x384xf32> -> vector<8x384xf32>
    %275 = vector.extract_strided_slice %270 {offsets = [0, 0], sizes = [8, 256], strides = [1, 1]} : vector<8x384xf32> to vector<8x256xf32>
    %276 = vector.extract_strided_slice %274 {offsets = [0, 0], sizes = [8, 256], strides = [1, 1]} : vector<8x384xf32> to vector<8x256xf32>
    %277 = arith.addf %275, %276 : vector<8x256xf32>
    %cst_121 = arith.constant 5.000000e-01 : f32
    %278 = vector.broadcast %cst_121 : f32 to vector<8x256xf32>
    %279 = arith.mulf %278, %277 : vector<8x256xf32>
    %280 = math.tanh %279 : vector<8x256xf32>
    %cst_122 = arith.constant 1.000000e+00 : f32
    %281 = vector.broadcast %cst_122 : f32 to vector<8x256xf32>
    %282 = arith.addf %280, %281 : vector<8x256xf32>
    %cst_123 = arith.constant 5.000000e-01 : f32
    %283 = vector.broadcast %cst_123 : f32 to vector<8x256xf32>
    %284 = arith.mulf %283, %282 : vector<8x256xf32>
    %285 = vector.extract_strided_slice %284 {offsets = [0, 0], sizes = [8, 128], strides = [1, 1]} : vector<8x256xf32> to vector<8x128xf32>
    %286 = vector.extract_strided_slice %284 {offsets = [0, 128], sizes = [8, 128], strides = [1, 1]} : vector<8x256xf32> to vector<8x128xf32>
    %287 = vector.extract_strided_slice %270 {offsets = [0, 256], sizes = [8, 128], strides = [1, 1]} : vector<8x384xf32> to vector<8x128xf32>
    %288 = vector.extract_strided_slice %274 {offsets = [0, 256], sizes = [8, 128], strides = [1, 1]} : vector<8x384xf32> to vector<8x128xf32>
    %289 = arith.addf %288, %32 : vector<8x128xf32>
    %290 = arith.mulf %285, %289 : vector<8x128xf32>
    %291 = arith.addf %287, %290 : vector<8x128xf32>
    %292 = math.tanh %291 : vector<8x128xf32>
    %cst_124 = arith.constant 1.000000e+00 : f32
    %293 = vector.broadcast %cst_124 : f32 to vector<8x128xf32>
    %294 = arith.subf %293, %286 : vector<8x128xf32>
    %295 = arith.mulf %294, %292 : vector<8x128xf32>
    %296 = arith.mulf %286, %204 : vector<8x128xf32>
    %297 = arith.addf %295, %296 : vector<8x128xf32>
    %298 = arith.truncf %204 : vector<8x128xf32> to vector<8x128xbf16>
    %c5_125 = arith.constant 5 : index
    %c0_126 = arith.constant 0 : index
    %c0_127 = arith.constant 0 : index
    %299 = vector.load %arg11[%c5_125, %c0_126, %c0_127] : memref<7x128x384xbf16, #tpu.memory_space<vmem>>, vector<1x128x384xbf16>
    %300 = vector.shape_cast %299 : vector<1x128x384xbf16> to vector<128x384xbf16>
    %cst_128 = arith.constant dense<0.000000e+00> : vector<8x384xf32>
    %301 = tpu.matmul %298, %300, %cst_128 {dimension_numbers = #tpu.dot_dimension_numbers<[1], [0], [0], [1], [0, 0, 1, 1], [], []>} : vector<8x128xbf16>, vector<128x384xbf16>, vector<8x384xf32> -> vector<8x384xf32>
    %302 = arith.addf %301, %44 : vector<8x384xf32>
    %303 = arith.truncf %236 : vector<8x128xf32> to vector<8x128xbf16>
    %c2_129 = arith.constant 2 : index
    %c0_130 = arith.constant 0 : index
    %c0_131 = arith.constant 0 : index
    %304 = vector.load %arg11[%c2_129, %c0_130, %c0_131] : memref<7x128x384xbf16, #tpu.memory_space<vmem>>, vector<1x128x384xbf16>
    %305 = vector.shape_cast %304 : vector<1x128x384xbf16> to vector<128x384xbf16>
    %cst_132 = arith.constant dense<0.000000e+00> : vector<8x384xf32>
    %306 = tpu.matmul %303, %305, %cst_132 {dimension_numbers = #tpu.dot_dimension_numbers<[1], [0], [0], [1], [0, 0, 1, 1], [], []>} : vector<8x128xbf16>, vector<128x384xbf16>, vector<8x384xf32> -> vector<8x384xf32>
    %307 = vector.extract_strided_slice %302 {offsets = [0, 0], sizes = [8, 256], strides = [1, 1]} : vector<8x384xf32> to vector<8x256xf32>
    %308 = vector.extract_strided_slice %306 {offsets = [0, 0], sizes = [8, 256], strides = [1, 1]} : vector<8x384xf32> to vector<8x256xf32>
    %309 = arith.addf %307, %308 : vector<8x256xf32>
    %cst_133 = arith.constant 5.000000e-01 : f32
    %310 = vector.broadcast %cst_133 : f32 to vector<8x256xf32>
    %311 = arith.mulf %310, %309 : vector<8x256xf32>
    %312 = math.tanh %311 : vector<8x256xf32>
    %cst_134 = arith.constant 1.000000e+00 : f32
    %313 = vector.broadcast %cst_134 : f32 to vector<8x256xf32>
    %314 = arith.addf %312, %313 : vector<8x256xf32>
    %cst_135 = arith.constant 5.000000e-01 : f32
    %315 = vector.broadcast %cst_135 : f32 to vector<8x256xf32>
    %316 = arith.mulf %315, %314 : vector<8x256xf32>
    %317 = vector.extract_strided_slice %316 {offsets = [0, 0], sizes = [8, 128], strides = [1, 1]} : vector<8x256xf32> to vector<8x128xf32>
    %318 = vector.extract_strided_slice %316 {offsets = [0, 128], sizes = [8, 128], strides = [1, 1]} : vector<8x256xf32> to vector<8x128xf32>
    %319 = vector.extract_strided_slice %302 {offsets = [0, 256], sizes = [8, 128], strides = [1, 1]} : vector<8x384xf32> to vector<8x128xf32>
    %320 = vector.extract_strided_slice %306 {offsets = [0, 256], sizes = [8, 128], strides = [1, 1]} : vector<8x384xf32> to vector<8x128xf32>
    %321 = arith.addf %320, %35 : vector<8x128xf32>
    %322 = arith.mulf %317, %321 : vector<8x128xf32>
    %323 = arith.addf %319, %322 : vector<8x128xf32>
    %324 = math.tanh %323 : vector<8x128xf32>
    %cst_136 = arith.constant 1.000000e+00 : f32
    %325 = vector.broadcast %cst_136 : f32 to vector<8x128xf32>
    %326 = arith.subf %325, %318 : vector<8x128xf32>
    %327 = arith.mulf %326, %324 : vector<8x128xf32>
    %328 = arith.mulf %318, %236 : vector<8x128xf32>
    %329 = arith.addf %327, %328 : vector<8x128xf32>
    %330 = arith.truncf %236 : vector<8x128xf32> to vector<8x128xbf16>
    %c6 = arith.constant 6 : index
    %c0_137 = arith.constant 0 : index
    %c0_138 = arith.constant 0 : index
    %331 = vector.load %arg11[%c6, %c0_137, %c0_138] : memref<7x128x384xbf16, #tpu.memory_space<vmem>>, vector<1x128x384xbf16>
    %332 = vector.shape_cast %331 : vector<1x128x384xbf16> to vector<128x384xbf16>
    %cst_139 = arith.constant dense<0.000000e+00> : vector<8x384xf32>
    %333 = tpu.matmul %330, %332, %cst_139 {dimension_numbers = #tpu.dot_dimension_numbers<[1], [0], [0], [1], [0, 0, 1, 1], [], []>} : vector<8x128xbf16>, vector<128x384xbf16>, vector<8x384xf32> -> vector<8x384xf32>
    %334 = arith.addf %333, %47 : vector<8x384xf32>
    %335 = arith.truncf %53 : vector<8x128xf32> to vector<8x128xbf16>
    %c3_140 = arith.constant 3 : index
    %c0_141 = arith.constant 0 : index
    %c0_142 = arith.constant 0 : index
    %336 = vector.load %arg11[%c3_140, %c0_141, %c0_142] : memref<7x128x384xbf16, #tpu.memory_space<vmem>>, vector<1x128x384xbf16>
    %337 = vector.shape_cast %336 : vector<1x128x384xbf16> to vector<128x384xbf16>
    %cst_143 = arith.constant dense<0.000000e+00> : vector<8x384xf32>
    %338 = tpu.matmul %335, %337, %cst_143 {dimension_numbers = #tpu.dot_dimension_numbers<[1], [0], [0], [1], [0, 0, 1, 1], [], []>} : vector<8x128xbf16>, vector<128x384xbf16>, vector<8x384xf32> -> vector<8x384xf32>
    %339 = vector.extract_strided_slice %334 {offsets = [0, 0], sizes = [8, 256], strides = [1, 1]} : vector<8x384xf32> to vector<8x256xf32>
    %340 = vector.extract_strided_slice %338 {offsets = [0, 0], sizes = [8, 256], strides = [1, 1]} : vector<8x384xf32> to vector<8x256xf32>
    %341 = arith.addf %339, %340 : vector<8x256xf32>
    %cst_144 = arith.constant 5.000000e-01 : f32
    %342 = vector.broadcast %cst_144 : f32 to vector<8x256xf32>
    %343 = arith.mulf %342, %341 : vector<8x256xf32>
    %344 = math.tanh %343 : vector<8x256xf32>
    %cst_145 = arith.constant 1.000000e+00 : f32
    %345 = vector.broadcast %cst_145 : f32 to vector<8x256xf32>
    %346 = arith.addf %344, %345 : vector<8x256xf32>
    %cst_146 = arith.constant 5.000000e-01 : f32
    %347 = vector.broadcast %cst_146 : f32 to vector<8x256xf32>
    %348 = arith.mulf %347, %346 : vector<8x256xf32>
    %349 = vector.extract_strided_slice %348 {offsets = [0, 0], sizes = [8, 128], strides = [1, 1]} : vector<8x256xf32> to vector<8x128xf32>
    %350 = vector.extract_strided_slice %348 {offsets = [0, 128], sizes = [8, 128], strides = [1, 1]} : vector<8x256xf32> to vector<8x128xf32>
    %351 = vector.extract_strided_slice %334 {offsets = [0, 256], sizes = [8, 128], strides = [1, 1]} : vector<8x384xf32> to vector<8x128xf32>
    %352 = vector.extract_strided_slice %338 {offsets = [0, 256], sizes = [8, 128], strides = [1, 1]} : vector<8x384xf32> to vector<8x128xf32>
    %353 = arith.addf %352, %38 : vector<8x128xf32>
    %354 = arith.mulf %349, %353 : vector<8x128xf32>
    %355 = arith.addf %351, %354 : vector<8x128xf32>
    %356 = math.tanh %355 : vector<8x128xf32>
    %cst_147 = arith.constant 1.000000e+00 : f32
    %357 = vector.broadcast %cst_147 : f32 to vector<8x128xf32>
    %358 = arith.subf %357, %350 : vector<8x128xf32>
    %359 = arith.mulf %358, %356 : vector<8x128xf32>
    %360 = arith.mulf %350, %53 : vector<8x128xf32>
    %361 = arith.addf %359, %360 : vector<8x128xf32>
    %c4_148 = arith.constant 4 : index
    %c0_149 = arith.constant 0 : index
    %c0_150 = arith.constant 0 : index
    %362 = vector.load %arg10[%c4_148, %c0_149, %c0_150] : memref<8x8x384xf32, #tpu.memory_space<vmem>>, vector<1x8x384xf32>
    %363 = vector.shape_cast %362 : vector<1x8x384xf32> to vector<8x384xf32>
    %364 = arith.truncf %265 : vector<8x128xf32> to vector<8x128xbf16>
    %c0_151 = arith.constant 0 : index
    %c0_152 = arith.constant 0 : index
    %c0_153 = arith.constant 0 : index
    %365 = vector.load %arg11[%c0_151, %c0_152, %c0_153] : memref<7x128x384xbf16, #tpu.memory_space<vmem>>, vector<1x128x384xbf16>
    %366 = vector.shape_cast %365 : vector<1x128x384xbf16> to vector<128x384xbf16>
    %cst_154 = arith.constant dense<0.000000e+00> : vector<8x384xf32>
    %367 = tpu.matmul %364, %366, %cst_154 {dimension_numbers = #tpu.dot_dimension_numbers<[1], [0], [0], [1], [0, 0, 1, 1], [], []>} : vector<8x128xbf16>, vector<128x384xbf16>, vector<8x384xf32> -> vector<8x384xf32>
    %368 = vector.extract_strided_slice %363 {offsets = [0, 0], sizes = [8, 256], strides = [1, 1]} : vector<8x384xf32> to vector<8x256xf32>
    %369 = vector.extract_strided_slice %367 {offsets = [0, 0], sizes = [8, 256], strides = [1, 1]} : vector<8x384xf32> to vector<8x256xf32>
    %370 = arith.addf %368, %369 : vector<8x256xf32>
    %cst_155 = arith.constant 5.000000e-01 : f32
    %371 = vector.broadcast %cst_155 : f32 to vector<8x256xf32>
    %372 = arith.mulf %371, %370 : vector<8x256xf32>
    %373 = math.tanh %372 : vector<8x256xf32>
    %cst_156 = arith.constant 1.000000e+00 : f32
    %374 = vector.broadcast %cst_156 : f32 to vector<8x256xf32>
    %375 = arith.addf %373, %374 : vector<8x256xf32>
    %cst_157 = arith.constant 5.000000e-01 : f32
    %376 = vector.broadcast %cst_157 : f32 to vector<8x256xf32>
    %377 = arith.mulf %376, %375 : vector<8x256xf32>
    %378 = vector.extract_strided_slice %377 {offsets = [0, 0], sizes = [8, 128], strides = [1, 1]} : vector<8x256xf32> to vector<8x128xf32>
    %379 = vector.extract_strided_slice %377 {offsets = [0, 128], sizes = [8, 128], strides = [1, 1]} : vector<8x256xf32> to vector<8x128xf32>
    %380 = vector.extract_strided_slice %363 {offsets = [0, 256], sizes = [8, 128], strides = [1, 1]} : vector<8x384xf32> to vector<8x128xf32>
    %381 = vector.extract_strided_slice %367 {offsets = [0, 256], sizes = [8, 128], strides = [1, 1]} : vector<8x384xf32> to vector<8x128xf32>
    %382 = arith.addf %381, %29 : vector<8x128xf32>
    %383 = arith.mulf %378, %382 : vector<8x128xf32>
    %384 = arith.addf %380, %383 : vector<8x128xf32>
    %385 = math.tanh %384 : vector<8x128xf32>
    %cst_158 = arith.constant 1.000000e+00 : f32
    %386 = vector.broadcast %cst_158 : f32 to vector<8x128xf32>
    %387 = arith.subf %386, %379 : vector<8x128xf32>
    %388 = arith.mulf %387, %385 : vector<8x128xf32>
    %389 = arith.mulf %379, %265 : vector<8x128xf32>
    %390 = arith.addf %388, %389 : vector<8x128xf32>
    %391 = arith.truncf %265 : vector<8x128xf32> to vector<8x128xbf16>
    %c4_159 = arith.constant 4 : index
    %c0_160 = arith.constant 0 : index
    %c0_161 = arith.constant 0 : index
    %392 = vector.load %arg11[%c4_159, %c0_160, %c0_161] : memref<7x128x384xbf16, #tpu.memory_space<vmem>>, vector<1x128x384xbf16>
    %393 = vector.shape_cast %392 : vector<1x128x384xbf16> to vector<128x384xbf16>
    %cst_162 = arith.constant dense<0.000000e+00> : vector<8x384xf32>
    %394 = tpu.matmul %391, %393, %cst_162 {dimension_numbers = #tpu.dot_dimension_numbers<[1], [0], [0], [1], [0, 0, 1, 1], [], []>} : vector<8x128xbf16>, vector<128x384xbf16>, vector<8x384xf32> -> vector<8x384xf32>
    %395 = arith.addf %394, %41 : vector<8x384xf32>
    %396 = arith.truncf %297 : vector<8x128xf32> to vector<8x128xbf16>
    %c1_163 = arith.constant 1 : index
    %c0_164 = arith.constant 0 : index
    %c0_165 = arith.constant 0 : index
    %397 = vector.load %arg11[%c1_163, %c0_164, %c0_165] : memref<7x128x384xbf16, #tpu.memory_space<vmem>>, vector<1x128x384xbf16>
    %398 = vector.shape_cast %397 : vector<1x128x384xbf16> to vector<128x384xbf16>
    %cst_166 = arith.constant dense<0.000000e+00> : vector<8x384xf32>
    %399 = tpu.matmul %396, %398, %cst_166 {dimension_numbers = #tpu.dot_dimension_numbers<[1], [0], [0], [1], [0, 0, 1, 1], [], []>} : vector<8x128xbf16>, vector<128x384xbf16>, vector<8x384xf32> -> vector<8x384xf32>
    %400 = vector.extract_strided_slice %395 {offsets = [0, 0], sizes = [8, 256], strides = [1, 1]} : vector<8x384xf32> to vector<8x256xf32>
    %401 = vector.extract_strided_slice %399 {offsets = [0, 0], sizes = [8, 256], strides = [1, 1]} : vector<8x384xf32> to vector<8x256xf32>
    %402 = arith.addf %400, %401 : vector<8x256xf32>
    %cst_167 = arith.constant 5.000000e-01 : f32
    %403 = vector.broadcast %cst_167 : f32 to vector<8x256xf32>
    %404 = arith.mulf %403, %402 : vector<8x256xf32>
    %405 = math.tanh %404 : vector<8x256xf32>
    %cst_168 = arith.constant 1.000000e+00 : f32
    %406 = vector.broadcast %cst_168 : f32 to vector<8x256xf32>
    %407 = arith.addf %405, %406 : vector<8x256xf32>
    %cst_169 = arith.constant 5.000000e-01 : f32
    %408 = vector.broadcast %cst_169 : f32 to vector<8x256xf32>
    %409 = arith.mulf %408, %407 : vector<8x256xf32>
    %410 = vector.extract_strided_slice %409 {offsets = [0, 0], sizes = [8, 128], strides = [1, 1]} : vector<8x256xf32> to vector<8x128xf32>
    %411 = vector.extract_strided_slice %409 {offsets = [0, 128], sizes = [8, 128], strides = [1, 1]} : vector<8x256xf32> to vector<8x128xf32>
    %412 = vector.extract_strided_slice %395 {offsets = [0, 256], sizes = [8, 128], strides = [1, 1]} : vector<8x384xf32> to vector<8x128xf32>
    %413 = vector.extract_strided_slice %399 {offsets = [0, 256], sizes = [8, 128], strides = [1, 1]} : vector<8x384xf32> to vector<8x128xf32>
    %414 = arith.addf %413, %32 : vector<8x128xf32>
    %415 = arith.mulf %410, %414 : vector<8x128xf32>
    %416 = arith.addf %412, %415 : vector<8x128xf32>
    %417 = math.tanh %416 : vector<8x128xf32>
    %cst_170 = arith.constant 1.000000e+00 : f32
    %418 = vector.broadcast %cst_170 : f32 to vector<8x128xf32>
    %419 = arith.subf %418, %411 : vector<8x128xf32>
    %420 = arith.mulf %419, %417 : vector<8x128xf32>
    %421 = arith.mulf %411, %297 : vector<8x128xf32>
    %422 = arith.addf %420, %421 : vector<8x128xf32>
    %423 = arith.truncf %297 : vector<8x128xf32> to vector<8x128xbf16>
    %c5_171 = arith.constant 5 : index
    %c0_172 = arith.constant 0 : index
    %c0_173 = arith.constant 0 : index
    %424 = vector.load %arg11[%c5_171, %c0_172, %c0_173] : memref<7x128x384xbf16, #tpu.memory_space<vmem>>, vector<1x128x384xbf16>
    %425 = vector.shape_cast %424 : vector<1x128x384xbf16> to vector<128x384xbf16>
    %cst_174 = arith.constant dense<0.000000e+00> : vector<8x384xf32>
    %426 = tpu.matmul %423, %425, %cst_174 {dimension_numbers = #tpu.dot_dimension_numbers<[1], [0], [0], [1], [0, 0, 1, 1], [], []>} : vector<8x128xbf16>, vector<128x384xbf16>, vector<8x384xf32> -> vector<8x384xf32>
    %427 = arith.addf %426, %44 : vector<8x384xf32>
    %428 = arith.truncf %329 : vector<8x128xf32> to vector<8x128xbf16>
    %c2_175 = arith.constant 2 : index
    %c0_176 = arith.constant 0 : index
    %c0_177 = arith.constant 0 : index
    %429 = vector.load %arg11[%c2_175, %c0_176, %c0_177] : memref<7x128x384xbf16, #tpu.memory_space<vmem>>, vector<1x128x384xbf16>
    %430 = vector.shape_cast %429 : vector<1x128x384xbf16> to vector<128x384xbf16>
    %cst_178 = arith.constant dense<0.000000e+00> : vector<8x384xf32>
    %431 = tpu.matmul %428, %430, %cst_178 {dimension_numbers = #tpu.dot_dimension_numbers<[1], [0], [0], [1], [0, 0, 1, 1], [], []>} : vector<8x128xbf16>, vector<128x384xbf16>, vector<8x384xf32> -> vector<8x384xf32>
    %432 = vector.extract_strided_slice %427 {offsets = [0, 0], sizes = [8, 256], strides = [1, 1]} : vector<8x384xf32> to vector<8x256xf32>
    %433 = vector.extract_strided_slice %431 {offsets = [0, 0], sizes = [8, 256], strides = [1, 1]} : vector<8x384xf32> to vector<8x256xf32>
    %434 = arith.addf %432, %433 : vector<8x256xf32>
    %cst_179 = arith.constant 5.000000e-01 : f32
    %435 = vector.broadcast %cst_179 : f32 to vector<8x256xf32>
    %436 = arith.mulf %435, %434 : vector<8x256xf32>
    %437 = math.tanh %436 : vector<8x256xf32>
    %cst_180 = arith.constant 1.000000e+00 : f32
    %438 = vector.broadcast %cst_180 : f32 to vector<8x256xf32>
    %439 = arith.addf %437, %438 : vector<8x256xf32>
    %cst_181 = arith.constant 5.000000e-01 : f32
    %440 = vector.broadcast %cst_181 : f32 to vector<8x256xf32>
    %441 = arith.mulf %440, %439 : vector<8x256xf32>
    %442 = vector.extract_strided_slice %441 {offsets = [0, 0], sizes = [8, 128], strides = [1, 1]} : vector<8x256xf32> to vector<8x128xf32>
    %443 = vector.extract_strided_slice %441 {offsets = [0, 128], sizes = [8, 128], strides = [1, 1]} : vector<8x256xf32> to vector<8x128xf32>
    %444 = vector.extract_strided_slice %427 {offsets = [0, 256], sizes = [8, 128], strides = [1, 1]} : vector<8x384xf32> to vector<8x128xf32>
    %445 = vector.extract_strided_slice %431 {offsets = [0, 256], sizes = [8, 128], strides = [1, 1]} : vector<8x384xf32> to vector<8x128xf32>
    %446 = arith.addf %445, %35 : vector<8x128xf32>
    %447 = arith.mulf %442, %446 : vector<8x128xf32>
    %448 = arith.addf %444, %447 : vector<8x128xf32>
    %449 = math.tanh %448 : vector<8x128xf32>
    %cst_182 = arith.constant 1.000000e+00 : f32
    %450 = vector.broadcast %cst_182 : f32 to vector<8x128xf32>
    %451 = arith.subf %450, %443 : vector<8x128xf32>
    %452 = arith.mulf %451, %449 : vector<8x128xf32>
    %453 = arith.mulf %443, %329 : vector<8x128xf32>
    %454 = arith.addf %452, %453 : vector<8x128xf32>
    %455 = arith.truncf %329 : vector<8x128xf32> to vector<8x128xbf16>
    %c6_183 = arith.constant 6 : index
    %c0_184 = arith.constant 0 : index
    %c0_185 = arith.constant 0 : index
    %456 = vector.load %arg11[%c6_183, %c0_184, %c0_185] : memref<7x128x384xbf16, #tpu.memory_space<vmem>>, vector<1x128x384xbf16>
    %457 = vector.shape_cast %456 : vector<1x128x384xbf16> to vector<128x384xbf16>
    %cst_186 = arith.constant dense<0.000000e+00> : vector<8x384xf32>
    %458 = tpu.matmul %455, %457, %cst_186 {dimension_numbers = #tpu.dot_dimension_numbers<[1], [0], [0], [1], [0, 0, 1, 1], [], []>} : vector<8x128xbf16>, vector<128x384xbf16>, vector<8x384xf32> -> vector<8x384xf32>
    %459 = arith.addf %458, %47 : vector<8x384xf32>
    %460 = arith.truncf %361 : vector<8x128xf32> to vector<8x128xbf16>
    %c3_187 = arith.constant 3 : index
    %c0_188 = arith.constant 0 : index
    %c0_189 = arith.constant 0 : index
    %461 = vector.load %arg11[%c3_187, %c0_188, %c0_189] : memref<7x128x384xbf16, #tpu.memory_space<vmem>>, vector<1x128x384xbf16>
    %462 = vector.shape_cast %461 : vector<1x128x384xbf16> to vector<128x384xbf16>
    %cst_190 = arith.constant dense<0.000000e+00> : vector<8x384xf32>
    %463 = tpu.matmul %460, %462, %cst_190 {dimension_numbers = #tpu.dot_dimension_numbers<[1], [0], [0], [1], [0, 0, 1, 1], [], []>} : vector<8x128xbf16>, vector<128x384xbf16>, vector<8x384xf32> -> vector<8x384xf32>
    %464 = vector.extract_strided_slice %459 {offsets = [0, 0], sizes = [8, 256], strides = [1, 1]} : vector<8x384xf32> to vector<8x256xf32>
    %465 = vector.extract_strided_slice %463 {offsets = [0, 0], sizes = [8, 256], strides = [1, 1]} : vector<8x384xf32> to vector<8x256xf32>
    %466 = arith.addf %464, %465 : vector<8x256xf32>
    %cst_191 = arith.constant 5.000000e-01 : f32
    %467 = vector.broadcast %cst_191 : f32 to vector<8x256xf32>
    %468 = arith.mulf %467, %466 : vector<8x256xf32>
    %469 = math.tanh %468 : vector<8x256xf32>
    %cst_192 = arith.constant 1.000000e+00 : f32
    %470 = vector.broadcast %cst_192 : f32 to vector<8x256xf32>
    %471 = arith.addf %469, %470 : vector<8x256xf32>
    %cst_193 = arith.constant 5.000000e-01 : f32
    %472 = vector.broadcast %cst_193 : f32 to vector<8x256xf32>
    %473 = arith.mulf %472, %471 : vector<8x256xf32>
    %474 = vector.extract_strided_slice %473 {offsets = [0, 0], sizes = [8, 128], strides = [1, 1]} : vector<8x256xf32> to vector<8x128xf32>
    %475 = vector.extract_strided_slice %473 {offsets = [0, 128], sizes = [8, 128], strides = [1, 1]} : vector<8x256xf32> to vector<8x128xf32>
    %476 = vector.extract_strided_slice %459 {offsets = [0, 256], sizes = [8, 128], strides = [1, 1]} : vector<8x384xf32> to vector<8x128xf32>
    %477 = vector.extract_strided_slice %463 {offsets = [0, 256], sizes = [8, 128], strides = [1, 1]} : vector<8x384xf32> to vector<8x128xf32>
    %478 = arith.addf %477, %38 : vector<8x128xf32>
    %479 = arith.mulf %474, %478 : vector<8x128xf32>
    %480 = arith.addf %476, %479 : vector<8x128xf32>
    %481 = math.tanh %480 : vector<8x128xf32>
    %cst_194 = arith.constant 1.000000e+00 : f32
    %482 = vector.broadcast %cst_194 : f32 to vector<8x128xf32>
    %483 = arith.subf %482, %475 : vector<8x128xf32>
    %484 = arith.mulf %483, %481 : vector<8x128xf32>
    %485 = arith.mulf %475, %361 : vector<8x128xf32>
    %486 = arith.addf %484, %485 : vector<8x128xf32>
    %c5_195 = arith.constant 5 : index
    %c0_196 = arith.constant 0 : index
    %c0_197 = arith.constant 0 : index
    %487 = vector.load %arg10[%c5_195, %c0_196, %c0_197] : memref<8x8x384xf32, #tpu.memory_space<vmem>>, vector<1x8x384xf32>
    %488 = vector.shape_cast %487 : vector<1x8x384xf32> to vector<8x384xf32>
    %489 = arith.truncf %390 : vector<8x128xf32> to vector<8x128xbf16>
    %c0_198 = arith.constant 0 : index
    %c0_199 = arith.constant 0 : index
    %c0_200 = arith.constant 0 : index
    %490 = vector.load %arg11[%c0_198, %c0_199, %c0_200] : memref<7x128x384xbf16, #tpu.memory_space<vmem>>, vector<1x128x384xbf16>
    %491 = vector.shape_cast %490 : vector<1x128x384xbf16> to vector<128x384xbf16>
    %cst_201 = arith.constant dense<0.000000e+00> : vector<8x384xf32>
    %492 = tpu.matmul %489, %491, %cst_201 {dimension_numbers = #tpu.dot_dimension_numbers<[1], [0], [0], [1], [0, 0, 1, 1], [], []>} : vector<8x128xbf16>, vector<128x384xbf16>, vector<8x384xf32> -> vector<8x384xf32>
    %493 = vector.extract_strided_slice %488 {offsets = [0, 0], sizes = [8, 256], strides = [1, 1]} : vector<8x384xf32> to vector<8x256xf32>
    %494 = vector.extract_strided_slice %492 {offsets = [0, 0], sizes = [8, 256], strides = [1, 1]} : vector<8x384xf32> to vector<8x256xf32>
    %495 = arith.addf %493, %494 : vector<8x256xf32>
    %cst_202 = arith.constant 5.000000e-01 : f32
    %496 = vector.broadcast %cst_202 : f32 to vector<8x256xf32>
    %497 = arith.mulf %496, %495 : vector<8x256xf32>
    %498 = math.tanh %497 : vector<8x256xf32>
    %cst_203 = arith.constant 1.000000e+00 : f32
    %499 = vector.broadcast %cst_203 : f32 to vector<8x256xf32>
    %500 = arith.addf %498, %499 : vector<8x256xf32>
    %cst_204 = arith.constant 5.000000e-01 : f32
    %501 = vector.broadcast %cst_204 : f32 to vector<8x256xf32>
    %502 = arith.mulf %501, %500 : vector<8x256xf32>
    %503 = vector.extract_strided_slice %502 {offsets = [0, 0], sizes = [8, 128], strides = [1, 1]} : vector<8x256xf32> to vector<8x128xf32>
    %504 = vector.extract_strided_slice %502 {offsets = [0, 128], sizes = [8, 128], strides = [1, 1]} : vector<8x256xf32> to vector<8x128xf32>
    %505 = vector.extract_strided_slice %488 {offsets = [0, 256], sizes = [8, 128], strides = [1, 1]} : vector<8x384xf32> to vector<8x128xf32>
    %506 = vector.extract_strided_slice %492 {offsets = [0, 256], sizes = [8, 128], strides = [1, 1]} : vector<8x384xf32> to vector<8x128xf32>
    %507 = arith.addf %506, %29 : vector<8x128xf32>
    %508 = arith.mulf %503, %507 : vector<8x128xf32>
    %509 = arith.addf %505, %508 : vector<8x128xf32>
    %510 = math.tanh %509 : vector<8x128xf32>
    %cst_205 = arith.constant 1.000000e+00 : f32
    %511 = vector.broadcast %cst_205 : f32 to vector<8x128xf32>
    %512 = arith.subf %511, %504 : vector<8x128xf32>
    %513 = arith.mulf %512, %510 : vector<8x128xf32>
    %514 = arith.mulf %504, %390 : vector<8x128xf32>
    %515 = arith.addf %513, %514 : vector<8x128xf32>
    %516 = arith.truncf %390 : vector<8x128xf32> to vector<8x128xbf16>
    %c4_206 = arith.constant 4 : index
    %c0_207 = arith.constant 0 : index
    %c0_208 = arith.constant 0 : index
    %517 = vector.load %arg11[%c4_206, %c0_207, %c0_208] : memref<7x128x384xbf16, #tpu.memory_space<vmem>>, vector<1x128x384xbf16>
    %518 = vector.shape_cast %517 : vector<1x128x384xbf16> to vector<128x384xbf16>
    %cst_209 = arith.constant dense<0.000000e+00> : vector<8x384xf32>
    %519 = tpu.matmul %516, %518, %cst_209 {dimension_numbers = #tpu.dot_dimension_numbers<[1], [0], [0], [1], [0, 0, 1, 1], [], []>} : vector<8x128xbf16>, vector<128x384xbf16>, vector<8x384xf32> -> vector<8x384xf32>
    %520 = arith.addf %519, %41 : vector<8x384xf32>
    %521 = arith.truncf %422 : vector<8x128xf32> to vector<8x128xbf16>
    %c1_210 = arith.constant 1 : index
    %c0_211 = arith.constant 0 : index
    %c0_212 = arith.constant 0 : index
    %522 = vector.load %arg11[%c1_210, %c0_211, %c0_212] : memref<7x128x384xbf16, #tpu.memory_space<vmem>>, vector<1x128x384xbf16>
    %523 = vector.shape_cast %522 : vector<1x128x384xbf16> to vector<128x384xbf16>
    %cst_213 = arith.constant dense<0.000000e+00> : vector<8x384xf32>
    %524 = tpu.matmul %521, %523, %cst_213 {dimension_numbers = #tpu.dot_dimension_numbers<[1], [0], [0], [1], [0, 0, 1, 1], [], []>} : vector<8x128xbf16>, vector<128x384xbf16>, vector<8x384xf32> -> vector<8x384xf32>
    %525 = vector.extract_strided_slice %520 {offsets = [0, 0], sizes = [8, 256], strides = [1, 1]} : vector<8x384xf32> to vector<8x256xf32>
    %526 = vector.extract_strided_slice %524 {offsets = [0, 0], sizes = [8, 256], strides = [1, 1]} : vector<8x384xf32> to vector<8x256xf32>
    %527 = arith.addf %525, %526 : vector<8x256xf32>
    %cst_214 = arith.constant 5.000000e-01 : f32
    %528 = vector.broadcast %cst_214 : f32 to vector<8x256xf32>
    %529 = arith.mulf %528, %527 : vector<8x256xf32>
    %530 = math.tanh %529 : vector<8x256xf32>
    %cst_215 = arith.constant 1.000000e+00 : f32
    %531 = vector.broadcast %cst_215 : f32 to vector<8x256xf32>
    %532 = arith.addf %530, %531 : vector<8x256xf32>
    %cst_216 = arith.constant 5.000000e-01 : f32
    %533 = vector.broadcast %cst_216 : f32 to vector<8x256xf32>
    %534 = arith.mulf %533, %532 : vector<8x256xf32>
    %535 = vector.extract_strided_slice %534 {offsets = [0, 0], sizes = [8, 128], strides = [1, 1]} : vector<8x256xf32> to vector<8x128xf32>
    %536 = vector.extract_strided_slice %534 {offsets = [0, 128], sizes = [8, 128], strides = [1, 1]} : vector<8x256xf32> to vector<8x128xf32>
    %537 = vector.extract_strided_slice %520 {offsets = [0, 256], sizes = [8, 128], strides = [1, 1]} : vector<8x384xf32> to vector<8x128xf32>
    %538 = vector.extract_strided_slice %524 {offsets = [0, 256], sizes = [8, 128], strides = [1, 1]} : vector<8x384xf32> to vector<8x128xf32>
    %539 = arith.addf %538, %32 : vector<8x128xf32>
    %540 = arith.mulf %535, %539 : vector<8x128xf32>
    %541 = arith.addf %537, %540 : vector<8x128xf32>
    %542 = math.tanh %541 : vector<8x128xf32>
    %cst_217 = arith.constant 1.000000e+00 : f32
    %543 = vector.broadcast %cst_217 : f32 to vector<8x128xf32>
    %544 = arith.subf %543, %536 : vector<8x128xf32>
    %545 = arith.mulf %544, %542 : vector<8x128xf32>
    %546 = arith.mulf %536, %422 : vector<8x128xf32>
    %547 = arith.addf %545, %546 : vector<8x128xf32>
    %548 = arith.truncf %422 : vector<8x128xf32> to vector<8x128xbf16>
    %c5_218 = arith.constant 5 : index
    %c0_219 = arith.constant 0 : index
    %c0_220 = arith.constant 0 : index
    %549 = vector.load %arg11[%c5_218, %c0_219, %c0_220] : memref<7x128x384xbf16, #tpu.memory_space<vmem>>, vector<1x128x384xbf16>
    %550 = vector.shape_cast %549 : vector<1x128x384xbf16> to vector<128x384xbf16>
    %cst_221 = arith.constant dense<0.000000e+00> : vector<8x384xf32>
    %551 = tpu.matmul %548, %550, %cst_221 {dimension_numbers = #tpu.dot_dimension_numbers<[1], [0], [0], [1], [0, 0, 1, 1], [], []>} : vector<8x128xbf16>, vector<128x384xbf16>, vector<8x384xf32> -> vector<8x384xf32>
    %552 = arith.addf %551, %44 : vector<8x384xf32>
    %553 = arith.truncf %454 : vector<8x128xf32> to vector<8x128xbf16>
    %c2_222 = arith.constant 2 : index
    %c0_223 = arith.constant 0 : index
    %c0_224 = arith.constant 0 : index
    %554 = vector.load %arg11[%c2_222, %c0_223, %c0_224] : memref<7x128x384xbf16, #tpu.memory_space<vmem>>, vector<1x128x384xbf16>
    %555 = vector.shape_cast %554 : vector<1x128x384xbf16> to vector<128x384xbf16>
    %cst_225 = arith.constant dense<0.000000e+00> : vector<8x384xf32>
    %556 = tpu.matmul %553, %555, %cst_225 {dimension_numbers = #tpu.dot_dimension_numbers<[1], [0], [0], [1], [0, 0, 1, 1], [], []>} : vector<8x128xbf16>, vector<128x384xbf16>, vector<8x384xf32> -> vector<8x384xf32>
    %557 = vector.extract_strided_slice %552 {offsets = [0, 0], sizes = [8, 256], strides = [1, 1]} : vector<8x384xf32> to vector<8x256xf32>
    %558 = vector.extract_strided_slice %556 {offsets = [0, 0], sizes = [8, 256], strides = [1, 1]} : vector<8x384xf32> to vector<8x256xf32>
    %559 = arith.addf %557, %558 : vector<8x256xf32>
    %cst_226 = arith.constant 5.000000e-01 : f32
    %560 = vector.broadcast %cst_226 : f32 to vector<8x256xf32>
    %561 = arith.mulf %560, %559 : vector<8x256xf32>
    %562 = math.tanh %561 : vector<8x256xf32>
    %cst_227 = arith.constant 1.000000e+00 : f32
    %563 = vector.broadcast %cst_227 : f32 to vector<8x256xf32>
    %564 = arith.addf %562, %563 : vector<8x256xf32>
    %cst_228 = arith.constant 5.000000e-01 : f32
    %565 = vector.broadcast %cst_228 : f32 to vector<8x256xf32>
    %566 = arith.mulf %565, %564 : vector<8x256xf32>
    %567 = vector.extract_strided_slice %566 {offsets = [0, 0], sizes = [8, 128], strides = [1, 1]} : vector<8x256xf32> to vector<8x128xf32>
    %568 = vector.extract_strided_slice %566 {offsets = [0, 128], sizes = [8, 128], strides = [1, 1]} : vector<8x256xf32> to vector<8x128xf32>
    %569 = vector.extract_strided_slice %552 {offsets = [0, 256], sizes = [8, 128], strides = [1, 1]} : vector<8x384xf32> to vector<8x128xf32>
    %570 = vector.extract_strided_slice %556 {offsets = [0, 256], sizes = [8, 128], strides = [1, 1]} : vector<8x384xf32> to vector<8x128xf32>
    %571 = arith.addf %570, %35 : vector<8x128xf32>
    %572 = arith.mulf %567, %571 : vector<8x128xf32>
    %573 = arith.addf %569, %572 : vector<8x128xf32>
    %574 = math.tanh %573 : vector<8x128xf32>
    %cst_229 = arith.constant 1.000000e+00 : f32
    %575 = vector.broadcast %cst_229 : f32 to vector<8x128xf32>
    %576 = arith.subf %575, %568 : vector<8x128xf32>
    %577 = arith.mulf %576, %574 : vector<8x128xf32>
    %578 = arith.mulf %568, %454 : vector<8x128xf32>
    %579 = arith.addf %577, %578 : vector<8x128xf32>
    %580 = arith.truncf %454 : vector<8x128xf32> to vector<8x128xbf16>
    %c6_230 = arith.constant 6 : index
    %c0_231 = arith.constant 0 : index
    %c0_232 = arith.constant 0 : index
    %581 = vector.load %arg11[%c6_230, %c0_231, %c0_232] : memref<7x128x384xbf16, #tpu.memory_space<vmem>>, vector<1x128x384xbf16>
    %582 = vector.shape_cast %581 : vector<1x128x384xbf16> to vector<128x384xbf16>
    %cst_233 = arith.constant dense<0.000000e+00> : vector<8x384xf32>
    %583 = tpu.matmul %580, %582, %cst_233 {dimension_numbers = #tpu.dot_dimension_numbers<[1], [0], [0], [1], [0, 0, 1, 1], [], []>} : vector<8x128xbf16>, vector<128x384xbf16>, vector<8x384xf32> -> vector<8x384xf32>
    %584 = arith.addf %583, %47 : vector<8x384xf32>
    %585 = arith.truncf %486 : vector<8x128xf32> to vector<8x128xbf16>
    %c3_234 = arith.constant 3 : index
    %c0_235 = arith.constant 0 : index
    %c0_236 = arith.constant 0 : index
    %586 = vector.load %arg11[%c3_234, %c0_235, %c0_236] : memref<7x128x384xbf16, #tpu.memory_space<vmem>>, vector<1x128x384xbf16>
    %587 = vector.shape_cast %586 : vector<1x128x384xbf16> to vector<128x384xbf16>
    %cst_237 = arith.constant dense<0.000000e+00> : vector<8x384xf32>
    %588 = tpu.matmul %585, %587, %cst_237 {dimension_numbers = #tpu.dot_dimension_numbers<[1], [0], [0], [1], [0, 0, 1, 1], [], []>} : vector<8x128xbf16>, vector<128x384xbf16>, vector<8x384xf32> -> vector<8x384xf32>
    %589 = vector.extract_strided_slice %584 {offsets = [0, 0], sizes = [8, 256], strides = [1, 1]} : vector<8x384xf32> to vector<8x256xf32>
    %590 = vector.extract_strided_slice %588 {offsets = [0, 0], sizes = [8, 256], strides = [1, 1]} : vector<8x384xf32> to vector<8x256xf32>
    %591 = arith.addf %589, %590 : vector<8x256xf32>
    %cst_238 = arith.constant 5.000000e-01 : f32
    %592 = vector.broadcast %cst_238 : f32 to vector<8x256xf32>
    %593 = arith.mulf %592, %591 : vector<8x256xf32>
    %594 = math.tanh %593 : vector<8x256xf32>
    %cst_239 = arith.constant 1.000000e+00 : f32
    %595 = vector.broadcast %cst_239 : f32 to vector<8x256xf32>
    %596 = arith.addf %594, %595 : vector<8x256xf32>
    %cst_240 = arith.constant 5.000000e-01 : f32
    %597 = vector.broadcast %cst_240 : f32 to vector<8x256xf32>
    %598 = arith.mulf %597, %596 : vector<8x256xf32>
    %599 = vector.extract_strided_slice %598 {offsets = [0, 0], sizes = [8, 128], strides = [1, 1]} : vector<8x256xf32> to vector<8x128xf32>
    %600 = vector.extract_strided_slice %598 {offsets = [0, 128], sizes = [8, 128], strides = [1, 1]} : vector<8x256xf32> to vector<8x128xf32>
    %601 = vector.extract_strided_slice %584 {offsets = [0, 256], sizes = [8, 128], strides = [1, 1]} : vector<8x384xf32> to vector<8x128xf32>
    %602 = vector.extract_strided_slice %588 {offsets = [0, 256], sizes = [8, 128], strides = [1, 1]} : vector<8x384xf32> to vector<8x128xf32>
    %603 = arith.addf %602, %38 : vector<8x128xf32>
    %604 = arith.mulf %599, %603 : vector<8x128xf32>
    %605 = arith.addf %601, %604 : vector<8x128xf32>
    %606 = math.tanh %605 : vector<8x128xf32>
    %cst_241 = arith.constant 1.000000e+00 : f32
    %607 = vector.broadcast %cst_241 : f32 to vector<8x128xf32>
    %608 = arith.subf %607, %600 : vector<8x128xf32>
    %609 = arith.mulf %608, %606 : vector<8x128xf32>
    %610 = arith.mulf %600, %486 : vector<8x128xf32>
    %611 = arith.addf %609, %610 : vector<8x128xf32>
    %c6_242 = arith.constant 6 : index
    %c0_243 = arith.constant 0 : index
    %c0_244 = arith.constant 0 : index
    %612 = vector.load %arg10[%c6_242, %c0_243, %c0_244] : memref<8x8x384xf32, #tpu.memory_space<vmem>>, vector<1x8x384xf32>
    %613 = vector.shape_cast %612 : vector<1x8x384xf32> to vector<8x384xf32>
    %614 = arith.truncf %515 : vector<8x128xf32> to vector<8x128xbf16>
    %c0_245 = arith.constant 0 : index
    %c0_246 = arith.constant 0 : index
    %c0_247 = arith.constant 0 : index
    %615 = vector.load %arg11[%c0_245, %c0_246, %c0_247] : memref<7x128x384xbf16, #tpu.memory_space<vmem>>, vector<1x128x384xbf16>
    %616 = vector.shape_cast %615 : vector<1x128x384xbf16> to vector<128x384xbf16>
    %cst_248 = arith.constant dense<0.000000e+00> : vector<8x384xf32>
    %617 = tpu.matmul %614, %616, %cst_248 {dimension_numbers = #tpu.dot_dimension_numbers<[1], [0], [0], [1], [0, 0, 1, 1], [], []>} : vector<8x128xbf16>, vector<128x384xbf16>, vector<8x384xf32> -> vector<8x384xf32>
    %618 = vector.extract_strided_slice %613 {offsets = [0, 0], sizes = [8, 256], strides = [1, 1]} : vector<8x384xf32> to vector<8x256xf32>
    %619 = vector.extract_strided_slice %617 {offsets = [0, 0], sizes = [8, 256], strides = [1, 1]} : vector<8x384xf32> to vector<8x256xf32>
    %620 = arith.addf %618, %619 : vector<8x256xf32>
    %cst_249 = arith.constant 5.000000e-01 : f32
    %621 = vector.broadcast %cst_249 : f32 to vector<8x256xf32>
    %622 = arith.mulf %621, %620 : vector<8x256xf32>
    %623 = math.tanh %622 : vector<8x256xf32>
    %cst_250 = arith.constant 1.000000e+00 : f32
    %624 = vector.broadcast %cst_250 : f32 to vector<8x256xf32>
    %625 = arith.addf %623, %624 : vector<8x256xf32>
    %cst_251 = arith.constant 5.000000e-01 : f32
    %626 = vector.broadcast %cst_251 : f32 to vector<8x256xf32>
    %627 = arith.mulf %626, %625 : vector<8x256xf32>
    %628 = vector.extract_strided_slice %627 {offsets = [0, 0], sizes = [8, 128], strides = [1, 1]} : vector<8x256xf32> to vector<8x128xf32>
    %629 = vector.extract_strided_slice %627 {offsets = [0, 128], sizes = [8, 128], strides = [1, 1]} : vector<8x256xf32> to vector<8x128xf32>
    %630 = vector.extract_strided_slice %613 {offsets = [0, 256], sizes = [8, 128], strides = [1, 1]} : vector<8x384xf32> to vector<8x128xf32>
    %631 = vector.extract_strided_slice %617 {offsets = [0, 256], sizes = [8, 128], strides = [1, 1]} : vector<8x384xf32> to vector<8x128xf32>
    %632 = arith.addf %631, %29 : vector<8x128xf32>
    %633 = arith.mulf %628, %632 : vector<8x128xf32>
    %634 = arith.addf %630, %633 : vector<8x128xf32>
    %635 = math.tanh %634 : vector<8x128xf32>
    %cst_252 = arith.constant 1.000000e+00 : f32
    %636 = vector.broadcast %cst_252 : f32 to vector<8x128xf32>
    %637 = arith.subf %636, %629 : vector<8x128xf32>
    %638 = arith.mulf %637, %635 : vector<8x128xf32>
    %639 = arith.mulf %629, %515 : vector<8x128xf32>
    %640 = arith.addf %638, %639 : vector<8x128xf32>
    %641 = arith.truncf %515 : vector<8x128xf32> to vector<8x128xbf16>
    %c4_253 = arith.constant 4 : index
    %c0_254 = arith.constant 0 : index
    %c0_255 = arith.constant 0 : index
    %642 = vector.load %arg11[%c4_253, %c0_254, %c0_255] : memref<7x128x384xbf16, #tpu.memory_space<vmem>>, vector<1x128x384xbf16>
    %643 = vector.shape_cast %642 : vector<1x128x384xbf16> to vector<128x384xbf16>
    %cst_256 = arith.constant dense<0.000000e+00> : vector<8x384xf32>
    %644 = tpu.matmul %641, %643, %cst_256 {dimension_numbers = #tpu.dot_dimension_numbers<[1], [0], [0], [1], [0, 0, 1, 1], [], []>} : vector<8x128xbf16>, vector<128x384xbf16>, vector<8x384xf32> -> vector<8x384xf32>
    %645 = arith.addf %644, %41 : vector<8x384xf32>
    %646 = arith.truncf %547 : vector<8x128xf32> to vector<8x128xbf16>
    %c1_257 = arith.constant 1 : index
    %c0_258 = arith.constant 0 : index
    %c0_259 = arith.constant 0 : index
    %647 = vector.load %arg11[%c1_257, %c0_258, %c0_259] : memref<7x128x384xbf16, #tpu.memory_space<vmem>>, vector<1x128x384xbf16>
    %648 = vector.shape_cast %647 : vector<1x128x384xbf16> to vector<128x384xbf16>
    %cst_260 = arith.constant dense<0.000000e+00> : vector<8x384xf32>
    %649 = tpu.matmul %646, %648, %cst_260 {dimension_numbers = #tpu.dot_dimension_numbers<[1], [0], [0], [1], [0, 0, 1, 1], [], []>} : vector<8x128xbf16>, vector<128x384xbf16>, vector<8x384xf32> -> vector<8x384xf32>
    %650 = vector.extract_strided_slice %645 {offsets = [0, 0], sizes = [8, 256], strides = [1, 1]} : vector<8x384xf32> to vector<8x256xf32>
    %651 = vector.extract_strided_slice %649 {offsets = [0, 0], sizes = [8, 256], strides = [1, 1]} : vector<8x384xf32> to vector<8x256xf32>
    %652 = arith.addf %650, %651 : vector<8x256xf32>
    %cst_261 = arith.constant 5.000000e-01 : f32
    %653 = vector.broadcast %cst_261 : f32 to vector<8x256xf32>
    %654 = arith.mulf %653, %652 : vector<8x256xf32>
    %655 = math.tanh %654 : vector<8x256xf32>
    %cst_262 = arith.constant 1.000000e+00 : f32
    %656 = vector.broadcast %cst_262 : f32 to vector<8x256xf32>
    %657 = arith.addf %655, %656 : vector<8x256xf32>
    %cst_263 = arith.constant 5.000000e-01 : f32
    %658 = vector.broadcast %cst_263 : f32 to vector<8x256xf32>
    %659 = arith.mulf %658, %657 : vector<8x256xf32>
    %660 = vector.extract_strided_slice %659 {offsets = [0, 0], sizes = [8, 128], strides = [1, 1]} : vector<8x256xf32> to vector<8x128xf32>
    %661 = vector.extract_strided_slice %659 {offsets = [0, 128], sizes = [8, 128], strides = [1, 1]} : vector<8x256xf32> to vector<8x128xf32>
    %662 = vector.extract_strided_slice %645 {offsets = [0, 256], sizes = [8, 128], strides = [1, 1]} : vector<8x384xf32> to vector<8x128xf32>
    %663 = vector.extract_strided_slice %649 {offsets = [0, 256], sizes = [8, 128], strides = [1, 1]} : vector<8x384xf32> to vector<8x128xf32>
    %664 = arith.addf %663, %32 : vector<8x128xf32>
    %665 = arith.mulf %660, %664 : vector<8x128xf32>
    %666 = arith.addf %662, %665 : vector<8x128xf32>
    %667 = math.tanh %666 : vector<8x128xf32>
    %cst_264 = arith.constant 1.000000e+00 : f32
    %668 = vector.broadcast %cst_264 : f32 to vector<8x128xf32>
    %669 = arith.subf %668, %661 : vector<8x128xf32>
    %670 = arith.mulf %669, %667 : vector<8x128xf32>
    %671 = arith.mulf %661, %547 : vector<8x128xf32>
    %672 = arith.addf %670, %671 : vector<8x128xf32>
    %673 = arith.truncf %547 : vector<8x128xf32> to vector<8x128xbf16>
    %c5_265 = arith.constant 5 : index
    %c0_266 = arith.constant 0 : index
    %c0_267 = arith.constant 0 : index
    %674 = vector.load %arg11[%c5_265, %c0_266, %c0_267] : memref<7x128x384xbf16, #tpu.memory_space<vmem>>, vector<1x128x384xbf16>
    %675 = vector.shape_cast %674 : vector<1x128x384xbf16> to vector<128x384xbf16>
    %cst_268 = arith.constant dense<0.000000e+00> : vector<8x384xf32>
    %676 = tpu.matmul %673, %675, %cst_268 {dimension_numbers = #tpu.dot_dimension_numbers<[1], [0], [0], [1], [0, 0, 1, 1], [], []>} : vector<8x128xbf16>, vector<128x384xbf16>, vector<8x384xf32> -> vector<8x384xf32>
    %677 = arith.addf %676, %44 : vector<8x384xf32>
    %678 = arith.truncf %579 : vector<8x128xf32> to vector<8x128xbf16>
    %c2_269 = arith.constant 2 : index
    %c0_270 = arith.constant 0 : index
    %c0_271 = arith.constant 0 : index
    %679 = vector.load %arg11[%c2_269, %c0_270, %c0_271] : memref<7x128x384xbf16, #tpu.memory_space<vmem>>, vector<1x128x384xbf16>
    %680 = vector.shape_cast %679 : vector<1x128x384xbf16> to vector<128x384xbf16>
    %cst_272 = arith.constant dense<0.000000e+00> : vector<8x384xf32>
    %681 = tpu.matmul %678, %680, %cst_272 {dimension_numbers = #tpu.dot_dimension_numbers<[1], [0], [0], [1], [0, 0, 1, 1], [], []>} : vector<8x128xbf16>, vector<128x384xbf16>, vector<8x384xf32> -> vector<8x384xf32>
    %682 = vector.extract_strided_slice %677 {offsets = [0, 0], sizes = [8, 256], strides = [1, 1]} : vector<8x384xf32> to vector<8x256xf32>
    %683 = vector.extract_strided_slice %681 {offsets = [0, 0], sizes = [8, 256], strides = [1, 1]} : vector<8x384xf32> to vector<8x256xf32>
    %684 = arith.addf %682, %683 : vector<8x256xf32>
    %cst_273 = arith.constant 5.000000e-01 : f32
    %685 = vector.broadcast %cst_273 : f32 to vector<8x256xf32>
    %686 = arith.mulf %685, %684 : vector<8x256xf32>
    %687 = math.tanh %686 : vector<8x256xf32>
    %cst_274 = arith.constant 1.000000e+00 : f32
    %688 = vector.broadcast %cst_274 : f32 to vector<8x256xf32>
    %689 = arith.addf %687, %688 : vector<8x256xf32>
    %cst_275 = arith.constant 5.000000e-01 : f32
    %690 = vector.broadcast %cst_275 : f32 to vector<8x256xf32>
    %691 = arith.mulf %690, %689 : vector<8x256xf32>
    %692 = vector.extract_strided_slice %691 {offsets = [0, 0], sizes = [8, 128], strides = [1, 1]} : vector<8x256xf32> to vector<8x128xf32>
    %693 = vector.extract_strided_slice %691 {offsets = [0, 128], sizes = [8, 128], strides = [1, 1]} : vector<8x256xf32> to vector<8x128xf32>
    %694 = vector.extract_strided_slice %677 {offsets = [0, 256], sizes = [8, 128], strides = [1, 1]} : vector<8x384xf32> to vector<8x128xf32>
    %695 = vector.extract_strided_slice %681 {offsets = [0, 256], sizes = [8, 128], strides = [1, 1]} : vector<8x384xf32> to vector<8x128xf32>
    %696 = arith.addf %695, %35 : vector<8x128xf32>
    %697 = arith.mulf %692, %696 : vector<8x128xf32>
    %698 = arith.addf %694, %697 : vector<8x128xf32>
    %699 = math.tanh %698 : vector<8x128xf32>
    %cst_276 = arith.constant 1.000000e+00 : f32
    %700 = vector.broadcast %cst_276 : f32 to vector<8x128xf32>
    %701 = arith.subf %700, %693 : vector<8x128xf32>
    %702 = arith.mulf %701, %699 : vector<8x128xf32>
    %703 = arith.mulf %693, %579 : vector<8x128xf32>
    %704 = arith.addf %702, %703 : vector<8x128xf32>
    %705 = arith.truncf %579 : vector<8x128xf32> to vector<8x128xbf16>
    %c6_277 = arith.constant 6 : index
    %c0_278 = arith.constant 0 : index
    %c0_279 = arith.constant 0 : index
    %706 = vector.load %arg11[%c6_277, %c0_278, %c0_279] : memref<7x128x384xbf16, #tpu.memory_space<vmem>>, vector<1x128x384xbf16>
    %707 = vector.shape_cast %706 : vector<1x128x384xbf16> to vector<128x384xbf16>
    %cst_280 = arith.constant dense<0.000000e+00> : vector<8x384xf32>
    %708 = tpu.matmul %705, %707, %cst_280 {dimension_numbers = #tpu.dot_dimension_numbers<[1], [0], [0], [1], [0, 0, 1, 1], [], []>} : vector<8x128xbf16>, vector<128x384xbf16>, vector<8x384xf32> -> vector<8x384xf32>
    %709 = arith.addf %708, %47 : vector<8x384xf32>
    %710 = arith.truncf %611 : vector<8x128xf32> to vector<8x128xbf16>
    %c3_281 = arith.constant 3 : index
    %c0_282 = arith.constant 0 : index
    %c0_283 = arith.constant 0 : index
    %711 = vector.load %arg11[%c3_281, %c0_282, %c0_283] : memref<7x128x384xbf16, #tpu.memory_space<vmem>>, vector<1x128x384xbf16>
    %712 = vector.shape_cast %711 : vector<1x128x384xbf16> to vector<128x384xbf16>
    %cst_284 = arith.constant dense<0.000000e+00> : vector<8x384xf32>
    %713 = tpu.matmul %710, %712, %cst_284 {dimension_numbers = #tpu.dot_dimension_numbers<[1], [0], [0], [1], [0, 0, 1, 1], [], []>} : vector<8x128xbf16>, vector<128x384xbf16>, vector<8x384xf32> -> vector<8x384xf32>
    %714 = vector.extract_strided_slice %709 {offsets = [0, 0], sizes = [8, 256], strides = [1, 1]} : vector<8x384xf32> to vector<8x256xf32>
    %715 = vector.extract_strided_slice %713 {offsets = [0, 0], sizes = [8, 256], strides = [1, 1]} : vector<8x384xf32> to vector<8x256xf32>
    %716 = arith.addf %714, %715 : vector<8x256xf32>
    %cst_285 = arith.constant 5.000000e-01 : f32
    %717 = vector.broadcast %cst_285 : f32 to vector<8x256xf32>
    %718 = arith.mulf %717, %716 : vector<8x256xf32>
    %719 = math.tanh %718 : vector<8x256xf32>
    %cst_286 = arith.constant 1.000000e+00 : f32
    %720 = vector.broadcast %cst_286 : f32 to vector<8x256xf32>
    %721 = arith.addf %719, %720 : vector<8x256xf32>
    %cst_287 = arith.constant 5.000000e-01 : f32
    %722 = vector.broadcast %cst_287 : f32 to vector<8x256xf32>
    %723 = arith.mulf %722, %721 : vector<8x256xf32>
    %724 = vector.extract_strided_slice %723 {offsets = [0, 0], sizes = [8, 128], strides = [1, 1]} : vector<8x256xf32> to vector<8x128xf32>
    %725 = vector.extract_strided_slice %723 {offsets = [0, 128], sizes = [8, 128], strides = [1, 1]} : vector<8x256xf32> to vector<8x128xf32>
    %726 = vector.extract_strided_slice %709 {offsets = [0, 256], sizes = [8, 128], strides = [1, 1]} : vector<8x384xf32> to vector<8x128xf32>
    %727 = vector.extract_strided_slice %713 {offsets = [0, 256], sizes = [8, 128], strides = [1, 1]} : vector<8x384xf32> to vector<8x128xf32>
    %728 = arith.addf %727, %38 : vector<8x128xf32>
    %729 = arith.mulf %724, %728 : vector<8x128xf32>
    %730 = arith.addf %726, %729 : vector<8x128xf32>
    %731 = math.tanh %730 : vector<8x128xf32>
    %cst_288 = arith.constant 1.000000e+00 : f32
    %732 = vector.broadcast %cst_288 : f32 to vector<8x128xf32>
    %733 = arith.subf %732, %725 : vector<8x128xf32>
    %734 = arith.mulf %733, %731 : vector<8x128xf32>
    %735 = arith.mulf %725, %611 : vector<8x128xf32>
    %736 = arith.addf %734, %735 : vector<8x128xf32>
    %c7 = arith.constant 7 : index
    %c0_289 = arith.constant 0 : index
    %c0_290 = arith.constant 0 : index
    %737 = vector.load %arg10[%c7, %c0_289, %c0_290] : memref<8x8x384xf32, #tpu.memory_space<vmem>>, vector<1x8x384xf32>
    %738 = vector.shape_cast %737 : vector<1x8x384xf32> to vector<8x384xf32>
    %739 = arith.truncf %640 : vector<8x128xf32> to vector<8x128xbf16>
    %c0_291 = arith.constant 0 : index
    %c0_292 = arith.constant 0 : index
    %c0_293 = arith.constant 0 : index
    %740 = vector.load %arg11[%c0_291, %c0_292, %c0_293] : memref<7x128x384xbf16, #tpu.memory_space<vmem>>, vector<1x128x384xbf16>
    %741 = vector.shape_cast %740 : vector<1x128x384xbf16> to vector<128x384xbf16>
    %cst_294 = arith.constant dense<0.000000e+00> : vector<8x384xf32>
    %742 = tpu.matmul %739, %741, %cst_294 {dimension_numbers = #tpu.dot_dimension_numbers<[1], [0], [0], [1], [0, 0, 1, 1], [], []>} : vector<8x128xbf16>, vector<128x384xbf16>, vector<8x384xf32> -> vector<8x384xf32>
    %743 = vector.extract_strided_slice %738 {offsets = [0, 0], sizes = [8, 256], strides = [1, 1]} : vector<8x384xf32> to vector<8x256xf32>
    %744 = vector.extract_strided_slice %742 {offsets = [0, 0], sizes = [8, 256], strides = [1, 1]} : vector<8x384xf32> to vector<8x256xf32>
    %745 = arith.addf %743, %744 : vector<8x256xf32>
    %cst_295 = arith.constant 5.000000e-01 : f32
    %746 = vector.broadcast %cst_295 : f32 to vector<8x256xf32>
    %747 = arith.mulf %746, %745 : vector<8x256xf32>
    %748 = math.tanh %747 : vector<8x256xf32>
    %cst_296 = arith.constant 1.000000e+00 : f32
    %749 = vector.broadcast %cst_296 : f32 to vector<8x256xf32>
    %750 = arith.addf %748, %749 : vector<8x256xf32>
    %cst_297 = arith.constant 5.000000e-01 : f32
    %751 = vector.broadcast %cst_297 : f32 to vector<8x256xf32>
    %752 = arith.mulf %751, %750 : vector<8x256xf32>
    %753 = vector.extract_strided_slice %752 {offsets = [0, 0], sizes = [8, 128], strides = [1, 1]} : vector<8x256xf32> to vector<8x128xf32>
    %754 = vector.extract_strided_slice %752 {offsets = [0, 128], sizes = [8, 128], strides = [1, 1]} : vector<8x256xf32> to vector<8x128xf32>
    %755 = vector.extract_strided_slice %738 {offsets = [0, 256], sizes = [8, 128], strides = [1, 1]} : vector<8x384xf32> to vector<8x128xf32>
    %756 = vector.extract_strided_slice %742 {offsets = [0, 256], sizes = [8, 128], strides = [1, 1]} : vector<8x384xf32> to vector<8x128xf32>
    %757 = arith.addf %756, %29 : vector<8x128xf32>
    %758 = arith.mulf %753, %757 : vector<8x128xf32>
    %759 = arith.addf %755, %758 : vector<8x128xf32>
    %760 = math.tanh %759 : vector<8x128xf32>
    %cst_298 = arith.constant 1.000000e+00 : f32
    %761 = vector.broadcast %cst_298 : f32 to vector<8x128xf32>
    %762 = arith.subf %761, %754 : vector<8x128xf32>
    %763 = arith.mulf %762, %760 : vector<8x128xf32>
    %764 = arith.mulf %754, %640 : vector<8x128xf32>
    %765 = arith.addf %763, %764 : vector<8x128xf32>
    %766 = arith.truncf %640 : vector<8x128xf32> to vector<8x128xbf16>
    %c4_299 = arith.constant 4 : index
    %c0_300 = arith.constant 0 : index
    %c0_301 = arith.constant 0 : index
    %767 = vector.load %arg11[%c4_299, %c0_300, %c0_301] : memref<7x128x384xbf16, #tpu.memory_space<vmem>>, vector<1x128x384xbf16>
    %768 = vector.shape_cast %767 : vector<1x128x384xbf16> to vector<128x384xbf16>
    %cst_302 = arith.constant dense<0.000000e+00> : vector<8x384xf32>
    %769 = tpu.matmul %766, %768, %cst_302 {dimension_numbers = #tpu.dot_dimension_numbers<[1], [0], [0], [1], [0, 0, 1, 1], [], []>} : vector<8x128xbf16>, vector<128x384xbf16>, vector<8x384xf32> -> vector<8x384xf32>
    %770 = arith.addf %769, %41 : vector<8x384xf32>
    %771 = arith.truncf %672 : vector<8x128xf32> to vector<8x128xbf16>
    %c1_303 = arith.constant 1 : index
    %c0_304 = arith.constant 0 : index
    %c0_305 = arith.constant 0 : index
    %772 = vector.load %arg11[%c1_303, %c0_304, %c0_305] : memref<7x128x384xbf16, #tpu.memory_space<vmem>>, vector<1x128x384xbf16>
    %773 = vector.shape_cast %772 : vector<1x128x384xbf16> to vector<128x384xbf16>
    %cst_306 = arith.constant dense<0.000000e+00> : vector<8x384xf32>
    %774 = tpu.matmul %771, %773, %cst_306 {dimension_numbers = #tpu.dot_dimension_numbers<[1], [0], [0], [1], [0, 0, 1, 1], [], []>} : vector<8x128xbf16>, vector<128x384xbf16>, vector<8x384xf32> -> vector<8x384xf32>
    %775 = vector.extract_strided_slice %770 {offsets = [0, 0], sizes = [8, 256], strides = [1, 1]} : vector<8x384xf32> to vector<8x256xf32>
    %776 = vector.extract_strided_slice %774 {offsets = [0, 0], sizes = [8, 256], strides = [1, 1]} : vector<8x384xf32> to vector<8x256xf32>
    %777 = arith.addf %775, %776 : vector<8x256xf32>
    %cst_307 = arith.constant 5.000000e-01 : f32
    %778 = vector.broadcast %cst_307 : f32 to vector<8x256xf32>
    %779 = arith.mulf %778, %777 : vector<8x256xf32>
    %780 = math.tanh %779 : vector<8x256xf32>
    %cst_308 = arith.constant 1.000000e+00 : f32
    %781 = vector.broadcast %cst_308 : f32 to vector<8x256xf32>
    %782 = arith.addf %780, %781 : vector<8x256xf32>
    %cst_309 = arith.constant 5.000000e-01 : f32
    %783 = vector.broadcast %cst_309 : f32 to vector<8x256xf32>
    %784 = arith.mulf %783, %782 : vector<8x256xf32>
    %785 = vector.extract_strided_slice %784 {offsets = [0, 0], sizes = [8, 128], strides = [1, 1]} : vector<8x256xf32> to vector<8x128xf32>
    %786 = vector.extract_strided_slice %784 {offsets = [0, 128], sizes = [8, 128], strides = [1, 1]} : vector<8x256xf32> to vector<8x128xf32>
    %787 = vector.extract_strided_slice %770 {offsets = [0, 256], sizes = [8, 128], strides = [1, 1]} : vector<8x384xf32> to vector<8x128xf32>
    %788 = vector.extract_strided_slice %774 {offsets = [0, 256], sizes = [8, 128], strides = [1, 1]} : vector<8x384xf32> to vector<8x128xf32>
    %789 = arith.addf %788, %32 : vector<8x128xf32>
    %790 = arith.mulf %785, %789 : vector<8x128xf32>
    %791 = arith.addf %787, %790 : vector<8x128xf32>
    %792 = math.tanh %791 : vector<8x128xf32>
    %cst_310 = arith.constant 1.000000e+00 : f32
    %793 = vector.broadcast %cst_310 : f32 to vector<8x128xf32>
    %794 = arith.subf %793, %786 : vector<8x128xf32>
    %795 = arith.mulf %794, %792 : vector<8x128xf32>
    %796 = arith.mulf %786, %672 : vector<8x128xf32>
    %797 = arith.addf %795, %796 : vector<8x128xf32>
    %798 = arith.truncf %672 : vector<8x128xf32> to vector<8x128xbf16>
    %c5_311 = arith.constant 5 : index
    %c0_312 = arith.constant 0 : index
    %c0_313 = arith.constant 0 : index
    %799 = vector.load %arg11[%c5_311, %c0_312, %c0_313] : memref<7x128x384xbf16, #tpu.memory_space<vmem>>, vector<1x128x384xbf16>
    %800 = vector.shape_cast %799 : vector<1x128x384xbf16> to vector<128x384xbf16>
    %cst_314 = arith.constant dense<0.000000e+00> : vector<8x384xf32>
    %801 = tpu.matmul %798, %800, %cst_314 {dimension_numbers = #tpu.dot_dimension_numbers<[1], [0], [0], [1], [0, 0, 1, 1], [], []>} : vector<8x128xbf16>, vector<128x384xbf16>, vector<8x384xf32> -> vector<8x384xf32>
    %802 = arith.addf %801, %44 : vector<8x384xf32>
    %803 = arith.truncf %704 : vector<8x128xf32> to vector<8x128xbf16>
    %c2_315 = arith.constant 2 : index
    %c0_316 = arith.constant 0 : index
    %c0_317 = arith.constant 0 : index
    %804 = vector.load %arg11[%c2_315, %c0_316, %c0_317] : memref<7x128x384xbf16, #tpu.memory_space<vmem>>, vector<1x128x384xbf16>
    %805 = vector.shape_cast %804 : vector<1x128x384xbf16> to vector<128x384xbf16>
    %cst_318 = arith.constant dense<0.000000e+00> : vector<8x384xf32>
    %806 = tpu.matmul %803, %805, %cst_318 {dimension_numbers = #tpu.dot_dimension_numbers<[1], [0], [0], [1], [0, 0, 1, 1], [], []>} : vector<8x128xbf16>, vector<128x384xbf16>, vector<8x384xf32> -> vector<8x384xf32>
    %807 = vector.extract_strided_slice %802 {offsets = [0, 0], sizes = [8, 256], strides = [1, 1]} : vector<8x384xf32> to vector<8x256xf32>
    %808 = vector.extract_strided_slice %806 {offsets = [0, 0], sizes = [8, 256], strides = [1, 1]} : vector<8x384xf32> to vector<8x256xf32>
    %809 = arith.addf %807, %808 : vector<8x256xf32>
    %cst_319 = arith.constant 5.000000e-01 : f32
    %810 = vector.broadcast %cst_319 : f32 to vector<8x256xf32>
    %811 = arith.mulf %810, %809 : vector<8x256xf32>
    %812 = math.tanh %811 : vector<8x256xf32>
    %cst_320 = arith.constant 1.000000e+00 : f32
    %813 = vector.broadcast %cst_320 : f32 to vector<8x256xf32>
    %814 = arith.addf %812, %813 : vector<8x256xf32>
    %cst_321 = arith.constant 5.000000e-01 : f32
    %815 = vector.broadcast %cst_321 : f32 to vector<8x256xf32>
    %816 = arith.mulf %815, %814 : vector<8x256xf32>
    %817 = vector.extract_strided_slice %816 {offsets = [0, 0], sizes = [8, 128], strides = [1, 1]} : vector<8x256xf32> to vector<8x128xf32>
    %818 = vector.extract_strided_slice %816 {offsets = [0, 128], sizes = [8, 128], strides = [1, 1]} : vector<8x256xf32> to vector<8x128xf32>
    %819 = vector.extract_strided_slice %802 {offsets = [0, 256], sizes = [8, 128], strides = [1, 1]} : vector<8x384xf32> to vector<8x128xf32>
    %820 = vector.extract_strided_slice %806 {offsets = [0, 256], sizes = [8, 128], strides = [1, 1]} : vector<8x384xf32> to vector<8x128xf32>
    %821 = arith.addf %820, %35 : vector<8x128xf32>
    %822 = arith.mulf %817, %821 : vector<8x128xf32>
    %823 = arith.addf %819, %822 : vector<8x128xf32>
    %824 = math.tanh %823 : vector<8x128xf32>
    %cst_322 = arith.constant 1.000000e+00 : f32
    %825 = vector.broadcast %cst_322 : f32 to vector<8x128xf32>
    %826 = arith.subf %825, %818 : vector<8x128xf32>
    %827 = arith.mulf %826, %824 : vector<8x128xf32>
    %828 = arith.mulf %818, %704 : vector<8x128xf32>
    %829 = arith.addf %827, %828 : vector<8x128xf32>
    %830 = arith.truncf %704 : vector<8x128xf32> to vector<8x128xbf16>
    %c6_323 = arith.constant 6 : index
    %c0_324 = arith.constant 0 : index
    %c0_325 = arith.constant 0 : index
    %831 = vector.load %arg11[%c6_323, %c0_324, %c0_325] : memref<7x128x384xbf16, #tpu.memory_space<vmem>>, vector<1x128x384xbf16>
    %832 = vector.shape_cast %831 : vector<1x128x384xbf16> to vector<128x384xbf16>
    %cst_326 = arith.constant dense<0.000000e+00> : vector<8x384xf32>
    %833 = tpu.matmul %830, %832, %cst_326 {dimension_numbers = #tpu.dot_dimension_numbers<[1], [0], [0], [1], [0, 0, 1, 1], [], []>} : vector<8x128xbf16>, vector<128x384xbf16>, vector<8x384xf32> -> vector<8x384xf32>
    %834 = arith.addf %833, %47 : vector<8x384xf32>
    %835 = arith.truncf %736 : vector<8x128xf32> to vector<8x128xbf16>
    %c3_327 = arith.constant 3 : index
    %c0_328 = arith.constant 0 : index
    %c0_329 = arith.constant 0 : index
    %836 = vector.load %arg11[%c3_327, %c0_328, %c0_329] : memref<7x128x384xbf16, #tpu.memory_space<vmem>>, vector<1x128x384xbf16>
    %837 = vector.shape_cast %836 : vector<1x128x384xbf16> to vector<128x384xbf16>
    %cst_330 = arith.constant dense<0.000000e+00> : vector<8x384xf32>
    %838 = tpu.matmul %835, %837, %cst_330 {dimension_numbers = #tpu.dot_dimension_numbers<[1], [0], [0], [1], [0, 0, 1, 1], [], []>} : vector<8x128xbf16>, vector<128x384xbf16>, vector<8x384xf32> -> vector<8x384xf32>
    %839 = vector.extract_strided_slice %834 {offsets = [0, 0], sizes = [8, 256], strides = [1, 1]} : vector<8x384xf32> to vector<8x256xf32>
    %840 = vector.extract_strided_slice %838 {offsets = [0, 0], sizes = [8, 256], strides = [1, 1]} : vector<8x384xf32> to vector<8x256xf32>
    %841 = arith.addf %839, %840 : vector<8x256xf32>
    %cst_331 = arith.constant 5.000000e-01 : f32
    %842 = vector.broadcast %cst_331 : f32 to vector<8x256xf32>
    %843 = arith.mulf %842, %841 : vector<8x256xf32>
    %844 = math.tanh %843 : vector<8x256xf32>
    %cst_332 = arith.constant 1.000000e+00 : f32
    %845 = vector.broadcast %cst_332 : f32 to vector<8x256xf32>
    %846 = arith.addf %844, %845 : vector<8x256xf32>
    %cst_333 = arith.constant 5.000000e-01 : f32
    %847 = vector.broadcast %cst_333 : f32 to vector<8x256xf32>
    %848 = arith.mulf %847, %846 : vector<8x256xf32>
    %849 = vector.extract_strided_slice %848 {offsets = [0, 0], sizes = [8, 128], strides = [1, 1]} : vector<8x256xf32> to vector<8x128xf32>
    %850 = vector.extract_strided_slice %848 {offsets = [0, 128], sizes = [8, 128], strides = [1, 1]} : vector<8x256xf32> to vector<8x128xf32>
    %851 = vector.extract_strided_slice %834 {offsets = [0, 256], sizes = [8, 128], strides = [1, 1]} : vector<8x384xf32> to vector<8x128xf32>
    %852 = vector.extract_strided_slice %838 {offsets = [0, 256], sizes = [8, 128], strides = [1, 1]} : vector<8x384xf32> to vector<8x128xf32>
    %853 = arith.addf %852, %38 : vector<8x128xf32>
    %854 = arith.mulf %849, %853 : vector<8x128xf32>
    %855 = arith.addf %851, %854 : vector<8x128xf32>
    %856 = math.tanh %855 : vector<8x128xf32>
    %cst_334 = arith.constant 1.000000e+00 : f32
    %857 = vector.broadcast %cst_334 : f32 to vector<8x128xf32>
    %858 = arith.subf %857, %850 : vector<8x128xf32>
    %859 = arith.mulf %858, %856 : vector<8x128xf32>
    %860 = arith.mulf %850, %736 : vector<8x128xf32>
    %861 = arith.addf %859, %860 : vector<8x128xf32>
    %862 = arith.truncf %765 : vector<8x128xf32> to vector<8x128xbf16>
    %c4_335 = arith.constant 4 : index
    %c0_336 = arith.constant 0 : index
    %c0_337 = arith.constant 0 : index
    %863 = vector.load %arg11[%c4_335, %c0_336, %c0_337] : memref<7x128x384xbf16, #tpu.memory_space<vmem>>, vector<1x128x384xbf16>
    %864 = vector.shape_cast %863 : vector<1x128x384xbf16> to vector<128x384xbf16>
    %cst_338 = arith.constant dense<0.000000e+00> : vector<8x384xf32>
    %865 = tpu.matmul %862, %864, %cst_338 {dimension_numbers = #tpu.dot_dimension_numbers<[1], [0], [0], [1], [0, 0, 1, 1], [], []>} : vector<8x128xbf16>, vector<128x384xbf16>, vector<8x384xf32> -> vector<8x384xf32>
    %866 = arith.addf %865, %41 : vector<8x384xf32>
    %867 = arith.truncf %797 : vector<8x128xf32> to vector<8x128xbf16>
    %c1_339 = arith.constant 1 : index
    %c0_340 = arith.constant 0 : index
    %c0_341 = arith.constant 0 : index
    %868 = vector.load %arg11[%c1_339, %c0_340, %c0_341] : memref<7x128x384xbf16, #tpu.memory_space<vmem>>, vector<1x128x384xbf16>
    %869 = vector.shape_cast %868 : vector<1x128x384xbf16> to vector<128x384xbf16>
    %cst_342 = arith.constant dense<0.000000e+00> : vector<8x384xf32>
    %870 = tpu.matmul %867, %869, %cst_342 {dimension_numbers = #tpu.dot_dimension_numbers<[1], [0], [0], [1], [0, 0, 1, 1], [], []>} : vector<8x128xbf16>, vector<128x384xbf16>, vector<8x384xf32> -> vector<8x384xf32>
    %871 = vector.extract_strided_slice %866 {offsets = [0, 0], sizes = [8, 256], strides = [1, 1]} : vector<8x384xf32> to vector<8x256xf32>
    %872 = vector.extract_strided_slice %870 {offsets = [0, 0], sizes = [8, 256], strides = [1, 1]} : vector<8x384xf32> to vector<8x256xf32>
    %873 = arith.addf %871, %872 : vector<8x256xf32>
    %cst_343 = arith.constant 5.000000e-01 : f32
    %874 = vector.broadcast %cst_343 : f32 to vector<8x256xf32>
    %875 = arith.mulf %874, %873 : vector<8x256xf32>
    %876 = math.tanh %875 : vector<8x256xf32>
    %cst_344 = arith.constant 1.000000e+00 : f32
    %877 = vector.broadcast %cst_344 : f32 to vector<8x256xf32>
    %878 = arith.addf %876, %877 : vector<8x256xf32>
    %cst_345 = arith.constant 5.000000e-01 : f32
    %879 = vector.broadcast %cst_345 : f32 to vector<8x256xf32>
    %880 = arith.mulf %879, %878 : vector<8x256xf32>
    %881 = vector.extract_strided_slice %880 {offsets = [0, 0], sizes = [8, 128], strides = [1, 1]} : vector<8x256xf32> to vector<8x128xf32>
    %882 = vector.extract_strided_slice %880 {offsets = [0, 128], sizes = [8, 128], strides = [1, 1]} : vector<8x256xf32> to vector<8x128xf32>
    %883 = vector.extract_strided_slice %866 {offsets = [0, 256], sizes = [8, 128], strides = [1, 1]} : vector<8x384xf32> to vector<8x128xf32>
    %884 = vector.extract_strided_slice %870 {offsets = [0, 256], sizes = [8, 128], strides = [1, 1]} : vector<8x384xf32> to vector<8x128xf32>
    %885 = arith.addf %884, %32 : vector<8x128xf32>
    %886 = arith.mulf %881, %885 : vector<8x128xf32>
    %887 = arith.addf %883, %886 : vector<8x128xf32>
    %888 = math.tanh %887 : vector<8x128xf32>
    %cst_346 = arith.constant 1.000000e+00 : f32
    %889 = vector.broadcast %cst_346 : f32 to vector<8x128xf32>
    %890 = arith.subf %889, %882 : vector<8x128xf32>
    %891 = arith.mulf %890, %888 : vector<8x128xf32>
    %892 = arith.mulf %882, %797 : vector<8x128xf32>
    %893 = arith.addf %891, %892 : vector<8x128xf32>
    %894 = arith.truncf %797 : vector<8x128xf32> to vector<8x128xbf16>
    %c5_347 = arith.constant 5 : index
    %c0_348 = arith.constant 0 : index
    %c0_349 = arith.constant 0 : index
    %895 = vector.load %arg11[%c5_347, %c0_348, %c0_349] : memref<7x128x384xbf16, #tpu.memory_space<vmem>>, vector<1x128x384xbf16>
    %896 = vector.shape_cast %895 : vector<1x128x384xbf16> to vector<128x384xbf16>
    %cst_350 = arith.constant dense<0.000000e+00> : vector<8x384xf32>
    %897 = tpu.matmul %894, %896, %cst_350 {dimension_numbers = #tpu.dot_dimension_numbers<[1], [0], [0], [1], [0, 0, 1, 1], [], []>} : vector<8x128xbf16>, vector<128x384xbf16>, vector<8x384xf32> -> vector<8x384xf32>
    %898 = arith.addf %897, %44 : vector<8x384xf32>
    %899 = arith.truncf %829 : vector<8x128xf32> to vector<8x128xbf16>
    %c2_351 = arith.constant 2 : index
    %c0_352 = arith.constant 0 : index
    %c0_353 = arith.constant 0 : index
    %900 = vector.load %arg11[%c2_351, %c0_352, %c0_353] : memref<7x128x384xbf16, #tpu.memory_space<vmem>>, vector<1x128x384xbf16>
    %901 = vector.shape_cast %900 : vector<1x128x384xbf16> to vector<128x384xbf16>
    %cst_354 = arith.constant dense<0.000000e+00> : vector<8x384xf32>
    %902 = tpu.matmul %899, %901, %cst_354 {dimension_numbers = #tpu.dot_dimension_numbers<[1], [0], [0], [1], [0, 0, 1, 1], [], []>} : vector<8x128xbf16>, vector<128x384xbf16>, vector<8x384xf32> -> vector<8x384xf32>
    %903 = vector.extract_strided_slice %898 {offsets = [0, 0], sizes = [8, 256], strides = [1, 1]} : vector<8x384xf32> to vector<8x256xf32>
    %904 = vector.extract_strided_slice %902 {offsets = [0, 0], sizes = [8, 256], strides = [1, 1]} : vector<8x384xf32> to vector<8x256xf32>
    %905 = arith.addf %903, %904 : vector<8x256xf32>
    %cst_355 = arith.constant 5.000000e-01 : f32
    %906 = vector.broadcast %cst_355 : f32 to vector<8x256xf32>
    %907 = arith.mulf %906, %905 : vector<8x256xf32>
    %908 = math.tanh %907 : vector<8x256xf32>
    %cst_356 = arith.constant 1.000000e+00 : f32
    %909 = vector.broadcast %cst_356 : f32 to vector<8x256xf32>
    %910 = arith.addf %908, %909 : vector<8x256xf32>
    %cst_357 = arith.constant 5.000000e-01 : f32
    %911 = vector.broadcast %cst_357 : f32 to vector<8x256xf32>
    %912 = arith.mulf %911, %910 : vector<8x256xf32>
    %913 = vector.extract_strided_slice %912 {offsets = [0, 0], sizes = [8, 128], strides = [1, 1]} : vector<8x256xf32> to vector<8x128xf32>
    %914 = vector.extract_strided_slice %912 {offsets = [0, 128], sizes = [8, 128], strides = [1, 1]} : vector<8x256xf32> to vector<8x128xf32>
    %915 = vector.extract_strided_slice %898 {offsets = [0, 256], sizes = [8, 128], strides = [1, 1]} : vector<8x384xf32> to vector<8x128xf32>
    %916 = vector.extract_strided_slice %902 {offsets = [0, 256], sizes = [8, 128], strides = [1, 1]} : vector<8x384xf32> to vector<8x128xf32>
    %917 = arith.addf %916, %35 : vector<8x128xf32>
    %918 = arith.mulf %913, %917 : vector<8x128xf32>
    %919 = arith.addf %915, %918 : vector<8x128xf32>
    %920 = math.tanh %919 : vector<8x128xf32>
    %cst_358 = arith.constant 1.000000e+00 : f32
    %921 = vector.broadcast %cst_358 : f32 to vector<8x128xf32>
    %922 = arith.subf %921, %914 : vector<8x128xf32>
    %923 = arith.mulf %922, %920 : vector<8x128xf32>
    %924 = arith.mulf %914, %829 : vector<8x128xf32>
    %925 = arith.addf %923, %924 : vector<8x128xf32>
    %926 = arith.truncf %829 : vector<8x128xf32> to vector<8x128xbf16>
    %c6_359 = arith.constant 6 : index
    %c0_360 = arith.constant 0 : index
    %c0_361 = arith.constant 0 : index
    %927 = vector.load %arg11[%c6_359, %c0_360, %c0_361] : memref<7x128x384xbf16, #tpu.memory_space<vmem>>, vector<1x128x384xbf16>
    %928 = vector.shape_cast %927 : vector<1x128x384xbf16> to vector<128x384xbf16>
    %cst_362 = arith.constant dense<0.000000e+00> : vector<8x384xf32>
    %929 = tpu.matmul %926, %928, %cst_362 {dimension_numbers = #tpu.dot_dimension_numbers<[1], [0], [0], [1], [0, 0, 1, 1], [], []>} : vector<8x128xbf16>, vector<128x384xbf16>, vector<8x384xf32> -> vector<8x384xf32>
    %930 = arith.addf %929, %47 : vector<8x384xf32>
    %931 = arith.truncf %861 : vector<8x128xf32> to vector<8x128xbf16>
    %c3_363 = arith.constant 3 : index
    %c0_364 = arith.constant 0 : index
    %c0_365 = arith.constant 0 : index
    %932 = vector.load %arg11[%c3_363, %c0_364, %c0_365] : memref<7x128x384xbf16, #tpu.memory_space<vmem>>, vector<1x128x384xbf16>
    %933 = vector.shape_cast %932 : vector<1x128x384xbf16> to vector<128x384xbf16>
    %cst_366 = arith.constant dense<0.000000e+00> : vector<8x384xf32>
    %934 = tpu.matmul %931, %933, %cst_366 {dimension_numbers = #tpu.dot_dimension_numbers<[1], [0], [0], [1], [0, 0, 1, 1], [], []>} : vector<8x128xbf16>, vector<128x384xbf16>, vector<8x384xf32> -> vector<8x384xf32>
    %935 = vector.extract_strided_slice %930 {offsets = [0, 0], sizes = [8, 256], strides = [1, 1]} : vector<8x384xf32> to vector<8x256xf32>
    %936 = vector.extract_strided_slice %934 {offsets = [0, 0], sizes = [8, 256], strides = [1, 1]} : vector<8x384xf32> to vector<8x256xf32>
    %937 = arith.addf %935, %936 : vector<8x256xf32>
    %cst_367 = arith.constant 5.000000e-01 : f32
    %938 = vector.broadcast %cst_367 : f32 to vector<8x256xf32>
    %939 = arith.mulf %938, %937 : vector<8x256xf32>
    %940 = math.tanh %939 : vector<8x256xf32>
    %cst_368 = arith.constant 1.000000e+00 : f32
    %941 = vector.broadcast %cst_368 : f32 to vector<8x256xf32>
    %942 = arith.addf %940, %941 : vector<8x256xf32>
    %cst_369 = arith.constant 5.000000e-01 : f32
    %943 = vector.broadcast %cst_369 : f32 to vector<8x256xf32>
    %944 = arith.mulf %943, %942 : vector<8x256xf32>
    %945 = vector.extract_strided_slice %944 {offsets = [0, 0], sizes = [8, 128], strides = [1, 1]} : vector<8x256xf32> to vector<8x128xf32>
    %946 = vector.extract_strided_slice %944 {offsets = [0, 128], sizes = [8, 128], strides = [1, 1]} : vector<8x256xf32> to vector<8x128xf32>
    %947 = vector.extract_strided_slice %930 {offsets = [0, 256], sizes = [8, 128], strides = [1, 1]} : vector<8x384xf32> to vector<8x128xf32>
    %948 = vector.extract_strided_slice %934 {offsets = [0, 256], sizes = [8, 128], strides = [1, 1]} : vector<8x384xf32> to vector<8x128xf32>
    %949 = arith.addf %948, %38 : vector<8x128xf32>
    %950 = arith.mulf %945, %949 : vector<8x128xf32>
    %951 = arith.addf %947, %950 : vector<8x128xf32>
    %952 = math.tanh %951 : vector<8x128xf32>
    %cst_370 = arith.constant 1.000000e+00 : f32
    %953 = vector.broadcast %cst_370 : f32 to vector<8x128xf32>
    %954 = arith.subf %953, %946 : vector<8x128xf32>
    %955 = arith.mulf %954, %952 : vector<8x128xf32>
    %956 = arith.mulf %946, %861 : vector<8x128xf32>
    %957 = arith.addf %955, %956 : vector<8x128xf32>
    %958 = arith.truncf %893 : vector<8x128xf32> to vector<8x128xbf16>
    %c5_371 = arith.constant 5 : index
    %c0_372 = arith.constant 0 : index
    %c0_373 = arith.constant 0 : index
    %959 = vector.load %arg11[%c5_371, %c0_372, %c0_373] : memref<7x128x384xbf16, #tpu.memory_space<vmem>>, vector<1x128x384xbf16>
    %960 = vector.shape_cast %959 : vector<1x128x384xbf16> to vector<128x384xbf16>
    %cst_374 = arith.constant dense<0.000000e+00> : vector<8x384xf32>
    %961 = tpu.matmul %958, %960, %cst_374 {dimension_numbers = #tpu.dot_dimension_numbers<[1], [0], [0], [1], [0, 0, 1, 1], [], []>} : vector<8x128xbf16>, vector<128x384xbf16>, vector<8x384xf32> -> vector<8x384xf32>
    %962 = arith.addf %961, %44 : vector<8x384xf32>
    %963 = arith.truncf %925 : vector<8x128xf32> to vector<8x128xbf16>
    %c2_375 = arith.constant 2 : index
    %c0_376 = arith.constant 0 : index
    %c0_377 = arith.constant 0 : index
    %964 = vector.load %arg11[%c2_375, %c0_376, %c0_377] : memref<7x128x384xbf16, #tpu.memory_space<vmem>>, vector<1x128x384xbf16>
    %965 = vector.shape_cast %964 : vector<1x128x384xbf16> to vector<128x384xbf16>
    %cst_378 = arith.constant dense<0.000000e+00> : vector<8x384xf32>
    %966 = tpu.matmul %963, %965, %cst_378 {dimension_numbers = #tpu.dot_dimension_numbers<[1], [0], [0], [1], [0, 0, 1, 1], [], []>} : vector<8x128xbf16>, vector<128x384xbf16>, vector<8x384xf32> -> vector<8x384xf32>
    %967 = vector.extract_strided_slice %962 {offsets = [0, 0], sizes = [8, 256], strides = [1, 1]} : vector<8x384xf32> to vector<8x256xf32>
    %968 = vector.extract_strided_slice %966 {offsets = [0, 0], sizes = [8, 256], strides = [1, 1]} : vector<8x384xf32> to vector<8x256xf32>
    %969 = arith.addf %967, %968 : vector<8x256xf32>
    %cst_379 = arith.constant 5.000000e-01 : f32
    %970 = vector.broadcast %cst_379 : f32 to vector<8x256xf32>
    %971 = arith.mulf %970, %969 : vector<8x256xf32>
    %972 = math.tanh %971 : vector<8x256xf32>
    %cst_380 = arith.constant 1.000000e+00 : f32
    %973 = vector.broadcast %cst_380 : f32 to vector<8x256xf32>
    %974 = arith.addf %972, %973 : vector<8x256xf32>
    %cst_381 = arith.constant 5.000000e-01 : f32
    %975 = vector.broadcast %cst_381 : f32 to vector<8x256xf32>
    %976 = arith.mulf %975, %974 : vector<8x256xf32>
    %977 = vector.extract_strided_slice %976 {offsets = [0, 0], sizes = [8, 128], strides = [1, 1]} : vector<8x256xf32> to vector<8x128xf32>
    %978 = vector.extract_strided_slice %976 {offsets = [0, 128], sizes = [8, 128], strides = [1, 1]} : vector<8x256xf32> to vector<8x128xf32>
    %979 = vector.extract_strided_slice %962 {offsets = [0, 256], sizes = [8, 128], strides = [1, 1]} : vector<8x384xf32> to vector<8x128xf32>
    %980 = vector.extract_strided_slice %966 {offsets = [0, 256], sizes = [8, 128], strides = [1, 1]} : vector<8x384xf32> to vector<8x128xf32>
    %981 = arith.addf %980, %35 : vector<8x128xf32>
    %982 = arith.mulf %977, %981 : vector<8x128xf32>
    %983 = arith.addf %979, %982 : vector<8x128xf32>
    %984 = math.tanh %983 : vector<8x128xf32>
    %cst_382 = arith.constant 1.000000e+00 : f32
    %985 = vector.broadcast %cst_382 : f32 to vector<8x128xf32>
    %986 = arith.subf %985, %978 : vector<8x128xf32>
    %987 = arith.mulf %986, %984 : vector<8x128xf32>
    %988 = arith.mulf %978, %925 : vector<8x128xf32>
    %989 = arith.addf %987, %988 : vector<8x128xf32>
    %990 = arith.truncf %925 : vector<8x128xf32> to vector<8x128xbf16>
    %c6_383 = arith.constant 6 : index
    %c0_384 = arith.constant 0 : index
    %c0_385 = arith.constant 0 : index
    %991 = vector.load %arg11[%c6_383, %c0_384, %c0_385] : memref<7x128x384xbf16, #tpu.memory_space<vmem>>, vector<1x128x384xbf16>
    %992 = vector.shape_cast %991 : vector<1x128x384xbf16> to vector<128x384xbf16>
    %cst_386 = arith.constant dense<0.000000e+00> : vector<8x384xf32>
    %993 = tpu.matmul %990, %992, %cst_386 {dimension_numbers = #tpu.dot_dimension_numbers<[1], [0], [0], [1], [0, 0, 1, 1], [], []>} : vector<8x128xbf16>, vector<128x384xbf16>, vector<8x384xf32> -> vector<8x384xf32>
    %994 = arith.addf %993, %47 : vector<8x384xf32>
    %995 = arith.truncf %957 : vector<8x128xf32> to vector<8x128xbf16>
    %c3_387 = arith.constant 3 : index
    %c0_388 = arith.constant 0 : index
    %c0_389 = arith.constant 0 : index
    %996 = vector.load %arg11[%c3_387, %c0_388, %c0_389] : memref<7x128x384xbf16, #tpu.memory_space<vmem>>, vector<1x128x384xbf16>
    %997 = vector.shape_cast %996 : vector<1x128x384xbf16> to vector<128x384xbf16>
    %cst_390 = arith.constant dense<0.000000e+00> : vector<8x384xf32>
    %998 = tpu.matmul %995, %997, %cst_390 {dimension_numbers = #tpu.dot_dimension_numbers<[1], [0], [0], [1], [0, 0, 1, 1], [], []>} : vector<8x128xbf16>, vector<128x384xbf16>, vector<8x384xf32> -> vector<8x384xf32>
    %999 = vector.extract_strided_slice %994 {offsets = [0, 0], sizes = [8, 256], strides = [1, 1]} : vector<8x384xf32> to vector<8x256xf32>
    %1000 = vector.extract_strided_slice %998 {offsets = [0, 0], sizes = [8, 256], strides = [1, 1]} : vector<8x384xf32> to vector<8x256xf32>
    %1001 = arith.addf %999, %1000 : vector<8x256xf32>
    %cst_391 = arith.constant 5.000000e-01 : f32
    %1002 = vector.broadcast %cst_391 : f32 to vector<8x256xf32>
    %1003 = arith.mulf %1002, %1001 : vector<8x256xf32>
    %1004 = math.tanh %1003 : vector<8x256xf32>
    %cst_392 = arith.constant 1.000000e+00 : f32
    %1005 = vector.broadcast %cst_392 : f32 to vector<8x256xf32>
    %1006 = arith.addf %1004, %1005 : vector<8x256xf32>
    %cst_393 = arith.constant 5.000000e-01 : f32
    %1007 = vector.broadcast %cst_393 : f32 to vector<8x256xf32>
    %1008 = arith.mulf %1007, %1006 : vector<8x256xf32>
    %1009 = vector.extract_strided_slice %1008 {offsets = [0, 0], sizes = [8, 128], strides = [1, 1]} : vector<8x256xf32> to vector<8x128xf32>
    %1010 = vector.extract_strided_slice %1008 {offsets = [0, 128], sizes = [8, 128], strides = [1, 1]} : vector<8x256xf32> to vector<8x128xf32>
    %1011 = vector.extract_strided_slice %994 {offsets = [0, 256], sizes = [8, 128], strides = [1, 1]} : vector<8x384xf32> to vector<8x128xf32>
    %1012 = vector.extract_strided_slice %998 {offsets = [0, 256], sizes = [8, 128], strides = [1, 1]} : vector<8x384xf32> to vector<8x128xf32>
    %1013 = arith.addf %1012, %38 : vector<8x128xf32>
    %1014 = arith.mulf %1009, %1013 : vector<8x128xf32>
    %1015 = arith.addf %1011, %1014 : vector<8x128xf32>
    %1016 = math.tanh %1015 : vector<8x128xf32>
    %cst_394 = arith.constant 1.000000e+00 : f32
    %1017 = vector.broadcast %cst_394 : f32 to vector<8x128xf32>
    %1018 = arith.subf %1017, %1010 : vector<8x128xf32>
    %1019 = arith.mulf %1018, %1016 : vector<8x128xf32>
    %1020 = arith.mulf %1010, %957 : vector<8x128xf32>
    %1021 = arith.addf %1019, %1020 : vector<8x128xf32>
    %1022 = arith.truncf %989 : vector<8x128xf32> to vector<8x128xbf16>
    %c6_395 = arith.constant 6 : index
    %c0_396 = arith.constant 0 : index
    %c0_397 = arith.constant 0 : index
    %1023 = vector.load %arg11[%c6_395, %c0_396, %c0_397] : memref<7x128x384xbf16, #tpu.memory_space<vmem>>, vector<1x128x384xbf16>
    %1024 = vector.shape_cast %1023 : vector<1x128x384xbf16> to vector<128x384xbf16>
    %cst_398 = arith.constant dense<0.000000e+00> : vector<8x384xf32>
    %1025 = tpu.matmul %1022, %1024, %cst_398 {dimension_numbers = #tpu.dot_dimension_numbers<[1], [0], [0], [1], [0, 0, 1, 1], [], []>} : vector<8x128xbf16>, vector<128x384xbf16>, vector<8x384xf32> -> vector<8x384xf32>
    %1026 = arith.addf %1025, %47 : vector<8x384xf32>
    %1027 = arith.truncf %1021 : vector<8x128xf32> to vector<8x128xbf16>
    %c3_399 = arith.constant 3 : index
    %c0_400 = arith.constant 0 : index
    %c0_401 = arith.constant 0 : index
    %1028 = vector.load %arg11[%c3_399, %c0_400, %c0_401] : memref<7x128x384xbf16, #tpu.memory_space<vmem>>, vector<1x128x384xbf16>
    %1029 = vector.shape_cast %1028 : vector<1x128x384xbf16> to vector<128x384xbf16>
    %cst_402 = arith.constant dense<0.000000e+00> : vector<8x384xf32>
    %1030 = tpu.matmul %1027, %1029, %cst_402 {dimension_numbers = #tpu.dot_dimension_numbers<[1], [0], [0], [1], [0, 0, 1, 1], [], []>} : vector<8x128xbf16>, vector<128x384xbf16>, vector<8x384xf32> -> vector<8x384xf32>
    %1031 = vector.extract_strided_slice %1026 {offsets = [0, 0], sizes = [8, 256], strides = [1, 1]} : vector<8x384xf32> to vector<8x256xf32>
    %1032 = vector.extract_strided_slice %1030 {offsets = [0, 0], sizes = [8, 256], strides = [1, 1]} : vector<8x384xf32> to vector<8x256xf32>
    %1033 = arith.addf %1031, %1032 : vector<8x256xf32>
    %cst_403 = arith.constant 5.000000e-01 : f32
    %1034 = vector.broadcast %cst_403 : f32 to vector<8x256xf32>
    %1035 = arith.mulf %1034, %1033 : vector<8x256xf32>
    %1036 = math.tanh %1035 : vector<8x256xf32>
    %cst_404 = arith.constant 1.000000e+00 : f32
    %1037 = vector.broadcast %cst_404 : f32 to vector<8x256xf32>
    %1038 = arith.addf %1036, %1037 : vector<8x256xf32>
    %cst_405 = arith.constant 5.000000e-01 : f32
    %1039 = vector.broadcast %cst_405 : f32 to vector<8x256xf32>
    %1040 = arith.mulf %1039, %1038 : vector<8x256xf32>
    %1041 = vector.extract_strided_slice %1040 {offsets = [0, 0], sizes = [8, 128], strides = [1, 1]} : vector<8x256xf32> to vector<8x128xf32>
    %1042 = vector.extract_strided_slice %1040 {offsets = [0, 128], sizes = [8, 128], strides = [1, 1]} : vector<8x256xf32> to vector<8x128xf32>
    %1043 = vector.extract_strided_slice %1026 {offsets = [0, 256], sizes = [8, 128], strides = [1, 1]} : vector<8x384xf32> to vector<8x128xf32>
    %1044 = vector.extract_strided_slice %1030 {offsets = [0, 256], sizes = [8, 128], strides = [1, 1]} : vector<8x384xf32> to vector<8x128xf32>
    %1045 = arith.addf %1044, %38 : vector<8x128xf32>
    %1046 = arith.mulf %1041, %1045 : vector<8x128xf32>
    %1047 = arith.addf %1043, %1046 : vector<8x128xf32>
    %1048 = math.tanh %1047 : vector<8x128xf32>
    %cst_406 = arith.constant 1.000000e+00 : f32
    %1049 = vector.broadcast %cst_406 : f32 to vector<8x128xf32>
    %1050 = arith.subf %1049, %1042 : vector<8x128xf32>
    %1051 = arith.mulf %1050, %1048 : vector<8x128xf32>
    %1052 = arith.mulf %1042, %1021 : vector<8x128xf32>
    %1053 = arith.addf %1051, %1052 : vector<8x128xf32>
    %c256 = arith.constant 256 : index
    %c0_407 = arith.constant 0 : index
    %1054 = vector.load %arg4[%c256, %c0_407] : memref<385x2xf32, #tpu.memory_space<vmem>>, vector<128x2xf32>
    %cst_408 = arith.constant dense<0.000000e+00> : vector<8x2xf32>
    %1055 = tpu.matmul %1053, %1054, %cst_408 {dimension_numbers = #tpu.dot_dimension_numbers<[1], [0], [0], [1], [0, 0, 1, 1], [], []>} : vector<8x128xf32>, vector<128x2xf32>, vector<8x2xf32> -> vector<8x2xf32>
    %1056 = arith.addf %26, %1055 : vector<8x2xf32>
    %c0_409 = arith.constant 0 : index
    %c0_410 = arith.constant 0 : index
    %1057 = vector.load %arg9[%c0_409, %c0_410] : memref<8x2xf32, #tpu.memory_space<vmem>>, vector<8x2xf32>
    tpu.vector_store %arg9[%c0_409, %c0_410], %1056 {strides = array<i32>} : memref<8x2xf32, #tpu.memory_space<vmem>>, vector<8x2xf32>,
    return
  }
}

</mosaic_0001>

<llo_original>
// kernel: tpu_custom_call.1
$region0: #{tpu_custom_call.1}
  #allocation0 [shape = 'u32[]', space=smem, size = 0x4, offset = 0x4, fixed_abs, tag = 'smem constant byte address 0x4 - core index']
  #allocation1 [shape = 'u32[144,128]{1,0:T(1,128)}', space=vmem, size = 0x12000, scoped, tag = 'internal scratch']
  #allocation2 [shape = 'f32[8,8,384]{2,1,0:T(8,128)}', space=vmem, size = 0x18000, scoped, tag = 'scratch operand']
  #allocation3 [shape = 'bf16[7,128,384]{2,1,0:T(8,128)(2,1)}', space=vmem, size = 0xa8000, scoped, tag = 'scratch operand']
  #allocation4 [shape = 's32[1]{0}', space=sflag, size = 0x4, scoped, tag = 'scratch operand']
  #allocation5 [shape = 's32[]', space=sflag, size = 0x4, offset = 0, fixed_abs, tag = 'sflag constant byte address 0x0 - dummy sync flag']
  #allocation6 [shape = 's32[]', space=sflag, size = 0x4, offset = 0, fixed_abs, tag = 'sflag constant byte address 0x0 - dummy sync flag']
  #allocation7 [shape = 'u32[]', space=smem, size = 0x4, offset = 0x44, fixed_abs, tag = 'smem constant byte address 0x44 - assertion arg 0']
  #allocation8 [shape = 'u32[]', space=smem, size = 0x4, offset = 0x48, fixed_abs, tag = 'smem constant byte address 0x48 - assertion arg 1']
  %s0 = inlined_call_operand.vmem [shape: f32[8,32], index: 0, kind: input, shape index: {}]
  %s1 = inlined_call_operand.vmem [shape: f32[8,8], index: 1, kind: input, shape index: {}]
  %s2 = inlined_call_operand.vmem [shape: f32[32,256], index: 2, kind: input, shape index: {}]
  %s3 = inlined_call_operand.vmem [shape: f32[1,256], index: 3, kind: input, shape index: {}]
  %s4 = inlined_call_operand.vmem [shape: f32[385,2], index: 4, kind: input, shape index: {}]
  %s5 = inlined_call_operand.vmem [shape: f32[1,384], index: 5, kind: input, shape index: {}]
  %s6 = inlined_call_operand.vmem [shape: f32[4,384], index: 6, kind: input, shape index: {}]
  %s7 = inlined_call_operand.vmem [shape: f32[4,128], index: 7, kind: input, shape index: {}]
  %s8 = inlined_call_operand.hbm [shape: bf16[7,128,384], index: 8, kind: input, shape index: {}]
  %s9 = inlined_call_operand.vmem [shape: f32[8,2], index: 9, kind: output, shape index: {}]
  %s10 = sld [smem:[#allocation0]]
  $region46: #{tpu_custom_call.1} parent=0
    _
  %s12 = ssub.s32 1, %s10
  %s13 = scalar_select 0, %s12, %s10
  // Predicated region
  $region2: #{tpu_custom_call.1} parent=0 // pred_check
    _
  $region3: #{tpu_custom_call.1} parent=0 // pred_check_branch
    %15 = sbr.rel (0) target = $region5
  $region4: #{tpu_custom_call.1} parent=0 // pred_region
    _
  $region5: #{tpu_custom_call.1} parent=0 // pred_fallthru
    _
  // Predicated region
  $region6: #{tpu_custom_call.1} parent=0 // pred_check
    _
  $region7: #{tpu_custom_call.1} parent=0 // pred_check_branch
    %17 = sbr.rel (0) target = $region9
  $region8: #{tpu_custom_call.1} parent=0 // pred_region
    _
  $region9: #{tpu_custom_call.1} parent=0 // pred_fallthru
    _
  // Predicated region
  $region10: #{tpu_custom_call.1} parent=0 // pred_check
    _
  $region11: #{tpu_custom_call.1} parent=0 // pred_check_branch
    %19 = sbr.rel (0) target = $region13
  $region12: #{tpu_custom_call.1} parent=0 // pred_region
    _
  $region13: #{tpu_custom_call.1} parent=0 // pred_fallthru
    _
  // Predicated region
  $region14: #{tpu_custom_call.1} parent=0 // pred_check
    _
  $region15: #{tpu_custom_call.1} parent=0 // pred_check_branch
    %21 = sbr.rel (0) target = $region17
  $region16: #{tpu_custom_call.1} parent=0 // pred_region
    _
  $region17: #{tpu_custom_call.1} parent=0 // pred_fallthru
    _
  // Predicated region
  $region18: #{tpu_custom_call.1} parent=0 // pred_check
    _
  $region19: #{tpu_custom_call.1} parent=0 // pred_check_branch
    %23 = sbr.rel (0) target = $region21
  $region20: #{tpu_custom_call.1} parent=0 // pred_region
    _
  $region21: #{tpu_custom_call.1} parent=0 // pred_fallthru
    _
  // Predicated region
  $region22: #{tpu_custom_call.1} parent=0 // pred_check
    _
  $region23: #{tpu_custom_call.1} parent=0 // pred_check_branch
    %25 = sbr.rel (0) target = $region25
  $region24: #{tpu_custom_call.1} parent=0 // pred_region
    _
  $region25: #{tpu_custom_call.1} parent=0 // pred_fallthru
    _
  // Predicated region
  $region26: #{tpu_custom_call.1} parent=0 // pred_check
    _
  $region27: #{tpu_custom_call.1} parent=0 // pred_check_branch
    %27 = sbr.rel (0) target = $region29
  $region28: #{tpu_custom_call.1} parent=0 // pred_region
    _
  $region29: #{tpu_custom_call.1} parent=0 // pred_fallthru
    _
  // Predicated region
  $region30: #{tpu_custom_call.1} parent=0 // pred_check
    _
  $region31: #{tpu_custom_call.1} parent=0 // pred_check_branch
    %29 = sbr.rel (0) target = $region33
  $region32: #{tpu_custom_call.1} parent=0 // pred_region
    _
  $region33: #{tpu_custom_call.1} parent=0 // pred_fallthru
    _
  // Predicated region
  $region34: #{tpu_custom_call.1} parent=0 // pred_check
    _
  $region35: #{tpu_custom_call.1} parent=0 // pred_check_branch
    %32 = sbr.rel target = $region37
  $region36: #{tpu_custom_call.1} parent=0 // pred_region
    %33 = sst [smem:[#allocation7]] [#allocation6]
    %34 = sst [smem:[#allocation8]] [#allocation5]
  $region37: #{tpu_custom_call.1} parent=0 // pred_fallthru
    _
  %36 = shalt.err (0)
  %s38 = sshll.u32 [#allocation3], 4
  %s39 = int_to_ptr.vmem [resolvable:$true] %s38
  %41 = dma.hbm_to_vmem [thread:$0]  %s8, 21504, %s39, [#allocation4]
  %v42 = vld [vmem:[%s1] sm:$0xff]
  %v43 = vlaneseq
  %v44 = vshrl.u32 %v43, 7
  %v45 = vsub.s32 0, %v44
  %v46 = vrot.slane %v42, %v45
  %48 = vbcast.lane.b32.xlu0 %v46, 256
  %v49 = vpop.permute.xlu0 %48
  %v50 = vlaneseq
  %v51 = vshrl.u32 %v50, 7
  %v52 = vsub.s32 1, %v51
  %v53 = vrot.slane %v42, %v52
  %55 = vbcast.lane.b32.xlu0 %v53, 256
  %v56 = vpop.permute.xlu0 %55
  %v57 = vlaneseq
  %v58 = vshrl.u32 %v57, 7
  %v59 = vsub.s32 2, %v58
  %v60 = vrot.slane %v42, %v59
  %62 = vbcast.lane.b32.xlu0 %v60, 256
  %v63 = vpop.permute.xlu0 %62
  %v64 = vlaneseq
  %v65 = vshrl.u32 %v64, 7
  %v66 = vsub.s32 3, %v65
  %v67 = vrot.slane %v42, %v66
  %69 = vbcast.lane.b32.xlu0 %v67, 256
  %v70 = vpop.permute.xlu0 %69
  %v71 = vlaneseq
  %v72 = vshrl.u32 %v71, 7
  %v73 = vsub.s32 4, %v72
  %v74 = vrot.slane %v42, %v73
  %76 = vbcast.lane.b32.xlu0 %v74, 256
  %v77 = vpop.permute.xlu0 %76
  %v78 = vlaneseq
  %v79 = vshrl.u32 %v78, 7
  %v80 = vsub.s32 5, %v79
  %v81 = vrot.slane %v42, %v80
  %83 = vbcast.lane.b32.xlu0 %v81, 256
  %v84 = vpop.permute.xlu0 %83
  %v85 = vlaneseq
  %v86 = vshrl.u32 %v85, 7
  %v87 = vsub.s32 6, %v86
  %v88 = vrot.slane %v42, %v87
  %90 = vbcast.lane.b32.xlu0 %v88, 256
  %v91 = vpop.permute.xlu0 %90
  %v92 = vlaneseq
  %v93 = vshrl.u32 %v92, 7
  %v94 = vsub.s32 7, %v93
  %v95 = vrot.slane %v42, %v94
  %97 = vbcast.lane.b32.xlu0 %v95, 256
  %v98 = vpop.permute.xlu0 %97
  %v99 = vld [vmem:[%s5] sm:$0x7]
  %v101 = vlaneseq
  %v102 = vshrl.u32 %v101, 7
  %v103 = vsub.s32 0, %v102
  %v104 = vrot.slane %v99, %v103
  %v105 = vlaneseq
  %v106 = vshrl.u32 %v105, 7
  %v107 = vsub.s32 1, %v106
  %v108 = vrot.slane %v99, %v107
  %v109 = vlaneseq
  %v110 = vshrl.u32 %v109, 7
  %v111 = vsub.s32 2, %v110
  %v112 = vrot.slane %v99, %v111
  %v116 = vmul.f32 %v49, %v104
  %v117 = vmul.f32 %v49, %v108
  %v118 = vmul.f32 %v49, %v112
  %v119 = vmul.f32 %v56, %v104
  %v120 = vmul.f32 %v56, %v108
  %v121 = vmul.f32 %v56, %v112
  %v122 = vmul.f32 %v63, %v104
  %v123 = vmul.f32 %v63, %v108
  %v124 = vmul.f32 %v63, %v112
  %v125 = vmul.f32 %v70, %v104
  %v126 = vmul.f32 %v70, %v108
  %v127 = vmul.f32 %v70, %v112
  %v128 = vmul.f32 %v77, %v104
  %v129 = vmul.f32 %v77, %v108
  %v130 = vmul.f32 %v77, %v112
  %v131 = vmul.f32 %v84, %v104
  %v132 = vmul.f32 %v84, %v108
  %v133 = vmul.f32 %v84, %v112
  %v134 = vmul.f32 %v91, %v104
  %v135 = vmul.f32 %v91, %v108
  %v136 = vmul.f32 %v91, %v112
  %v137 = vmul.f32 %v98, %v104
  %v138 = vmul.f32 %v98, %v108
  %v139 = vmul.f32 %v98, %v112
  %v140 = vld [vmem:[%s6] ss:$4 sm:$0x7]
  %v142 = vlaneseq
  %v143 = vshrl.u32 %v142, 7
  %v144 = vsub.s32 0, %v143
  %v145 = vrot.slane %v140, %v144
  %v146 = vlaneseq
  %v147 = vshrl.u32 %v146, 7
  %v148 = vsub.s32 1, %v147
  %v149 = vrot.slane %v140, %v148
  %v150 = vlaneseq
  %v151 = vshrl.u32 %v150, 7
  %v152 = vsub.s32 2, %v151
  %v153 = vrot.slane %v140, %v152
  %v157 = vadd.f32 %v116, %v145
  %v158 = vadd.f32 %v117, %v149
  %v159 = vadd.f32 %v118, %v153
  %v160 = vadd.f32 %v119, %v145
  %v161 = vadd.f32 %v120, %v149
  %v162 = vadd.f32 %v121, %v153
  %v163 = vadd.f32 %v122, %v145
  %v164 = vadd.f32 %v123, %v149
  %v165 = vadd.f32 %v124, %v153
  %v166 = vadd.f32 %v125, %v145
  %v167 = vadd.f32 %v126, %v149
  %v168 = vadd.f32 %v127, %v153
  %v169 = vadd.f32 %v128, %v145
  %v170 = vadd.f32 %v129, %v149
  %v171 = vadd.f32 %v130, %v153
  %v172 = vadd.f32 %v131, %v145
  %v173 = vadd.f32 %v132, %v149
  %v174 = vadd.f32 %v133, %v153
  %v175 = vadd.f32 %v134, %v145
  %v176 = vadd.f32 %v135, %v149
  %v177 = vadd.f32 %v136, %v153
  %v178 = vadd.f32 %v137, %v145
  %v179 = vadd.f32 %v138, %v149
  %v180 = vadd.f32 %v139, %v153
  %181 = vst [vmem:[#allocation2] sm:$0xff] %v157
  %182 = vst [vmem:[#allocation2 + $0x8] sm:$0xff] %v158
  %183 = vst [vmem:[#allocation2 + $0x10] sm:$0xff] %v159
  %184 = vst [vmem:[#allocation2 + $0x18] sm:$0xff] %v160
  %185 = vst [vmem:[#allocation2 + $0x20] sm:$0xff] %v161
  %186 = vst [vmem:[#allocation2 + $0x28] sm:$0xff] %v162
  %187 = vst [vmem:[#allocation2 + $0x30] sm:$0xff] %v163
  %188 = vst [vmem:[#allocation2 + $0x38] sm:$0xff] %v164
  %189 = vst [vmem:[#allocation2 + $0x40] sm:$0xff] %v165
  %190 = vst [vmem:[#allocation2 + $0x48] sm:$0xff] %v166
  %191 = vst [vmem:[#allocation2 + $0x50] sm:$0xff] %v167
  %192 = vst [vmem:[#allocation2 + $0x58] sm:$0xff] %v168
  %193 = vst [vmem:[#allocation2 + $0x60] sm:$0xff] %v169
  %194 = vst [vmem:[#allocation2 + $0x68] sm:$0xff] %v170
  %195 = vst [vmem:[#allocation2 + $0x70] sm:$0xff] %v171
  %196 = vst [vmem:[#allocation2 + $0x78] sm:$0xff] %v172
  %197 = vst [vmem:[#allocation2 + $0x80] sm:$0xff] %v173
  %198 = vst [vmem:[#allocation2 + $0x88] sm:$0xff] %v174
  %199 = vst [vmem:[#allocation2 + $0x90] sm:$0xff] %v175
  %200 = vst [vmem:[#allocation2 + $0x98] sm:$0xff] %v176
  %201 = vst [vmem:[#allocation2 + $0xa0] sm:$0xff] %v177
  %202 = vst [vmem:[#allocation2 + $0xa8] sm:$0xff] %v178
  %203 = vst [vmem:[#allocation2 + $0xb0] sm:$0xff] %v179
  %204 = vst [vmem:[#allocation2 + $0xb8] sm:$0xff] %v180
  %v205 = vld [vmem:[%s0] sm:$0xff]
  %v206 = vld [vmem:[%s2] sm:$0xff]
  %v207 = vld [vmem:[%s2 + $0x8] sm:$0xff]
  %v208 = vld [vmem:[%s2 + $0x10] sm:$0xff]
  %v209 = vld [vmem:[%s2 + $0x18] sm:$0xff]
  %v210 = vld [vmem:[%s2 + $0x20] sm:$0xff]
  %v211 = vld [vmem:[%s2 + $0x28] sm:$0xff]
  %v212 = vld [vmem:[%s2 + $0x30] sm:$0xff]
  %v213 = vld [vmem:[%s2 + $0x38] sm:$0xff]
  %v214 = vld [vmem:[%s3] sm:$0x3]
  %v216 = vlaneseq
  %v217 = vshrl.u32 %v216, 7
  %v218 = vsub.s32 0, %v217
  %v219 = vrot.slane %v214, %v218
  %v220 = vlaneseq
  %v221 = vshrl.u32 %v220, 7
  %v222 = vsub.s32 1, %v221
  %v223 = vrot.slane %v214, %v222
  %vm226 = vcmask 261120
  %v228 = vsel %vm226, %v205, 0
  %230 = vmatprep.subr.mxu0 0.0
  %231 = vmatpush1.msra.mxu0 0.0
  %232 = vmatprep.subr.mxu0 0.0
  %233 = vmatpush1.msra.mxu0 0.0
  %234 = vmatprep.subr.mxu0 0.0
  %235 = vmatpush1.msra.mxu0 0.0
  %236 = vmatprep.subr.mxu0 0.0
  %237 = vmatpush1.msra.mxu0 0.0
  %238 = vmatprep.subr.mxu0 0.0
  %239 = vmatpush1.msra.mxu0 0.0
  %240 = vmatprep.subr.mxu0 0.0
  %241 = vmatpush1.msra.mxu0 0.0
  %242 = vmatprep.subr.mxu0 0.0
  %243 = vmatpush1.msra.mxu0 0.0
  %244 = vmatprep.subr.mxu0 0.0
  %245 = vmatpush1.msra.mxu0 0.0
  %246 = vmatprep.subr.mxu0 0.0
  %247 = vmatpush1.msra.mxu0 0.0
  %248 = vmatprep.subr.mxu0 0.0
  %249 = vmatpush1.msra.mxu0 0.0
  %250 = vmatprep.subr.mxu0 0.0
  %251 = vmatpush1.msra.mxu0 0.0
  %252 = vmatprep.subr.mxu0 0.0
  %253 = vmatpush1.msra.mxu0 0.0
  %254 = vmatprep.subr.mxu0 %v213
  %255 = vmatpush1.msra.mxu0 %v212
  %256 = vmatprep.subr.mxu0 %v211
  %257 = vmatpush1.msra.mxu0 %v210
  %258 = vmatprep.subr.mxu0 %v209
  %259 = vmatpush1.msra.mxu0 %v208
  %260 = vmatprep.subr.mxu0 %v207
  %261 = vmatpush1.msra.mxu0 %v206
  %262 = vmatprep.subr.mxu0 0.0
  %263 = vmatpush2.msra.mxu0 0.0
  %264 = vmatprep.subr.mxu0 0.0
  %265 = vmatpush2.msra.mxu0 0.0
  %266 = vmatprep.subr.mxu0 0.0
  %267 = vmatpush2.msra.mxu0 0.0
  %268 = vmatprep.subr.mxu0 0.0
  %269 = vmatpush2.msra.mxu0 0.0
  %270 = vmatprep.subr.mxu0 0.0
  %271 = vmatpush2.msra.mxu0 0.0
  %272 = vmatprep.subr.mxu0 0.0
  %273 = vmatpush2.msra.mxu0 0.0
  %274 = vmatprep.subr.mxu0 0.0
  %275 = vmatpush2.msra.mxu0 0.0
  %276 = vmatprep.subr.mxu0 0.0
  %277 = vmatpush2.msra.mxu0 0.0
  %278 = vmatprep.subr.mxu0 0.0
  %279 = vmatpush2.msra.mxu0 0.0
  %280 = vmatprep.subr.mxu0 0.0
  %281 = vmatpush2.msra.mxu0 0.0
  %282 = vmatprep.subr.mxu0 0.0
  %283 = vmatpush2.msra.mxu0 0.0
  %284 = vmatprep.subr.mxu0 0.0
  %285 = vmatpush2.msra.mxu0 0.0
  %286 = vmatprep.subr.mxu0 0.0
  %287 = vmatpush2.msra.mxu0 0.0
  %288 = vmatprep.subr.mxu0 0.0
  %289 = vmatpush2.msra.mxu0 0.0
  %290 = vmatprep.subr.mxu0 0.0
  %291 = vmatpush2.msra.mxu0 0.0
  %292 = vmatprep.subr.mxu0 0.0
  %293 = vmatpush2.msra.mxu0 0.0
  %294 = vmatprep.mubr.f32.mxu0 0.0
  %295 = vmatmul.mubr.f32.gmra.mxu0 %v228
  %v296 = vpop.f32.mrf.mxu0
  %v297 = vadd.f32 %v219, %v296
  %v298 = vpop.f32.mrf.mxu0
  %v299 = vadd.f32 %v223, %v298
  %300 = vdwg.mxu0
  %v301 = vmax.f32 %v297, 0.0
  %v302 = vmax.f32 %v299, 0.0
  %v303 = vld [vmem:[%s4] sm:$0xff]
  %v304 = vld [vmem:[%s4 + $0x8] sm:$0xff]
  %v305 = vld [vmem:[%s4 + $0x10] sm:$0xff]
  %v306 = vld [vmem:[%s4 + $0x18] sm:$0xff]
  %v307 = vld [vmem:[%s4 + $0x20] sm:$0xff]
  %v308 = vld [vmem:[%s4 + $0x28] sm:$0xff]
  %v309 = vld [vmem:[%s4 + $0x30] sm:$0xff]
  %v310 = vld [vmem:[%s4 + $0x38] sm:$0xff]
  %v311 = vld [vmem:[%s4 + $0x40] sm:$0xff]
  %v312 = vld [vmem:[%s4 + $0x48] sm:$0xff]
  %v313 = vld [vmem:[%s4 + $0x50] sm:$0xff]
  %v314 = vld [vmem:[%s4 + $0x58] sm:$0xff]
  %v315 = vld [vmem:[%s4 + $0x60] sm:$0xff]
  %v316 = vld [vmem:[%s4 + $0x68] sm:$0xff]
  %v317 = vld [vmem:[%s4 + $0x70] sm:$0xff]
  %v318 = vld [vmem:[%s4 + $0x78] sm:$0xff]
  %v319 = vld [vmem:[%s4 + $0x80] sm:$0xff]
  %v320 = vld [vmem:[%s4 + $0x88] sm:$0xff]
  %v321 = vld [vmem:[%s4 + $0x90] sm:$0xff]
  %v322 = vld [vmem:[%s4 + $0x98] sm:$0xff]
  %v323 = vld [vmem:[%s4 + $0xa0] sm:$0xff]
  %v324 = vld [vmem:[%s4 + $0xa8] sm:$0xff]
  %v325 = vld [vmem:[%s4 + $0xb0] sm:$0xff]
  %v326 = vld [vmem:[%s4 + $0xb8] sm:$0xff]
  %v327 = vld [vmem:[%s4 + $0xc0] sm:$0xff]
  %v328 = vld [vmem:[%s4 + $0xc8] sm:$0xff]
  %v329 = vld [vmem:[%s4 + $0xd0] sm:$0xff]
  %v330 = vld [vmem:[%s4 + $0xd8] sm:$0xff]
  %v331 = vld [vmem:[%s4 + $0xe0] sm:$0xff]
  %v332 = vld [vmem:[%s4 + $0xe8] sm:$0xff]
  %v333 = vld [vmem:[%s4 + $0xf0] sm:$0xff]
  %v334 = vld [vmem:[%s4 + $0xf8] sm:$0xff]
  %v335 = vld [vmem:[%s4 + $0x180] sm:$0x1]
  %v336 = vlaneseq
  %v337 = vshrl.u32 %v336, 7
  %v338 = vsub.s32 0, %v337
  %v339 = vrot.slane %v335, %v338
  %340 = vmatprep.subr.mxu0 0.0
  %341 = vmatpush1.msra.mxu0 %v318
  %342 = vmatprep.subr.mxu0 0.0
  %343 = vmatpush1.msra.mxu0 %v317
  %344 = vmatprep.subr.mxu0 0.0
  %345 = vmatpush1.msra.mxu0 %v316
  %346 = vmatprep.subr.mxu0 0.0
  %347 = vmatpush1.msra.mxu0 %v315
  %348 = vmatprep.subr.mxu0 0.0
  %349 = vmatpush1.msra.mxu0 %v314
  %350 = vmatprep.subr.mxu0 0.0
  %351 = vmatpush1.msra.mxu0 %v313
  %352 = vmatprep.subr.mxu0 0.0
  %353 = vmatpush1.msra.mxu0 %v312
  %354 = vmatprep.subr.mxu0 0.0
  %355 = vmatpush1.msra.mxu0 %v311
  %356 = vmatprep.subr.mxu0 0.0
  %357 = vmatpush1.msra.mxu0 %v310
  %358 = vmatprep.subr.mxu0 0.0
  %359 = vmatpush1.msra.mxu0 %v309
  %360 = vmatprep.subr.mxu0 0.0
  %361 = vmatpush1.msra.mxu0 %v308
  %362 = vmatprep.subr.mxu0 0.0
  %363 = vmatpush1.msra.mxu0 %v307
  %364 = vmatprep.subr.mxu0 0.0
  %365 = vmatpush1.msra.mxu0 %v306
  %366 = vmatprep.subr.mxu0 0.0
  %367 = vmatpush1.msra.mxu0 %v305
  %368 = vmatprep.subr.mxu0 0.0
  %369 = vmatpush1.msra.mxu0 %v304
  %370 = vmatprep.subr.mxu0 0.0
  %371 = vmatpush1.msra.mxu0 %v303
  %372 = vmatprep.subr.mxu0 0.0
  %373 = vmatpush2.msra.mxu0 %v334
  %374 = vmatprep.subr.mxu0 0.0
  %375 = vmatpush2.msra.mxu0 %v333
  %376 = vmatprep.subr.mxu0 0.0
  %377 = vmatpush2.msra.mxu0 %v332
  %378 = vmatprep.subr.mxu0 0.0
  %379 = vmatpush2.msra.mxu0 %v331
  %380 = vmatprep.subr.mxu0 0.0
  %381 = vmatpush2.msra.mxu0 %v330
  %382 = vmatprep.subr.mxu0 0.0
  %383 = vmatpush2.msra.mxu0 %v329
  %384 = vmatprep.subr.mxu0 0.0
  %385 = vmatpush2.msra.mxu0 %v328
  %386 = vmatprep.subr.mxu0 0.0
  %387 = vmatpush2.msra.mxu0 %v327
  %388 = vmatprep.subr.mxu0 0.0
  %389 = vmatpush2.msra.mxu0 %v326
  %390 = vmatprep.subr.mxu0 0.0
  %391 = vmatpush2.msra.mxu0 %v325
  %392 = vmatprep.subr.mxu0 0.0
  %393 = vmatpush2.msra.mxu0 %v324
  %394 = vmatprep.subr.mxu0 0.0
  %395 = vmatpush2.msra.mxu0 %v323
  %396 = vmatprep.subr.mxu0 0.0
  %397 = vmatpush2.msra.mxu0 %v322
  %398 = vmatprep.subr.mxu0 0.0
  %399 = vmatpush2.msra.mxu0 %v321
  %400 = vmatprep.subr.mxu0 0.0
  %401 = vmatpush2.msra.mxu0 %v320
  %402 = vmatprep.subr.mxu0 0.0
  %403 = vmatpush2.msra.mxu0 %v319
  %404 = vmatprep.mubr.f32.mxu0 %v302
  %405 = vmatmul.mubr.f32.gmra.mxu0 %v301
  %v406 = vpop.f32.mrf.mxu0
  %v407 = vadd.f32 %v339, %v406
  %v408 = vpop.f32.mrf.mxu0
  %409 = vdwg.mxu0
  %v410 = vld [vmem:[%s7] sm:$0x1]
  %v411 = vlaneseq
  %v412 = vshrl.u32 %v411, 7
  %v413 = vsub.s32 0, %v412
  %v414 = vrot.slane %v410, %v413
  %v415 = vld [vmem:[%s7 + $0x1] sm:$0x1]
  %v416 = vlaneseq
  %v417 = vshrl.u32 %v416, 7
  %v418 = vsub.s32 0, %v417
  %v419 = vrot.slane %v415, %v418
  %v420 = vld [vmem:[%s7 + $0x2] sm:$0x1]
  %v421 = vlaneseq
  %v422 = vshrl.u32 %v421, 7
  %v423 = vsub.s32 0, %v422
  %v424 = vrot.slane %v420, %v423
  %v425 = vld [vmem:[%s7 + $0x3] sm:$0x1]
  %v426 = vlaneseq
  %v427 = vshrl.u32 %v426, 7
  %v428 = vsub.s32 0, %v427
  %v429 = vrot.slane %v425, %v428
  %s430 = scalar_lea.vmem %s6, 1
  %v431 = vld [vmem:[%s430] ss:$4 sm:$0x7]
  %v433 = vlaneseq
  %v434 = vshrl.u32 %v433, 7
  %v435 = vsub.s32 0, %v434
  %v436 = vrot.slane %v431, %v435
  %v437 = vlaneseq
  %v438 = vshrl.u32 %v437, 7
  %v439 = vsub.s32 1, %v438
  %v440 = vrot.slane %v431, %v439
  %v441 = vlaneseq
  %v442 = vshrl.u32 %v441, 7
  %v443 = vsub.s32 2, %v442
  %v444 = vrot.slane %v431, %v443
  %s448 = scalar_lea.vmem %s6, 2
  %v449 = vld [vmem:[%s448] ss:$4 sm:$0x7]
  %v451 = vlaneseq
  %v452 = vshrl.u32 %v451, 7
  %v453 = vsub.s32 0, %v452
  %v454 = vrot.slane %v449, %v453
  %v455 = vlaneseq
  %v456 = vshrl.u32 %v455, 7
  %v457 = vsub.s32 1, %v456
  %v458 = vrot.slane %v449, %v457
  %v459 = vlaneseq
  %v460 = vshrl.u32 %v459, 7
  %v461 = vsub.s32 2, %v460
  %v462 = vrot.slane %v449, %v461
  %s466 = scalar_lea.vmem %s6, 3
  %v467 = vld [vmem:[%s466] ss:$4 sm:$0x7]
  %v469 = vlaneseq
  %v470 = vshrl.u32 %v469, 7
  %v471 = vsub.s32 0, %v470
  %v472 = vrot.slane %v467, %v471
  %v473 = vlaneseq
  %v474 = vshrl.u32 %v473, 7
  %v475 = vsub.s32 1, %v474
  %v476 = vrot.slane %v467, %v475
  %v477 = vlaneseq
  %v478 = vshrl.u32 %v477, 7
  %v479 = vsub.s32 2, %v478
  %v480 = vrot.slane %v467, %v479
  %s484 = smul.u32 4, 7
  %s485 = smul.u32 %s484, 16
  %s486 = smul.u32 %s485, 3
  %s487 = sshll.u32 %s486, 4
  %488 = dma.done [#allocation4], %s487
  %v489 = vld [vmem:[#allocation2] sm:$0xff]
  %v490 = vld [vmem:[#allocation2 + $0x8] sm:$0xff]
  %v491 = vld [vmem:[#allocation2 + $0x10] sm:$0xff]
  %v492 = vld [vmem:[#allocation3] sm:$0xff]
  %v493 = vld [vmem:[#allocation3 + $0x8] sm:$0xf]
  %v494 = vld [vmem:[#allocation3 + $0xc] sm:$0xff]
  %v495 = vld [vmem:[#allocation3 + $0x14] sm:$0xf]
  %v496 = vld [vmem:[#allocation3 + $0x18] sm:$0xff]
  %v497 = vld [vmem:[#allocation3 + $0x20] sm:$0xf]
  %v498 = vld [vmem:[#allocation3 + $0x24] sm:$0xff]
  %v499 = vld [vmem:[#allocation3 + $0x2c] sm:$0xf]
  %v500 = vld [vmem:[#allocation3 + $0x30] sm:$0xff]
  %v501 = vld [vmem:[#allocation3 + $0x38] sm:$0xf]
  %v502 = vld [vmem:[#allocation3 + $0x3c] sm:$0xff]
  %v503 = vld [vmem:[#allocation3 + $0x44] sm:$0xf]
  %v504 = vld [vmem:[#allocation3 + $0x48] sm:$0xff]
  %v505 = vld [vmem:[#allocation3 + $0x50] sm:$0xf]
  %v506 = vld [vmem:[#allocation3 + $0x54] sm:$0xff]
  %v507 = vld [vmem:[#allocation3 + $0x5c] sm:$0xf]
  %v508 = vld [vmem:[#allocation3 + $0x60] sm:$0xff]
  %v509 = vld [vmem:[#allocation3 + $0x68] sm:$0xf]
  %v510 = vld [vmem:[#allocation3 + $0x6c] sm:$0xff]
  %v511 = vld [vmem:[#allocation3 + $0x74] sm:$0xf]
  %v512 = vld [vmem:[#allocation3 + $0x78] sm:$0xff]
  %v513 = vld [vmem:[#allocation3 + $0x80] sm:$0xf]
  %v514 = vld [vmem:[#allocation3 + $0x84] sm:$0xff]
  %v515 = vld [vmem:[#allocation3 + $0x8c] sm:$0xf]
  %v516 = vld [vmem:[#allocation3 + $0x90] sm:$0xff]
  %v517 = vld [vmem:[#allocation3 + $0x98] sm:$0xf]
  %v518 = vld [vmem:[#allocation3 + $0x9c] sm:$0xff]
  %v519 = vld [vmem:[#allocation3 + $0xa4] sm:$0xf]
  %v520 = vld [vmem:[#allocation3 + $0xa8] sm:$0xff]
  %v521 = vld [vmem:[#allocation3 + $0xb0] sm:$0xf]
  %v522 = vld [vmem:[#allocation3 + $0xb4] sm:$0xff]
  %v523 = vld [vmem:[#allocation3 + $0xbc] sm:$0xf]
  %v556 = vunpack.c.l.b16 %v492
  %v557 = vunpack.c.h.b16 %v492
  %v558 = vunpack.c.l.b16 %v493
  %v559 = vunpack.c.l.b16 %v494
  %v560 = vunpack.c.h.b16 %v494
  %v561 = vunpack.c.l.b16 %v495
  %v562 = vunpack.c.l.b16 %v496
  %v563 = vunpack.c.h.b16 %v496
  %v564 = vunpack.c.l.b16 %v497
  %v565 = vunpack.c.l.b16 %v498
  %v566 = vunpack.c.h.b16 %v498
  %v567 = vunpack.c.l.b16 %v499
  %v568 = vunpack.c.l.b16 %v500
  %v569 = vunpack.c.h.b16 %v500
  %v570 = vunpack.c.l.b16 %v501
  %v571 = vunpack.c.l.b16 %v502
  %v572 = vunpack.c.h.b16 %v502
  %v573 = vunpack.c.l.b16 %v503
  %v574 = vunpack.c.l.b16 %v504
  %v575 = vunpack.c.h.b16 %v504
  %v576 = vunpack.c.l.b16 %v505
  %v577 = vunpack.c.l.b16 %v506
  %v578 = vunpack.c.h.b16 %v506
  %v579 = vunpack.c.l.b16 %v507
  %v580 = vunpack.c.l.b16 %v508
  %v581 = vunpack.c.h.b16 %v508
  %v582 = vunpack.c.l.b16 %v509
  %v583 = vunpack.c.l.b16 %v510
  %v584 = vunpack.c.h.b16 %v510
  %v585 = vunpack.c.l.b16 %v511
  %v586 = vunpack.c.l.b16 %v512
  %v587 = vunpack.c.h.b16 %v512
  %v588 = vunpack.c.l.b16 %v513
  %v589 = vunpack.c.l.b16 %v514
  %v590 = vunpack.c.h.b16 %v514
  %v591 = vunpack.c.l.b16 %v515
  %v592 = vunpack.c.l.b16 %v516
  %v593 = vunpack.c.h.b16 %v516
  %v594 = vunpack.c.l.b16 %v517
  %v595 = vunpack.c.l.b16 %v518
  %v596 = vunpack.c.h.b16 %v518
  %v597 = vunpack.c.l.b16 %v519
  %v598 = vunpack.c.l.b16 %v520
  %v599 = vunpack.c.h.b16 %v520
  %v600 = vunpack.c.l.b16 %v521
  %v601 = vunpack.c.l.b16 %v522
  %v602 = vunpack.c.h.b16 %v522
  %v603 = vunpack.c.l.b16 %v523
  %v604 = vpack.c.b16 %v559, %v556
  %v605 = vpack.c.b16 %v560, %v557
  %v606 = vpack.c.b16 %v561, %v558
  %v607 = vpack.c.b16 %v565, %v562
  %v608 = vpack.c.b16 %v566, %v563
  %v609 = vpack.c.b16 %v567, %v564
  %v610 = vpack.c.b16 %v571, %v568
  %v611 = vpack.c.b16 %v572, %v569
  %v612 = vpack.c.b16 %v573, %v570
  %v613 = vpack.c.b16 %v577, %v574
  %v614 = vpack.c.b16 %v578, %v575
  %v615 = vpack.c.b16 %v579, %v576
  %v616 = vpack.c.b16 %v583, %v580
  %v617 = vpack.c.b16 %v584, %v581
  %v618 = vpack.c.b16 %v585, %v582
  %v619 = vpack.c.b16 %v589, %v586
  %v620 = vpack.c.b16 %v590, %v587
  %v621 = vpack.c.b16 %v591, %v588
  %v622 = vpack.c.b16 %v595, %v592
  %v623 = vpack.c.b16 %v596, %v593
  %v624 = vpack.c.b16 %v597, %v594
  %v625 = vpack.c.b16 %v601, %v598
  %v626 = vpack.c.b16 %v602, %v599
  %v627 = vpack.c.b16 %v603, %v600
  %652 = vmatprep.subr.bf16.mxu0 %v626
  %653 = vmatpush1.bf16.msra.mxu0 %v625
  %654 = vmatprep.subr.bf16.mxu0 %v623
  %655 = vmatpush1.bf16.msra.mxu0 %v622
  %656 = vmatprep.subr.bf16.mxu0 %v620
  %657 = vmatpush1.bf16.msra.mxu0 %v619
  %658 = vmatprep.subr.bf16.mxu0 %v617
  %659 = vmatpush1.bf16.msra.mxu0 %v616
  %660 = vmatprep.subr.bf16.mxu0 %v614
  %661 = vmatpush1.bf16.msra.mxu0 %v613
  %662 = vmatprep.subr.bf16.mxu0 %v611
  %663 = vmatpush1.bf16.msra.mxu0 %v610
  %664 = vmatprep.subr.bf16.mxu0 %v608
  %665 = vmatpush1.bf16.msra.mxu0 %v607
  %666 = vmatprep.subr.bf16.mxu0 %v605
  %667 = vmatpush1.bf16.msra.mxu0 %v604
  %668 = vmatprep.subr.bf16.mxu0 0
  %669 = vmatpush2.bf16.msra.mxu0 0
  %670 = vmatprep.subr.bf16.mxu0 0
  %671 = vmatpush2.bf16.msra.mxu0 0
  %672 = vmatprep.subr.bf16.mxu0 0
  %673 = vmatpush2.bf16.msra.mxu0 0
  %674 = vmatprep.subr.bf16.mxu0 0
  %675 = vmatpush2.bf16.msra.mxu0 0
  %676 = vmatprep.subr.bf16.mxu0 0
  %677 = vmatpush2.bf16.msra.mxu0 0
  %678 = vmatprep.subr.bf16.mxu0 0
  %679 = vmatpush2.bf16.msra.mxu0 0
  %680 = vmatprep.subr.bf16.mxu0 0
  %681 = vmatpush2.bf16.msra.mxu0 0
  %682 = vmatprep.subr.bf16.mxu0 0
  %683 = vmatpush2.bf16.msra.mxu0 0
  %684 = vmatprep.mubr.bf16.mxu0 0
  %685 = vmatmul.mubr.bf16.gmra.mxu0 0
  %v686 = vpop.f32.mrf.mxu0
  %v687 = vadd.f32 0.0, %v686
  %v688 = vpop.f32.mrf.mxu0
  %v689 = vadd.f32 0.0, %v688
  %v690 = vpop.f32.mrf.mxu0
  %v691 = vpop.f32.mrf.mxu0
  %692 = vdwg.mxu0
  %693 = vmatprep.subr.bf16.mxu0 0
  %694 = vmatpush1.bf16.msra.mxu0 %v627
  %695 = vmatprep.subr.bf16.mxu0 0
  %696 = vmatpush1.bf16.msra.mxu0 %v624
  %697 = vmatprep.subr.bf16.mxu0 0
  %698 = vmatpush1.bf16.msra.mxu0 %v621
  %699 = vmatprep.subr.bf16.mxu0 0
  %700 = vmatpush1.bf16.msra.mxu0 %v618
  %701 = vmatprep.subr.bf16.mxu0 0
  %702 = vmatpush1.bf16.msra.mxu0 %v615
  %703 = vmatprep.subr.bf16.mxu0 0
  %704 = vmatpush1.bf16.msra.mxu0 %v612
  %705 = vmatprep.subr.bf16.mxu0 0
  %706 = vmatpush1.bf16.msra.mxu0 %v609
  %707 = vmatprep.subr.bf16.mxu0 0
  %708 = vmatpush1.bf16.msra.mxu0 %v606
  %709 = vmatprep.subr.bf16.mxu0 0
  %710 = vmatpush2.bf16.msra.mxu0 0
  %711 = vmatprep.subr.bf16.mxu0 0
  %712 = vmatpush2.bf16.msra.mxu0 0
  %713 = vmatprep.subr.bf16.mxu0 0
  %714 = vmatpush2.bf16.msra.mxu0 0
  %715 = vmatprep.subr.bf16.mxu0 0
  %716 = vmatpush2.bf16.msra.mxu0 0
  %717 = vmatprep.subr.bf16.mxu0 0
  %718 = vmatpush2.bf16.msra.mxu0 0
  %719 = vmatprep.subr.bf16.mxu0 0
  %720 = vmatpush2.bf16.msra.mxu0 0
  %721 = vmatprep.subr.bf16.mxu0 0
  %722 = vmatpush2.bf16.msra.mxu0 0
  %723 = vmatprep.subr.bf16.mxu0 0
  %724 = vmatpush2.bf16.msra.mxu0 0
  %725 = vmatprep.mubr.bf16.mxu0 0
  %726 = vmatmul.mubr.bf16.gmra.mxu0 0
  %v727 = vpop.f32.mrf.mxu0
  %v728 = vadd.f32 0.0, %v727
  %v729 = vpop.f32.mrf.mxu0
  %v730 = vpop.f32.mrf.mxu0
  %v731 = vpop.f32.mrf.mxu0
  %732 = vdwg.mxu0
  %v733 = vadd.f32 %v489, %v687
  %v734 = vadd.f32 %v490, %v689
  %v735 = vmul.f32 %v733, 0.5
  %v736 = vmul.f32 %v734, 0.5
  %v737 = vtanh.pop %v735
  %v738 = vtanh.pop %v736
  %v739 = vadd.f32 %v737, 1.0
  %v740 = vadd.f32 %v738, 1.0
  %v741 = vmul.f32 %v739, 0.5
  %v742 = vmul.f32 %v740, 0.5
  %v743 = vadd.f32 %v728, %v414
  %v744 = vmul.f32 %v741, %v743
  %v745 = vadd.f32 %v491, %v744
  %v746 = vtanh.pop %v745
  %v747 = vsub.f32 1.0, %v742
  %v748 = vmul.f32 %v747, %v746
  %v749 = vmul.f32 %v742, 0.0
  %v750 = vadd.f32 %v748, %v749
  %s751 = scalar_lea.vmem [#allocation2], 24
  %v752 = vld [vmem:[%s751] sm:$0xff]
  %v753 = vld [vmem:[%s751 + $0x8] sm:$0xff]
  %v754 = vld [vmem:[%s751 + $0x10] sm:$0xff]
  %v755 = vpack.c.bf16 %v750, %v750
  %756 = vmatprep.subr.bf16.mxu0 %v626
  %757 = vmatpush1.bf16.msra.mxu0 %v625
  %758 = vmatprep.subr.bf16.mxu0 %v623
  %759 = vmatpush1.bf16.msra.mxu0 %v622
  %760 = vmatprep.subr.bf16.mxu0 %v620
  %761 = vmatpush1.bf16.msra.mxu0 %v619
  %762 = vmatprep.subr.bf16.mxu0 %v617
  %763 = vmatpush1.bf16.msra.mxu0 %v616
  %764 = vmatprep.subr.bf16.mxu0 %v614
  %765 = vmatpush1.bf16.msra.mxu0 %v613
  %766 = vmatprep.subr.bf16.mxu0 %v611
  %767 = vmatpush1.bf16.msra.mxu0 %v610
  %768 = vmatprep.subr.bf16.mxu0 %v608
  %769 = vmatpush1.bf16.msra.mxu0 %v607
  %770 = vmatprep.subr.bf16.mxu0 %v605
  %771 = vmatpush1.bf16.msra.mxu0 %v604
  %772 = vmatprep.subr.bf16.mxu0 0
  %773 = vmatpush2.bf16.msra.mxu0 0
  %774 = vmatprep.subr.bf16.mxu0 0
  %775 = vmatpush2.bf16.msra.mxu0 0
  %776 = vmatprep.subr.bf16.mxu0 0
  %777 = vmatpush2.bf16.msra.mxu0 0
  %778 = vmatprep.subr.bf16.mxu0 0
  %779 = vmatpush2.bf16.msra.mxu0 0
  %780 = vmatprep.subr.bf16.mxu0 0
  %781 = vmatpush2.bf16.msra.mxu0 0
  %782 = vmatprep.subr.bf16.mxu0 0
  %783 = vmatpush2.bf16.msra.mxu0 0
  %784 = vmatprep.subr.bf16.mxu0 0
  %785 = vmatpush2.bf16.msra.mxu0 0
  %786 = vmatprep.subr.bf16.mxu0 0
  %787 = vmatpush2.bf16.msra.mxu0 0
  %788 = vmatprep.mubr.bf16.mxu0 0
  %789 = vmatmul.mubr.bf16.gmra.mxu0 %v755
  %v790 = vpop.f32.mrf.mxu0
  %v791 = vadd.f32 0.0, %v790
  %v792 = vpop.f32.mrf.mxu0
  %v793 = vadd.f32 0.0, %v792
  %v794 = vpop.f32.mrf.mxu0
  %v795 = vpop.f32.mrf.mxu0
  %796 = vdwg.mxu0
  %797 = vmatprep.subr.bf16.mxu0 0
  %798 = vmatpush1.bf16.msra.mxu0 %v627
  %799 = vmatprep.subr.bf16.mxu0 0
  %800 = vmatpush1.bf16.msra.mxu0 %v624
  %801 = vmatprep.subr.bf16.mxu0 0
  %802 = vmatpush1.bf16.msra.mxu0 %v621
  %803 = vmatprep.subr.bf16.mxu0 0
  %804 = vmatpush1.bf16.msra.mxu0 %v618
  %805 = vmatprep.subr.bf16.mxu0 0
  %806 = vmatpush1.bf16.msra.mxu0 %v615
  %807 = vmatprep.subr.bf16.mxu0 0
  %808 = vmatpush1.bf16.msra.mxu0 %v612
  %809 = vmatprep.subr.bf16.mxu0 0
  %810 = vmatpush1.bf16.msra.mxu0 %v609
  %811 = vmatprep.subr.bf16.mxu0 0
  %812 = vmatpush1.bf16.msra.mxu0 %v606
  %813 = vmatprep.subr.bf16.mxu0 0
  %814 = vmatpush2.bf16.msra.mxu0 0
  %815 = vmatprep.subr.bf16.mxu0 0
  %816 = vmatpush2.bf16.msra.mxu0 0
  %817 = vmatprep.subr.bf16.mxu0 0
  %818 = vmatpush2.bf16.msra.mxu0 0
  %819 = vmatprep.subr.bf16.mxu0 0
  %820 = vmatpush2.bf16.msra.mxu0 0
  %821 = vmatprep.subr.bf16.mxu0 0
  %822 = vmatpush2.bf16.msra.mxu0 0
  %823 = vmatprep.subr.bf16.mxu0 0
  %824 = vmatpush2.bf16.msra.mxu0 0
  %825 = vmatprep.subr.bf16.mxu0 0
  %826 = vmatpush2.bf16.msra.mxu0 0
  %827 = vmatprep.subr.bf16.mxu0 0
  %828 = vmatpush2.bf16.msra.mxu0 0
  %829 = vmatprep.mubr.bf16.mxu0 0
  %830 = vmatmul.mubr.bf16.gmra.mxu0 %v755
  %v831 = vpop.f32.mrf.mxu0
  %v832 = vadd.f32 0.0, %v831
  %v833 = vpop.f32.mrf.mxu0
  %v834 = vpop.f32.mrf.mxu0
  %v835 = vpop.f32.mrf.mxu0
  %836 = vdwg.mxu0
  %v837 = vadd.f32 %v752, %v791
  %v838 = vadd.f32 %v753, %v793
  %v839 = vmul.f32 %v837, 0.5
  %v840 = vmul.f32 %v838, 0.5
  %v841 = vtanh.pop %v839
  %v842 = vtanh.pop %v840
  %v843 = vadd.f32 %v841, 1.0
  %v844 = vadd.f32 %v842, 1.0
  %v845 = vmul.f32 %v843, 0.5
  %v846 = vmul.f32 %v844, 0.5
  %v847 = vadd.f32 %v832, %v414
  %v848 = vmul.f32 %v845, %v847
  %v849 = vadd.f32 %v754, %v848
  %v850 = vtanh.pop %v849
  %v851 = vsub.f32 1.0, %v846
  %v852 = vmul.f32 %v851, %v850
  %v853 = vmul.f32 %v846, %v750
  %v854 = vadd.f32 %v852, %v853
  %s855 = scalar_lea.vmem [#allocation3], 768
  %v856 = vld [vmem:[%s855] sm:$0xff]
  %v857 = vld [vmem:[%s855 + $0x8] sm:$0xf]
  %v858 = vld [vmem:[%s855 + $0xc] sm:$0xff]
  %v859 = vld [vmem:[%s855 + $0x14] sm:$0xf]
  %v860 = vld [vmem:[%s855 + $0x18] sm:$0xff]
  %v861 = vld [vmem:[%s855 + $0x20] sm:$0xf]
  %v862 = vld [vmem:[%s855 + $0x24] sm:$0xff]
  %v863 = vld [vmem:[%s855 + $0x2c] sm:$0xf]
  %v864 = vld [vmem:[%s855 + $0x30] sm:$0xff]
  %v865 = vld [vmem:[%s855 + $0x38] sm:$0xf]
  %v866 = vld [vmem:[%s855 + $0x3c] sm:$0xff]
  %v867 = vld [vmem:[%s855 + $0x44] sm:$0xf]
  %v868 = vld [vmem:[%s855 + $0x48] sm:$0xff]
  %v869 = vld [vmem:[%s855 + $0x50] sm:$0xf]
  %v870 = vld [vmem:[%s855 + $0x54] sm:$0xff]
  %v871 = vld [vmem:[%s855 + $0x5c] sm:$0xf]
  %v872 = vld [vmem:[%s855 + $0x60] sm:$0xff]
  %v873 = vld [vmem:[%s855 + $0x68] sm:$0xf]
  %v874 = vld [vmem:[%s855 + $0x6c] sm:$0xff]
  %v875 = vld [vmem:[%s855 + $0x74] sm:$0xf]
  %v876 = vld [vmem:[%s855 + $0x78] sm:$0xff]
  %v877 = vld [vmem:[%s855 + $0x80] sm:$0xf]
  %v878 = vld [vmem:[%s855 + $0x84] sm:$0xff]
  %v879 = vld [vmem:[%s855 + $0x8c] sm:$0xf]
  %v880 = vld [vmem:[%s855 + $0x90] sm:$0xff]
  %v881 = vld [vmem:[%s855 + $0x98] sm:$0xf]
  %v882 = vld [vmem:[%s855 + $0x9c] sm:$0xff]
  %v883 = vld [vmem:[%s855 + $0xa4] sm:$0xf]
  %v884 = vld [vmem:[%s855 + $0xa8] sm:$0xff]
  %v885 = vld [vmem:[%s855 + $0xb0] sm:$0xf]
  %v886 = vld [vmem:[%s855 + $0xb4] sm:$0xff]
  %v887 = vld [vmem:[%s855 + $0xbc] sm:$0xf]
  %v920 = vunpack.c.l.b16 %v856
  %v921 = vunpack.c.h.b16 %v856
  %v922 = vunpack.c.l.b16 %v857
  %v923 = vunpack.c.l.b16 %v858
  %v924 = vunpack.c.h.b16 %v858
  %v925 = vunpack.c.l.b16 %v859
  %v926 = vunpack.c.l.b16 %v860
  %v927 = vunpack.c.h.b16 %v860
  %v928 = vunpack.c.l.b16 %v861
  %v929 = vunpack.c.l.b16 %v862
  %v930 = vunpack.c.h.b16 %v862
  %v931 = vunpack.c.l.b16 %v863
  %v932 = vunpack.c.l.b16 %v864
  %v933 = vunpack.c.h.b16 %v864
  %v934 = vunpack.c.l.b16 %v865
  %v935 = vunpack.c.l.b16 %v866
  %v936 = vunpack.c.h.b16 %v866
  %v937 = vunpack.c.l.b16 %v867
  %v938 = vunpack.c.l.b16 %v868
  %v939 = vunpack.c.h.b16 %v868
  %v940 = vunpack.c.l.b16 %v869
  %v941 = vunpack.c.l.b16 %v870
  %v942 = vunpack.c.h.b16 %v870
  %v943 = vunpack.c.l.b16 %v871
  %v944 = vunpack.c.l.b16 %v872
  %v945 = vunpack.c.h.b16 %v872
  %v946 = vunpack.c.l.b16 %v873
  %v947 = vunpack.c.l.b16 %v874
  %v948 = vunpack.c.h.b16 %v874
  %v949 = vunpack.c.l.b16 %v875
  %v950 = vunpack.c.l.b16 %v876
  %v951 = vunpack.c.h.b16 %v876
  %v952 = vunpack.c.l.b16 %v877
  %v953 = vunpack.c.l.b16 %v878
  %v954 = vunpack.c.h.b16 %v878
  %v955 = vunpack.c.l.b16 %v879
  %v956 = vunpack.c.l.b16 %v880
  %v957 = vunpack.c.h.b16 %v880
  %v958 = vunpack.c.l.b16 %v881
  %v959 = vunpack.c.l.b16 %v882
  %v960 = vunpack.c.h.b16 %v882
  %v961 = vunpack.c.l.b16 %v883
  %v962 = vunpack.c.l.b16 %v884
  %v963 = vunpack.c.h.b16 %v884
  %v964 = vunpack.c.l.b16 %v885
  %v965 = vunpack.c.l.b16 %v886
  %v966 = vunpack.c.h.b16 %v886
  %v967 = vunpack.c.l.b16 %v887
  %v968 = vpack.c.b16 %v923, %v920
  %v969 = vpack.c.b16 %v924, %v921
  %v970 = vpack.c.b16 %v925, %v922
  %v971 = vpack.c.b16 %v929, %v926
  %v972 = vpack.c.b16 %v930, %v927
  %v973 = vpack.c.b16 %v931, %v928
  %v974 = vpack.c.b16 %v935, %v932
  %v975 = vpack.c.b16 %v936, %v933
  %v976 = vpack.c.b16 %v937, %v934
  %v977 = vpack.c.b16 %v941, %v938
  %v978 = vpack.c.b16 %v942, %v939
  %v979 = vpack.c.b16 %v943, %v940
  %v980 = vpack.c.b16 %v947, %v944
  %v981 = vpack.c.b16 %v948, %v945
  %v982 = vpack.c.b16 %v949, %v946
  %v983 = vpack.c.b16 %v953, %v950
  %v984 = vpack.c.b16 %v954, %v951
  %v985 = vpack.c.b16 %v955, %v952
  %v986 = vpack.c.b16 %v959, %v956
  %v987 = vpack.c.b16 %v960, %v957
  %v988 = vpack.c.b16 %v961, %v958
  %v989 = vpack.c.b16 %v965, %v962
  %v990 = vpack.c.b16 %v966, %v963
  %v991 = vpack.c.b16 %v967, %v964
  %1016 = vmatprep.subr.bf16.mxu0 %v990
  %1017 = vmatpush1.bf16.msra.mxu0 %v989
  %1018 = vmatprep.subr.bf16.mxu0 %v987
  %1019 = vmatpush1.bf16.msra.mxu0 %v986
  %1020 = vmatprep.subr.bf16.mxu0 %v984
  %1021 = vmatpush1.bf16.msra.mxu0 %v983
  %1022 = vmatprep.subr.bf16.mxu0 %v981
  %1023 = vmatpush1.bf16.msra.mxu0 %v980
  %1024 = vmatprep.subr.bf16.mxu0 %v978
  %1025 = vmatpush1.bf16.msra.mxu0 %v977
  %1026 = vmatprep.subr.bf16.mxu0 %v975
  %1027 = vmatpush1.bf16.msra.mxu0 %v974
  %1028 = vmatprep.subr.bf16.mxu0 %v972
  %1029 = vmatpush1.bf16.msra.mxu0 %v971
  %1030 = vmatprep.subr.bf16.mxu0 %v969
  %1031 = vmatpush1.bf16.msra.mxu0 %v968
  %1032 = vmatprep.subr.bf16.mxu0 0
  %1033 = vmatpush2.bf16.msra.mxu0 0
  %1034 = vmatprep.subr.bf16.mxu0 0
  %1035 = vmatpush2.bf16.msra.mxu0 0
  %1036 = vmatprep.subr.bf16.mxu0 0
  %1037 = vmatpush2.bf16.msra.mxu0 0
  %1038 = vmatprep.subr.bf16.mxu0 0
  %1039 = vmatpush2.bf16.msra.mxu0 0
  %1040 = vmatprep.subr.bf16.mxu0 0
  %1041 = vmatpush2.bf16.msra.mxu0 0
  %1042 = vmatprep.subr.bf16.mxu0 0
  %1043 = vmatpush2.bf16.msra.mxu0 0
  %1044 = vmatprep.subr.bf16.mxu0 0
  %1045 = vmatpush2.bf16.msra.mxu0 0
  %1046 = vmatprep.subr.bf16.mxu0 0
  %1047 = vmatpush2.bf16.msra.mxu0 0
  %1048 = vmatprep.mubr.bf16.mxu0 0
  %1049 = vmatmul.mubr.bf16.gmra.mxu0 %v755
  %v1050 = vpop.f32.mrf.mxu0
  %v1051 = vadd.f32 %v436, %v1050
  %v1052 = vpop.f32.mrf.mxu0
  %v1053 = vadd.f32 %v440, %v1052
  %v1054 = vpop.f32.mrf.mxu0
  %v1055 = vpop.f32.mrf.mxu0
  %1056 = vdwg.mxu0
  %1057 = vmatprep.subr.bf16.mxu0 0
  %1058 = vmatpush1.bf16.msra.mxu0 %v991
  %1059 = vmatprep.subr.bf16.mxu0 0
  %1060 = vmatpush1.bf16.msra.mxu0 %v988
  %1061 = vmatprep.subr.bf16.mxu0 0
  %1062 = vmatpush1.bf16.msra.mxu0 %v985
  %1063 = vmatprep.subr.bf16.mxu0 0
  %1064 = vmatpush1.bf16.msra.mxu0 %v982
  %1065 = vmatprep.subr.bf16.mxu0 0
  %1066 = vmatpush1.bf16.msra.mxu0 %v979
  %1067 = vmatprep.subr.bf16.mxu0 0
  %1068 = vmatpush1.bf16.msra.mxu0 %v976
  %1069 = vmatprep.subr.bf16.mxu0 0
  %1070 = vmatpush1.bf16.msra.mxu0 %v973
  %1071 = vmatprep.subr.bf16.mxu0 0
  %1072 = vmatpush1.bf16.msra.mxu0 %v970
  %1073 = vmatprep.subr.bf16.mxu0 0
  %1074 = vmatpush2.bf16.msra.mxu0 0
  %1075 = vmatprep.subr.bf16.mxu0 0
  %1076 = vmatpush2.bf16.msra.mxu0 0
  %1077 = vmatprep.subr.bf16.mxu0 0
  %1078 = vmatpush2.bf16.msra.mxu0 0
  %1079 = vmatprep.subr.bf16.mxu0 0
  %1080 = vmatpush2.bf16.msra.mxu0 0
  %1081 = vmatprep.subr.bf16.mxu0 0
  %1082 = vmatpush2.bf16.msra.mxu0 0
  %1083 = vmatprep.subr.bf16.mxu0 0
  %1084 = vmatpush2.bf16.msra.mxu0 0
  %1085 = vmatprep.subr.bf16.mxu0 0
  %1086 = vmatpush2.bf16.msra.mxu0 0
  %1087 = vmatprep.subr.bf16.mxu0 0
  %1088 = vmatpush2.bf16.msra.mxu0 0
  %1089 = vmatprep.mubr.bf16.mxu0 0
  %1090 = vmatmul.mubr.bf16.gmra.mxu0 %v755
  %v1091 = vpop.f32.mrf.mxu0
  %v1092 = vadd.f32 %v444, %v1091
  %v1093 = vpop.f32.mrf.mxu0
  %v1094 = vpop.f32.mrf.mxu0
  %v1095 = vpop.f32.mrf.mxu0
  %1096 = vdwg.mxu0
  %s1097 = scalar_lea.vmem [#allocation3], 192
  %v1098 = vld [vmem:[%s1097] sm:$0xff]
  %v1099 = vld [vmem:[%s1097 + $0x8] sm:$0xf]
  %v1100 = vld [vmem:[%s1097 + $0xc] sm:$0xff]
  %v1101 = vld [vmem:[%s1097 + $0x14] sm:$0xf]
  %v1102 = vld [vmem:[%s1097 + $0x18] sm:$0xff]
  %v1103 = vld [vmem:[%s1097 + $0x20] sm:$0xf]
  %v1104 = vld [vmem:[%s1097 + $0x24] sm:$0xff]
  %v1105 = vld [vmem:[%s1097 + $0x2c] sm:$0xf]
  %v1106 = vld [vmem:[%s1097 + $0x30] sm:$0xff]
  %v1107 = vld [vmem:[%s1097 + $0x38] sm:$0xf]
  %v1108 = vld [vmem:[%s1097 + $0x3c] sm:$0xff]
  %v1109 = vld [vmem:[%s1097 + $0x44] sm:$0xf]
  %v1110 = vld [vmem:[%s1097 + $0x48] sm:$0xff]
  %v1111 = vld [vmem:[%s1097 + $0x50] sm:$0xf]
  %v1112 = vld [vmem:[%s1097 + $0x54] sm:$0xff]
  %v1113 = vld [vmem:[%s1097 + $0x5c] sm:$0xf]
  %v1114 = vld [vmem:[%s1097 + $0x60] sm:$0xff]
  %v1115 = vld [vmem:[%s1097 + $0x68] sm:$0xf]
  %v1116 = vld [vmem:[%s1097 + $0x6c] sm:$0xff]
  %v1117 = vld [vmem:[%s1097 + $0x74] sm:$0xf]
  %v1118 = vld [vmem:[%s1097 + $0x78] sm:$0xff]
  %v1119 = vld [vmem:[%s1097 + $0x80] sm:$0xf]
  %v1120 = vld [vmem:[%s1097 + $0x84] sm:$0xff]
  %v1121 = vld [vmem:[%s1097 + $0x8c] sm:$0xf]
  %v1122 = vld [vmem:[%s1097 + $0x90] sm:$0xff]
  %v1123 = vld [vmem:[%s1097 + $0x98] sm:$0xf]
  %v1124 = vld [vmem:[%s1097 + $0x9c] sm:$0xff]
  %v1125 = vld [vmem:[%s1097 + $0xa4] sm:$0xf]
  %v1126 = vld [vmem:[%s1097 + $0xa8] sm:$0xff]
  %v1127 = vld [vmem:[%s1097 + $0xb0] sm:$0xf]
  %v1128 = vld [vmem:[%s1097 + $0xb4] sm:$0xff]
  %v1129 = vld [vmem:[%s1097 + $0xbc] sm:$0xf]
  %v1162 = vunpack.c.l.b16 %v1098
  %v1163 = vunpack.c.h.b16 %v1098
  %v1164 = vunpack.c.l.b16 %v1099
  %v1165 = vunpack.c.l.b16 %v1100
  %v1166 = vunpack.c.h.b16 %v1100
  %v1167 = vunpack.c.l.b16 %v1101
  %v1168 = vunpack.c.l.b16 %v1102
  %v1169 = vunpack.c.h.b16 %v1102
  %v1170 = vunpack.c.l.b16 %v1103
  %v1171 = vunpack.c.l.b16 %v1104
  %v1172 = vunpack.c.h.b16 %v1104
  %v1173 = vunpack.c.l.b16 %v1105
  %v1174 = vunpack.c.l.b16 %v1106
  %v1175 = vunpack.c.h.b16 %v1106
  %v1176 = vunpack.c.l.b16 %v1107
  %v1177 = vunpack.c.l.b16 %v1108
  %v1178 = vunpack.c.h.b16 %v1108
  %v1179 = vunpack.c.l.b16 %v1109
  %v1180 = vunpack.c.l.b16 %v1110
  %v1181 = vunpack.c.h.b16 %v1110
  %v1182 = vunpack.c.l.b16 %v1111
  %v1183 = vunpack.c.l.b16 %v1112
  %v1184 = vunpack.c.h.b16 %v1112
  %v1185 = vunpack.c.l.b16 %v1113
  %v1186 = vunpack.c.l.b16 %v1114
  %v1187 = vunpack.c.h.b16 %v1114
  %v1188 = vunpack.c.l.b16 %v1115
  %v1189 = vunpack.c.l.b16 %v1116
  %v1190 = vunpack.c.h.b16 %v1116
  %v1191 = vunpack.c.l.b16 %v1117
  %v1192 = vunpack.c.l.b16 %v1118
  %v1193 = vunpack.c.h.b16 %v1118
  %v1194 = vunpack.c.l.b16 %v1119
  %v1195 = vunpack.c.l.b16 %v1120
  %v1196 = vunpack.c.h.b16 %v1120
  %v1197 = vunpack.c.l.b16 %v1121
  %v1198 = vunpack.c.l.b16 %v1122
  %v1199 = vunpack.c.h.b16 %v1122
  %v1200 = vunpack.c.l.b16 %v1123
  %v1201 = vunpack.c.l.b16 %v1124
  %v1202 = vunpack.c.h.b16 %v1124
  %v1203 = vunpack.c.l.b16 %v1125
  %v1204 = vunpack.c.l.b16 %v1126
  %v1205 = vunpack.c.h.b16 %v1126
  %v1206 = vunpack.c.l.b16 %v1127
  %v1207 = vunpack.c.l.b16 %v1128
  %v1208 = vunpack.c.h.b16 %v1128
  %v1209 = vunpack.c.l.b16 %v1129
  %v1210 = vpack.c.b16 %v1165, %v1162
  %v1211 = vpack.c.b16 %v1166, %v1163
  %v1212 = vpack.c.b16 %v1167, %v1164
  %v1213 = vpack.c.b16 %v1171, %v1168
  %v1214 = vpack.c.b16 %v1172, %v1169
  %v1215 = vpack.c.b16 %v1173, %v1170
  %v1216 = vpack.c.b16 %v1177, %v1174
  %v1217 = vpack.c.b16 %v1178, %v1175
  %v1218 = vpack.c.b16 %v1179, %v1176
  %v1219 = vpack.c.b16 %v1183, %v1180
  %v1220 = vpack.c.b16 %v1184, %v1181
  %v1221 = vpack.c.b16 %v1185, %v1182
  %v1222 = vpack.c.b16 %v1189, %v1186
  %v1223 = vpack.c.b16 %v1190, %v1187
  %v1224 = vpack.c.b16 %v1191, %v1188
  %v1225 = vpack.c.b16 %v1195, %v1192
  %v1226 = vpack.c.b16 %v1196, %v1193
  %v1227 = vpack.c.b16 %v1197, %v1194
  %v1228 = vpack.c.b16 %v1201, %v1198
  %v1229 = vpack.c.b16 %v1202, %v1199
  %v1230 = vpack.c.b16 %v1203, %v1200
  %v1231 = vpack.c.b16 %v1207, %v1204
  %v1232 = vpack.c.b16 %v1208, %v1205
  %v1233 = vpack.c.b16 %v1209, %v1206
  %1258 = vmatprep.subr.bf16.mxu0 %v1232
  %1259 = vmatpush1.bf16.msra.mxu0 %v1231
  %1260 = vmatprep.subr.bf16.mxu0 %v1229
  %1261 = vmatpush1.bf16.msra.mxu0 %v1228
  %1262 = vmatprep.subr.bf16.mxu0 %v1226
  %1263 = vmatpush1.bf16.msra.mxu0 %v1225
  %1264 = vmatprep.subr.bf16.mxu0 %v1223
  %1265 = vmatpush1.bf16.msra.mxu0 %v1222
  %1266 = vmatprep.subr.bf16.mxu0 %v1220
  %1267 = vmatpush1.bf16.msra.mxu0 %v1219
  %1268 = vmatprep.subr.bf16.mxu0 %v1217
  %1269 = vmatpush1.bf16.msra.mxu0 %v1216
  %1270 = vmatprep.subr.bf16.mxu0 %v1214
  %1271 = vmatpush1.bf16.msra.mxu0 %v1213
  %1272 = vmatprep.subr.bf16.mxu0 %v1211
  %1273 = vmatpush1.bf16.msra.mxu0 %v1210
  %1274 = vmatprep.subr.bf16.mxu0 0
  %1275 = vmatpush2.bf16.msra.mxu0 0
  %1276 = vmatprep.subr.bf16.mxu0 0
  %1277 = vmatpush2.bf16.msra.mxu0 0
  %1278 = vmatprep.subr.bf16.mxu0 0
  %1279 = vmatpush2.bf16.msra.mxu0 0
  %1280 = vmatprep.subr.bf16.mxu0 0
  %1281 = vmatpush2.bf16.msra.mxu0 0
  %1282 = vmatprep.subr.bf16.mxu0 0
  %1283 = vmatpush2.bf16.msra.mxu0 0
  %1284 = vmatprep.subr.bf16.mxu0 0
  %1285 = vmatpush2.bf16.msra.mxu0 0
  %1286 = vmatprep.subr.bf16.mxu0 0
  %1287 = vmatpush2.bf16.msra.mxu0 0
  %1288 = vmatprep.subr.bf16.mxu0 0
  %1289 = vmatpush2.bf16.msra.mxu0 0
  %1290 = vmatprep.mubr.bf16.mxu0 0
  %1291 = vmatmul.mubr.bf16.gmra.mxu0 0
  %v1292 = vpop.f32.mrf.mxu0
  %v1293 = vadd.f32 0.0, %v1292
  %v1294 = vpop.f32.mrf.mxu0
  %v1295 = vadd.f32 0.0, %v1294
  %v1296 = vpop.f32.mrf.mxu0
  %v1297 = vpop.f32.mrf.mxu0
  %1298 = vdwg.mxu0
  %1299 = vmatprep.subr.bf16.mxu0 0
  %1300 = vmatpush1.bf16.msra.mxu0 %v1233
  %1301 = vmatprep.subr.bf16.mxu0 0
  %1302 = vmatpush1.bf16.msra.mxu0 %v1230
  %1303 = vmatprep.subr.bf16.mxu0 0
  %1304 = vmatpush1.bf16.msra.mxu0 %v1227
  %1305 = vmatprep.subr.bf16.mxu0 0
  %1306 = vmatpush1.bf16.msra.mxu0 %v1224
  %1307 = vmatprep.subr.bf16.mxu0 0
  %1308 = vmatpush1.bf16.msra.mxu0 %v1221
  %1309 = vmatprep.subr.bf16.mxu0 0
  %1310 = vmatpush1.bf16.msra.mxu0 %v1218
  %1311 = vmatprep.subr.bf16.mxu0 0
  %1312 = vmatpush1.bf16.msra.mxu0 %v1215
  %1313 = vmatprep.subr.bf16.mxu0 0
  %1314 = vmatpush1.bf16.msra.mxu0 %v1212
  %1315 = vmatprep.subr.bf16.mxu0 0
  %1316 = vmatpush2.bf16.msra.mxu0 0
  %1317 = vmatprep.subr.bf16.mxu0 0
  %1318 = vmatpush2.bf16.msra.mxu0 0
  %1319 = vmatprep.subr.bf16.mxu0 0
  %1320 = vmatpush2.bf16.msra.mxu0 0
  %1321 = vmatprep.subr.bf16.mxu0 0
  %1322 = vmatpush2.bf16.msra.mxu0 0
  %1323 = vmatprep.subr.bf16.mxu0 0
  %1324 = vmatpush2.bf16.msra.mxu0 0
  %1325 = vmatprep.subr.bf16.mxu0 0
  %1326 = vmatpush2.bf16.msra.mxu0 0
  %1327 = vmatprep.subr.bf16.mxu0 0
  %1328 = vmatpush2.bf16.msra.mxu0 0
  %1329 = vmatprep.subr.bf16.mxu0 0
  %1330 = vmatpush2.bf16.msra.mxu0 0
  %1331 = vmatprep.mubr.bf16.mxu0 0
  %1332 = vmatmul.mubr.bf16.gmra.mxu0 0
  %v1333 = vpop.f32.mrf.mxu0
  %v1334 = vadd.f32 0.0, %v1333
  %v1335 = vpop.f32.mrf.mxu0
  %v1336 = vpop.f32.mrf.mxu0
  %v1337 = vpop.f32.mrf.mxu0
  %1338 = vdwg.mxu0
  %v1339 = vadd.f32 %v1051, %v1293
  %v1340 = vadd.f32 %v1053, %v1295
  %v1341 = vmul.f32 %v1339, 0.5
  %v1342 = vmul.f32 %v1340, 0.5
  %v1343 = vtanh.pop %v1341
  %v1344 = vtanh.pop %v1342
  %v1345 = vadd.f32 %v1343, 1.0
  %v1346 = vadd.f32 %v1344, 1.0
  %v1347 = vmul.f32 %v1345, 0.5
  %v1348 = vmul.f32 %v1346, 0.5
  %v1349 = vadd.f32 %v1334, %v419
  %v1350 = vmul.f32 %v1347, %v1349
  %v1351 = vadd.f32 %v1092, %v1350
  %v1352 = vtanh.pop %v1351
  %v1353 = vsub.f32 1.0, %v1348
  %v1354 = vmul.f32 %v1353, %v1352
  %v1355 = vmul.f32 %v1348, 0.0
  %v1356 = vadd.f32 %v1354, %v1355
  %s1357 = scalar_lea.vmem [#allocation2], 48
  %v1358 = vld [vmem:[%s1357] sm:$0xff]
  %v1359 = vld [vmem:[%s1357 + $0x8] sm:$0xff]
  %v1360 = vld [vmem:[%s1357 + $0x10] sm:$0xff]
  %v1361 = vpack.c.bf16 %v854, %v854
  %1362 = vmatprep.subr.bf16.mxu0 %v626
  %1363 = vmatpush1.bf16.msra.mxu0 %v625
  %1364 = vmatprep.subr.bf16.mxu0 %v623
  %1365 = vmatpush1.bf16.msra.mxu0 %v622
  %1366 = vmatprep.subr.bf16.mxu0 %v620
  %1367 = vmatpush1.bf16.msra.mxu0 %v619
  %1368 = vmatprep.subr.bf16.mxu0 %v617
  %1369 = vmatpush1.bf16.msra.mxu0 %v616
  %1370 = vmatprep.subr.bf16.mxu0 %v614
  %1371 = vmatpush1.bf16.msra.mxu0 %v613
  %1372 = vmatprep.subr.bf16.mxu0 %v611
  %1373 = vmatpush1.bf16.msra.mxu0 %v610
  %1374 = vmatprep.subr.bf16.mxu0 %v608
  %1375 = vmatpush1.bf16.msra.mxu0 %v607
  %1376 = vmatprep.subr.bf16.mxu0 %v605
  %1377 = vmatpush1.bf16.msra.mxu0 %v604
  %1378 = vmatprep.subr.bf16.mxu0 0
  %1379 = vmatpush2.bf16.msra.mxu0 0
  %1380 = vmatprep.subr.bf16.mxu0 0
  %1381 = vmatpush2.bf16.msra.mxu0 0
  %1382 = vmatprep.subr.bf16.mxu0 0
  %1383 = vmatpush2.bf16.msra.mxu0 0
  %1384 = vmatprep.subr.bf16.mxu0 0
  %1385 = vmatpush2.bf16.msra.mxu0 0
  %1386 = vmatprep.subr.bf16.mxu0 0
  %1387 = vmatpush2.bf16.msra.mxu0 0
  %1388 = vmatprep.subr.bf16.mxu0 0
  %1389 = vmatpush2.bf16.msra.mxu0 0
  %1390 = vmatprep.subr.bf16.mxu0 0
  %1391 = vmatpush2.bf16.msra.mxu0 0
  %1392 = vmatprep.subr.bf16.mxu0 0
  %1393 = vmatpush2.bf16.msra.mxu0 0
  %1394 = vmatprep.mubr.bf16.mxu0 0
  %1395 = vmatmul.mubr.bf16.gmra.mxu0 %v1361
  %v1396 = vpop.f32.mrf.mxu0
  %v1397 = vadd.f32 0.0, %v1396
  %v1398 = vpop.f32.mrf.mxu0
  %v1399 = vadd.f32 0.0, %v1398
  %v1400 = vpop.f32.mrf.mxu0
  %v1401 = vpop.f32.mrf.mxu0
  %1402 = vdwg.mxu0
  %1403 = vmatprep.subr.bf16.mxu0 0
  %1404 = vmatpush1.bf16.msra.mxu0 %v627
  %1405 = vmatprep.subr.bf16.mxu0 0
  %1406 = vmatpush1.bf16.msra.mxu0 %v624
  %1407 = vmatprep.subr.bf16.mxu0 0
  %1408 = vmatpush1.bf16.msra.mxu0 %v621
  %1409 = vmatprep.subr.bf16.mxu0 0
  %1410 = vmatpush1.bf16.msra.mxu0 %v618
  %1411 = vmatprep.subr.bf16.mxu0 0
  %1412 = vmatpush1.bf16.msra.mxu0 %v615
  %1413 = vmatprep.subr.bf16.mxu0 0
  %1414 = vmatpush1.bf16.msra.mxu0 %v612
  %1415 = vmatprep.subr.bf16.mxu0 0
  %1416 = vmatpush1.bf16.msra.mxu0 %v609
  %1417 = vmatprep.subr.bf16.mxu0 0
  %1418 = vmatpush1.bf16.msra.mxu0 %v606
  %1419 = vmatprep.subr.bf16.mxu0 0
  %1420 = vmatpush2.bf16.msra.mxu0 0
  %1421 = vmatprep.subr.bf16.mxu0 0
  %1422 = vmatpush2.bf16.msra.mxu0 0
  %1423 = vmatprep.subr.bf16.mxu0 0
  %1424 = vmatpush2.bf16.msra.mxu0 0
  %1425 = vmatprep.subr.bf16.mxu0 0
  %1426 = vmatpush2.bf16.msra.mxu0 0
  %1427 = vmatprep.subr.bf16.mxu0 0
  %1428 = vmatpush2.bf16.msra.mxu0 0
  %1429 = vmatprep.subr.bf16.mxu0 0
  %1430 = vmatpush2.bf16.msra.mxu0 0
  %1431 = vmatprep.subr.bf16.mxu0 0
  %1432 = vmatpush2.bf16.msra.mxu0 0
  %1433 = vmatprep.subr.bf16.mxu0 0
  %1434 = vmatpush2.bf16.msra.mxu0 0
  %1435 = vmatprep.mubr.bf16.mxu0 0
  %1436 = vmatmul.mubr.bf16.gmra.mxu0 %v1361
  %v1437 = vpop.f32.mrf.mxu0
  %v1438 = vadd.f32 0.0, %v1437
  %v1439 = vpop.f32.mrf.mxu0
  %v1440 = vpop.f32.mrf.mxu0
  %v1441 = vpop.f32.mrf.mxu0
  %1442 = vdwg.mxu0
  %v1443 = vadd.f32 %v1358, %v1397
  %v1444 = vadd.f32 %v1359, %v1399
  %v1445 = vmul.f32 %v1443, 0.5
  %v1446 = vmul.f32 %v1444, 0.5
  %v1447 = vtanh.pop %v1445
  %v1448 = vtanh.pop %v1446
  %v1449 = vadd.f32 %v1447, 1.0
  %v1450 = vadd.f32 %v1448, 1.0
  %v1451 = vmul.f32 %v1449, 0.5
  %v1452 = vmul.f32 %v1450, 0.5
  %v1453 = vadd.f32 %v1438, %v414
  %v1454 = vmul.f32 %v1451, %v1453
  %v1455 = vadd.f32 %v1360, %v1454
  %v1456 = vtanh.pop %v1455
  %v1457 = vsub.f32 1.0, %v1452
  %v1458 = vmul.f32 %v1457, %v1456
  %v1459 = vmul.f32 %v1452, %v854
  %v1460 = vadd.f32 %v1458, %v1459
  %1461 = vmatprep.subr.bf16.mxu0 %v990
  %1462 = vmatpush1.bf16.msra.mxu0 %v989
  %1463 = vmatprep.subr.bf16.mxu0 %v987
  %1464 = vmatpush1.bf16.msra.mxu0 %v986
  %1465 = vmatprep.subr.bf16.mxu0 %v984
  %1466 = vmatpush1.bf16.msra.mxu0 %v983
  %1467 = vmatprep.subr.bf16.mxu0 %v981
  %1468 = vmatpush1.bf16.msra.mxu0 %v980
  %1469 = vmatprep.subr.bf16.mxu0 %v978
  %1470 = vmatpush1.bf16.msra.mxu0 %v977
  %1471 = vmatprep.subr.bf16.mxu0 %v975
  %1472 = vmatpush1.bf16.msra.mxu0 %v974
  %1473 = vmatprep.subr.bf16.mxu0 %v972
  %1474 = vmatpush1.bf16.msra.mxu0 %v971
  %1475 = vmatprep.subr.bf16.mxu0 %v969
  %1476 = vmatpush1.bf16.msra.mxu0 %v968
  %1477 = vmatprep.subr.bf16.mxu0 0
  %1478 = vmatpush2.bf16.msra.mxu0 0
  %1479 = vmatprep.subr.bf16.mxu0 0
  %1480 = vmatpush2.bf16.msra.mxu0 0
  %1481 = vmatprep.subr.bf16.mxu0 0
  %1482 = vmatpush2.bf16.msra.mxu0 0
  %1483 = vmatprep.subr.bf16.mxu0 0
  %1484 = vmatpush2.bf16.msra.mxu0 0
  %1485 = vmatprep.subr.bf16.mxu0 0
  %1486 = vmatpush2.bf16.msra.mxu0 0
  %1487 = vmatprep.subr.bf16.mxu0 0
  %1488 = vmatpush2.bf16.msra.mxu0 0
  %1489 = vmatprep.subr.bf16.mxu0 0
  %1490 = vmatpush2.bf16.msra.mxu0 0
  %1491 = vmatprep.subr.bf16.mxu0 0
  %1492 = vmatpush2.bf16.msra.mxu0 0
  %1493 = vmatprep.mubr.bf16.mxu0 0
  %1494 = vmatmul.mubr.bf16.gmra.mxu0 %v1361
  %v1495 = vpop.f32.mrf.mxu0
  %v1496 = vadd.f32 %v436, %v1495
  %v1497 = vpop.f32.mrf.mxu0
  %v1498 = vadd.f32 %v440, %v1497
  %v1499 = vpop.f32.mrf.mxu0
  %v1500 = vpop.f32.mrf.mxu0
  %1501 = vdwg.mxu0
  %1502 = vmatprep.subr.bf16.mxu0 0
  %1503 = vmatpush1.bf16.msra.mxu0 %v991
  %1504 = vmatprep.subr.bf16.mxu0 0
  %1505 = vmatpush1.bf16.msra.mxu0 %v988
  %1506 = vmatprep.subr.bf16.mxu0 0
  %1507 = vmatpush1.bf16.msra.mxu0 %v985
  %1508 = vmatprep.subr.bf16.mxu0 0
  %1509 = vmatpush1.bf16.msra.mxu0 %v982
  %1510 = vmatprep.subr.bf16.mxu0 0
  %1511 = vmatpush1.bf16.msra.mxu0 %v979
  %1512 = vmatprep.subr.bf16.mxu0 0
  %1513 = vmatpush1.bf16.msra.mxu0 %v976
  %1514 = vmatprep.subr.bf16.mxu0 0
  %1515 = vmatpush1.bf16.msra.mxu0 %v973
  %1516 = vmatprep.subr.bf16.mxu0 0
  %1517 = vmatpush1.bf16.msra.mxu0 %v970
  %1518 = vmatprep.subr.bf16.mxu0 0
  %1519 = vmatpush2.bf16.msra.mxu0 0
  %1520 = vmatprep.subr.bf16.mxu0 0
  %1521 = vmatpush2.bf16.msra.mxu0 0
  %1522 = vmatprep.subr.bf16.mxu0 0
  %1523 = vmatpush2.bf16.msra.mxu0 0
  %1524 = vmatprep.subr.bf16.mxu0 0
  %1525 = vmatpush2.bf16.msra.mxu0 0
  %1526 = vmatprep.subr.bf16.mxu0 0
  %1527 = vmatpush2.bf16.msra.mxu0 0
  %1528 = vmatprep.subr.bf16.mxu0 0
  %1529 = vmatpush2.bf16.msra.mxu0 0
  %1530 = vmatprep.subr.bf16.mxu0 0
  %1531 = vmatpush2.bf16.msra.mxu0 0
  %1532 = vmatprep.subr.bf16.mxu0 0
  %1533 = vmatpush2.bf16.msra.mxu0 0
  %1534 = vmatprep.mubr.bf16.mxu0 0
  %1535 = vmatmul.mubr.bf16.gmra.mxu0 %v1361
  %v1536 = vpop.f32.mrf.mxu0
  %v1537 = vadd.f32 %v444, %v1536
  %v1538 = vpop.f32.mrf.mxu0
  %v1539 = vpop.f32.mrf.mxu0
  %v1540 = vpop.f32.mrf.mxu0
  %1541 = vdwg.mxu0
  %v1542 = vpack.c.bf16 %v1356, %v1356
  %1543 = vmatprep.subr.bf16.mxu0 %v1232
  %1544 = vmatpush1.bf16.msra.mxu0 %v1231
  %1545 = vmatprep.subr.bf16.mxu0 %v1229
  %1546 = vmatpush1.bf16.msra.mxu0 %v1228
  %1547 = vmatprep.subr.bf16.mxu0 %v1226
  %1548 = vmatpush1.bf16.msra.mxu0 %v1225
  %1549 = vmatprep.subr.bf16.mxu0 %v1223
  %1550 = vmatpush1.bf16.msra.mxu0 %v1222
  %1551 = vmatprep.subr.bf16.mxu0 %v1220
  %1552 = vmatpush1.bf16.msra.mxu0 %v1219
  %1553 = vmatprep.subr.bf16.mxu0 %v1217
  %1554 = vmatpush1.bf16.msra.mxu0 %v1216
  %1555 = vmatprep.subr.bf16.mxu0 %v1214
  %1556 = vmatpush1.bf16.msra.mxu0 %v1213
  %1557 = vmatprep.subr.bf16.mxu0 %v1211
  %1558 = vmatpush1.bf16.msra.mxu0 %v1210
  %1559 = vmatprep.subr.bf16.mxu0 0
  %1560 = vmatpush2.bf16.msra.mxu0 0
  %1561 = vmatprep.subr.bf16.mxu0 0
  %1562 = vmatpush2.bf16.msra.mxu0 0
  %1563 = vmatprep.subr.bf16.mxu0 0
  %1564 = vmatpush2.bf16.msra.mxu0 0
  %1565 = vmatprep.subr.bf16.mxu0 0
  %1566 = vmatpush2.bf16.msra.mxu0 0
  %1567 = vmatprep.subr.bf16.mxu0 0
  %1568 = vmatpush2.bf16.msra.mxu0 0
  %1569 = vmatprep.subr.bf16.mxu0 0
  %1570 = vmatpush2.bf16.msra.mxu0 0
  %1571 = vmatprep.subr.bf16.mxu0 0
  %1572 = vmatpush2.bf16.msra.mxu0 0
  %1573 = vmatprep.subr.bf16.mxu0 0
  %1574 = vmatpush2.bf16.msra.mxu0 0
  %1575 = vmatprep.mubr.bf16.mxu0 0
  %1576 = vmatmul.mubr.bf16.gmra.mxu0 %v1542
  %v1577 = vpop.f32.mrf.mxu0
  %v1578 = vadd.f32 0.0, %v1577
  %v1579 = vpop.f32.mrf.mxu0
  %v1580 = vadd.f32 0.0, %v1579
  %v1581 = vpop.f32.mrf.mxu0
  %v1582 = vpop.f32.mrf.mxu0
  %1583 = vdwg.mxu0
  %1584 = vmatprep.subr.bf16.mxu0 0
  %1585 = vmatpush1.bf16.msra.mxu0 %v1233
  %1586 = vmatprep.subr.bf16.mxu0 0
  %1587 = vmatpush1.bf16.msra.mxu0 %v1230
  %1588 = vmatprep.subr.bf16.mxu0 0
  %1589 = vmatpush1.bf16.msra.mxu0 %v1227
  %1590 = vmatprep.subr.bf16.mxu0 0
  %1591 = vmatpush1.bf16.msra.mxu0 %v1224
  %1592 = vmatprep.subr.bf16.mxu0 0
  %1593 = vmatpush1.bf16.msra.mxu0 %v1221
  %1594 = vmatprep.subr.bf16.mxu0 0
  %1595 = vmatpush1.bf16.msra.mxu0 %v1218
  %1596 = vmatprep.subr.bf16.mxu0 0
  %1597 = vmatpush1.bf16.msra.mxu0 %v1215
  %1598 = vmatprep.subr.bf16.mxu0 0
  %1599 = vmatpush1.bf16.msra.mxu0 %v1212
  %1600 = vmatprep.subr.bf16.mxu0 0
  %1601 = vmatpush2.bf16.msra.mxu0 0
  %1602 = vmatprep.subr.bf16.mxu0 0
  %1603 = vmatpush2.bf16.msra.mxu0 0
  %1604 = vmatprep.subr.bf16.mxu0 0
  %1605 = vmatpush2.bf16.msra.mxu0 0
  %1606 = vmatprep.subr.bf16.mxu0 0
  %1607 = vmatpush2.bf16.msra.mxu0 0
  %1608 = vmatprep.subr.bf16.mxu0 0
  %1609 = vmatpush2.bf16.msra.mxu0 0
  %1610 = vmatprep.subr.bf16.mxu0 0
  %1611 = vmatpush2.bf16.msra.mxu0 0
  %1612 = vmatprep.subr.bf16.mxu0 0
  %1613 = vmatpush2.bf16.msra.mxu0 0
  %1614 = vmatprep.subr.bf16.mxu0 0
  %1615 = vmatpush2.bf16.msra.mxu0 0
  %1616 = vmatprep.mubr.bf16.mxu0 0
  %1617 = vmatmul.mubr.bf16.gmra.mxu0 %v1542
  %v1618 = vpop.f32.mrf.mxu0
  %v1619 = vadd.f32 0.0, %v1618
  %v1620 = vpop.f32.mrf.mxu0
  %v1621 = vpop.f32.mrf.mxu0
  %v1622 = vpop.f32.mrf.mxu0
  %1623 = vdwg.mxu0
  %v1624 = vadd.f32 %v1496, %v1578
  %v1625 = vadd.f32 %v1498, %v1580
  %v1626 = vmul.f32 %v1624, 0.5
  %v1627 = vmul.f32 %v1625, 0.5
  %v1628 = vtanh.pop %v1626
  %v1629 = vtanh.pop %v1627
  %v1630 = vadd.f32 %v1628, 1.0
  %v1631 = vadd.f32 %v1629, 1.0
  %v1632 = vmul.f32 %v1630, 0.5
  %v1633 = vmul.f32 %v1631, 0.5
  %v1634 = vadd.f32 %v1619, %v419
  %v1635 = vmul.f32 %v1632, %v1634
  %v1636 = vadd.f32 %v1537, %v1635
  %v1637 = vtanh.pop %v1636
  %v1638 = vsub.f32 1.0, %v1633
  %v1639 = vmul.f32 %v1638, %v1637
  %v1640 = vmul.f32 %v1633, %v1356
  %v1641 = vadd.f32 %v1639, %v1640
  %s1642 = scalar_lea.vmem [#allocation3], 960
  %v1643 = vld [vmem:[%s1642] sm:$0xff]
  %v1644 = vld [vmem:[%s1642 + $0x8] sm:$0xf]
  %v1645 = vld [vmem:[%s1642 + $0xc] sm:$0xff]
  %v1646 = vld [vmem:[%s1642 + $0x14] sm:$0xf]
  %v1647 = vld [vmem:[%s1642 + $0x18] sm:$0xff]
  %v1648 = vld [vmem:[%s1642 + $0x20] sm:$0xf]
  %v1649 = vld [vmem:[%s1642 + $0x24] sm:$0xff]
  %v1650 = vld [vmem:[%s1642 + $0x2c] sm:$0xf]
  %v1651 = vld [vmem:[%s1642 + $0x30] sm:$0xff]
  %v1652 = vld [vmem:[%s1642 + $0x38] sm:$0xf]
  %v1653 = vld [vmem:[%s1642 + $0x3c] sm:$0xff]
  %v1654 = vld [vmem:[%s1642 + $0x44] sm:$0xf]
  %v1655 = vld [vmem:[%s1642 + $0x48] sm:$0xff]
  %v1656 = vld [vmem:[%s1642 + $0x50] sm:$0xf]
  %v1657 = vld [vmem:[%s1642 + $0x54] sm:$0xff]
  %v1658 = vld [vmem:[%s1642 + $0x5c] sm:$0xf]
  %v1659 = vld [vmem:[%s1642 + $0x60] sm:$0xff]
  %v1660 = vld [vmem:[%s1642 + $0x68] sm:$0xf]
  %v1661 = vld [vmem:[%s1642 + $0x6c] sm:$0xff]
  %v1662 = vld [vmem:[%s1642 + $0x74] sm:$0xf]
  %v1663 = vld [vmem:[%s1642 + $0x78] sm:$0xff]
  %v1664 = vld [vmem:[%s1642 + $0x80] sm:$0xf]
  %v1665 = vld [vmem:[%s1642 + $0x84] sm:$0xff]
  %v1666 = vld [vmem:[%s1642 + $0x8c] sm:$0xf]
  %v1667 = vld [vmem:[%s1642 + $0x90] sm:$0xff]
  %v1668 = vld [vmem:[%s1642 + $0x98] sm:$0xf]
  %v1669 = vld [vmem:[%s1642 + $0x9c] sm:$0xff]
  %v1670 = vld [vmem:[%s1642 + $0xa4] sm:$0xf]
  %v1671 = vld [vmem:[%s1642 + $0xa8] sm:$0xff]
  %v1672 = vld [vmem:[%s1642 + $0xb0] sm:$0xf]
  %v1673 = vld [vmem:[%s1642 + $0xb4] sm:$0xff]
  %v1674 = vld [vmem:[%s1642 + $0xbc] sm:$0xf]
  %v1707 = vunpack.c.l.b16 %v1643
  %v1708 = vunpack.c.h.b16 %v1643
  %v1709 = vunpack.c.l.b16 %v1644
  %v1710 = vunpack.c.l.b16 %v1645
  %v1711 = vunpack.c.h.b16 %v1645
  %v1712 = vunpack.c.l.b16 %v1646
  %v1713 = vunpack.c.l.b16 %v1647
  %v1714 = vunpack.c.h.b16 %v1647
  %v1715 = vunpack.c.l.b16 %v1648
  %v1716 = vunpack.c.l.b16 %v1649
  %v1717 = vunpack.c.h.b16 %v1649
  %v1718 = vunpack.c.l.b16 %v1650
  %v1719 = vunpack.c.l.b16 %v1651
  %v1720 = vunpack.c.h.b16 %v1651
  %v1721 = vunpack.c.l.b16 %v1652
  %v1722 = vunpack.c.l.b16 %v1653
  %v1723 = vunpack.c.h.b16 %v1653
  %v1724 = vunpack.c.l.b16 %v1654
  %v1725 = vunpack.c.l.b16 %v1655
  %v1726 = vunpack.c.h.b16 %v1655
  %v1727 = vunpack.c.l.b16 %v1656
  %v1728 = vunpack.c.l.b16 %v1657
  %v1729 = vunpack.c.h.b16 %v1657
  %v1730 = vunpack.c.l.b16 %v1658
  %v1731 = vunpack.c.l.b16 %v1659
  %v1732 = vunpack.c.h.b16 %v1659
  %v1733 = vunpack.c.l.b16 %v1660
  %v1734 = vunpack.c.l.b16 %v1661
  %v1735 = vunpack.c.h.b16 %v1661
  %v1736 = vunpack.c.l.b16 %v1662
  %v1737 = vunpack.c.l.b16 %v1663
  %v1738 = vunpack.c.h.b16 %v1663
  %v1739 = vunpack.c.l.b16 %v1664
  %v1740 = vunpack.c.l.b16 %v1665
  %v1741 = vunpack.c.h.b16 %v1665
  %v1742 = vunpack.c.l.b16 %v1666
  %v1743 = vunpack.c.l.b16 %v1667
  %v1744 = vunpack.c.h.b16 %v1667
  %v1745 = vunpack.c.l.b16 %v1668
  %v1746 = vunpack.c.l.b16 %v1669
  %v1747 = vunpack.c.h.b16 %v1669
  %v1748 = vunpack.c.l.b16 %v1670
  %v1749 = vunpack.c.l.b16 %v1671
  %v1750 = vunpack.c.h.b16 %v1671
  %v1751 = vunpack.c.l.b16 %v1672
  %v1752 = vunpack.c.l.b16 %v1673
  %v1753 = vunpack.c.h.b16 %v1673
  %v1754 = vunpack.c.l.b16 %v1674
  %v1755 = vpack.c.b16 %v1710, %v1707
  %v1756 = vpack.c.b16 %v1711, %v1708
  %v1757 = vpack.c.b16 %v1712, %v1709
  %v1758 = vpack.c.b16 %v1716, %v1713
  %v1759 = vpack.c.b16 %v1717, %v1714
  %v1760 = vpack.c.b16 %v1718, %v1715
  %v1761 = vpack.c.b16 %v1722, %v1719
  %v1762 = vpack.c.b16 %v1723, %v1720
  %v1763 = vpack.c.b16 %v1724, %v1721
  %v1764 = vpack.c.b16 %v1728, %v1725
  %v1765 = vpack.c.b16 %v1729, %v1726
  %v1766 = vpack.c.b16 %v1730, %v1727
  %v1767 = vpack.c.b16 %v1734, %v1731
  %v1768 = vpack.c.b16 %v1735, %v1732
  %v1769 = vpack.c.b16 %v1736, %v1733
  %v1770 = vpack.c.b16 %v1740, %v1737
  %v1771 = vpack.c.b16 %v1741, %v1738
  %v1772 = vpack.c.b16 %v1742, %v1739
  %v1773 = vpack.c.b16 %v1746, %v1743
  %v1774 = vpack.c.b16 %v1747, %v1744
  %v1775 = vpack.c.b16 %v1748, %v1745
  %v1776 = vpack.c.b16 %v1752, %v1749
  %v1777 = vpack.c.b16 %v1753, %v1750
  %v1778 = vpack.c.b16 %v1754, %v1751
  %1803 = vmatprep.subr.bf16.mxu0 %v1777
  %1804 = vmatpush1.bf16.msra.mxu0 %v1776
  %1805 = vmatprep.subr.bf16.mxu0 %v1774
  %1806 = vmatpush1.bf16.msra.mxu0 %v1773
  %1807 = vmatprep.subr.bf16.mxu0 %v1771
  %1808 = vmatpush1.bf16.msra.mxu0 %v1770
  %1809 = vmatprep.subr.bf16.mxu0 %v1768
  %1810 = vmatpush1.bf16.msra.mxu0 %v1767
  %1811 = vmatprep.subr.bf16.mxu0 %v1765
  %1812 = vmatpush1.bf16.msra.mxu0 %v1764
  %1813 = vmatprep.subr.bf16.mxu0 %v1762
  %1814 = vmatpush1.bf16.msra.mxu0 %v1761
  %1815 = vmatprep.subr.bf16.mxu0 %v1759
  %1816 = vmatpush1.bf16.msra.mxu0 %v1758
  %1817 = vmatprep.subr.bf16.mxu0 %v1756
  %1818 = vmatpush1.bf16.msra.mxu0 %v1755
  %1819 = vmatprep.subr.bf16.mxu0 0
  %1820 = vmatpush2.bf16.msra.mxu0 0
  %1821 = vmatprep.subr.bf16.mxu0 0
  %1822 = vmatpush2.bf16.msra.mxu0 0
  %1823 = vmatprep.subr.bf16.mxu0 0
  %1824 = vmatpush2.bf16.msra.mxu0 0
  %1825 = vmatprep.subr.bf16.mxu0 0
  %1826 = vmatpush2.bf16.msra.mxu0 0
  %1827 = vmatprep.subr.bf16.mxu0 0
  %1828 = vmatpush2.bf16.msra.mxu0 0
  %1829 = vmatprep.subr.bf16.mxu0 0
  %1830 = vmatpush2.bf16.msra.mxu0 0
  %1831 = vmatprep.subr.bf16.mxu0 0
  %1832 = vmatpush2.bf16.msra.mxu0 0
  %1833 = vmatprep.subr.bf16.mxu0 0
  %1834 = vmatpush2.bf16.msra.mxu0 0
  %1835 = vmatprep.mubr.bf16.mxu0 0
  %1836 = vmatmul.mubr.bf16.gmra.mxu0 %v1542
  %v1837 = vpop.f32.mrf.mxu0
  %v1838 = vadd.f32 %v454, %v1837
  %v1839 = vpop.f32.mrf.mxu0
  %v1840 = vadd.f32 %v458, %v1839
  %v1841 = vpop.f32.mrf.mxu0
  %v1842 = vpop.f32.mrf.mxu0
  %1843 = vdwg.mxu0
  %1844 = vmatprep.subr.bf16.mxu0 0
  %1845 = vmatpush1.bf16.msra.mxu0 %v1778
  %1846 = vmatprep.subr.bf16.mxu0 0
  %1847 = vmatpush1.bf16.msra.mxu0 %v1775
  %1848 = vmatprep.subr.bf16.mxu0 0
  %1849 = vmatpush1.bf16.msra.mxu0 %v1772
  %1850 = vmatprep.subr.bf16.mxu0 0
  %1851 = vmatpush1.bf16.msra.mxu0 %v1769
  %1852 = vmatprep.subr.bf16.mxu0 0
  %1853 = vmatpush1.bf16.msra.mxu0 %v1766
  %1854 = vmatprep.subr.bf16.mxu0 0
  %1855 = vmatpush1.bf16.msra.mxu0 %v1763
  %1856 = vmatprep.subr.bf16.mxu0 0
  %1857 = vmatpush1.bf16.msra.mxu0 %v1760
  %1858 = vmatprep.subr.bf16.mxu0 0
  %1859 = vmatpush1.bf16.msra.mxu0 %v1757
  %1860 = vmatprep.subr.bf16.mxu0 0
  %1861 = vmatpush2.bf16.msra.mxu0 0
  %1862 = vmatprep.subr.bf16.mxu0 0
  %1863 = vmatpush2.bf16.msra.mxu0 0
  %1864 = vmatprep.subr.bf16.mxu0 0
  %1865 = vmatpush2.bf16.msra.mxu0 0
  %1866 = vmatprep.subr.bf16.mxu0 0
  %1867 = vmatpush2.bf16.msra.mxu0 0
  %1868 = vmatprep.subr.bf16.mxu0 0
  %1869 = vmatpush2.bf16.msra.mxu0 0
  %1870 = vmatprep.subr.bf16.mxu0 0
  %1871 = vmatpush2.bf16.msra.mxu0 0
  %1872 = vmatprep.subr.bf16.mxu0 0
  %1873 = vmatpush2.bf16.msra.mxu0 0
  %1874 = vmatprep.subr.bf16.mxu0 0
  %1875 = vmatpush2.bf16.msra.mxu0 0
  %1876 = vmatprep.mubr.bf16.mxu0 0
  %1877 = vmatmul.mubr.bf16.gmra.mxu0 %v1542
  %v1878 = vpop.f32.mrf.mxu0
  %v1879 = vadd.f32 %v462, %v1878
  %v1880 = vpop.f32.mrf.mxu0
  %v1881 = vpop.f32.mrf.mxu0
  %v1882 = vpop.f32.mrf.mxu0
  %1883 = vdwg.mxu0
  %s1884 = scalar_lea.vmem [#allocation3], 384
  %v1885 = vld [vmem:[%s1884] sm:$0xff]
  %v1886 = vld [vmem:[%s1884 + $0x8] sm:$0xf]
  %v1887 = vld [vmem:[%s1884 + $0xc] sm:$0xff]
  %v1888 = vld [vmem:[%s1884 + $0x14] sm:$0xf]
  %v1889 = vld [vmem:[%s1884 + $0x18] sm:$0xff]
  %v1890 = vld [vmem:[%s1884 + $0x20] sm:$0xf]
  %v1891 = vld [vmem:[%s1884 + $0x24] sm:$0xff]
  %v1892 = vld [vmem:[%s1884 + $0x2c] sm:$0xf]
  %v1893 = vld [vmem:[%s1884 + $0x30] sm:$0xff]
  %v1894 = vld [vmem:[%s1884 + $0x38] sm:$0xf]
  %v1895 = vld [vmem:[%s1884 + $0x3c] sm:$0xff]
  %v1896 = vld [vmem:[%s1884 + $0x44] sm:$0xf]
  %v1897 = vld [vmem:[%s1884 + $0x48] sm:$0xff]
  %v1898 = vld [vmem:[%s1884 + $0x50] sm:$0xf]
  %v1899 = vld [vmem:[%s1884 + $0x54] sm:$0xff]
  %v1900 = vld [vmem:[%s1884 + $0x5c] sm:$0xf]
  %v1901 = vld [vmem:[%s1884 + $0x60] sm:$0xff]
  %v1902 = vld [vmem:[%s1884 + $0x68] sm:$0xf]
  %v1903 = vld [vmem:[%s1884 + $0x6c] sm:$0xff]
  %v1904 = vld [vmem:[%s1884 + $0x74] sm:$0xf]
  %v1905 = vld [vmem:[%s1884 + $0x78] sm:$0xff]
  %v1906 = vld [vmem:[%s1884 + $0x80] sm:$0xf]
  %v1907 = vld [vmem:[%s1884 + $0x84] sm:$0xff]
  %v1908 = vld [vmem:[%s1884 + $0x8c] sm:$0xf]
  %v1909 = vld [vmem:[%s1884 + $0x90] sm:$0xff]
  %v1910 = vld [vmem:[%s1884 + $0x98] sm:$0xf]
  %v1911 = vld [vmem:[%s1884 + $0x9c] sm:$0xff]
  %v1912 = vld [vmem:[%s1884 + $0xa4] sm:$0xf]
  %v1913 = vld [vmem:[%s1884 + $0xa8] sm:$0xff]
  %v1914 = vld [vmem:[%s1884 + $0xb0] sm:$0xf]
  %v1915 = vld [vmem:[%s1884 + $0xb4] sm:$0xff]
  %v1916 = vld [vmem:[%s1884 + $0xbc] sm:$0xf]
  %v1949 = vunpack.c.l.b16 %v1885
  %v1950 = vunpack.c.h.b16 %v1885
  %v1951 = vunpack.c.l.b16 %v1886
  %v1952 = vunpack.c.l.b16 %v1887
  %v1953 = vunpack.c.h.b16 %v1887
  %v1954 = vunpack.c.l.b16 %v1888
  %v1955 = vunpack.c.l.b16 %v1889
  %v1956 = vunpack.c.h.b16 %v1889
  %v1957 = vunpack.c.l.b16 %v1890
  %v1958 = vunpack.c.l.b16 %v1891
  %v1959 = vunpack.c.h.b16 %v1891
  %v1960 = vunpack.c.l.b16 %v1892
  %v1961 = vunpack.c.l.b16 %v1893
  %v1962 = vunpack.c.h.b16 %v1893
  %v1963 = vunpack.c.l.b16 %v1894
  %v1964 = vunpack.c.l.b16 %v1895
  %v1965 = vunpack.c.h.b16 %v1895
  %v1966 = vunpack.c.l.b16 %v1896
  %v1967 = vunpack.c.l.b16 %v1897
  %v1968 = vunpack.c.h.b16 %v1897
  %v1969 = vunpack.c.l.b16 %v1898
  %v1970 = vunpack.c.l.b16 %v1899
  %v1971 = vunpack.c.h.b16 %v1899
  %v1972 = vunpack.c.l.b16 %v1900
  %v1973 = vunpack.c.l.b16 %v1901
  %v1974 = vunpack.c.h.b16 %v1901
  %v1975 = vunpack.c.l.b16 %v1902
  %v1976 = vunpack.c.l.b16 %v1903
  %v1977 = vunpack.c.h.b16 %v1903
  %v1978 = vunpack.c.l.b16 %v1904
  %v1979 = vunpack.c.l.b16 %v1905
  %v1980 = vunpack.c.h.b16 %v1905
  %v1981 = vunpack.c.l.b16 %v1906
  %v1982 = vunpack.c.l.b16 %v1907
  %v1983 = vunpack.c.h.b16 %v1907
  %v1984 = vunpack.c.l.b16 %v1908
  %v1985 = vunpack.c.l.b16 %v1909
  %v1986 = vunpack.c.h.b16 %v1909
  %v1987 = vunpack.c.l.b16 %v1910
  %v1988 = vunpack.c.l.b16 %v1911
  %v1989 = vunpack.c.h.b16 %v1911
  %v1990 = vunpack.c.l.b16 %v1912
  %v1991 = vunpack.c.l.b16 %v1913
  %v1992 = vunpack.c.h.b16 %v1913
  %v1993 = vunpack.c.l.b16 %v1914
  %v1994 = vunpack.c.l.b16 %v1915
  %v1995 = vunpack.c.h.b16 %v1915
  %v1996 = vunpack.c.l.b16 %v1916
  %v1997 = vpack.c.b16 %v1952, %v1949
  %v1998 = vpack.c.b16 %v1953, %v1950
  %v1999 = vpack.c.b16 %v1954, %v1951
  %v2000 = vpack.c.b16 %v1958, %v1955
  %v2001 = vpack.c.b16 %v1959, %v1956
  %v2002 = vpack.c.b16 %v1960, %v1957
  %v2003 = vpack.c.b16 %v1964, %v1961
  %v2004 = vpack.c.b16 %v1965, %v1962
  %v2005 = vpack.c.b16 %v1966, %v1963
  %v2006 = vpack.c.b16 %v1970, %v1967
  %v2007 = vpack.c.b16 %v1971, %v1968
  %v2008 = vpack.c.b16 %v1972, %v1969
  %v2009 = vpack.c.b16 %v1976, %v1973
  %v2010 = vpack.c.b16 %v1977, %v1974
  %v2011 = vpack.c.b16 %v1978, %v1975
  %v2012 = vpack.c.b16 %v1982, %v1979
  %v2013 = vpack.c.b16 %v1983, %v1980
  %v2014 = vpack.c.b16 %v1984, %v1981
  %v2015 = vpack.c.b16 %v1988, %v1985
  %v2016 = vpack.c.b16 %v1989, %v1986
  %v2017 = vpack.c.b16 %v1990, %v1987
  %v2018 = vpack.c.b16 %v1994, %v1991
  %v2019 = vpack.c.b16 %v1995, %v1992
  %v2020 = vpack.c.b16 %v1996, %v1993
  %2045 = vmatprep.subr.bf16.mxu0 %v2019
  %2046 = vmatpush1.bf16.msra.mxu0 %v2018
  %2047 = vmatprep.subr.bf16.mxu0 %v2016
  %2048 = vmatpush1.bf16.msra.mxu0 %v2015
  %2049 = vmatprep.subr.bf16.mxu0 %v2013
  %2050 = vmatpush1.bf16.msra.mxu0 %v2012
  %2051 = vmatprep.subr.bf16.mxu0 %v2010
  %2052 = vmatpush1.bf16.msra.mxu0 %v2009
  %2053 = vmatprep.subr.bf16.mxu0 %v2007
  %2054 = vmatpush1.bf16.msra.mxu0 %v2006
  %2055 = vmatprep.subr.bf16.mxu0 %v2004
  %2056 = vmatpush1.bf16.msra.mxu0 %v2003
  %2057 = vmatprep.subr.bf16.mxu0 %v2001
  %2058 = vmatpush1.bf16.msra.mxu0 %v2000
  %2059 = vmatprep.subr.bf16.mxu0 %v1998
  %2060 = vmatpush1.bf16.msra.mxu0 %v1997
  %2061 = vmatprep.subr.bf16.mxu0 0
  %2062 = vmatpush2.bf16.msra.mxu0 0
  %2063 = vmatprep.subr.bf16.mxu0 0
  %2064 = vmatpush2.bf16.msra.mxu0 0
  %2065 = vmatprep.subr.bf16.mxu0 0
  %2066 = vmatpush2.bf16.msra.mxu0 0
  %2067 = vmatprep.subr.bf16.mxu0 0
  %2068 = vmatpush2.bf16.msra.mxu0 0
  %2069 = vmatprep.subr.bf16.mxu0 0
  %2070 = vmatpush2.bf16.msra.mxu0 0
  %2071 = vmatprep.subr.bf16.mxu0 0
  %2072 = vmatpush2.bf16.msra.mxu0 0
  %2073 = vmatprep.subr.bf16.mxu0 0
  %2074 = vmatpush2.bf16.msra.mxu0 0
  %2075 = vmatprep.subr.bf16.mxu0 0
  %2076 = vmatpush2.bf16.msra.mxu0 0
  %2077 = vmatprep.mubr.bf16.mxu0 0
  %2078 = vmatmul.mubr.bf16.gmra.mxu0 0
  %v2079 = vpop.f32.mrf.mxu0
  %v2080 = vadd.f32 0.0, %v2079
  %v2081 = vpop.f32.mrf.mxu0
  %v2082 = vadd.f32 0.0, %v2081
  %v2083 = vpop.f32.mrf.mxu0
  %v2084 = vpop.f32.mrf.mxu0
  %2085 = vdwg.mxu0
  %2086 = vmatprep.subr.bf16.mxu0 0
  %2087 = vmatpush1.bf16.msra.mxu0 %v2020
  %2088 = vmatprep.subr.bf16.mxu0 0
  %2089 = vmatpush1.bf16.msra.mxu0 %v2017
  %2090 = vmatprep.subr.bf16.mxu0 0
  %2091 = vmatpush1.bf16.msra.mxu0 %v2014
  %2092 = vmatprep.subr.bf16.mxu0 0
  %2093 = vmatpush1.bf16.msra.mxu0 %v2011
  %2094 = vmatprep.subr.bf16.mxu0 0
  %2095 = vmatpush1.bf16.msra.mxu0 %v2008
  %2096 = vmatprep.subr.bf16.mxu0 0
  %2097 = vmatpush1.bf16.msra.mxu0 %v2005
  %2098 = vmatprep.subr.bf16.mxu0 0
  %2099 = vmatpush1.bf16.msra.mxu0 %v2002
  %2100 = vmatprep.subr.bf16.mxu0 0
  %2101 = vmatpush1.bf16.msra.mxu0 %v1999
  %2102 = vmatprep.subr.bf16.mxu0 0
  %2103 = vmatpush2.bf16.msra.mxu0 0
  %2104 = vmatprep.subr.bf16.mxu0 0
  %2105 = vmatpush2.bf16.msra.mxu0 0
  %2106 = vmatprep.subr.bf16.mxu0 0
  %2107 = vmatpush2.bf16.msra.mxu0 0
  %2108 = vmatprep.subr.bf16.mxu0 0
  %2109 = vmatpush2.bf16.msra.mxu0 0
  %2110 = vmatprep.subr.bf16.mxu0 0
  %2111 = vmatpush2.bf16.msra.mxu0 0
  %2112 = vmatprep.subr.bf16.mxu0 0
  %2113 = vmatpush2.bf16.msra.mxu0 0
  %2114 = vmatprep.subr.bf16.mxu0 0
  %2115 = vmatpush2.bf16.msra.mxu0 0
  %2116 = vmatprep.subr.bf16.mxu0 0
  %2117 = vmatpush2.bf16.msra.mxu0 0
  %2118 = vmatprep.mubr.bf16.mxu0 0
  %2119 = vmatmul.mubr.bf16.gmra.mxu0 0
  %v2120 = vpop.f32.mrf.mxu0
  %v2121 = vadd.f32 0.0, %v2120
  %v2122 = vpop.f32.mrf.mxu0
  %v2123 = vpop.f32.mrf.mxu0
  %v2124 = vpop.f32.mrf.mxu0
  %2125 = vdwg.mxu0
  %v2126 = vadd.f32 %v1838, %v2080
  %v2127 = vadd.f32 %v1840, %v2082
  %v2128 = vmul.f32 %v2126, 0.5
  %v2129 = vmul.f32 %v2127, 0.5
  %v2130 = vtanh.pop %v2128
  %v2131 = vtanh.pop %v2129
  %v2132 = vadd.f32 %v2130, 1.0
  %v2133 = vadd.f32 %v2131, 1.0
  %v2134 = vmul.f32 %v2132, 0.5
  %v2135 = vmul.f32 %v2133, 0.5
  %v2136 = vadd.f32 %v2121, %v424
  %v2137 = vmul.f32 %v2134, %v2136
  %v2138 = vadd.f32 %v1879, %v2137
  %v2139 = vtanh.pop %v2138
  %v2140 = vsub.f32 1.0, %v2135
  %v2141 = vmul.f32 %v2140, %v2139
  %v2142 = vmul.f32 %v2135, 0.0
  %v2143 = vadd.f32 %v2141, %v2142
  %s2144 = scalar_lea.vmem [#allocation2], 72
  %v2145 = vld [vmem:[%s2144] sm:$0xff]
  %v2146 = vld [vmem:[%s2144 + $0x8] sm:$0xff]
  %v2147 = vld [vmem:[%s2144 + $0x10] sm:$0xff]
  %v2148 = vpack.c.bf16 %v1460, %v1460
  %2149 = vmatprep.subr.bf16.mxu0 %v626
  %2150 = vmatpush1.bf16.msra.mxu0 %v625
  %2151 = vmatprep.subr.bf16.mxu0 %v623
  %2152 = vmatpush1.bf16.msra.mxu0 %v622
  %2153 = vmatprep.subr.bf16.mxu0 %v620
  %2154 = vmatpush1.bf16.msra.mxu0 %v619
  %2155 = vmatprep.subr.bf16.mxu0 %v617
  %2156 = vmatpush1.bf16.msra.mxu0 %v616
  %2157 = vmatprep.subr.bf16.mxu0 %v614
  %2158 = vmatpush1.bf16.msra.mxu0 %v613
  %2159 = vmatprep.subr.bf16.mxu0 %v611
  %2160 = vmatpush1.bf16.msra.mxu0 %v610
  %2161 = vmatprep.subr.bf16.mxu0 %v608
  %2162 = vmatpush1.bf16.msra.mxu0 %v607
  %2163 = vmatprep.subr.bf16.mxu0 %v605
  %2164 = vmatpush1.bf16.msra.mxu0 %v604
  %2165 = vmatprep.subr.bf16.mxu0 0
  %2166 = vmatpush2.bf16.msra.mxu0 0
  %2167 = vmatprep.subr.bf16.mxu0 0
  %2168 = vmatpush2.bf16.msra.mxu0 0
  %2169 = vmatprep.subr.bf16.mxu0 0
  %2170 = vmatpush2.bf16.msra.mxu0 0
  %2171 = vmatprep.subr.bf16.mxu0 0
  %2172 = vmatpush2.bf16.msra.mxu0 0
  %2173 = vmatprep.subr.bf16.mxu0 0
  %2174 = vmatpush2.bf16.msra.mxu0 0
  %2175 = vmatprep.subr.bf16.mxu0 0
  %2176 = vmatpush2.bf16.msra.mxu0 0
  %2177 = vmatprep.subr.bf16.mxu0 0
  %2178 = vmatpush2.bf16.msra.mxu0 0
  %2179 = vmatprep.subr.bf16.mxu0 0
  %2180 = vmatpush2.bf16.msra.mxu0 0
  %2181 = vmatprep.mubr.bf16.mxu0 0
  %2182 = vmatmul.mubr.bf16.gmra.mxu0 %v2148
  %v2183 = vpop.f32.mrf.mxu0
  %v2184 = vadd.f32 0.0, %v2183
  %v2185 = vpop.f32.mrf.mxu0
  %v2186 = vadd.f32 0.0, %v2185
  %v2187 = vpop.f32.mrf.mxu0
  %v2188 = vpop.f32.mrf.mxu0
  %2189 = vdwg.mxu0
  %2190 = vmatprep.subr.bf16.mxu0 0
  %2191 = vmatpush1.bf16.msra.mxu0 %v627
  %2192 = vmatprep.subr.bf16.mxu0 0
  %2193 = vmatpush1.bf16.msra.mxu0 %v624
  %2194 = vmatprep.subr.bf16.mxu0 0
  %2195 = vmatpush1.bf16.msra.mxu0 %v621
  %2196 = vmatprep.subr.bf16.mxu0 0
  %2197 = vmatpush1.bf16.msra.mxu0 %v618
  %2198 = vmatprep.subr.bf16.mxu0 0
  %2199 = vmatpush1.bf16.msra.mxu0 %v615
  %2200 = vmatprep.subr.bf16.mxu0 0
  %2201 = vmatpush1.bf16.msra.mxu0 %v612
  %2202 = vmatprep.subr.bf16.mxu0 0
  %2203 = vmatpush1.bf16.msra.mxu0 %v609
  %2204 = vmatprep.subr.bf16.mxu0 0
  %2205 = vmatpush1.bf16.msra.mxu0 %v606
  %2206 = vmatprep.subr.bf16.mxu0 0
  %2207 = vmatpush2.bf16.msra.mxu0 0
  %2208 = vmatprep.subr.bf16.mxu0 0
  %2209 = vmatpush2.bf16.msra.mxu0 0
  %2210 = vmatprep.subr.bf16.mxu0 0
  %2211 = vmatpush2.bf16.msra.mxu0 0
  %2212 = vmatprep.subr.bf16.mxu0 0
  %2213 = vmatpush2.bf16.msra.mxu0 0
  %2214 = vmatprep.subr.bf16.mxu0 0
  %2215 = vmatpush2.bf16.msra.mxu0 0
  %2216 = vmatprep.subr.bf16.mxu0 0
  %2217 = vmatpush2.bf16.msra.mxu0 0
  %2218 = vmatprep.subr.bf16.mxu0 0
  %2219 = vmatpush2.bf16.msra.mxu0 0
  %2220 = vmatprep.subr.bf16.mxu0 0
  %2221 = vmatpush2.bf16.msra.mxu0 0
  %2222 = vmatprep.mubr.bf16.mxu0 0
  %2223 = vmatmul.mubr.bf16.gmra.mxu0 %v2148
  %v2224 = vpop.f32.mrf.mxu0
  %v2225 = vadd.f32 0.0, %v2224
  %v2226 = vpop.f32.mrf.mxu0
  %v2227 = vpop.f32.mrf.mxu0
  %v2228 = vpop.f32.mrf.mxu0
  %2229 = vdwg.mxu0
  %v2230 = vadd.f32 %v2145, %v2184
  %v2231 = vadd.f32 %v2146, %v2186
  %v2232 = vmul.f32 %v2230, 0.5
  %v2233 = vmul.f32 %v2231, 0.5
  %v2234 = vtanh.pop %v2232
  %v2235 = vtanh.pop %v2233
  %v2236 = vadd.f32 %v2234, 1.0
  %v2237 = vadd.f32 %v2235, 1.0
  %v2238 = vmul.f32 %v2236, 0.5
  %v2239 = vmul.f32 %v2237, 0.5
  %v2240 = vadd.f32 %v2225, %v414
  %v2241 = vmul.f32 %v2238, %v2240
  %v2242 = vadd.f32 %v2147, %v2241
  %v2243 = vtanh.pop %v2242
  %v2244 = vsub.f32 1.0, %v2239
  %v2245 = vmul.f32 %v2244, %v2243
  %v2246 = vmul.f32 %v2239, %v1460
  %v2247 = vadd.f32 %v2245, %v2246
  %2248 = vmatprep.subr.bf16.mxu0 %v990
  %2249 = vmatpush1.bf16.msra.mxu0 %v989
  %2250 = vmatprep.subr.bf16.mxu0 %v987
  %2251 = vmatpush1.bf16.msra.mxu0 %v986
  %2252 = vmatprep.subr.bf16.mxu0 %v984
  %2253 = vmatpush1.bf16.msra.mxu0 %v983
  %2254 = vmatprep.subr.bf16.mxu0 %v981
  %2255 = vmatpush1.bf16.msra.mxu0 %v980
  %2256 = vmatprep.subr.bf16.mxu0 %v978
  %2257 = vmatpush1.bf16.msra.mxu0 %v977
  %2258 = vmatprep.subr.bf16.mxu0 %v975
  %2259 = vmatpush1.bf16.msra.mxu0 %v974
  %2260 = vmatprep.subr.bf16.mxu0 %v972
  %2261 = vmatpush1.bf16.msra.mxu0 %v971
  %2262 = vmatprep.subr.bf16.mxu0 %v969
  %2263 = vmatpush1.bf16.msra.mxu0 %v968
  %2264 = vmatprep.subr.bf16.mxu0 0
  %2265 = vmatpush2.bf16.msra.mxu0 0
  %2266 = vmatprep.subr.bf16.mxu0 0
  %2267 = vmatpush2.bf16.msra.mxu0 0
  %2268 = vmatprep.subr.bf16.mxu0 0
  %2269 = vmatpush2.bf16.msra.mxu0 0
  %2270 = vmatprep.subr.bf16.mxu0 0
  %2271 = vmatpush2.bf16.msra.mxu0 0
  %2272 = vmatprep.subr.bf16.mxu0 0
  %2273 = vmatpush2.bf16.msra.mxu0 0
  %2274 = vmatprep.subr.bf16.mxu0 0
  %2275 = vmatpush2.bf16.msra.mxu0 0
  %2276 = vmatprep.subr.bf16.mxu0 0
  %2277 = vmatpush2.bf16.msra.mxu0 0
  %2278 = vmatprep.subr.bf16.mxu0 0
  %2279 = vmatpush2.bf16.msra.mxu0 0
  %2280 = vmatprep.mubr.bf16.mxu0 0
  %2281 = vmatmul.mubr.bf16.gmra.mxu0 %v2148
  %v2282 = vpop.f32.mrf.mxu0
  %v2283 = vadd.f32 %v436, %v2282
  %v2284 = vpop.f32.mrf.mxu0
  %v2285 = vadd.f32 %v440, %v2284
  %v2286 = vpop.f32.mrf.mxu0
  %v2287 = vpop.f32.mrf.mxu0
  %2288 = vdwg.mxu0
  %2289 = vmatprep.subr.bf16.mxu0 0
  %2290 = vmatpush1.bf16.msra.mxu0 %v991
  %2291 = vmatprep.subr.bf16.mxu0 0
  %2292 = vmatpush1.bf16.msra.mxu0 %v988
  %2293 = vmatprep.subr.bf16.mxu0 0
  %2294 = vmatpush1.bf16.msra.mxu0 %v985
  %2295 = vmatprep.subr.bf16.mxu0 0
  %2296 = vmatpush1.bf16.msra.mxu0 %v982
  %2297 = vmatprep.subr.bf16.mxu0 0
  %2298 = vmatpush1.bf16.msra.mxu0 %v979
  %2299 = vmatprep.subr.bf16.mxu0 0
  %2300 = vmatpush1.bf16.msra.mxu0 %v976
  %2301 = vmatprep.subr.bf16.mxu0 0
  %2302 = vmatpush1.bf16.msra.mxu0 %v973
  %2303 = vmatprep.subr.bf16.mxu0 0
  %2304 = vmatpush1.bf16.msra.mxu0 %v970
  %2305 = vmatprep.subr.bf16.mxu0 0
  %2306 = vmatpush2.bf16.msra.mxu0 0
  %2307 = vmatprep.subr.bf16.mxu0 0
  %2308 = vmatpush2.bf16.msra.mxu0 0
  %2309 = vmatprep.subr.bf16.mxu0 0
  %2310 = vmatpush2.bf16.msra.mxu0 0
  %2311 = vmatprep.subr.bf16.mxu0 0
  %2312 = vmatpush2.bf16.msra.mxu0 0
  %2313 = vmatprep.subr.bf16.mxu0 0
  %2314 = vmatpush2.bf16.msra.mxu0 0
  %2315 = vmatprep.subr.bf16.mxu0 0
  %2316 = vmatpush2.bf16.msra.mxu0 0
  %2317 = vmatprep.subr.bf16.mxu0 0
  %2318 = vmatpush2.bf16.msra.mxu0 0
  %2319 = vmatprep.subr.bf16.mxu0 0
  %2320 = vmatpush2.bf16.msra.mxu0 0
  %2321 = vmatprep.mubr.bf16.mxu0 0
  %2322 = vmatmul.mubr.bf16.gmra.mxu0 %v2148
  %v2323 = vpop.f32.mrf.mxu0
  %v2324 = vadd.f32 %v444, %v2323
  %v2325 = vpop.f32.mrf.mxu0
  %v2326 = vpop.f32.mrf.mxu0
  %v2327 = vpop.f32.mrf.mxu0
  %2328 = vdwg.mxu0
  %v2329 = vpack.c.bf16 %v1641, %v1641
  %2330 = vmatprep.subr.bf16.mxu0 %v1232
  %2331 = vmatpush1.bf16.msra.mxu0 %v1231
  %2332 = vmatprep.subr.bf16.mxu0 %v1229
  %2333 = vmatpush1.bf16.msra.mxu0 %v1228
  %2334 = vmatprep.subr.bf16.mxu0 %v1226
  %2335 = vmatpush1.bf16.msra.mxu0 %v1225
  %2336 = vmatprep.subr.bf16.mxu0 %v1223
  %2337 = vmatpush1.bf16.msra.mxu0 %v1222
  %2338 = vmatprep.subr.bf16.mxu0 %v1220
  %2339 = vmatpush1.bf16.msra.mxu0 %v1219
  %2340 = vmatprep.subr.bf16.mxu0 %v1217
  %2341 = vmatpush1.bf16.msra.mxu0 %v1216
  %2342 = vmatprep.subr.bf16.mxu0 %v1214
  %2343 = vmatpush1.bf16.msra.mxu0 %v1213
  %2344 = vmatprep.subr.bf16.mxu0 %v1211
  %2345 = vmatpush1.bf16.msra.mxu0 %v1210
  %2346 = vmatprep.subr.bf16.mxu0 0
  %2347 = vmatpush2.bf16.msra.mxu0 0
  %2348 = vmatprep.subr.bf16.mxu0 0
  %2349 = vmatpush2.bf16.msra.mxu0 0
  %2350 = vmatprep.subr.bf16.mxu0 0
  %2351 = vmatpush2.bf16.msra.mxu0 0
  %2352 = vmatprep.subr.bf16.mxu0 0
  %2353 = vmatpush2.bf16.msra.mxu0 0
  %2354 = vmatprep.subr.bf16.mxu0 0
  %2355 = vmatpush2.bf16.msra.mxu0 0
  %2356 = vmatprep.subr.bf16.mxu0 0
  %2357 = vmatpush2.bf16.msra.mxu0 0
  %2358 = vmatprep.subr.bf16.mxu0 0
  %2359 = vmatpush2.bf16.msra.mxu0 0
  %2360 = vmatprep.subr.bf16.mxu0 0
  %2361 = vmatpush2.bf16.msra.mxu0 0
  %2362 = vmatprep.mubr.bf16.mxu0 0
  %2363 = vmatmul.mubr.bf16.gmra.mxu0 %v2329
  %v2364 = vpop.f32.mrf.mxu0
  %v2365 = vadd.f32 0.0, %v2364
  %v2366 = vpop.f32.mrf.mxu0
  %v2367 = vadd.f32 0.0, %v2366
  %v2368 = vpop.f32.mrf.mxu0
  %v2369 = vpop.f32.mrf.mxu0
  %2370 = vdwg.mxu0
  %2371 = vmatprep.subr.bf16.mxu0 0
  %2372 = vmatpush1.bf16.msra.mxu0 %v1233
  %2373 = vmatprep.subr.bf16.mxu0 0
  %2374 = vmatpush1.bf16.msra.mxu0 %v1230
  %2375 = vmatprep.subr.bf16.mxu0 0
  %2376 = vmatpush1.bf16.msra.mxu0 %v1227
  %2377 = vmatprep.subr.bf16.mxu0 0
  %2378 = vmatpush1.bf16.msra.mxu0 %v1224
  %2379 = vmatprep.subr.bf16.mxu0 0
  %2380 = vmatpush1.bf16.msra.mxu0 %v1221
  %2381 = vmatprep.subr.bf16.mxu0 0
  %2382 = vmatpush1.bf16.msra.mxu0 %v1218
  %2383 = vmatprep.subr.bf16.mxu0 0
  %2384 = vmatpush1.bf16.msra.mxu0 %v1215
  %2385 = vmatprep.subr.bf16.mxu0 0
  %2386 = vmatpush1.bf16.msra.mxu0 %v1212
  %2387 = vmatprep.subr.bf16.mxu0 0
  %2388 = vmatpush2.bf16.msra.mxu0 0
  %2389 = vmatprep.subr.bf16.mxu0 0
  %2390 = vmatpush2.bf16.msra.mxu0 0
  %2391 = vmatprep.subr.bf16.mxu0 0
  %2392 = vmatpush2.bf16.msra.mxu0 0
  %2393 = vmatprep.subr.bf16.mxu0 0
  %2394 = vmatpush2.bf16.msra.mxu0 0
  %2395 = vmatprep.subr.bf16.mxu0 0
  %2396 = vmatpush2.bf16.msra.mxu0 0
  %2397 = vmatprep.subr.bf16.mxu0 0
  %2398 = vmatpush2.bf16.msra.mxu0 0
  %2399 = vmatprep.subr.bf16.mxu0 0
  %2400 = vmatpush2.bf16.msra.mxu0 0
  %2401 = vmatprep.subr.bf16.mxu0 0
  %2402 = vmatpush2.bf16.msra.mxu0 0
  %2403 = vmatprep.mubr.bf16.mxu0 0
  %2404 = vmatmul.mubr.bf16.gmra.mxu0 %v2329
  %v2405 = vpop.f32.mrf.mxu0
  %v2406 = vadd.f32 0.0, %v2405
  %v2407 = vpop.f32.mrf.mxu0
  %v2408 = vpop.f32.mrf.mxu0
  %v2409 = vpop.f32.mrf.mxu0
  %2410 = vdwg.mxu0
  %v2411 = vadd.f32 %v2283, %v2365
  %v2412 = vadd.f32 %v2285, %v2367
  %v2413 = vmul.f32 %v2411, 0.5
  %v2414 = vmul.f32 %v2412, 0.5
  %v2415 = vtanh.pop %v2413
  %v2416 = vtanh.pop %v2414
  %v2417 = vadd.f32 %v2415, 1.0
  %v2418 = vadd.f32 %v2416, 1.0
  %v2419 = vmul.f32 %v2417, 0.5
  %v2420 = vmul.f32 %v2418, 0.5
  %v2421 = vadd.f32 %v2406, %v419
  %v2422 = vmul.f32 %v2419, %v2421
  %v2423 = vadd.f32 %v2324, %v2422
  %v2424 = vtanh.pop %v2423
  %v2425 = vsub.f32 1.0, %v2420
  %v2426 = vmul.f32 %v2425, %v2424
  %v2427 = vmul.f32 %v2420, %v1641
  %v2428 = vadd.f32 %v2426, %v2427
  %2429 = vmatprep.subr.bf16.mxu0 %v1777
  %2430 = vmatpush1.bf16.msra.mxu0 %v1776
  %2431 = vmatprep.subr.bf16.mxu0 %v1774
  %2432 = vmatpush1.bf16.msra.mxu0 %v1773
  %2433 = vmatprep.subr.bf16.mxu0 %v1771
  %2434 = vmatpush1.bf16.msra.mxu0 %v1770
  %2435 = vmatprep.subr.bf16.mxu0 %v1768
  %2436 = vmatpush1.bf16.msra.mxu0 %v1767
  %2437 = vmatprep.subr.bf16.mxu0 %v1765
  %2438 = vmatpush1.bf16.msra.mxu0 %v1764
  %2439 = vmatprep.subr.bf16.mxu0 %v1762
  %2440 = vmatpush1.bf16.msra.mxu0 %v1761
  %2441 = vmatprep.subr.bf16.mxu0 %v1759
  %2442 = vmatpush1.bf16.msra.mxu0 %v1758
  %2443 = vmatprep.subr.bf16.mxu0 %v1756
  %2444 = vmatpush1.bf16.msra.mxu0 %v1755
  %2445 = vmatprep.subr.bf16.mxu0 0
  %2446 = vmatpush2.bf16.msra.mxu0 0
  %2447 = vmatprep.subr.bf16.mxu0 0
  %2448 = vmatpush2.bf16.msra.mxu0 0
  %2449 = vmatprep.subr.bf16.mxu0 0
  %2450 = vmatpush2.bf16.msra.mxu0 0
  %2451 = vmatprep.subr.bf16.mxu0 0
  %2452 = vmatpush2.bf16.msra.mxu0 0
  %2453 = vmatprep.subr.bf16.mxu0 0
  %2454 = vmatpush2.bf16.msra.mxu0 0
  %2455 = vmatprep.subr.bf16.mxu0 0
  %2456 = vmatpush2.bf16.msra.mxu0 0
  %2457 = vmatprep.subr.bf16.mxu0 0
  %2458 = vmatpush2.bf16.msra.mxu0 0
  %2459 = vmatprep.subr.bf16.mxu0 0
  %2460 = vmatpush2.bf16.msra.mxu0 0
  %2461 = vmatprep.mubr.bf16.mxu0 0
  %2462 = vmatmul.mubr.bf16.gmra.mxu0 %v2329
  %v2463 = vpop.f32.mrf.mxu0
  %v2464 = vadd.f32 %v454, %v2463
  %v2465 = vpop.f32.mrf.mxu0
  %v2466 = vadd.f32 %v458, %v2465
  %v2467 = vpop.f32.mrf.mxu0
  %v2468 = vpop.f32.mrf.mxu0
  %2469 = vdwg.mxu0
  %2470 = vmatprep.subr.bf16.mxu0 0
  %2471 = vmatpush1.bf16.msra.mxu0 %v1778
  %2472 = vmatprep.subr.bf16.mxu0 0
  %2473 = vmatpush1.bf16.msra.mxu0 %v1775
  %2474 = vmatprep.subr.bf16.mxu0 0
  %2475 = vmatpush1.bf16.msra.mxu0 %v1772
  %2476 = vmatprep.subr.bf16.mxu0 0
  %2477 = vmatpush1.bf16.msra.mxu0 %v1769
  %2478 = vmatprep.subr.bf16.mxu0 0
  %2479 = vmatpush1.bf16.msra.mxu0 %v1766
  %2480 = vmatprep.subr.bf16.mxu0 0
  %2481 = vmatpush1.bf16.msra.mxu0 %v1763
  %2482 = vmatprep.subr.bf16.mxu0 0
  %2483 = vmatpush1.bf16.msra.mxu0 %v1760
  %2484 = vmatprep.subr.bf16.mxu0 0
  %2485 = vmatpush1.bf16.msra.mxu0 %v1757
  %2486 = vmatprep.subr.bf16.mxu0 0
  %2487 = vmatpush2.bf16.msra.mxu0 0
  %2488 = vmatprep.subr.bf16.mxu0 0
  %2489 = vmatpush2.bf16.msra.mxu0 0
  %2490 = vmatprep.subr.bf16.mxu0 0
  %2491 = vmatpush2.bf16.msra.mxu0 0
  %2492 = vmatprep.subr.bf16.mxu0 0
  %2493 = vmatpush2.bf16.msra.mxu0 0
  %2494 = vmatprep.subr.bf16.mxu0 0
  %2495 = vmatpush2.bf16.msra.mxu0 0
  %2496 = vmatprep.subr.bf16.mxu0 0
  %2497 = vmatpush2.bf16.msra.mxu0 0
  %2498 = vmatprep.subr.bf16.mxu0 0
  %2499 = vmatpush2.bf16.msra.mxu0 0
  %2500 = vmatprep.subr.bf16.mxu0 0
  %2501 = vmatpush2.bf16.msra.mxu0 0
  %2502 = vmatprep.mubr.bf16.mxu0 0
  %2503 = vmatmul.mubr.bf16.gmra.mxu0 %v2329
  %v2504 = vpop.f32.mrf.mxu0
  %v2505 = vadd.f32 %v462, %v2504
  %v2506 = vpop.f32.mrf.mxu0
  %v2507 = vpop.f32.mrf.mxu0
  %v2508 = vpop.f32.mrf.mxu0
  %2509 = vdwg.mxu0
  %v2510 = vpack.c.bf16 %v2143, %v2143
  %2511 = vmatprep.subr.bf16.mxu0 %v2019
  %2512 = vmatpush1.bf16.msra.mxu0 %v2018
  %2513 = vmatprep.subr.bf16.mxu0 %v2016
  %2514 = vmatpush1.bf16.msra.mxu0 %v2015
  %2515 = vmatprep.subr.bf16.mxu0 %v2013
  %2516 = vmatpush1.bf16.msra.mxu0 %v2012
  %2517 = vmatprep.subr.bf16.mxu0 %v2010
  %2518 = vmatpush1.bf16.msra.mxu0 %v2009
  %2519 = vmatprep.subr.bf16.mxu0 %v2007
  %2520 = vmatpush1.bf16.msra.mxu0 %v2006
  %2521 = vmatprep.subr.bf16.mxu0 %v2004
  %2522 = vmatpush1.bf16.msra.mxu0 %v2003
  %2523 = vmatprep.subr.bf16.mxu0 %v2001
  %2524 = vmatpush1.bf16.msra.mxu0 %v2000
  %2525 = vmatprep.subr.bf16.mxu0 %v1998
  %2526 = vmatpush1.bf16.msra.mxu0 %v1997
  %2527 = vmatprep.subr.bf16.mxu0 0
  %2528 = vmatpush2.bf16.msra.mxu0 0
  %2529 = vmatprep.subr.bf16.mxu0 0
  %2530 = vmatpush2.bf16.msra.mxu0 0
  %2531 = vmatprep.subr.bf16.mxu0 0
  %2532 = vmatpush2.bf16.msra.mxu0 0
  %2533 = vmatprep.subr.bf16.mxu0 0
  %2534 = vmatpush2.bf16.msra.mxu0 0
  %2535 = vmatprep.subr.bf16.mxu0 0
  %2536 = vmatpush2.bf16.msra.mxu0 0
  %2537 = vmatprep.subr.bf16.mxu0 0
  %2538 = vmatpush2.bf16.msra.mxu0 0
  %2539 = vmatprep.subr.bf16.mxu0 0
  %2540 = vmatpush2.bf16.msra.mxu0 0
  %2541 = vmatprep.subr.bf16.mxu0 0
  %2542 = vmatpush2.bf16.msra.mxu0 0
  %2543 = vmatprep.mubr.bf16.mxu0 0
  %2544 = vmatmul.mubr.bf16.gmra.mxu0 %v2510
  %v2545 = vpop.f32.mrf.mxu0
  %v2546 = vadd.f32 0.0, %v2545
  %v2547 = vpop.f32.mrf.mxu0
  %v2548 = vadd.f32 0.0, %v2547
  %v2549 = vpop.f32.mrf.mxu0
  %v2550 = vpop.f32.mrf.mxu0
  %2551 = vdwg.mxu0
  %2552 = vmatprep.subr.bf16.mxu0 0
  %2553 = vmatpush1.bf16.msra.mxu0 %v2020
  %2554 = vmatprep.subr.bf16.mxu0 0
  %2555 = vmatpush1.bf16.msra.mxu0 %v2017
  %2556 = vmatprep.subr.bf16.mxu0 0
  %2557 = vmatpush1.bf16.msra.mxu0 %v2014
  %2558 = vmatprep.subr.bf16.mxu0 0
  %2559 = vmatpush1.bf16.msra.mxu0 %v2011
  %2560 = vmatprep.subr.bf16.mxu0 0
  %2561 = vmatpush1.bf16.msra.mxu0 %v2008
  %2562 = vmatprep.subr.bf16.mxu0 0
  %2563 = vmatpush1.bf16.msra.mxu0 %v2005
  %2564 = vmatprep.subr.bf16.mxu0 0
  %2565 = vmatpush1.bf16.msra.mxu0 %v2002
  %2566 = vmatprep.subr.bf16.mxu0 0
  %2567 = vmatpush1.bf16.msra.mxu0 %v1999
  %2568 = vmatprep.subr.bf16.mxu0 0
  %2569 = vmatpush2.bf16.msra.mxu0 0
  %2570 = vmatprep.subr.bf16.mxu0 0
  %2571 = vmatpush2.bf16.msra.mxu0 0
  %2572 = vmatprep.subr.bf16.mxu0 0
  %2573 = vmatpush2.bf16.msra.mxu0 0
  %2574 = vmatprep.subr.bf16.mxu0 0
  %2575 = vmatpush2.bf16.msra.mxu0 0
  %2576 = vmatprep.subr.bf16.mxu0 0
  %2577 = vmatpush2.bf16.msra.mxu0 0
  %2578 = vmatprep.subr.bf16.mxu0 0
  %2579 = vmatpush2.bf16.msra.mxu0 0
  %2580 = vmatprep.subr.bf16.mxu0 0
  %2581 = vmatpush2.bf16.msra.mxu0 0
  %2582 = vmatprep.subr.bf16.mxu0 0
  %2583 = vmatpush2.bf16.msra.mxu0 0
  %2584 = vmatprep.mubr.bf16.mxu0 0
  %2585 = vmatmul.mubr.bf16.gmra.mxu0 %v2510
  %v2586 = vpop.f32.mrf.mxu0
  %v2587 = vadd.f32 0.0, %v2586
  %v2588 = vpop.f32.mrf.mxu0
  %v2589 = vpop.f32.mrf.mxu0
  %v2590 = vpop.f32.mrf.mxu0
  %2591 = vdwg.mxu0
  %v2592 = vadd.f32 %v2464, %v2546
  %v2593 = vadd.f32 %v2466, %v2548
  %v2594 = vmul.f32 %v2592, 0.5
  %v2595 = vmul.f32 %v2593, 0.5
  %v2596 = vtanh.pop %v2594
  %v2597 = vtanh.pop %v2595
  %v2598 = vadd.f32 %v2596, 1.0
  %v2599 = vadd.f32 %v2597, 1.0
  %v2600 = vmul.f32 %v2598, 0.5
  %v2601 = vmul.f32 %v2599, 0.5
  %v2602 = vadd.f32 %v2587, %v424
  %v2603 = vmul.f32 %v2600, %v2602
  %v2604 = vadd.f32 %v2505, %v2603
  %v2605 = vtanh.pop %v2604
  %v2606 = vsub.f32 1.0, %v2601
  %v2607 = vmul.f32 %v2606, %v2605
  %v2608 = vmul.f32 %v2601, %v2143
  %v2609 = vadd.f32 %v2607, %v2608
  %s2610 = scalar_lea.vmem [#allocation3], 1152
  %v2611 = vld [vmem:[%s2610] sm:$0xff]
  %v2612 = vld [vmem:[%s2610 + $0x8] sm:$0xf]
  %v2613 = vld [vmem:[%s2610 + $0xc] sm:$0xff]
  %v2614 = vld [vmem:[%s2610 + $0x14] sm:$0xf]
  %v2615 = vld [vmem:[%s2610 + $0x18] sm:$0xff]
  %v2616 = vld [vmem:[%s2610 + $0x20] sm:$0xf]
  %v2617 = vld [vmem:[%s2610 + $0x24] sm:$0xff]
  %v2618 = vld [vmem:[%s2610 + $0x2c] sm:$0xf]
  %v2619 = vld [vmem:[%s2610 + $0x30] sm:$0xff]
  %v2620 = vld [vmem:[%s2610 + $0x38] sm:$0xf]
  %v2621 = vld [vmem:[%s2610 + $0x3c] sm:$0xff]
  %v2622 = vld [vmem:[%s2610 + $0x44] sm:$0xf]
  %v2623 = vld [vmem:[%s2610 + $0x48] sm:$0xff]
  %v2624 = vld [vmem:[%s2610 + $0x50] sm:$0xf]
  %v2625 = vld [vmem:[%s2610 + $0x54] sm:$0xff]
  %v2626 = vld [vmem:[%s2610 + $0x5c] sm:$0xf]
  %v2627 = vld [vmem:[%s2610 + $0x60] sm:$0xff]
  %v2628 = vld [vmem:[%s2610 + $0x68] sm:$0xf]
  %v2629 = vld [vmem:[%s2610 + $0x6c] sm:$0xff]
  %v2630 = vld [vmem:[%s2610 + $0x74] sm:$0xf]
  %v2631 = vld [vmem:[%s2610 + $0x78] sm:$0xff]
  %v2632 = vld [vmem:[%s2610 + $0x80] sm:$0xf]
  %v2633 = vld [vmem:[%s2610 + $0x84] sm:$0xff]
  %v2634 = vld [vmem:[%s2610 + $0x8c] sm:$0xf]
  %v2635 = vld [vmem:[%s2610 + $0x90] sm:$0xff]
  %v2636 = vld [vmem:[%s2610 + $0x98] sm:$0xf]
  %v2637 = vld [vmem:[%s2610 + $0x9c] sm:$0xff]
  %v2638 = vld [vmem:[%s2610 + $0xa4] sm:$0xf]
  %v2639 = vld [vmem:[%s2610 + $0xa8] sm:$0xff]
  %v2640 = vld [vmem:[%s2610 + $0xb0] sm:$0xf]
  %v2641 = vld [vmem:[%s2610 + $0xb4] sm:$0xff]
  %v2642 = vld [vmem:[%s2610 + $0xbc] sm:$0xf]
  %v2675 = vunpack.c.l.b16 %v2611
  %v2676 = vunpack.c.h.b16 %v2611
  %v2677 = vunpack.c.l.b16 %v2612
  %v2678 = vunpack.c.l.b16 %v2613
  %v2679 = vunpack.c.h.b16 %v2613
  %v2680 = vunpack.c.l.b16 %v2614
  %v2681 = vunpack.c.l.b16 %v2615
  %v2682 = vunpack.c.h.b16 %v2615
  %v2683 = vunpack.c.l.b16 %v2616
  %v2684 = vunpack.c.l.b16 %v2617
  %v2685 = vunpack.c.h.b16 %v2617
  %v2686 = vunpack.c.l.b16 %v2618
  %v2687 = vunpack.c.l.b16 %v2619
  %v2688 = vunpack.c.h.b16 %v2619
  %v2689 = vunpack.c.l.b16 %v2620
  %v2690 = vunpack.c.l.b16 %v2621
  %v2691 = vunpack.c.h.b16 %v2621
  %v2692 = vunpack.c.l.b16 %v2622
  %v2693 = vunpack.c.l.b16 %v2623
  %v2694 = vunpack.c.h.b16 %v2623
  %v2695 = vunpack.c.l.b16 %v2624
  %v2696 = vunpack.c.l.b16 %v2625
  %v2697 = vunpack.c.h.b16 %v2625
  %v2698 = vunpack.c.l.b16 %v2626
  %v2699 = vunpack.c.l.b16 %v2627
  %v2700 = vunpack.c.h.b16 %v2627
  %v2701 = vunpack.c.l.b16 %v2628
  %v2702 = vunpack.c.l.b16 %v2629
  %v2703 = vunpack.c.h.b16 %v2629
  %v2704 = vunpack.c.l.b16 %v2630
  %v2705 = vunpack.c.l.b16 %v2631
  %v2706 = vunpack.c.h.b16 %v2631
  %v2707 = vunpack.c.l.b16 %v2632
  %v2708 = vunpack.c.l.b16 %v2633
  %v2709 = vunpack.c.h.b16 %v2633
  %v2710 = vunpack.c.l.b16 %v2634
  %v2711 = vunpack.c.l.b16 %v2635
  %v2712 = vunpack.c.h.b16 %v2635
  %v2713 = vunpack.c.l.b16 %v2636
  %v2714 = vunpack.c.l.b16 %v2637
  %v2715 = vunpack.c.h.b16 %v2637
  %v2716 = vunpack.c.l.b16 %v2638
  %v2717 = vunpack.c.l.b16 %v2639
  %v2718 = vunpack.c.h.b16 %v2639
  %v2719 = vunpack.c.l.b16 %v2640
  %v2720 = vunpack.c.l.b16 %v2641
  %v2721 = vunpack.c.h.b16 %v2641
  %v2722 = vunpack.c.l.b16 %v2642
  %v2723 = vpack.c.b16 %v2678, %v2675
  %v2724 = vpack.c.b16 %v2679, %v2676
  %v2725 = vpack.c.b16 %v2680, %v2677
  %v2726 = vpack.c.b16 %v2684, %v2681
  %v2727 = vpack.c.b16 %v2685, %v2682
  %v2728 = vpack.c.b16 %v2686, %v2683
  %v2729 = vpack.c.b16 %v2690, %v2687
  %v2730 = vpack.c.b16 %v2691, %v2688
  %v2731 = vpack.c.b16 %v2692, %v2689
  %v2732 = vpack.c.b16 %v2696, %v2693
  %v2733 = vpack.c.b16 %v2697, %v2694
  %v2734 = vpack.c.b16 %v2698, %v2695
  %v2735 = vpack.c.b16 %v2702, %v2699
  %v2736 = vpack.c.b16 %v2703, %v2700
  %v2737 = vpack.c.b16 %v2704, %v2701
  %v2738 = vpack.c.b16 %v2708, %v2705
  %v2739 = vpack.c.b16 %v2709, %v2706
  %v2740 = vpack.c.b16 %v2710, %v2707
  %v2741 = vpack.c.b16 %v2714, %v2711
  %v2742 = vpack.c.b16 %v2715, %v2712
  %v2743 = vpack.c.b16 %v2716, %v2713
  %v2744 = vpack.c.b16 %v2720, %v2717
  %v2745 = vpack.c.b16 %v2721, %v2718
  %v2746 = vpack.c.b16 %v2722, %v2719
  %2771 = vmatprep.subr.bf16.mxu0 %v2745
  %2772 = vmatpush1.bf16.msra.mxu0 %v2744
  %2773 = vmatprep.subr.bf16.mxu0 %v2742
  %2774 = vmatpush1.bf16.msra.mxu0 %v2741
  %2775 = vmatprep.subr.bf16.mxu0 %v2739
  %2776 = vmatpush1.bf16.msra.mxu0 %v2738
  %2777 = vmatprep.subr.bf16.mxu0 %v2736
  %2778 = vmatpush1.bf16.msra.mxu0 %v2735
  %2779 = vmatprep.subr.bf16.mxu0 %v2733
  %2780 = vmatpush1.bf16.msra.mxu0 %v2732
  %2781 = vmatprep.subr.bf16.mxu0 %v2730
  %2782 = vmatpush1.bf16.msra.mxu0 %v2729
  %2783 = vmatprep.subr.bf16.mxu0 %v2727
  %2784 = vmatpush1.bf16.msra.mxu0 %v2726
  %2785 = vmatprep.subr.bf16.mxu0 %v2724
  %2786 = vmatpush1.bf16.msra.mxu0 %v2723
  %2787 = vmatprep.subr.bf16.mxu0 0
  %2788 = vmatpush2.bf16.msra.mxu0 0
  %2789 = vmatprep.subr.bf16.mxu0 0
  %2790 = vmatpush2.bf16.msra.mxu0 0
  %2791 = vmatprep.subr.bf16.mxu0 0
  %2792 = vmatpush2.bf16.msra.mxu0 0
  %2793 = vmatprep.subr.bf16.mxu0 0
  %2794 = vmatpush2.bf16.msra.mxu0 0
  %2795 = vmatprep.subr.bf16.mxu0 0
  %2796 = vmatpush2.bf16.msra.mxu0 0
  %2797 = vmatprep.subr.bf16.mxu0 0
  %2798 = vmatpush2.bf16.msra.mxu0 0
  %2799 = vmatprep.subr.bf16.mxu0 0
  %2800 = vmatpush2.bf16.msra.mxu0 0
  %2801 = vmatprep.subr.bf16.mxu0 0
  %2802 = vmatpush2.bf16.msra.mxu0 0
  %2803 = vmatprep.mubr.bf16.mxu0 0
  %2804 = vmatmul.mubr.bf16.gmra.mxu0 %v2510
  %v2805 = vpop.f32.mrf.mxu0
  %v2806 = vadd.f32 %v472, %v2805
  %v2807 = vpop.f32.mrf.mxu0
  %v2808 = vadd.f32 %v476, %v2807
  %v2809 = vpop.f32.mrf.mxu0
  %v2810 = vpop.f32.mrf.mxu0
  %2811 = vdwg.mxu0
  %2812 = vmatprep.subr.bf16.mxu0 0
  %2813 = vmatpush1.bf16.msra.mxu0 %v2746
  %2814 = vmatprep.subr.bf16.mxu0 0
  %2815 = vmatpush1.bf16.msra.mxu0 %v2743
  %2816 = vmatprep.subr.bf16.mxu0 0
  %2817 = vmatpush1.bf16.msra.mxu0 %v2740
  %2818 = vmatprep.subr.bf16.mxu0 0
  %2819 = vmatpush1.bf16.msra.mxu0 %v2737
  %2820 = vmatprep.subr.bf16.mxu0 0
  %2821 = vmatpush1.bf16.msra.mxu0 %v2734
  %2822 = vmatprep.subr.bf16.mxu0 0
  %2823 = vmatpush1.bf16.msra.mxu0 %v2731
  %2824 = vmatprep.subr.bf16.mxu0 0
  %2825 = vmatpush1.bf16.msra.mxu0 %v2728
  %2826 = vmatprep.subr.bf16.mxu0 0
  %2827 = vmatpush1.bf16.msra.mxu0 %v2725
  %2828 = vmatprep.subr.bf16.mxu0 0
  %2829 = vmatpush2.bf16.msra.mxu0 0
  %2830 = vmatprep.subr.bf16.mxu0 0
  %2831 = vmatpush2.bf16.msra.mxu0 0
  %2832 = vmatprep.subr.bf16.mxu0 0
  %2833 = vmatpush2.bf16.msra.mxu0 0
  %2834 = vmatprep.subr.bf16.mxu0 0
  %2835 = vmatpush2.bf16.msra.mxu0 0
  %2836 = vmatprep.subr.bf16.mxu0 0
  %2837 = vmatpush2.bf16.msra.mxu0 0
  %2838 = vmatprep.subr.bf16.mxu0 0
  %2839 = vmatpush2.bf16.msra.mxu0 0
  %2840 = vmatprep.subr.bf16.mxu0 0
  %2841 = vmatpush2.bf16.msra.mxu0 0
  %2842 = vmatprep.subr.bf16.mxu0 0
  %2843 = vmatpush2.bf16.msra.mxu0 0
  %2844 = vmatprep.mubr.bf16.mxu0 0
  %2845 = vmatmul.mubr.bf16.gmra.mxu0 %v2510
  %v2846 = vpop.f32.mrf.mxu0
  %v2847 = vadd.f32 %v480, %v2846
  %v2848 = vpop.f32.mrf.mxu0
  %v2849 = vpop.f32.mrf.mxu0
  %v2850 = vpop.f32.mrf.mxu0
  %2851 = vdwg.mxu0
  %s2852 = scalar_lea.vmem [#allocation3], 576
  %v2853 = vld [vmem:[%s2852] sm:$0xff]
  %v2854 = vld [vmem:[%s2852 + $0x8] sm:$0xf]
  %v2855 = vld [vmem:[%s2852 + $0xc] sm:$0xff]
  %v2856 = vld [vmem:[%s2852 + $0x14] sm:$0xf]
  %v2857 = vld [vmem:[%s2852 + $0x18] sm:$0xff]
  %v2858 = vld [vmem:[%s2852 + $0x20] sm:$0xf]
  %v2859 = vld [vmem:[%s2852 + $0x24] sm:$0xff]
  %v2860 = vld [vmem:[%s2852 + $0x2c] sm:$0xf]
  %v2861 = vld [vmem:[%s2852 + $0x30] sm:$0xff]
  %v2862 = vld [vmem:[%s2852 + $0x38] sm:$0xf]
  %v2863 = vld [vmem:[%s2852 + $0x3c] sm:$0xff]
  %v2864 = vld [vmem:[%s2852 + $0x44] sm:$0xf]
  %v2865 = vld [vmem:[%s2852 + $0x48] sm:$0xff]
  %v2866 = vld [vmem:[%s2852 + $0x50] sm:$0xf]
  %v2867 = vld [vmem:[%s2852 + $0x54] sm:$0xff]
  %v2868 = vld [vmem:[%s2852 + $0x5c] sm:$0xf]
  %v2869 = vld [vmem:[%s2852 + $0x60] sm:$0xff]
  %v2870 = vld [vmem:[%s2852 + $0x68] sm:$0xf]
  %v2871 = vld [vmem:[%s2852 + $0x6c] sm:$0xff]
  %v2872 = vld [vmem:[%s2852 + $0x74] sm:$0xf]
  %v2873 = vld [vmem:[%s2852 + $0x78] sm:$0xff]
  %v2874 = vld [vmem:[%s2852 + $0x80] sm:$0xf]
  %v2875 = vld [vmem:[%s2852 + $0x84] sm:$0xff]
  %v2876 = vld [vmem:[%s2852 + $0x8c] sm:$0xf]
  %v2877 = vld [vmem:[%s2852 + $0x90] sm:$0xff]
  %v2878 = vld [vmem:[%s2852 + $0x98] sm:$0xf]
  %v2879 = vld [vmem:[%s2852 + $0x9c] sm:$0xff]
  %v2880 = vld [vmem:[%s2852 + $0xa4] sm:$0xf]
  %v2881 = vld [vmem:[%s2852 + $0xa8] sm:$0xff]
  %v2882 = vld [vmem:[%s2852 + $0xb0] sm:$0xf]
  %v2883 = vld [vmem:[%s2852 + $0xb4] sm:$0xff]
  %v2884 = vld [vmem:[%s2852 + $0xbc] sm:$0xf]
  %v2917 = vunpack.c.l.b16 %v2853
  %v2918 = vunpack.c.h.b16 %v2853
  %v2919 = vunpack.c.l.b16 %v2854
  %v2920 = vunpack.c.l.b16 %v2855
  %v2921 = vunpack.c.h.b16 %v2855
  %v2922 = vunpack.c.l.b16 %v2856
  %v2923 = vunpack.c.l.b16 %v2857
  %v2924 = vunpack.c.h.b16 %v2857
  %v2925 = vunpack.c.l.b16 %v2858
  %v2926 = vunpack.c.l.b16 %v2859
  %v2927 = vunpack.c.h.b16 %v2859
  %v2928 = vunpack.c.l.b16 %v2860
  %v2929 = vunpack.c.l.b16 %v2861
  %v2930 = vunpack.c.h.b16 %v2861
  %v2931 = vunpack.c.l.b16 %v2862
  %v2932 = vunpack.c.l.b16 %v2863
  %v2933 = vunpack.c.h.b16 %v2863
  %v2934 = vunpack.c.l.b16 %v2864
  %v2935 = vunpack.c.l.b16 %v2865
  %v2936 = vunpack.c.h.b16 %v2865
  %v2937 = vunpack.c.l.b16 %v2866
  %v2938 = vunpack.c.l.b16 %v2867
  %v2939 = vunpack.c.h.b16 %v2867
  %v2940 = vunpack.c.l.b16 %v2868
  %v2941 = vunpack.c.l.b16 %v2869
  %v2942 = vunpack.c.h.b16 %v2869
  %v2943 = vunpack.c.l.b16 %v2870
  %v2944 = vunpack.c.l.b16 %v2871
  %v2945 = vunpack.c.h.b16 %v2871
  %v2946 = vunpack.c.l.b16 %v2872
  %v2947 = vunpack.c.l.b16 %v2873
  %v2948 = vunpack.c.h.b16 %v2873
  %v2949 = vunpack.c.l.b16 %v2874
  %v2950 = vunpack.c.l.b16 %v2875
  %v2951 = vunpack.c.h.b16 %v2875
  %v2952 = vunpack.c.l.b16 %v2876
  %v2953 = vunpack.c.l.b16 %v2877
  %v2954 = vunpack.c.h.b16 %v2877
  %v2955 = vunpack.c.l.b16 %v2878
  %v2956 = vunpack.c.l.b16 %v2879
  %v2957 = vunpack.c.h.b16 %v2879
  %v2958 = vunpack.c.l.b16 %v2880
  %v2959 = vunpack.c.l.b16 %v2881
  %v2960 = vunpack.c.h.b16 %v2881
  %v2961 = vunpack.c.l.b16 %v2882
  %v2962 = vunpack.c.l.b16 %v2883
  %v2963 = vunpack.c.h.b16 %v2883
  %v2964 = vunpack.c.l.b16 %v2884
  %v2965 = vpack.c.b16 %v2920, %v2917
  %v2966 = vpack.c.b16 %v2921, %v2918
  %v2967 = vpack.c.b16 %v2922, %v2919
  %v2968 = vpack.c.b16 %v2926, %v2923
  %v2969 = vpack.c.b16 %v2927, %v2924
  %v2970 = vpack.c.b16 %v2928, %v2925
  %v2971 = vpack.c.b16 %v2932, %v2929
  %v2972 = vpack.c.b16 %v2933, %v2930
  %v2973 = vpack.c.b16 %v2934, %v2931
  %v2974 = vpack.c.b16 %v2938, %v2935
  %v2975 = vpack.c.b16 %v2939, %v2936
  %v2976 = vpack.c.b16 %v2940, %v2937
  %v2977 = vpack.c.b16 %v2944, %v2941
  %v2978 = vpack.c.b16 %v2945, %v2942
  %v2979 = vpack.c.b16 %v2946, %v2943
  %v2980 = vpack.c.b16 %v2950, %v2947
  %v2981 = vpack.c.b16 %v2951, %v2948
  %v2982 = vpack.c.b16 %v2952, %v2949
  %v2983 = vpack.c.b16 %v2956, %v2953
  %v2984 = vpack.c.b16 %v2957, %v2954
  %v2985 = vpack.c.b16 %v2958, %v2955
  %v2986 = vpack.c.b16 %v2962, %v2959
  %v2987 = vpack.c.b16 %v2963, %v2960
  %v2988 = vpack.c.b16 %v2964, %v2961
  %3013 = vmatprep.subr.bf16.mxu0 %v2987
  %3014 = vmatpush1.bf16.msra.mxu0 %v2986
  %3015 = vmatprep.subr.bf16.mxu0 %v2984
  %3016 = vmatpush1.bf16.msra.mxu0 %v2983
  %3017 = vmatprep.subr.bf16.mxu0 %v2981
  %3018 = vmatpush1.bf16.msra.mxu0 %v2980
  %3019 = vmatprep.subr.bf16.mxu0 %v2978
  %3020 = vmatpush1.bf16.msra.mxu0 %v2977
  %3021 = vmatprep.subr.bf16.mxu0 %v2975
  %3022 = vmatpush1.bf16.msra.mxu0 %v2974
  %3023 = vmatprep.subr.bf16.mxu0 %v2972
  %3024 = vmatpush1.bf16.msra.mxu0 %v2971
  %3025 = vmatprep.subr.bf16.mxu0 %v2969
  %3026 = vmatpush1.bf16.msra.mxu0 %v2968
  %3027 = vmatprep.subr.bf16.mxu0 %v2966
  %3028 = vmatpush1.bf16.msra.mxu0 %v2965
  %3029 = vmatprep.subr.bf16.mxu0 0
  %3030 = vmatpush2.bf16.msra.mxu0 0
  %3031 = vmatprep.subr.bf16.mxu0 0
  %3032 = vmatpush2.bf16.msra.mxu0 0
  %3033 = vmatprep.subr.bf16.mxu0 0
  %3034 = vmatpush2.bf16.msra.mxu0 0
  %3035 = vmatprep.subr.bf16.mxu0 0
  %3036 = vmatpush2.bf16.msra.mxu0 0
  %3037 = vmatprep.subr.bf16.mxu0 0
  %3038 = vmatpush2.bf16.msra.mxu0 0
  %3039 = vmatprep.subr.bf16.mxu0 0
  %3040 = vmatpush2.bf16.msra.mxu0 0
  %3041 = vmatprep.subr.bf16.mxu0 0
  %3042 = vmatpush2.bf16.msra.mxu0 0
  %3043 = vmatprep.subr.bf16.mxu0 0
  %3044 = vmatpush2.bf16.msra.mxu0 0
  %3045 = vmatprep.mubr.bf16.mxu0 0
  %3046 = vmatmul.mubr.bf16.gmra.mxu0 0
  %v3047 = vpop.f32.mrf.mxu0
  %v3048 = vadd.f32 0.0, %v3047
  %v3049 = vpop.f32.mrf.mxu0
  %v3050 = vadd.f32 0.0, %v3049
  %v3051 = vpop.f32.mrf.mxu0
  %v3052 = vpop.f32.mrf.mxu0
  %3053 = vdwg.mxu0
  %3054 = vmatprep.subr.bf16.mxu0 0
  %3055 = vmatpush1.bf16.msra.mxu0 %v2988
  %3056 = vmatprep.subr.bf16.mxu0 0
  %3057 = vmatpush1.bf16.msra.mxu0 %v2985
  %3058 = vmatprep.subr.bf16.mxu0 0
  %3059 = vmatpush1.bf16.msra.mxu0 %v2982
  %3060 = vmatprep.subr.bf16.mxu0 0
  %3061 = vmatpush1.bf16.msra.mxu0 %v2979
  %3062 = vmatprep.subr.bf16.mxu0 0
  %3063 = vmatpush1.bf16.msra.mxu0 %v2976
  %3064 = vmatprep.subr.bf16.mxu0 0
  %3065 = vmatpush1.bf16.msra.mxu0 %v2973
  %3066 = vmatprep.subr.bf16.mxu0 0
  %3067 = vmatpush1.bf16.msra.mxu0 %v2970
  %3068 = vmatprep.subr.bf16.mxu0 0
  %3069 = vmatpush1.bf16.msra.mxu0 %v2967
  %3070 = vmatprep.subr.bf16.mxu0 0
  %3071 = vmatpush2.bf16.msra.mxu0 0
  %3072 = vmatprep.subr.bf16.mxu0 0
  %3073 = vmatpush2.bf16.msra.mxu0 0
  %3074 = vmatprep.subr.bf16.mxu0 0
  %3075 = vmatpush2.bf16.msra.mxu0 0
  %3076 = vmatprep.subr.bf16.mxu0 0
  %3077 = vmatpush2.bf16.msra.mxu0 0
  %3078 = vmatprep.subr.bf16.mxu0 0
  %3079 = vmatpush2.bf16.msra.mxu0 0
  %3080 = vmatprep.subr.bf16.mxu0 0
  %3081 = vmatpush2.bf16.msra.mxu0 0
  %3082 = vmatprep.subr.bf16.mxu0 0
  %3083 = vmatpush2.bf16.msra.mxu0 0
  %3084 = vmatprep.subr.bf16.mxu0 0
  %3085 = vmatpush2.bf16.msra.mxu0 0
  %3086 = vmatprep.mubr.bf16.mxu0 0
  %3087 = vmatmul.mubr.bf16.gmra.mxu0 0
  %v3088 = vpop.f32.mrf.mxu0
  %v3089 = vadd.f32 0.0, %v3088
  %v3090 = vpop.f32.mrf.mxu0
  %v3091 = vpop.f32.mrf.mxu0
  %v3092 = vpop.f32.mrf.mxu0
  %3093 = vdwg.mxu0
  %v3094 = vadd.f32 %v2806, %v3048
  %v3095 = vadd.f32 %v2808, %v3050
  %v3096 = vmul.f32 %v3094, 0.5
  %v3097 = vmul.f32 %v3095, 0.5
  %v3098 = vtanh.pop %v3096
  %v3099 = vtanh.pop %v3097
  %v3100 = vadd.f32 %v3098, 1.0
  %v3101 = vadd.f32 %v3099, 1.0
  %v3102 = vmul.f32 %v3100, 0.5
  %v3103 = vmul.f32 %v3101, 0.5
  %v3104 = vadd.f32 %v3089, %v429
  %v3105 = vmul.f32 %v3102, %v3104
  %v3106 = vadd.f32 %v2847, %v3105
  %v3107 = vtanh.pop %v3106
  %v3108 = vsub.f32 1.0, %v3103
  %v3109 = vmul.f32 %v3108, %v3107
  %v3110 = vmul.f32 %v3103, 0.0
  %v3111 = vadd.f32 %v3109, %v3110
  %s3112 = scalar_lea.vmem [#allocation2], 96
  %v3113 = vld [vmem:[%s3112] sm:$0xff]
  %v3114 = vld [vmem:[%s3112 + $0x8] sm:$0xff]
  %v3115 = vld [vmem:[%s3112 + $0x10] sm:$0xff]
  %v3116 = vpack.c.bf16 %v2247, %v2247
  %3117 = vmatprep.subr.bf16.mxu0 %v626
  %3118 = vmatpush1.bf16.msra.mxu0 %v625
  %3119 = vmatprep.subr.bf16.mxu0 %v623
  %3120 = vmatpush1.bf16.msra.mxu0 %v622
  %3121 = vmatprep.subr.bf16.mxu0 %v620
  %3122 = vmatpush1.bf16.msra.mxu0 %v619
  %3123 = vmatprep.subr.bf16.mxu0 %v617
  %3124 = vmatpush1.bf16.msra.mxu0 %v616
  %3125 = vmatprep.subr.bf16.mxu0 %v614
  %3126 = vmatpush1.bf16.msra.mxu0 %v613
  %3127 = vmatprep.subr.bf16.mxu0 %v611
  %3128 = vmatpush1.bf16.msra.mxu0 %v610
  %3129 = vmatprep.subr.bf16.mxu0 %v608
  %3130 = vmatpush1.bf16.msra.mxu0 %v607
  %3131 = vmatprep.subr.bf16.mxu0 %v605
  %3132 = vmatpush1.bf16.msra.mxu0 %v604
  %3133 = vmatprep.subr.bf16.mxu0 0
  %3134 = vmatpush2.bf16.msra.mxu0 0
  %3135 = vmatprep.subr.bf16.mxu0 0
  %3136 = vmatpush2.bf16.msra.mxu0 0
  %3137 = vmatprep.subr.bf16.mxu0 0
  %3138 = vmatpush2.bf16.msra.mxu0 0
  %3139 = vmatprep.subr.bf16.mxu0 0
  %3140 = vmatpush2.bf16.msra.mxu0 0
  %3141 = vmatprep.subr.bf16.mxu0 0
  %3142 = vmatpush2.bf16.msra.mxu0 0
  %3143 = vmatprep.subr.bf16.mxu0 0
  %3144 = vmatpush2.bf16.msra.mxu0 0
  %3145 = vmatprep.subr.bf16.mxu0 0
  %3146 = vmatpush2.bf16.msra.mxu0 0
  %3147 = vmatprep.subr.bf16.mxu0 0
  %3148 = vmatpush2.bf16.msra.mxu0 0
  %3149 = vmatprep.mubr.bf16.mxu0 0
  %3150 = vmatmul.mubr.bf16.gmra.mxu0 %v3116
  %v3151 = vpop.f32.mrf.mxu0
  %v3152 = vadd.f32 0.0, %v3151
  %v3153 = vpop.f32.mrf.mxu0
  %v3154 = vadd.f32 0.0, %v3153
  %v3155 = vpop.f32.mrf.mxu0
  %v3156 = vpop.f32.mrf.mxu0
  %3157 = vdwg.mxu0
  %3158 = vmatprep.subr.bf16.mxu0 0
  %3159 = vmatpush1.bf16.msra.mxu0 %v627
  %3160 = vmatprep.subr.bf16.mxu0 0
  %3161 = vmatpush1.bf16.msra.mxu0 %v624
  %3162 = vmatprep.subr.bf16.mxu0 0
  %3163 = vmatpush1.bf16.msra.mxu0 %v621
  %3164 = vmatprep.subr.bf16.mxu0 0
  %3165 = vmatpush1.bf16.msra.mxu0 %v618
  %3166 = vmatprep.subr.bf16.mxu0 0
  %3167 = vmatpush1.bf16.msra.mxu0 %v615
  %3168 = vmatprep.subr.bf16.mxu0 0
  %3169 = vmatpush1.bf16.msra.mxu0 %v612
  %3170 = vmatprep.subr.bf16.mxu0 0
  %3171 = vmatpush1.bf16.msra.mxu0 %v609
  %3172 = vmatprep.subr.bf16.mxu0 0
  %3173 = vmatpush1.bf16.msra.mxu0 %v606
  %3174 = vmatprep.subr.bf16.mxu0 0
  %3175 = vmatpush2.bf16.msra.mxu0 0
  %3176 = vmatprep.subr.bf16.mxu0 0
  %3177 = vmatpush2.bf16.msra.mxu0 0
  %3178 = vmatprep.subr.bf16.mxu0 0
  %3179 = vmatpush2.bf16.msra.mxu0 0
  %3180 = vmatprep.subr.bf16.mxu0 0
  %3181 = vmatpush2.bf16.msra.mxu0 0
  %3182 = vmatprep.subr.bf16.mxu0 0
  %3183 = vmatpush2.bf16.msra.mxu0 0
  %3184 = vmatprep.subr.bf16.mxu0 0
  %3185 = vmatpush2.bf16.msra.mxu0 0
  %3186 = vmatprep.subr.bf16.mxu0 0
  %3187 = vmatpush2.bf16.msra.mxu0 0
  %3188 = vmatprep.subr.bf16.mxu0 0
  %3189 = vmatpush2.bf16.msra.mxu0 0
  %3190 = vmatprep.mubr.bf16.mxu0 0
  %3191 = vmatmul.mubr.bf16.gmra.mxu0 %v3116
  %v3192 = vpop.f32.mrf.mxu0
  %v3193 = vadd.f32 0.0, %v3192
  %v3194 = vpop.f32.mrf.mxu0
  %v3195 = vpop.f32.mrf.mxu0
  %v3196 = vpop.f32.mrf.mxu0
  %3197 = vdwg.mxu0
  %v3198 = vadd.f32 %v3113, %v3152
  %v3199 = vadd.f32 %v3114, %v3154
  %v3200 = vmul.f32 %v3198, 0.5
  %v3201 = vmul.f32 %v3199, 0.5
  %v3202 = vtanh.pop %v3200
  %v3203 = vtanh.pop %v3201
  %v3204 = vadd.f32 %v3202, 1.0
  %v3205 = vadd.f32 %v3203, 1.0
  %v3206 = vmul.f32 %v3204, 0.5
  %v3207 = vmul.f32 %v3205, 0.5
  %v3208 = vadd.f32 %v3193, %v414
  %v3209 = vmul.f32 %v3206, %v3208
  %v3210 = vadd.f32 %v3115, %v3209
  %v3211 = vtanh.pop %v3210
  %v3212 = vsub.f32 1.0, %v3207
  %v3213 = vmul.f32 %v3212, %v3211
  %v3214 = vmul.f32 %v3207, %v2247
  %v3215 = vadd.f32 %v3213, %v3214
  %3216 = vmatprep.subr.bf16.mxu0 %v990
  %3217 = vmatpush1.bf16.msra.mxu0 %v989
  %3218 = vmatprep.subr.bf16.mxu0 %v987
  %3219 = vmatpush1.bf16.msra.mxu0 %v986
  %3220 = vmatprep.subr.bf16.mxu0 %v984
  %3221 = vmatpush1.bf16.msra.mxu0 %v983
  %3222 = vmatprep.subr.bf16.mxu0 %v981
  %3223 = vmatpush1.bf16.msra.mxu0 %v980
  %3224 = vmatprep.subr.bf16.mxu0 %v978
  %3225 = vmatpush1.bf16.msra.mxu0 %v977
  %3226 = vmatprep.subr.bf16.mxu0 %v975
  %3227 = vmatpush1.bf16.msra.mxu0 %v974
  %3228 = vmatprep.subr.bf16.mxu0 %v972
  %3229 = vmatpush1.bf16.msra.mxu0 %v971
  %3230 = vmatprep.subr.bf16.mxu0 %v969
  %3231 = vmatpush1.bf16.msra.mxu0 %v968
  %3232 = vmatprep.subr.bf16.mxu0 0
  %3233 = vmatpush2.bf16.msra.mxu0 0
  %3234 = vmatprep.subr.bf16.mxu0 0
  %3235 = vmatpush2.bf16.msra.mxu0 0
  %3236 = vmatprep.subr.bf16.mxu0 0
  %3237 = vmatpush2.bf16.msra.mxu0 0
  %3238 = vmatprep.subr.bf16.mxu0 0
  %3239 = vmatpush2.bf16.msra.mxu0 0
  %3240 = vmatprep.subr.bf16.mxu0 0
  %3241 = vmatpush2.bf16.msra.mxu0 0
  %3242 = vmatprep.subr.bf16.mxu0 0
  %3243 = vmatpush2.bf16.msra.mxu0 0
  %3244 = vmatprep.subr.bf16.mxu0 0
  %3245 = vmatpush2.bf16.msra.mxu0 0
  %3246 = vmatprep.subr.bf16.mxu0 0
  %3247 = vmatpush2.bf16.msra.mxu0 0
  %3248 = vmatprep.mubr.bf16.mxu0 0
  %3249 = vmatmul.mubr.bf16.gmra.mxu0 %v3116
  %v3250 = vpop.f32.mrf.mxu0
  %v3251 = vadd.f32 %v436, %v3250
  %v3252 = vpop.f32.mrf.mxu0
  %v3253 = vadd.f32 %v440, %v3252
  %v3254 = vpop.f32.mrf.mxu0
  %v3255 = vpop.f32.mrf.mxu0
  %3256 = vdwg.mxu0
  %3257 = vmatprep.subr.bf16.mxu0 0
  %3258 = vmatpush1.bf16.msra.mxu0 %v991
  %3259 = vmatprep.subr.bf16.mxu0 0
  %3260 = vmatpush1.bf16.msra.mxu0 %v988
  %3261 = vmatprep.subr.bf16.mxu0 0
  %3262 = vmatpush1.bf16.msra.mxu0 %v985
  %3263 = vmatprep.subr.bf16.mxu0 0
  %3264 = vmatpush1.bf16.msra.mxu0 %v982
  %3265 = vmatprep.subr.bf16.mxu0 0
  %3266 = vmatpush1.bf16.msra.mxu0 %v979
  %3267 = vmatprep.subr.bf16.mxu0 0
  %3268 = vmatpush1.bf16.msra.mxu0 %v976
  %3269 = vmatprep.subr.bf16.mxu0 0
  %3270 = vmatpush1.bf16.msra.mxu0 %v973
  %3271 = vmatprep.subr.bf16.mxu0 0
  %3272 = vmatpush1.bf16.msra.mxu0 %v970
  %3273 = vmatprep.subr.bf16.mxu0 0
  %3274 = vmatpush2.bf16.msra.mxu0 0
  %3275 = vmatprep.subr.bf16.mxu0 0
  %3276 = vmatpush2.bf16.msra.mxu0 0
  %3277 = vmatprep.subr.bf16.mxu0 0
  %3278 = vmatpush2.bf16.msra.mxu0 0
  %3279 = vmatprep.subr.bf16.mxu0 0
  %3280 = vmatpush2.bf16.msra.mxu0 0
  %3281 = vmatprep.subr.bf16.mxu0 0
  %3282 = vmatpush2.bf16.msra.mxu0 0
  %3283 = vmatprep.subr.bf16.mxu0 0
  %3284 = vmatpush2.bf16.msra.mxu0 0
  %3285 = vmatprep.subr.bf16.mxu0 0
  %3286 = vmatpush2.bf16.msra.mxu0 0
  %3287 = vmatprep.subr.bf16.mxu0 0
  %3288 = vmatpush2.bf16.msra.mxu0 0
  %3289 = vmatprep.mubr.bf16.mxu0 0
  %3290 = vmatmul.mubr.bf16.gmra.mxu0 %v3116
  %v3291 = vpop.f32.mrf.mxu0
  %v3292 = vadd.f32 %v444, %v3291
  %v3293 = vpop.f32.mrf.mxu0
  %v3294 = vpop.f32.mrf.mxu0
  %v3295 = vpop.f32.mrf.mxu0
  %3296 = vdwg.mxu0
  %v3297 = vpack.c.bf16 %v2428, %v2428
  %3298 = vmatprep.subr.bf16.mxu0 %v1232
  %3299 = vmatpush1.bf16.msra.mxu0 %v1231
  %3300 = vmatprep.subr.bf16.mxu0 %v1229
  %3301 = vmatpush1.bf16.msra.mxu0 %v1228
  %3302 = vmatprep.subr.bf16.mxu0 %v1226
  %3303 = vmatpush1.bf16.msra.mxu0 %v1225
  %3304 = vmatprep.subr.bf16.mxu0 %v1223
  %3305 = vmatpush1.bf16.msra.mxu0 %v1222
  %3306 = vmatprep.subr.bf16.mxu0 %v1220
  %3307 = vmatpush1.bf16.msra.mxu0 %v1219
  %3308 = vmatprep.subr.bf16.mxu0 %v1217
  %3309 = vmatpush1.bf16.msra.mxu0 %v1216
  %3310 = vmatprep.subr.bf16.mxu0 %v1214
  %3311 = vmatpush1.bf16.msra.mxu0 %v1213
  %3312 = vmatprep.subr.bf16.mxu0 %v1211
  %3313 = vmatpush1.bf16.msra.mxu0 %v1210
  %3314 = vmatprep.subr.bf16.mxu0 0
  %3315 = vmatpush2.bf16.msra.mxu0 0
  %3316 = vmatprep.subr.bf16.mxu0 0
  %3317 = vmatpush2.bf16.msra.mxu0 0
  %3318 = vmatprep.subr.bf16.mxu0 0
  %3319 = vmatpush2.bf16.msra.mxu0 0
  %3320 = vmatprep.subr.bf16.mxu0 0
  %3321 = vmatpush2.bf16.msra.mxu0 0
  %3322 = vmatprep.subr.bf16.mxu0 0
  %3323 = vmatpush2.bf16.msra.mxu0 0
  %3324 = vmatprep.subr.bf16.mxu0 0
  %3325 = vmatpush2.bf16.msra.mxu0 0
  %3326 = vmatprep.subr.bf16.mxu0 0
  %3327 = vmatpush2.bf16.msra.mxu0 0
  %3328 = vmatprep.subr.bf16.mxu0 0
  %3329 = vmatpush2.bf16.msra.mxu0 0
  %3330 = vmatprep.mubr.bf16.mxu0 0
  %3331 = vmatmul.mubr.bf16.gmra.mxu0 %v3297
  %v3332 = vpop.f32.mrf.mxu0
  %v3333 = vadd.f32 0.0, %v3332
  %v3334 = vpop.f32.mrf.mxu0
  %v3335 = vadd.f32 0.0, %v3334
  %v3336 = vpop.f32.mrf.mxu0
  %v3337 = vpop.f32.mrf.mxu0
  %3338 = vdwg.mxu0
  %3339 = vmatprep.subr.bf16.mxu0 0
  %3340 = vmatpush1.bf16.msra.mxu0 %v1233
  %3341 = vmatprep.subr.bf16.mxu0 0
  %3342 = vmatpush1.bf16.msra.mxu0 %v1230
  %3343 = vmatprep.subr.bf16.mxu0 0
  %3344 = vmatpush1.bf16.msra.mxu0 %v1227
  %3345 = vmatprep.subr.bf16.mxu0 0
  %3346 = vmatpush1.bf16.msra.mxu0 %v1224
  %3347 = vmatprep.subr.bf16.mxu0 0
  %3348 = vmatpush1.bf16.msra.mxu0 %v1221
  %3349 = vmatprep.subr.bf16.mxu0 0
  %3350 = vmatpush1.bf16.msra.mxu0 %v1218
  %3351 = vmatprep.subr.bf16.mxu0 0
  %3352 = vmatpush1.bf16.msra.mxu0 %v1215
  %3353 = vmatprep.subr.bf16.mxu0 0
  %3354 = vmatpush1.bf16.msra.mxu0 %v1212
  %3355 = vmatprep.subr.bf16.mxu0 0
  %3356 = vmatpush2.bf16.msra.mxu0 0
  %3357 = vmatprep.subr.bf16.mxu0 0
  %3358 = vmatpush2.bf16.msra.mxu0 0
  %3359 = vmatprep.subr.bf16.mxu0 0
  %3360 = vmatpush2.bf16.msra.mxu0 0
  %3361 = vmatprep.subr.bf16.mxu0 0
  %3362 = vmatpush2.bf16.msra.mxu0 0
  %3363 = vmatprep.subr.bf16.mxu0 0
  %3364 = vmatpush2.bf16.msra.mxu0 0
  %3365 = vmatprep.subr.bf16.mxu0 0
  %3366 = vmatpush2.bf16.msra.mxu0 0
  %3367 = vmatprep.subr.bf16.mxu0 0
  %3368 = vmatpush2.bf16.msra.mxu0 0
  %3369 = vmatprep.subr.bf16.mxu0 0
  %3370 = vmatpush2.bf16.msra.mxu0 0
  %3371 = vmatprep.mubr.bf16.mxu0 0
  %3372 = vmatmul.mubr.bf16.gmra.mxu0 %v3297
  %v3373 = vpop.f32.mrf.mxu0
  %v3374 = vadd.f32 0.0, %v3373
  %v3375 = vpop.f32.mrf.mxu0
  %v3376 = vpop.f32.mrf.mxu0
  %v3377 = vpop.f32.mrf.mxu0
  %3378 = vdwg.mxu0
  %v3379 = vadd.f32 %v3251, %v3333
  %v3380 = vadd.f32 %v3253, %v3335
  %v3381 = vmul.f32 %v3379, 0.5
  %v3382 = vmul.f32 %v3380, 0.5
  %v3383 = vtanh.pop %v3381
  %v3384 = vtanh.pop %v3382
  %v3385 = vadd.f32 %v3383, 1.0
  %v3386 = vadd.f32 %v3384, 1.0
  %v3387 = vmul.f32 %v3385, 0.5
  %v3388 = vmul.f32 %v3386, 0.5
  %v3389 = vadd.f32 %v3374, %v419
  %v3390 = vmul.f32 %v3387, %v3389
  %v3391 = vadd.f32 %v3292, %v3390
  %v3392 = vtanh.pop %v3391
  %v3393 = vsub.f32 1.0, %v3388
  %v3394 = vmul.f32 %v3393, %v3392
  %v3395 = vmul.f32 %v3388, %v2428
  %v3396 = vadd.f32 %v3394, %v3395
  %3397 = vmatprep.subr.bf16.mxu0 %v1777
  %3398 = vmatpush1.bf16.msra.mxu0 %v1776
  %3399 = vmatprep.subr.bf16.mxu0 %v1774
  %3400 = vmatpush1.bf16.msra.mxu0 %v1773
  %3401 = vmatprep.subr.bf16.mxu0 %v1771
  %3402 = vmatpush1.bf16.msra.mxu0 %v1770
  %3403 = vmatprep.subr.bf16.mxu0 %v1768
  %3404 = vmatpush1.bf16.msra.mxu0 %v1767
  %3405 = vmatprep.subr.bf16.mxu0 %v1765
  %3406 = vmatpush1.bf16.msra.mxu0 %v1764
  %3407 = vmatprep.subr.bf16.mxu0 %v1762
  %3408 = vmatpush1.bf16.msra.mxu0 %v1761
  %3409 = vmatprep.subr.bf16.mxu0 %v1759
  %3410 = vmatpush1.bf16.msra.mxu0 %v1758
  %3411 = vmatprep.subr.bf16.mxu0 %v1756
  %3412 = vmatpush1.bf16.msra.mxu0 %v1755
  %3413 = vmatprep.subr.bf16.mxu0 0
  %3414 = vmatpush2.bf16.msra.mxu0 0
  %3415 = vmatprep.subr.bf16.mxu0 0
  %3416 = vmatpush2.bf16.msra.mxu0 0
  %3417 = vmatprep.subr.bf16.mxu0 0
  %3418 = vmatpush2.bf16.msra.mxu0 0
  %3419 = vmatprep.subr.bf16.mxu0 0
  %3420 = vmatpush2.bf16.msra.mxu0 0
  %3421 = vmatprep.subr.bf16.mxu0 0
  %3422 = vmatpush2.bf16.msra.mxu0 0
  %3423 = vmatprep.subr.bf16.mxu0 0
  %3424 = vmatpush2.bf16.msra.mxu0 0
  %3425 = vmatprep.subr.bf16.mxu0 0
  %3426 = vmatpush2.bf16.msra.mxu0 0
  %3427 = vmatprep.subr.bf16.mxu0 0
  %3428 = vmatpush2.bf16.msra.mxu0 0
  %3429 = vmatprep.mubr.bf16.mxu0 0
  %3430 = vmatmul.mubr.bf16.gmra.mxu0 %v3297
  %v3431 = vpop.f32.mrf.mxu0
  %v3432 = vadd.f32 %v454, %v3431
  %v3433 = vpop.f32.mrf.mxu0
  %v3434 = vadd.f32 %v458, %v3433
  %v3435 = vpop.f32.mrf.mxu0
  %v3436 = vpop.f32.mrf.mxu0
  %3437 = vdwg.mxu0
  %3438 = vmatprep.subr.bf16.mxu0 0
  %3439 = vmatpush1.bf16.msra.mxu0 %v1778
  %3440 = vmatprep.subr.bf16.mxu0 0
  %3441 = vmatpush1.bf16.msra.mxu0 %v1775
  %3442 = vmatprep.subr.bf16.mxu0 0
  %3443 = vmatpush1.bf16.msra.mxu0 %v1772
  %3444 = vmatprep.subr.bf16.mxu0 0
  %3445 = vmatpush1.bf16.msra.mxu0 %v1769
  %3446 = vmatprep.subr.bf16.mxu0 0
  %3447 = vmatpush1.bf16.msra.mxu0 %v1766
  %3448 = vmatprep.subr.bf16.mxu0 0
  %3449 = vmatpush1.bf16.msra.mxu0 %v1763
  %3450 = vmatprep.subr.bf16.mxu0 0
  %3451 = vmatpush1.bf16.msra.mxu0 %v1760
  %3452 = vmatprep.subr.bf16.mxu0 0
  %3453 = vmatpush1.bf16.msra.mxu0 %v1757
  %3454 = vmatprep.subr.bf16.mxu0 0
  %3455 = vmatpush2.bf16.msra.mxu0 0
  %3456 = vmatprep.subr.bf16.mxu0 0
  %3457 = vmatpush2.bf16.msra.mxu0 0
  %3458 = vmatprep.subr.bf16.mxu0 0
  %3459 = vmatpush2.bf16.msra.mxu0 0
  %3460 = vmatprep.subr.bf16.mxu0 0
  %3461 = vmatpush2.bf16.msra.mxu0 0
  %3462 = vmatprep.subr.bf16.mxu0 0
  %3463 = vmatpush2.bf16.msra.mxu0 0
  %3464 = vmatprep.subr.bf16.mxu0 0
  %3465 = vmatpush2.bf16.msra.mxu0 0
  %3466 = vmatprep.subr.bf16.mxu0 0
  %3467 = vmatpush2.bf16.msra.mxu0 0
  %3468 = vmatprep.subr.bf16.mxu0 0
  %3469 = vmatpush2.bf16.msra.mxu0 0
  %3470 = vmatprep.mubr.bf16.mxu0 0
  %3471 = vmatmul.mubr.bf16.gmra.mxu0 %v3297
  %v3472 = vpop.f32.mrf.mxu0
  %v3473 = vadd.f32 %v462, %v3472
  %v3474 = vpop.f32.mrf.mxu0
  %v3475 = vpop.f32.mrf.mxu0
  %v3476 = vpop.f32.mrf.mxu0
  %3477 = vdwg.mxu0
  %v3478 = vpack.c.bf16 %v2609, %v2609
  %3479 = vmatprep.subr.bf16.mxu0 %v2019
  %3480 = vmatpush1.bf16.msra.mxu0 %v2018
  %3481 = vmatprep.subr.bf16.mxu0 %v2016
  %3482 = vmatpush1.bf16.msra.mxu0 %v2015
  %3483 = vmatprep.subr.bf16.mxu0 %v2013
  %3484 = vmatpush1.bf16.msra.mxu0 %v2012
  %3485 = vmatprep.subr.bf16.mxu0 %v2010
  %3486 = vmatpush1.bf16.msra.mxu0 %v2009
  %3487 = vmatprep.subr.bf16.mxu0 %v2007
  %3488 = vmatpush1.bf16.msra.mxu0 %v2006
  %3489 = vmatprep.subr.bf16.mxu0 %v2004
  %3490 = vmatpush1.bf16.msra.mxu0 %v2003
  %3491 = vmatprep.subr.bf16.mxu0 %v2001
  %3492 = vmatpush1.bf16.msra.mxu0 %v2000
  %3493 = vmatprep.subr.bf16.mxu0 %v1998
  %3494 = vmatpush1.bf16.msra.mxu0 %v1997
  %3495 = vmatprep.subr.bf16.mxu0 0
  %3496 = vmatpush2.bf16.msra.mxu0 0
  %3497 = vmatprep.subr.bf16.mxu0 0
  %3498 = vmatpush2.bf16.msra.mxu0 0
  %3499 = vmatprep.subr.bf16.mxu0 0
  %3500 = vmatpush2.bf16.msra.mxu0 0
  %3501 = vmatprep.subr.bf16.mxu0 0
  %3502 = vmatpush2.bf16.msra.mxu0 0
  %3503 = vmatprep.subr.bf16.mxu0 0
  %3504 = vmatpush2.bf16.msra.mxu0 0
  %3505 = vmatprep.subr.bf16.mxu0 0
  %3506 = vmatpush2.bf16.msra.mxu0 0
  %3507 = vmatprep.subr.bf16.mxu0 0
  %3508 = vmatpush2.bf16.msra.mxu0 0
  %3509 = vmatprep.subr.bf16.mxu0 0
  %3510 = vmatpush2.bf16.msra.mxu0 0
  %3511 = vmatprep.mubr.bf16.mxu0 0
  %3512 = vmatmul.mubr.bf16.gmra.mxu0 %v3478
  %v3513 = vpop.f32.mrf.mxu0
  %v3514 = vadd.f32 0.0, %v3513
  %v3515 = vpop.f32.mrf.mxu0
  %v3516 = vadd.f32 0.0, %v3515
  %v3517 = vpop.f32.mrf.mxu0
  %v3518 = vpop.f32.mrf.mxu0
  %3519 = vdwg.mxu0
  %3520 = vmatprep.subr.bf16.mxu0 0
  %3521 = vmatpush1.bf16.msra.mxu0 %v2020
  %3522 = vmatprep.subr.bf16.mxu0 0
  %3523 = vmatpush1.bf16.msra.mxu0 %v2017
  %3524 = vmatprep.subr.bf16.mxu0 0
  %3525 = vmatpush1.bf16.msra.mxu0 %v2014
  %3526 = vmatprep.subr.bf16.mxu0 0
  %3527 = vmatpush1.bf16.msra.mxu0 %v2011
  %3528 = vmatprep.subr.bf16.mxu0 0
  %3529 = vmatpush1.bf16.msra.mxu0 %v2008
  %3530 = vmatprep.subr.bf16.mxu0 0
  %3531 = vmatpush1.bf16.msra.mxu0 %v2005
  %3532 = vmatprep.subr.bf16.mxu0 0
  %3533 = vmatpush1.bf16.msra.mxu0 %v2002
  %3534 = vmatprep.subr.bf16.mxu0 0
  %3535 = vmatpush1.bf16.msra.mxu0 %v1999
  %3536 = vmatprep.subr.bf16.mxu0 0
  %3537 = vmatpush2.bf16.msra.mxu0 0
  %3538 = vmatprep.subr.bf16.mxu0 0
  %3539 = vmatpush2.bf16.msra.mxu0 0
  %3540 = vmatprep.subr.bf16.mxu0 0
  %3541 = vmatpush2.bf16.msra.mxu0 0
  %3542 = vmatprep.subr.bf16.mxu0 0
  %3543 = vmatpush2.bf16.msra.mxu0 0
  %3544 = vmatprep.subr.bf16.mxu0 0
  %3545 = vmatpush2.bf16.msra.mxu0 0
  %3546 = vmatprep.subr.bf16.mxu0 0
  %3547 = vmatpush2.bf16.msra.mxu0 0
  %3548 = vmatprep.subr.bf16.mxu0 0
  %3549 = vmatpush2.bf16.msra.mxu0 0
  %3550 = vmatprep.subr.bf16.mxu0 0
  %3551 = vmatpush2.bf16.msra.mxu0 0
  %3552 = vmatprep.mubr.bf16.mxu0 0
  %3553 = vmatmul.mubr.bf16.gmra.mxu0 %v3478
  %v3554 = vpop.f32.mrf.mxu0
  %v3555 = vadd.f32 0.0, %v3554
  %v3556 = vpop.f32.mrf.mxu0
  %v3557 = vpop.f32.mrf.mxu0
  %v3558 = vpop.f32.mrf.mxu0
  %3559 = vdwg.mxu0
  %v3560 = vadd.f32 %v3432, %v3514
  %v3561 = vadd.f32 %v3434, %v3516
  %v3562 = vmul.f32 %v3560, 0.5
  %v3563 = vmul.f32 %v3561, 0.5
  %v3564 = vtanh.pop %v3562
  %v3565 = vtanh.pop %v3563
  %v3566 = vadd.f32 %v3564, 1.0
  %v3567 = vadd.f32 %v3565, 1.0
  %v3568 = vmul.f32 %v3566, 0.5
  %v3569 = vmul.f32 %v3567, 0.5
  %v3570 = vadd.f32 %v3555, %v424
  %v3571 = vmul.f32 %v3568, %v3570
  %v3572 = vadd.f32 %v3473, %v3571
  %v3573 = vtanh.pop %v3572
  %v3574 = vsub.f32 1.0, %v3569
  %v3575 = vmul.f32 %v3574, %v3573
  %v3576 = vmul.f32 %v3569, %v2609
  %v3577 = vadd.f32 %v3575, %v3576
  %3578 = vmatprep.subr.bf16.mxu0 %v2745
  %3579 = vmatpush1.bf16.msra.mxu0 %v2744
  %3580 = vmatprep.subr.bf16.mxu0 %v2742
  %3581 = vmatpush1.bf16.msra.mxu0 %v2741
  %3582 = vmatprep.subr.bf16.mxu0 %v2739
  %3583 = vmatpush1.bf16.msra.mxu0 %v2738
  %3584 = vmatprep.subr.bf16.mxu0 %v2736
  %3585 = vmatpush1.bf16.msra.mxu0 %v2735
  %3586 = vmatprep.subr.bf16.mxu0 %v2733
  %3587 = vmatpush1.bf16.msra.mxu0 %v2732
  %3588 = vmatprep.subr.bf16.mxu0 %v2730
  %3589 = vmatpush1.bf16.msra.mxu0 %v2729
  %3590 = vmatprep.subr.bf16.mxu0 %v2727
  %3591 = vmatpush1.bf16.msra.mxu0 %v2726
  %3592 = vmatprep.subr.bf16.mxu0 %v2724
  %3593 = vmatpush1.bf16.msra.mxu0 %v2723
  %3594 = vmatprep.subr.bf16.mxu0 0
  %3595 = vmatpush2.bf16.msra.mxu0 0
  %3596 = vmatprep.subr.bf16.mxu0 0
  %3597 = vmatpush2.bf16.msra.mxu0 0
  %3598 = vmatprep.subr.bf16.mxu0 0
  %3599 = vmatpush2.bf16.msra.mxu0 0
  %3600 = vmatprep.subr.bf16.mxu0 0
  %3601 = vmatpush2.bf16.msra.mxu0 0
  %3602 = vmatprep.subr.bf16.mxu0 0
  %3603 = vmatpush2.bf16.msra.mxu0 0
  %3604 = vmatprep.subr.bf16.mxu0 0
  %3605 = vmatpush2.bf16.msra.mxu0 0
  %3606 = vmatprep.subr.bf16.mxu0 0
  %3607 = vmatpush2.bf16.msra.mxu0 0
  %3608 = vmatprep.subr.bf16.mxu0 0
  %3609 = vmatpush2.bf16.msra.mxu0 0
  %3610 = vmatprep.mubr.bf16.mxu0 0
  %3611 = vmatmul.mubr.bf16.gmra.mxu0 %v3478
  %v3612 = vpop.f32.mrf.mxu0
  %v3613 = vadd.f32 %v472, %v3612
  %v3614 = vpop.f32.mrf.mxu0
  %v3615 = vadd.f32 %v476, %v3614
  %v3616 = vpop.f32.mrf.mxu0
  %v3617 = vpop.f32.mrf.mxu0
  %3618 = vdwg.mxu0
  %3619 = vmatprep.subr.bf16.mxu0 0
  %3620 = vmatpush1.bf16.msra.mxu0 %v2746
  %3621 = vmatprep.subr.bf16.mxu0 0
  %3622 = vmatpush1.bf16.msra.mxu0 %v2743
  %3623 = vmatprep.subr.bf16.mxu0 0
  %3624 = vmatpush1.bf16.msra.mxu0 %v2740
  %3625 = vmatprep.subr.bf16.mxu0 0
  %3626 = vmatpush1.bf16.msra.mxu0 %v2737
  %3627 = vmatprep.subr.bf16.mxu0 0
  %3628 = vmatpush1.bf16.msra.mxu0 %v2734
  %3629 = vmatprep.subr.bf16.mxu0 0
  %3630 = vmatpush1.bf16.msra.mxu0 %v2731
  %3631 = vmatprep.subr.bf16.mxu0 0
  %3632 = vmatpush1.bf16.msra.mxu0 %v2728
  %3633 = vmatprep.subr.bf16.mxu0 0
  %3634 = vmatpush1.bf16.msra.mxu0 %v2725
  %3635 = vmatprep.subr.bf16.mxu0 0
  %3636 = vmatpush2.bf16.msra.mxu0 0
  %3637 = vmatprep.subr.bf16.mxu0 0
  %3638 = vmatpush2.bf16.msra.mxu0 0
  %3639 = vmatprep.subr.bf16.mxu0 0
  %3640 = vmatpush2.bf16.msra.mxu0 0
  %3641 = vmatprep.subr.bf16.mxu0 0
  %3642 = vmatpush2.bf16.msra.mxu0 0
  %3643 = vmatprep.subr.bf16.mxu0 0
  %3644 = vmatpush2.bf16.msra.mxu0 0
  %3645 = vmatprep.subr.bf16.mxu0 0
  %3646 = vmatpush2.bf16.msra.mxu0 0
  %3647 = vmatprep.subr.bf16.mxu0 0
  %3648 = vmatpush2.bf16.msra.mxu0 0
  %3649 = vmatprep.subr.bf16.mxu0 0
  %3650 = vmatpush2.bf16.msra.mxu0 0
  %3651 = vmatprep.mubr.bf16.mxu0 0
  %3652 = vmatmul.mubr.bf16.gmra.mxu0 %v3478
  %v3653 = vpop.f32.mrf.mxu0
  %v3654 = vadd.f32 %v480, %v3653
  %v3655 = vpop.f32.mrf.mxu0
  %v3656 = vpop.f32.mrf.mxu0
  %v3657 = vpop.f32.mrf.mxu0
  %3658 = vdwg.mxu0
  %v3659 = vpack.c.bf16 %v3111, %v3111
  %3660 = vmatprep.subr.bf16.mxu0 %v2987
  %3661 = vmatpush1.bf16.msra.mxu0 %v2986
  %3662 = vmatprep.subr.bf16.mxu0 %v2984
  %3663 = vmatpush1.bf16.msra.mxu0 %v2983
  %3664 = vmatprep.subr.bf16.mxu0 %v2981
  %3665 = vmatpush1.bf16.msra.mxu0 %v2980
  %3666 = vmatprep.subr.bf16.mxu0 %v2978
  %3667 = vmatpush1.bf16.msra.mxu0 %v2977
  %3668 = vmatprep.subr.bf16.mxu0 %v2975
  %3669 = vmatpush1.bf16.msra.mxu0 %v2974
  %3670 = vmatprep.subr.bf16.mxu0 %v2972
  %3671 = vmatpush1.bf16.msra.mxu0 %v2971
  %3672 = vmatprep.subr.bf16.mxu0 %v2969
  %3673 = vmatpush1.bf16.msra.mxu0 %v2968
  %3674 = vmatprep.subr.bf16.mxu0 %v2966
  %3675 = vmatpush1.bf16.msra.mxu0 %v2965
  %3676 = vmatprep.subr.bf16.mxu0 0
  %3677 = vmatpush2.bf16.msra.mxu0 0
  %3678 = vmatprep.subr.bf16.mxu0 0
  %3679 = vmatpush2.bf16.msra.mxu0 0
  %3680 = vmatprep.subr.bf16.mxu0 0
  %3681 = vmatpush2.bf16.msra.mxu0 0
  %3682 = vmatprep.subr.bf16.mxu0 0
  %3683 = vmatpush2.bf16.msra.mxu0 0
  %3684 = vmatprep.subr.bf16.mxu0 0
  %3685 = vmatpush2.bf16.msra.mxu0 0
  %3686 = vmatprep.subr.bf16.mxu0 0
  %3687 = vmatpush2.bf16.msra.mxu0 0
  %3688 = vmatprep.subr.bf16.mxu0 0
  %3689 = vmatpush2.bf16.msra.mxu0 0
  %3690 = vmatprep.subr.bf16.mxu0 0
  %3691 = vmatpush2.bf16.msra.mxu0 0
  %3692 = vmatprep.mubr.bf16.mxu0 0
  %3693 = vmatmul.mubr.bf16.gmra.mxu0 %v3659
  %v3694 = vpop.f32.mrf.mxu0
  %v3695 = vadd.f32 0.0, %v3694
  %v3696 = vpop.f32.mrf.mxu0
  %v3697 = vadd.f32 0.0, %v3696
  %v3698 = vpop.f32.mrf.mxu0
  %v3699 = vpop.f32.mrf.mxu0
  %3700 = vdwg.mxu0
  %3701 = vmatprep.subr.bf16.mxu0 0
  %3702 = vmatpush1.bf16.msra.mxu0 %v2988
  %3703 = vmatprep.subr.bf16.mxu0 0
  %3704 = vmatpush1.bf16.msra.mxu0 %v2985
  %3705 = vmatprep.subr.bf16.mxu0 0
  %3706 = vmatpush1.bf16.msra.mxu0 %v2982
  %3707 = vmatprep.subr.bf16.mxu0 0
  %3708 = vmatpush1.bf16.msra.mxu0 %v2979
  %3709 = vmatprep.subr.bf16.mxu0 0
  %3710 = vmatpush1.bf16.msra.mxu0 %v2976
  %3711 = vmatprep.subr.bf16.mxu0 0
  %3712 = vmatpush1.bf16.msra.mxu0 %v2973
  %3713 = vmatprep.subr.bf16.mxu0 0
  %3714 = vmatpush1.bf16.msra.mxu0 %v2970
  %3715 = vmatprep.subr.bf16.mxu0 0
  %3716 = vmatpush1.bf16.msra.mxu0 %v2967
  %3717 = vmatprep.subr.bf16.mxu0 0
  %3718 = vmatpush2.bf16.msra.mxu0 0
  %3719 = vmatprep.subr.bf16.mxu0 0
  %3720 = vmatpush2.bf16.msra.mxu0 0
  %3721 = vmatprep.subr.bf16.mxu0 0
  %3722 = vmatpush2.bf16.msra.mxu0 0
  %3723 = vmatprep.subr.bf16.mxu0 0
  %3724 = vmatpush2.bf16.msra.mxu0 0
  %3725 = vmatprep.subr.bf16.mxu0 0
  %3726 = vmatpush2.bf16.msra.mxu0 0
  %3727 = vmatprep.subr.bf16.mxu0 0
  %3728 = vmatpush2.bf16.msra.mxu0 0
  %3729 = vmatprep.subr.bf16.mxu0 0
  %3730 = vmatpush2.bf16.msra.mxu0 0
  %3731 = vmatprep.subr.bf16.mxu0 0
  %3732 = vmatpush2.bf16.msra.mxu0 0
  %3733 = vmatprep.mubr.bf16.mxu0 0
  %3734 = vmatmul.mubr.bf16.gmra.mxu0 %v3659
  %v3735 = vpop.f32.mrf.mxu0
  %v3736 = vadd.f32 0.0, %v3735
  %v3737 = vpop.f32.mrf.mxu0
  %v3738 = vpop.f32.mrf.mxu0
  %v3739 = vpop.f32.mrf.mxu0
  %3740 = vdwg.mxu0
  %v3741 = vadd.f32 %v3613, %v3695
  %v3742 = vadd.f32 %v3615, %v3697
  %v3743 = vmul.f32 %v3741, 0.5
  %v3744 = vmul.f32 %v3742, 0.5
  %v3745 = vtanh.pop %v3743
  %v3746 = vtanh.pop %v3744
  %v3747 = vadd.f32 %v3745, 1.0
  %v3748 = vadd.f32 %v3746, 1.0
  %v3749 = vmul.f32 %v3747, 0.5
  %v3750 = vmul.f32 %v3748, 0.5
  %v3751 = vadd.f32 %v3736, %v429
  %v3752 = vmul.f32 %v3749, %v3751
  %v3753 = vadd.f32 %v3654, %v3752
  %v3754 = vtanh.pop %v3753
  %v3755 = vsub.f32 1.0, %v3750
  %v3756 = vmul.f32 %v3755, %v3754
  %v3757 = vmul.f32 %v3750, %v3111
  %v3758 = vadd.f32 %v3756, %v3757
  %s3759 = scalar_lea.vmem [#allocation2], 120
  %v3760 = vld [vmem:[%s3759] sm:$0xff]
  %v3761 = vld [vmem:[%s3759 + $0x8] sm:$0xff]
  %v3762 = vld [vmem:[%s3759 + $0x10] sm:$0xff]
  %v3763 = vpack.c.bf16 %v3215, %v3215
  %3764 = vmatprep.subr.bf16.mxu0 %v626
  %3765 = vmatpush1.bf16.msra.mxu0 %v625
  %3766 = vmatprep.subr.bf16.mxu0 %v623
  %3767 = vmatpush1.bf16.msra.mxu0 %v622
  %3768 = vmatprep.subr.bf16.mxu0 %v620
  %3769 = vmatpush1.bf16.msra.mxu0 %v619
  %3770 = vmatprep.subr.bf16.mxu0 %v617
  %3771 = vmatpush1.bf16.msra.mxu0 %v616
  %3772 = vmatprep.subr.bf16.mxu0 %v614
  %3773 = vmatpush1.bf16.msra.mxu0 %v613
  %3774 = vmatprep.subr.bf16.mxu0 %v611
  %3775 = vmatpush1.bf16.msra.mxu0 %v610
  %3776 = vmatprep.subr.bf16.mxu0 %v608
  %3777 = vmatpush1.bf16.msra.mxu0 %v607
  %3778 = vmatprep.subr.bf16.mxu0 %v605
  %3779 = vmatpush1.bf16.msra.mxu0 %v604
  %3780 = vmatprep.subr.bf16.mxu0 0
  %3781 = vmatpush2.bf16.msra.mxu0 0
  %3782 = vmatprep.subr.bf16.mxu0 0
  %3783 = vmatpush2.bf16.msra.mxu0 0
  %3784 = vmatprep.subr.bf16.mxu0 0
  %3785 = vmatpush2.bf16.msra.mxu0 0
  %3786 = vmatprep.subr.bf16.mxu0 0
  %3787 = vmatpush2.bf16.msra.mxu0 0
  %3788 = vmatprep.subr.bf16.mxu0 0
  %3789 = vmatpush2.bf16.msra.mxu0 0
  %3790 = vmatprep.subr.bf16.mxu0 0
  %3791 = vmatpush2.bf16.msra.mxu0 0
  %3792 = vmatprep.subr.bf16.mxu0 0
  %3793 = vmatpush2.bf16.msra.mxu0 0
  %3794 = vmatprep.subr.bf16.mxu0 0
  %3795 = vmatpush2.bf16.msra.mxu0 0
  %3796 = vmatprep.mubr.bf16.mxu0 0
  %3797 = vmatmul.mubr.bf16.gmra.mxu0 %v3763
  %v3798 = vpop.f32.mrf.mxu0
  %v3799 = vadd.f32 0.0, %v3798
  %v3800 = vpop.f32.mrf.mxu0
  %v3801 = vadd.f32 0.0, %v3800
  %v3802 = vpop.f32.mrf.mxu0
  %v3803 = vpop.f32.mrf.mxu0
  %3804 = vdwg.mxu0
  %3805 = vmatprep.subr.bf16.mxu0 0
  %3806 = vmatpush1.bf16.msra.mxu0 %v627
  %3807 = vmatprep.subr.bf16.mxu0 0
  %3808 = vmatpush1.bf16.msra.mxu0 %v624
  %3809 = vmatprep.subr.bf16.mxu0 0
  %3810 = vmatpush1.bf16.msra.mxu0 %v621
  %3811 = vmatprep.subr.bf16.mxu0 0
  %3812 = vmatpush1.bf16.msra.mxu0 %v618
  %3813 = vmatprep.subr.bf16.mxu0 0
  %3814 = vmatpush1.bf16.msra.mxu0 %v615
  %3815 = vmatprep.subr.bf16.mxu0 0
  %3816 = vmatpush1.bf16.msra.mxu0 %v612
  %3817 = vmatprep.subr.bf16.mxu0 0
  %3818 = vmatpush1.bf16.msra.mxu0 %v609
  %3819 = vmatprep.subr.bf16.mxu0 0
  %3820 = vmatpush1.bf16.msra.mxu0 %v606
  %3821 = vmatprep.subr.bf16.mxu0 0
  %3822 = vmatpush2.bf16.msra.mxu0 0
  %3823 = vmatprep.subr.bf16.mxu0 0
  %3824 = vmatpush2.bf16.msra.mxu0 0
  %3825 = vmatprep.subr.bf16.mxu0 0
  %3826 = vmatpush2.bf16.msra.mxu0 0
  %3827 = vmatprep.subr.bf16.mxu0 0
  %3828 = vmatpush2.bf16.msra.mxu0 0
  %3829 = vmatprep.subr.bf16.mxu0 0
  %3830 = vmatpush2.bf16.msra.mxu0 0
  %3831 = vmatprep.subr.bf16.mxu0 0
  %3832 = vmatpush2.bf16.msra.mxu0 0
  %3833 = vmatprep.subr.bf16.mxu0 0
  %3834 = vmatpush2.bf16.msra.mxu0 0
  %3835 = vmatprep.subr.bf16.mxu0 0
  %3836 = vmatpush2.bf16.msra.mxu0 0
  %3837 = vmatprep.mubr.bf16.mxu0 0
  %3838 = vmatmul.mubr.bf16.gmra.mxu0 %v3763
  %v3839 = vpop.f32.mrf.mxu0
  %v3840 = vadd.f32 0.0, %v3839
  %v3841 = vpop.f32.mrf.mxu0
  %v3842 = vpop.f32.mrf.mxu0
  %v3843 = vpop.f32.mrf.mxu0
  %3844 = vdwg.mxu0
  %v3845 = vadd.f32 %v3760, %v3799
  %v3846 = vadd.f32 %v3761, %v3801
  %v3847 = vmul.f32 %v3845, 0.5
  %v3848 = vmul.f32 %v3846, 0.5
  %v3849 = vtanh.pop %v3847
  %v3850 = vtanh.pop %v3848
  %v3851 = vadd.f32 %v3849, 1.0
  %v3852 = vadd.f32 %v3850, 1.0
  %v3853 = vmul.f32 %v3851, 0.5
  %v3854 = vmul.f32 %v3852, 0.5
  %v3855 = vadd.f32 %v3840, %v414
  %v3856 = vmul.f32 %v3853, %v3855
  %v3857 = vadd.f32 %v3762, %v3856
  %v3858 = vtanh.pop %v3857
  %v3859 = vsub.f32 1.0, %v3854
  %v3860 = vmul.f32 %v3859, %v3858
  %v3861 = vmul.f32 %v3854, %v3215
  %v3862 = vadd.f32 %v3860, %v3861
  %3863 = vmatprep.subr.bf16.mxu0 %v990
  %3864 = vmatpush1.bf16.msra.mxu0 %v989
  %3865 = vmatprep.subr.bf16.mxu0 %v987
  %3866 = vmatpush1.bf16.msra.mxu0 %v986
  %3867 = vmatprep.subr.bf16.mxu0 %v984
  %3868 = vmatpush1.bf16.msra.mxu0 %v983
  %3869 = vmatprep.subr.bf16.mxu0 %v981
  %3870 = vmatpush1.bf16.msra.mxu0 %v980
  %3871 = vmatprep.subr.bf16.mxu0 %v978
  %3872 = vmatpush1.bf16.msra.mxu0 %v977
  %3873 = vmatprep.subr.bf16.mxu0 %v975
  %3874 = vmatpush1.bf16.msra.mxu0 %v974
  %3875 = vmatprep.subr.bf16.mxu0 %v972
  %3876 = vmatpush1.bf16.msra.mxu0 %v971
  %3877 = vmatprep.subr.bf16.mxu0 %v969
  %3878 = vmatpush1.bf16.msra.mxu0 %v968
  %3879 = vmatprep.subr.bf16.mxu0 0
  %3880 = vmatpush2.bf16.msra.mxu0 0
  %3881 = vmatprep.subr.bf16.mxu0 0
  %3882 = vmatpush2.bf16.msra.mxu0 0
  %3883 = vmatprep.subr.bf16.mxu0 0
  %3884 = vmatpush2.bf16.msra.mxu0 0
  %3885 = vmatprep.subr.bf16.mxu0 0
  %3886 = vmatpush2.bf16.msra.mxu0 0
  %3887 = vmatprep.subr.bf16.mxu0 0
  %3888 = vmatpush2.bf16.msra.mxu0 0
  %3889 = vmatprep.subr.bf16.mxu0 0
  %3890 = vmatpush2.bf16.msra.mxu0 0
  %3891 = vmatprep.subr.bf16.mxu0 0
  %3892 = vmatpush2.bf16.msra.mxu0 0
  %3893 = vmatprep.subr.bf16.mxu0 0
  %3894 = vmatpush2.bf16.msra.mxu0 0
  %3895 = vmatprep.mubr.bf16.mxu0 0
  %3896 = vmatmul.mubr.bf16.gmra.mxu0 %v3763
  %v3897 = vpop.f32.mrf.mxu0
  %v3898 = vadd.f32 %v436, %v3897
  %v3899 = vpop.f32.mrf.mxu0
  %v3900 = vadd.f32 %v440, %v3899
  %v3901 = vpop.f32.mrf.mxu0
  %v3902 = vpop.f32.mrf.mxu0
  %3903 = vdwg.mxu0
  %3904 = vmatprep.subr.bf16.mxu0 0
  %3905 = vmatpush1.bf16.msra.mxu0 %v991
  %3906 = vmatprep.subr.bf16.mxu0 0
  %3907 = vmatpush1.bf16.msra.mxu0 %v988
  %3908 = vmatprep.subr.bf16.mxu0 0
  %3909 = vmatpush1.bf16.msra.mxu0 %v985
  %3910 = vmatprep.subr.bf16.mxu0 0
  %3911 = vmatpush1.bf16.msra.mxu0 %v982
  %3912 = vmatprep.subr.bf16.mxu0 0
  %3913 = vmatpush1.bf16.msra.mxu0 %v979
  %3914 = vmatprep.subr.bf16.mxu0 0
  %3915 = vmatpush1.bf16.msra.mxu0 %v976
  %3916 = vmatprep.subr.bf16.mxu0 0
  %3917 = vmatpush1.bf16.msra.mxu0 %v973
  %3918 = vmatprep.subr.bf16.mxu0 0
  %3919 = vmatpush1.bf16.msra.mxu0 %v970
  %3920 = vmatprep.subr.bf16.mxu0 0
  %3921 = vmatpush2.bf16.msra.mxu0 0
  %3922 = vmatprep.subr.bf16.mxu0 0
  %3923 = vmatpush2.bf16.msra.mxu0 0
  %3924 = vmatprep.subr.bf16.mxu0 0
  %3925 = vmatpush2.bf16.msra.mxu0 0
  %3926 = vmatprep.subr.bf16.mxu0 0
  %3927 = vmatpush2.bf16.msra.mxu0 0
  %3928 = vmatprep.subr.bf16.mxu0 0
  %3929 = vmatpush2.bf16.msra.mxu0 0
  %3930 = vmatprep.subr.bf16.mxu0 0
  %3931 = vmatpush2.bf16.msra.mxu0 0
  %3932 = vmatprep.subr.bf16.mxu0 0
  %3933 = vmatpush2.bf16.msra.mxu0 0
  %3934 = vmatprep.subr.bf16.mxu0 0
  %3935 = vmatpush2.bf16.msra.mxu0 0
  %3936 = vmatprep.mubr.bf16.mxu0 0
  %3937 = vmatmul.mubr.bf16.gmra.mxu0 %v3763
  %v3938 = vpop.f32.mrf.mxu0
  %v3939 = vadd.f32 %v444, %v3938
  %v3940 = vpop.f32.mrf.mxu0
  %v3941 = vpop.f32.mrf.mxu0
  %v3942 = vpop.f32.mrf.mxu0
  %3943 = vdwg.mxu0
  %v3944 = vpack.c.bf16 %v3396, %v3396
  %3945 = vmatprep.subr.bf16.mxu0 %v1232
  %3946 = vmatpush1.bf16.msra.mxu0 %v1231
  %3947 = vmatprep.subr.bf16.mxu0 %v1229
  %3948 = vmatpush1.bf16.msra.mxu0 %v1228
  %3949 = vmatprep.subr.bf16.mxu0 %v1226
  %3950 = vmatpush1.bf16.msra.mxu0 %v1225
  %3951 = vmatprep.subr.bf16.mxu0 %v1223
  %3952 = vmatpush1.bf16.msra.mxu0 %v1222
  %3953 = vmatprep.subr.bf16.mxu0 %v1220
  %3954 = vmatpush1.bf16.msra.mxu0 %v1219
  %3955 = vmatprep.subr.bf16.mxu0 %v1217
  %3956 = vmatpush1.bf16.msra.mxu0 %v1216
  %3957 = vmatprep.subr.bf16.mxu0 %v1214
  %3958 = vmatpush1.bf16.msra.mxu0 %v1213
  %3959 = vmatprep.subr.bf16.mxu0 %v1211
  %3960 = vmatpush1.bf16.msra.mxu0 %v1210
  %3961 = vmatprep.subr.bf16.mxu0 0
  %3962 = vmatpush2.bf16.msra.mxu0 0
  %3963 = vmatprep.subr.bf16.mxu0 0
  %3964 = vmatpush2.bf16.msra.mxu0 0
  %3965 = vmatprep.subr.bf16.mxu0 0
  %3966 = vmatpush2.bf16.msra.mxu0 0
  %3967 = vmatprep.subr.bf16.mxu0 0
  %3968 = vmatpush2.bf16.msra.mxu0 0
  %3969 = vmatprep.subr.bf16.mxu0 0
  %3970 = vmatpush2.bf16.msra.mxu0 0
  %3971 = vmatprep.subr.bf16.mxu0 0
  %3972 = vmatpush2.bf16.msra.mxu0 0
  %3973 = vmatprep.subr.bf16.mxu0 0
  %3974 = vmatpush2.bf16.msra.mxu0 0
  %3975 = vmatprep.subr.bf16.mxu0 0
  %3976 = vmatpush2.bf16.msra.mxu0 0
  %3977 = vmatprep.mubr.bf16.mxu0 0
  %3978 = vmatmul.mubr.bf16.gmra.mxu0 %v3944
  %v3979 = vpop.f32.mrf.mxu0
  %v3980 = vadd.f32 0.0, %v3979
  %v3981 = vpop.f32.mrf.mxu0
  %v3982 = vadd.f32 0.0, %v3981
  %v3983 = vpop.f32.mrf.mxu0
  %v3984 = vpop.f32.mrf.mxu0
  %3985 = vdwg.mxu0
  %3986 = vmatprep.subr.bf16.mxu0 0
  %3987 = vmatpush1.bf16.msra.mxu0 %v1233
  %3988 = vmatprep.subr.bf16.mxu0 0
  %3989 = vmatpush1.bf16.msra.mxu0 %v1230
  %3990 = vmatprep.subr.bf16.mxu0 0
  %3991 = vmatpush1.bf16.msra.mxu0 %v1227
  %3992 = vmatprep.subr.bf16.mxu0 0
  %3993 = vmatpush1.bf16.msra.mxu0 %v1224
  %3994 = vmatprep.subr.bf16.mxu0 0
  %3995 = vmatpush1.bf16.msra.mxu0 %v1221
  %3996 = vmatprep.subr.bf16.mxu0 0
  %3997 = vmatpush1.bf16.msra.mxu0 %v1218
  %3998 = vmatprep.subr.bf16.mxu0 0
  %3999 = vmatpush1.bf16.msra.mxu0 %v1215
  %4000 = vmatprep.subr.bf16.mxu0 0
  %4001 = vmatpush1.bf16.msra.mxu0 %v1212
  %4002 = vmatprep.subr.bf16.mxu0 0
  %4003 = vmatpush2.bf16.msra.mxu0 0
  %4004 = vmatprep.subr.bf16.mxu0 0
  %4005 = vmatpush2.bf16.msra.mxu0 0
  %4006 = vmatprep.subr.bf16.mxu0 0
  %4007 = vmatpush2.bf16.msra.mxu0 0
  %4008 = vmatprep.subr.bf16.mxu0 0
  %4009 = vmatpush2.bf16.msra.mxu0 0
  %4010 = vmatprep.subr.bf16.mxu0 0
  %4011 = vmatpush2.bf16.msra.mxu0 0
  %4012 = vmatprep.subr.bf16.mxu0 0
  %4013 = vmatpush2.bf16.msra.mxu0 0
  %4014 = vmatprep.subr.bf16.mxu0 0
  %4015 = vmatpush2.bf16.msra.mxu0 0
  %4016 = vmatprep.subr.bf16.mxu0 0
  %4017 = vmatpush2.bf16.msra.mxu0 0
  %4018 = vmatprep.mubr.bf16.mxu0 0
  %4019 = vmatmul.mubr.bf16.gmra.mxu0 %v3944
  %v4020 = vpop.f32.mrf.mxu0
  %v4021 = vadd.f32 0.0, %v4020
  %v4022 = vpop.f32.mrf.mxu0
  %v4023 = vpop.f32.mrf.mxu0
  %v4024 = vpop.f32.mrf.mxu0
  %4025 = vdwg.mxu0
  %v4026 = vadd.f32 %v3898, %v3980
  %v4027 = vadd.f32 %v3900, %v3982
  %v4028 = vmul.f32 %v4026, 0.5
  %v4029 = vmul.f32 %v4027, 0.5
  %v4030 = vtanh.pop %v4028
  %v4031 = vtanh.pop %v4029
  %v4032 = vadd.f32 %v4030, 1.0
  %v4033 = vadd.f32 %v4031, 1.0
  %v4034 = vmul.f32 %v4032, 0.5
  %v4035 = vmul.f32 %v4033, 0.5
  %v4036 = vadd.f32 %v4021, %v419
  %v4037 = vmul.f32 %v4034, %v4036
  %v4038 = vadd.f32 %v3939, %v4037
  %v4039 = vtanh.pop %v4038
  %v4040 = vsub.f32 1.0, %v4035
  %v4041 = vmul.f32 %v4040, %v4039
  %v4042 = vmul.f32 %v4035, %v3396
  %v4043 = vadd.f32 %v4041, %v4042
  %4044 = vmatprep.subr.bf16.mxu0 %v1777
  %4045 = vmatpush1.bf16.msra.mxu0 %v1776
  %4046 = vmatprep.subr.bf16.mxu0 %v1774
  %4047 = vmatpush1.bf16.msra.mxu0 %v1773
  %4048 = vmatprep.subr.bf16.mxu0 %v1771
  %4049 = vmatpush1.bf16.msra.mxu0 %v1770
  %4050 = vmatprep.subr.bf16.mxu0 %v1768
  %4051 = vmatpush1.bf16.msra.mxu0 %v1767
  %4052 = vmatprep.subr.bf16.mxu0 %v1765
  %4053 = vmatpush1.bf16.msra.mxu0 %v1764
  %4054 = vmatprep.subr.bf16.mxu0 %v1762
  %4055 = vmatpush1.bf16.msra.mxu0 %v1761
  %4056 = vmatprep.subr.bf16.mxu0 %v1759
  %4057 = vmatpush1.bf16.msra.mxu0 %v1758
  %4058 = vmatprep.subr.bf16.mxu0 %v1756
  %4059 = vmatpush1.bf16.msra.mxu0 %v1755
  %4060 = vmatprep.subr.bf16.mxu0 0
  %4061 = vmatpush2.bf16.msra.mxu0 0
  %4062 = vmatprep.subr.bf16.mxu0 0
  %4063 = vmatpush2.bf16.msra.mxu0 0
  %4064 = vmatprep.subr.bf16.mxu0 0
  %4065 = vmatpush2.bf16.msra.mxu0 0
  %4066 = vmatprep.subr.bf16.mxu0 0
  %4067 = vmatpush2.bf16.msra.mxu0 0
  %4068 = vmatprep.subr.bf16.mxu0 0
  %4069 = vmatpush2.bf16.msra.mxu0 0
  %4070 = vmatprep.subr.bf16.mxu0 0
  %4071 = vmatpush2.bf16.msra.mxu0 0
  %4072 = vmatprep.subr.bf16.mxu0 0
  %4073 = vmatpush2.bf16.msra.mxu0 0
  %4074 = vmatprep.subr.bf16.mxu0 0
  %4075 = vmatpush2.bf16.msra.mxu0 0
  %4076 = vmatprep.mubr.bf16.mxu0 0
  %4077 = vmatmul.mubr.bf16.gmra.mxu0 %v3944
  %v4078 = vpop.f32.mrf.mxu0
  %v4079 = vadd.f32 %v454, %v4078
  %v4080 = vpop.f32.mrf.mxu0
  %v4081 = vadd.f32 %v458, %v4080
  %v4082 = vpop.f32.mrf.mxu0
  %v4083 = vpop.f32.mrf.mxu0
  %4084 = vdwg.mxu0
  %4085 = vmatprep.subr.bf16.mxu0 0
  %4086 = vmatpush1.bf16.msra.mxu0 %v1778
  %4087 = vmatprep.subr.bf16.mxu0 0
  %4088 = vmatpush1.bf16.msra.mxu0 %v1775
  %4089 = vmatprep.subr.bf16.mxu0 0
  %4090 = vmatpush1.bf16.msra.mxu0 %v1772
  %4091 = vmatprep.subr.bf16.mxu0 0
  %4092 = vmatpush1.bf16.msra.mxu0 %v1769
  %4093 = vmatprep.subr.bf16.mxu0 0
  %4094 = vmatpush1.bf16.msra.mxu0 %v1766
  %4095 = vmatprep.subr.bf16.mxu0 0
  %4096 = vmatpush1.bf16.msra.mxu0 %v1763
  %4097 = vmatprep.subr.bf16.mxu0 0
  %4098 = vmatpush1.bf16.msra.mxu0 %v1760
  %4099 = vmatprep.subr.bf16.mxu0 0
  %4100 = vmatpush1.bf16.msra.mxu0 %v1757
  %4101 = vmatprep.subr.bf16.mxu0 0
  %4102 = vmatpush2.bf16.msra.mxu0 0
  %4103 = vmatprep.subr.bf16.mxu0 0
  %4104 = vmatpush2.bf16.msra.mxu0 0
  %4105 = vmatprep.subr.bf16.mxu0 0
  %4106 = vmatpush2.bf16.msra.mxu0 0
  %4107 = vmatprep.subr.bf16.mxu0 0
  %4108 = vmatpush2.bf16.msra.mxu0 0
  %4109 = vmatprep.subr.bf16.mxu0 0
  %4110 = vmatpush2.bf16.msra.mxu0 0
  %4111 = vmatprep.subr.bf16.mxu0 0
  %4112 = vmatpush2.bf16.msra.mxu0 0
  %4113 = vmatprep.subr.bf16.mxu0 0
  %4114 = vmatpush2.bf16.msra.mxu0 0
  %4115 = vmatprep.subr.bf16.mxu0 0
  %4116 = vmatpush2.bf16.msra.mxu0 0
  %4117 = vmatprep.mubr.bf16.mxu0 0
  %4118 = vmatmul.mubr.bf16.gmra.mxu0 %v3944
  %v4119 = vpop.f32.mrf.mxu0
  %v4120 = vadd.f32 %v462, %v4119
  %v4121 = vpop.f32.mrf.mxu0
  %v4122 = vpop.f32.mrf.mxu0
  %v4123 = vpop.f32.mrf.mxu0
  %4124 = vdwg.mxu0
  %v4125 = vpack.c.bf16 %v3577, %v3577
  %4126 = vmatprep.subr.bf16.mxu0 %v2019
  %4127 = vmatpush1.bf16.msra.mxu0 %v2018
  %4128 = vmatprep.subr.bf16.mxu0 %v2016
  %4129 = vmatpush1.bf16.msra.mxu0 %v2015
  %4130 = vmatprep.subr.bf16.mxu0 %v2013
  %4131 = vmatpush1.bf16.msra.mxu0 %v2012
  %4132 = vmatprep.subr.bf16.mxu0 %v2010
  %4133 = vmatpush1.bf16.msra.mxu0 %v2009
  %4134 = vmatprep.subr.bf16.mxu0 %v2007
  %4135 = vmatpush1.bf16.msra.mxu0 %v2006
  %4136 = vmatprep.subr.bf16.mxu0 %v2004
  %4137 = vmatpush1.bf16.msra.mxu0 %v2003
  %4138 = vmatprep.subr.bf16.mxu0 %v2001
  %4139 = vmatpush1.bf16.msra.mxu0 %v2000
  %4140 = vmatprep.subr.bf16.mxu0 %v1998
  %4141 = vmatpush1.bf16.msra.mxu0 %v1997
  %4142 = vmatprep.subr.bf16.mxu0 0
  %4143 = vmatpush2.bf16.msra.mxu0 0
  %4144 = vmatprep.subr.bf16.mxu0 0
  %4145 = vmatpush2.bf16.msra.mxu0 0
  %4146 = vmatprep.subr.bf16.mxu0 0
  %4147 = vmatpush2.bf16.msra.mxu0 0
  %4148 = vmatprep.subr.bf16.mxu0 0
  %4149 = vmatpush2.bf16.msra.mxu0 0
  %4150 = vmatprep.subr.bf16.mxu0 0
  %4151 = vmatpush2.bf16.msra.mxu0 0
  %4152 = vmatprep.subr.bf16.mxu0 0
  %4153 = vmatpush2.bf16.msra.mxu0 0
  %4154 = vmatprep.subr.bf16.mxu0 0
  %4155 = vmatpush2.bf16.msra.mxu0 0
  %4156 = vmatprep.subr.bf16.mxu0 0
  %4157 = vmatpush2.bf16.msra.mxu0 0
  %4158 = vmatprep.mubr.bf16.mxu0 0
  %4159 = vmatmul.mubr.bf16.gmra.mxu0 %v4125
  %v4160 = vpop.f32.mrf.mxu0
  %v4161 = vadd.f32 0.0, %v4160
  %v4162 = vpop.f32.mrf.mxu0
  %v4163 = vadd.f32 0.0, %v4162
  %v4164 = vpop.f32.mrf.mxu0
  %v4165 = vpop.f32.mrf.mxu0
  %4166 = vdwg.mxu0
  %4167 = vmatprep.subr.bf16.mxu0 0
  %4168 = vmatpush1.bf16.msra.mxu0 %v2020
  %4169 = vmatprep.subr.bf16.mxu0 0
  %4170 = vmatpush1.bf16.msra.mxu0 %v2017
  %4171 = vmatprep.subr.bf16.mxu0 0
  %4172 = vmatpush1.bf16.msra.mxu0 %v2014
  %4173 = vmatprep.subr.bf16.mxu0 0
  %4174 = vmatpush1.bf16.msra.mxu0 %v2011
  %4175 = vmatprep.subr.bf16.mxu0 0
  %4176 = vmatpush1.bf16.msra.mxu0 %v2008
  %4177 = vmatprep.subr.bf16.mxu0 0
  %4178 = vmatpush1.bf16.msra.mxu0 %v2005
  %4179 = vmatprep.subr.bf16.mxu0 0
  %4180 = vmatpush1.bf16.msra.mxu0 %v2002
  %4181 = vmatprep.subr.bf16.mxu0 0
  %4182 = vmatpush1.bf16.msra.mxu0 %v1999
  %4183 = vmatprep.subr.bf16.mxu0 0
  %4184 = vmatpush2.bf16.msra.mxu0 0
  %4185 = vmatprep.subr.bf16.mxu0 0
  %4186 = vmatpush2.bf16.msra.mxu0 0
  %4187 = vmatprep.subr.bf16.mxu0 0
  %4188 = vmatpush2.bf16.msra.mxu0 0
  %4189 = vmatprep.subr.bf16.mxu0 0
  %4190 = vmatpush2.bf16.msra.mxu0 0
  %4191 = vmatprep.subr.bf16.mxu0 0
  %4192 = vmatpush2.bf16.msra.mxu0 0
  %4193 = vmatprep.subr.bf16.mxu0 0
  %4194 = vmatpush2.bf16.msra.mxu0 0
  %4195 = vmatprep.subr.bf16.mxu0 0
  %4196 = vmatpush2.bf16.msra.mxu0 0
  %4197 = vmatprep.subr.bf16.mxu0 0
  %4198 = vmatpush2.bf16.msra.mxu0 0
  %4199 = vmatprep.mubr.bf16.mxu0 0
  %4200 = vmatmul.mubr.bf16.gmra.mxu0 %v4125
  %v4201 = vpop.f32.mrf.mxu0
  %v4202 = vadd.f32 0.0, %v4201
  %v4203 = vpop.f32.mrf.mxu0
  %v4204 = vpop.f32.mrf.mxu0
  %v4205 = vpop.f32.mrf.mxu0
  %4206 = vdwg.mxu0
  %v4207 = vadd.f32 %v4079, %v4161
  %v4208 = vadd.f32 %v4081, %v4163
  %v4209 = vmul.f32 %v4207, 0.5
  %v4210 = vmul.f32 %v4208, 0.5
  %v4211 = vtanh.pop %v4209
  %v4212 = vtanh.pop %v4210
  %v4213 = vadd.f32 %v4211, 1.0
  %v4214 = vadd.f32 %v4212, 1.0
  %v4215 = vmul.f32 %v4213, 0.5
  %v4216 = vmul.f32 %v4214, 0.5
  %v4217 = vadd.f32 %v4202, %v424
  %v4218 = vmul.f32 %v4215, %v4217
  %v4219 = vadd.f32 %v4120, %v4218
  %v4220 = vtanh.pop %v4219
  %v4221 = vsub.f32 1.0, %v4216
  %v4222 = vmul.f32 %v4221, %v4220
  %v4223 = vmul.f32 %v4216, %v3577
  %v4224 = vadd.f32 %v4222, %v4223
  %4225 = vmatprep.subr.bf16.mxu0 %v2745
  %4226 = vmatpush1.bf16.msra.mxu0 %v2744
  %4227 = vmatprep.subr.bf16.mxu0 %v2742
  %4228 = vmatpush1.bf16.msra.mxu0 %v2741
  %4229 = vmatprep.subr.bf16.mxu0 %v2739
  %4230 = vmatpush1.bf16.msra.mxu0 %v2738
  %4231 = vmatprep.subr.bf16.mxu0 %v2736
  %4232 = vmatpush1.bf16.msra.mxu0 %v2735
  %4233 = vmatprep.subr.bf16.mxu0 %v2733
  %4234 = vmatpush1.bf16.msra.mxu0 %v2732
  %4235 = vmatprep.subr.bf16.mxu0 %v2730
  %4236 = vmatpush1.bf16.msra.mxu0 %v2729
  %4237 = vmatprep.subr.bf16.mxu0 %v2727
  %4238 = vmatpush1.bf16.msra.mxu0 %v2726
  %4239 = vmatprep.subr.bf16.mxu0 %v2724
  %4240 = vmatpush1.bf16.msra.mxu0 %v2723
  %4241 = vmatprep.subr.bf16.mxu0 0
  %4242 = vmatpush2.bf16.msra.mxu0 0
  %4243 = vmatprep.subr.bf16.mxu0 0
  %4244 = vmatpush2.bf16.msra.mxu0 0
  %4245 = vmatprep.subr.bf16.mxu0 0
  %4246 = vmatpush2.bf16.msra.mxu0 0
  %4247 = vmatprep.subr.bf16.mxu0 0
  %4248 = vmatpush2.bf16.msra.mxu0 0
  %4249 = vmatprep.subr.bf16.mxu0 0
  %4250 = vmatpush2.bf16.msra.mxu0 0
  %4251 = vmatprep.subr.bf16.mxu0 0
  %4252 = vmatpush2.bf16.msra.mxu0 0
  %4253 = vmatprep.subr.bf16.mxu0 0
  %4254 = vmatpush2.bf16.msra.mxu0 0
  %4255 = vmatprep.subr.bf16.mxu0 0
  %4256 = vmatpush2.bf16.msra.mxu0 0
  %4257 = vmatprep.mubr.bf16.mxu0 0
  %4258 = vmatmul.mubr.bf16.gmra.mxu0 %v4125
  %v4259 = vpop.f32.mrf.mxu0
  %v4260 = vadd.f32 %v472, %v4259
  %v4261 = vpop.f32.mrf.mxu0
  %v4262 = vadd.f32 %v476, %v4261
  %v4263 = vpop.f32.mrf.mxu0
  %v4264 = vpop.f32.mrf.mxu0
  %4265 = vdwg.mxu0
  %4266 = vmatprep.subr.bf16.mxu0 0
  %4267 = vmatpush1.bf16.msra.mxu0 %v2746
  %4268 = vmatprep.subr.bf16.mxu0 0
  %4269 = vmatpush1.bf16.msra.mxu0 %v2743
  %4270 = vmatprep.subr.bf16.mxu0 0
  %4271 = vmatpush1.bf16.msra.mxu0 %v2740
  %4272 = vmatprep.subr.bf16.mxu0 0
  %4273 = vmatpush1.bf16.msra.mxu0 %v2737
  %4274 = vmatprep.subr.bf16.mxu0 0
  %4275 = vmatpush1.bf16.msra.mxu0 %v2734
  %4276 = vmatprep.subr.bf16.mxu0 0
  %4277 = vmatpush1.bf16.msra.mxu0 %v2731
  %4278 = vmatprep.subr.bf16.mxu0 0
  %4279 = vmatpush1.bf16.msra.mxu0 %v2728
  %4280 = vmatprep.subr.bf16.mxu0 0
  %4281 = vmatpush1.bf16.msra.mxu0 %v2725
  %4282 = vmatprep.subr.bf16.mxu0 0
  %4283 = vmatpush2.bf16.msra.mxu0 0
  %4284 = vmatprep.subr.bf16.mxu0 0
  %4285 = vmatpush2.bf16.msra.mxu0 0
  %4286 = vmatprep.subr.bf16.mxu0 0
  %4287 = vmatpush2.bf16.msra.mxu0 0
  %4288 = vmatprep.subr.bf16.mxu0 0
  %4289 = vmatpush2.bf16.msra.mxu0 0
  %4290 = vmatprep.subr.bf16.mxu0 0
  %4291 = vmatpush2.bf16.msra.mxu0 0
  %4292 = vmatprep.subr.bf16.mxu0 0
  %4293 = vmatpush2.bf16.msra.mxu0 0
  %4294 = vmatprep.subr.bf16.mxu0 0
  %4295 = vmatpush2.bf16.msra.mxu0 0
  %4296 = vmatprep.subr.bf16.mxu0 0
  %4297 = vmatpush2.bf16.msra.mxu0 0
  %4298 = vmatprep.mubr.bf16.mxu0 0
  %4299 = vmatmul.mubr.bf16.gmra.mxu0 %v4125
  %v4300 = vpop.f32.mrf.mxu0
  %v4301 = vadd.f32 %v480, %v4300
  %v4302 = vpop.f32.mrf.mxu0
  %v4303 = vpop.f32.mrf.mxu0
  %v4304 = vpop.f32.mrf.mxu0
  %4305 = vdwg.mxu0
  %v4306 = vpack.c.bf16 %v3758, %v3758
  %4307 = vmatprep.subr.bf16.mxu0 %v2987
  %4308 = vmatpush1.bf16.msra.mxu0 %v2986
  %4309 = vmatprep.subr.bf16.mxu0 %v2984
  %4310 = vmatpush1.bf16.msra.mxu0 %v2983
  %4311 = vmatprep.subr.bf16.mxu0 %v2981
  %4312 = vmatpush1.bf16.msra.mxu0 %v2980
  %4313 = vmatprep.subr.bf16.mxu0 %v2978
  %4314 = vmatpush1.bf16.msra.mxu0 %v2977
  %4315 = vmatprep.subr.bf16.mxu0 %v2975
  %4316 = vmatpush1.bf16.msra.mxu0 %v2974
  %4317 = vmatprep.subr.bf16.mxu0 %v2972
  %4318 = vmatpush1.bf16.msra.mxu0 %v2971
  %4319 = vmatprep.subr.bf16.mxu0 %v2969
  %4320 = vmatpush1.bf16.msra.mxu0 %v2968
  %4321 = vmatprep.subr.bf16.mxu0 %v2966
  %4322 = vmatpush1.bf16.msra.mxu0 %v2965
  %4323 = vmatprep.subr.bf16.mxu0 0
  %4324 = vmatpush2.bf16.msra.mxu0 0
  %4325 = vmatprep.subr.bf16.mxu0 0
  %4326 = vmatpush2.bf16.msra.mxu0 0
  %4327 = vmatprep.subr.bf16.mxu0 0
  %4328 = vmatpush2.bf16.msra.mxu0 0
  %4329 = vmatprep.subr.bf16.mxu0 0
  %4330 = vmatpush2.bf16.msra.mxu0 0
  %4331 = vmatprep.subr.bf16.mxu0 0
  %4332 = vmatpush2.bf16.msra.mxu0 0
  %4333 = vmatprep.subr.bf16.mxu0 0
  %4334 = vmatpush2.bf16.msra.mxu0 0
  %4335 = vmatprep.subr.bf16.mxu0 0
  %4336 = vmatpush2.bf16.msra.mxu0 0
  %4337 = vmatprep.subr.bf16.mxu0 0
  %4338 = vmatpush2.bf16.msra.mxu0 0
  %4339 = vmatprep.mubr.bf16.mxu0 0
  %4340 = vmatmul.mubr.bf16.gmra.mxu0 %v4306
  %v4341 = vpop.f32.mrf.mxu0
  %v4342 = vadd.f32 0.0, %v4341
  %v4343 = vpop.f32.mrf.mxu0
  %v4344 = vadd.f32 0.0, %v4343
  %v4345 = vpop.f32.mrf.mxu0
  %v4346 = vpop.f32.mrf.mxu0
  %4347 = vdwg.mxu0
  %4348 = vmatprep.subr.bf16.mxu0 0
  %4349 = vmatpush1.bf16.msra.mxu0 %v2988
  %4350 = vmatprep.subr.bf16.mxu0 0
  %4351 = vmatpush1.bf16.msra.mxu0 %v2985
  %4352 = vmatprep.subr.bf16.mxu0 0
  %4353 = vmatpush1.bf16.msra.mxu0 %v2982
  %4354 = vmatprep.subr.bf16.mxu0 0
  %4355 = vmatpush1.bf16.msra.mxu0 %v2979
  %4356 = vmatprep.subr.bf16.mxu0 0
  %4357 = vmatpush1.bf16.msra.mxu0 %v2976
  %4358 = vmatprep.subr.bf16.mxu0 0
  %4359 = vmatpush1.bf16.msra.mxu0 %v2973
  %4360 = vmatprep.subr.bf16.mxu0 0
  %4361 = vmatpush1.bf16.msra.mxu0 %v2970
  %4362 = vmatprep.subr.bf16.mxu0 0
  %4363 = vmatpush1.bf16.msra.mxu0 %v2967
  %4364 = vmatprep.subr.bf16.mxu0 0
  %4365 = vmatpush2.bf16.msra.mxu0 0
  %4366 = vmatprep.subr.bf16.mxu0 0
  %4367 = vmatpush2.bf16.msra.mxu0 0
  %4368 = vmatprep.subr.bf16.mxu0 0
  %4369 = vmatpush2.bf16.msra.mxu0 0
  %4370 = vmatprep.subr.bf16.mxu0 0
  %4371 = vmatpush2.bf16.msra.mxu0 0
  %4372 = vmatprep.subr.bf16.mxu0 0
  %4373 = vmatpush2.bf16.msra.mxu0 0
  %4374 = vmatprep.subr.bf16.mxu0 0
  %4375 = vmatpush2.bf16.msra.mxu0 0
  %4376 = vmatprep.subr.bf16.mxu0 0
  %4377 = vmatpush2.bf16.msra.mxu0 0
  %4378 = vmatprep.subr.bf16.mxu0 0
  %4379 = vmatpush2.bf16.msra.mxu0 0
  %4380 = vmatprep.mubr.bf16.mxu0 0
  %4381 = vmatmul.mubr.bf16.gmra.mxu0 %v4306
  %v4382 = vpop.f32.mrf.mxu0
  %v4383 = vadd.f32 0.0, %v4382
  %v4384 = vpop.f32.mrf.mxu0
  %v4385 = vpop.f32.mrf.mxu0
  %v4386 = vpop.f32.mrf.mxu0
  %4387 = vdwg.mxu0
  %v4388 = vadd.f32 %v4260, %v4342
  %v4389 = vadd.f32 %v4262, %v4344
  %v4390 = vmul.f32 %v4388, 0.5
  %v4391 = vmul.f32 %v4389, 0.5
  %v4392 = vtanh.pop %v4390
  %v4393 = vtanh.pop %v4391
  %v4394 = vadd.f32 %v4392, 1.0
  %v4395 = vadd.f32 %v4393, 1.0
  %v4396 = vmul.f32 %v4394, 0.5
  %v4397 = vmul.f32 %v4395, 0.5
  %v4398 = vadd.f32 %v4383, %v429
  %v4399 = vmul.f32 %v4396, %v4398
  %v4400 = vadd.f32 %v4301, %v4399
  %v4401 = vtanh.pop %v4400
  %v4402 = vsub.f32 1.0, %v4397
  %v4403 = vmul.f32 %v4402, %v4401
  %v4404 = vmul.f32 %v4397, %v3758
  %v4405 = vadd.f32 %v4403, %v4404
  %s4406 = scalar_lea.vmem [#allocation2], 144
  %v4407 = vld [vmem:[%s4406] sm:$0xff]
  %v4408 = vld [vmem:[%s4406 + $0x8] sm:$0xff]
  %v4409 = vld [vmem:[%s4406 + $0x10] sm:$0xff]
  %v4410 = vpack.c.bf16 %v3862, %v3862
  %4411 = vmatprep.subr.bf16.mxu0 %v626
  %4412 = vmatpush1.bf16.msra.mxu0 %v625
  %4413 = vmatprep.subr.bf16.mxu0 %v623
  %4414 = vmatpush1.bf16.msra.mxu0 %v622
  %4415 = vmatprep.subr.bf16.mxu0 %v620
  %4416 = vmatpush1.bf16.msra.mxu0 %v619
  %4417 = vmatprep.subr.bf16.mxu0 %v617
  %4418 = vmatpush1.bf16.msra.mxu0 %v616
  %4419 = vmatprep.subr.bf16.mxu0 %v614
  %4420 = vmatpush1.bf16.msra.mxu0 %v613
  %4421 = vmatprep.subr.bf16.mxu0 %v611
  %4422 = vmatpush1.bf16.msra.mxu0 %v610
  %4423 = vmatprep.subr.bf16.mxu0 %v608
  %4424 = vmatpush1.bf16.msra.mxu0 %v607
  %4425 = vmatprep.subr.bf16.mxu0 %v605
  %4426 = vmatpush1.bf16.msra.mxu0 %v604
  %4427 = vmatprep.subr.bf16.mxu0 0
  %4428 = vmatpush2.bf16.msra.mxu0 0
  %4429 = vmatprep.subr.bf16.mxu0 0
  %4430 = vmatpush2.bf16.msra.mxu0 0
  %4431 = vmatprep.subr.bf16.mxu0 0
  %4432 = vmatpush2.bf16.msra.mxu0 0
  %4433 = vmatprep.subr.bf16.mxu0 0
  %4434 = vmatpush2.bf16.msra.mxu0 0
  %4435 = vmatprep.subr.bf16.mxu0 0
  %4436 = vmatpush2.bf16.msra.mxu0 0
  %4437 = vmatprep.subr.bf16.mxu0 0
  %4438 = vmatpush2.bf16.msra.mxu0 0
  %4439 = vmatprep.subr.bf16.mxu0 0
  %4440 = vmatpush2.bf16.msra.mxu0 0
  %4441 = vmatprep.subr.bf16.mxu0 0
  %4442 = vmatpush2.bf16.msra.mxu0 0
  %4443 = vmatprep.mubr.bf16.mxu0 0
  %4444 = vmatmul.mubr.bf16.gmra.mxu0 %v4410
  %v4445 = vpop.f32.mrf.mxu0
  %v4446 = vadd.f32 0.0, %v4445
  %v4447 = vpop.f32.mrf.mxu0
  %v4448 = vadd.f32 0.0, %v4447
  %v4449 = vpop.f32.mrf.mxu0
  %v4450 = vpop.f32.mrf.mxu0
  %4451 = vdwg.mxu0
  %4452 = vmatprep.subr.bf16.mxu0 0
  %4453 = vmatpush1.bf16.msra.mxu0 %v627
  %4454 = vmatprep.subr.bf16.mxu0 0
  %4455 = vmatpush1.bf16.msra.mxu0 %v624
  %4456 = vmatprep.subr.bf16.mxu0 0
  %4457 = vmatpush1.bf16.msra.mxu0 %v621
  %4458 = vmatprep.subr.bf16.mxu0 0
  %4459 = vmatpush1.bf16.msra.mxu0 %v618
  %4460 = vmatprep.subr.bf16.mxu0 0
  %4461 = vmatpush1.bf16.msra.mxu0 %v615
  %4462 = vmatprep.subr.bf16.mxu0 0
  %4463 = vmatpush1.bf16.msra.mxu0 %v612
  %4464 = vmatprep.subr.bf16.mxu0 0
  %4465 = vmatpush1.bf16.msra.mxu0 %v609
  %4466 = vmatprep.subr.bf16.mxu0 0
  %4467 = vmatpush1.bf16.msra.mxu0 %v606
  %4468 = vmatprep.subr.bf16.mxu0 0
  %4469 = vmatpush2.bf16.msra.mxu0 0
  %4470 = vmatprep.subr.bf16.mxu0 0
  %4471 = vmatpush2.bf16.msra.mxu0 0
  %4472 = vmatprep.subr.bf16.mxu0 0
  %4473 = vmatpush2.bf16.msra.mxu0 0
  %4474 = vmatprep.subr.bf16.mxu0 0
  %4475 = vmatpush2.bf16.msra.mxu0 0
  %4476 = vmatprep.subr.bf16.mxu0 0
  %4477 = vmatpush2.bf16.msra.mxu0 0
  %4478 = vmatprep.subr.bf16.mxu0 0
  %4479 = vmatpush2.bf16.msra.mxu0 0
  %4480 = vmatprep.subr.bf16.mxu0 0
  %4481 = vmatpush2.bf16.msra.mxu0 0
  %4482 = vmatprep.subr.bf16.mxu0 0
  %4483 = vmatpush2.bf16.msra.mxu0 0
  %4484 = vmatprep.mubr.bf16.mxu0 0
  %4485 = vmatmul.mubr.bf16.gmra.mxu0 %v4410
  %v4486 = vpop.f32.mrf.mxu0
  %v4487 = vadd.f32 0.0, %v4486
  %v4488 = vpop.f32.mrf.mxu0
  %v4489 = vpop.f32.mrf.mxu0
  %v4490 = vpop.f32.mrf.mxu0
  %4491 = vdwg.mxu0
  %v4492 = vadd.f32 %v4407, %v4446
  %v4493 = vadd.f32 %v4408, %v4448
  %v4494 = vmul.f32 %v4492, 0.5
  %v4495 = vmul.f32 %v4493, 0.5
  %v4496 = vtanh.pop %v4494
  %v4497 = vtanh.pop %v4495
  %v4498 = vadd.f32 %v4496, 1.0
  %v4499 = vadd.f32 %v4497, 1.0
  %v4500 = vmul.f32 %v4498, 0.5
  %v4501 = vmul.f32 %v4499, 0.5
  %v4502 = vadd.f32 %v4487, %v414
  %v4503 = vmul.f32 %v4500, %v4502
  %v4504 = vadd.f32 %v4409, %v4503
  %v4505 = vtanh.pop %v4504
  %v4506 = vsub.f32 1.0, %v4501
  %v4507 = vmul.f32 %v4506, %v4505
  %v4508 = vmul.f32 %v4501, %v3862
  %v4509 = vadd.f32 %v4507, %v4508
  %4510 = vmatprep.subr.bf16.mxu0 %v990
  %4511 = vmatpush1.bf16.msra.mxu0 %v989
  %4512 = vmatprep.subr.bf16.mxu0 %v987
  %4513 = vmatpush1.bf16.msra.mxu0 %v986
  %4514 = vmatprep.subr.bf16.mxu0 %v984
  %4515 = vmatpush1.bf16.msra.mxu0 %v983
  %4516 = vmatprep.subr.bf16.mxu0 %v981
  %4517 = vmatpush1.bf16.msra.mxu0 %v980
  %4518 = vmatprep.subr.bf16.mxu0 %v978
  %4519 = vmatpush1.bf16.msra.mxu0 %v977
  %4520 = vmatprep.subr.bf16.mxu0 %v975
  %4521 = vmatpush1.bf16.msra.mxu0 %v974
  %4522 = vmatprep.subr.bf16.mxu0 %v972
  %4523 = vmatpush1.bf16.msra.mxu0 %v971
  %4524 = vmatprep.subr.bf16.mxu0 %v969
  %4525 = vmatpush1.bf16.msra.mxu0 %v968
  %4526 = vmatprep.subr.bf16.mxu0 0
  %4527 = vmatpush2.bf16.msra.mxu0 0
  %4528 = vmatprep.subr.bf16.mxu0 0
  %4529 = vmatpush2.bf16.msra.mxu0 0
  %4530 = vmatprep.subr.bf16.mxu0 0
  %4531 = vmatpush2.bf16.msra.mxu0 0
  %4532 = vmatprep.subr.bf16.mxu0 0
  %4533 = vmatpush2.bf16.msra.mxu0 0
  %4534 = vmatprep.subr.bf16.mxu0 0
  %4535 = vmatpush2.bf16.msra.mxu0 0
  %4536 = vmatprep.subr.bf16.mxu0 0
  %4537 = vmatpush2.bf16.msra.mxu0 0
  %4538 = vmatprep.subr.bf16.mxu0 0
  %4539 = vmatpush2.bf16.msra.mxu0 0
  %4540 = vmatprep.subr.bf16.mxu0 0
  %4541 = vmatpush2.bf16.msra.mxu0 0
  %4542 = vmatprep.mubr.bf16.mxu0 0
  %4543 = vmatmul.mubr.bf16.gmra.mxu0 %v4410
  %v4544 = vpop.f32.mrf.mxu0
  %v4545 = vadd.f32 %v436, %v4544
  %v4546 = vpop.f32.mrf.mxu0
  %v4547 = vadd.f32 %v440, %v4546
  %v4548 = vpop.f32.mrf.mxu0
  %v4549 = vpop.f32.mrf.mxu0
  %4550 = vdwg.mxu0
  %4551 = vmatprep.subr.bf16.mxu0 0
  %4552 = vmatpush1.bf16.msra.mxu0 %v991
  %4553 = vmatprep.subr.bf16.mxu0 0
  %4554 = vmatpush1.bf16.msra.mxu0 %v988
  %4555 = vmatprep.subr.bf16.mxu0 0
  %4556 = vmatpush1.bf16.msra.mxu0 %v985
  %4557 = vmatprep.subr.bf16.mxu0 0
  %4558 = vmatpush1.bf16.msra.mxu0 %v982
  %4559 = vmatprep.subr.bf16.mxu0 0
  %4560 = vmatpush1.bf16.msra.mxu0 %v979
  %4561 = vmatprep.subr.bf16.mxu0 0
  %4562 = vmatpush1.bf16.msra.mxu0 %v976
  %4563 = vmatprep.subr.bf16.mxu0 0
  %4564 = vmatpush1.bf16.msra.mxu0 %v973
  %4565 = vmatprep.subr.bf16.mxu0 0
  %4566 = vmatpush1.bf16.msra.mxu0 %v970
  %4567 = vmatprep.subr.bf16.mxu0 0
  %4568 = vmatpush2.bf16.msra.mxu0 0
  %4569 = vmatprep.subr.bf16.mxu0 0
  %4570 = vmatpush2.bf16.msra.mxu0 0
  %4571 = vmatprep.subr.bf16.mxu0 0
  %4572 = vmatpush2.bf16.msra.mxu0 0
  %4573 = vmatprep.subr.bf16.mxu0 0
  %4574 = vmatpush2.bf16.msra.mxu0 0
  %4575 = vmatprep.subr.bf16.mxu0 0
  %4576 = vmatpush2.bf16.msra.mxu0 0
  %4577 = vmatprep.subr.bf16.mxu0 0
  %4578 = vmatpush2.bf16.msra.mxu0 0
  %4579 = vmatprep.subr.bf16.mxu0 0
  %4580 = vmatpush2.bf16.msra.mxu0 0
  %4581 = vmatprep.subr.bf16.mxu0 0
  %4582 = vmatpush2.bf16.msra.mxu0 0
  %4583 = vmatprep.mubr.bf16.mxu0 0
  %4584 = vmatmul.mubr.bf16.gmra.mxu0 %v4410
  %v4585 = vpop.f32.mrf.mxu0
  %v4586 = vadd.f32 %v444, %v4585
  %v4587 = vpop.f32.mrf.mxu0
  %v4588 = vpop.f32.mrf.mxu0
  %v4589 = vpop.f32.mrf.mxu0
  %4590 = vdwg.mxu0
  %v4591 = vpack.c.bf16 %v4043, %v4043
  %4592 = vmatprep.subr.bf16.mxu0 %v1232
  %4593 = vmatpush1.bf16.msra.mxu0 %v1231
  %4594 = vmatprep.subr.bf16.mxu0 %v1229
  %4595 = vmatpush1.bf16.msra.mxu0 %v1228
  %4596 = vmatprep.subr.bf16.mxu0 %v1226
  %4597 = vmatpush1.bf16.msra.mxu0 %v1225
  %4598 = vmatprep.subr.bf16.mxu0 %v1223
  %4599 = vmatpush1.bf16.msra.mxu0 %v1222
  %4600 = vmatprep.subr.bf16.mxu0 %v1220
  %4601 = vmatpush1.bf16.msra.mxu0 %v1219
  %4602 = vmatprep.subr.bf16.mxu0 %v1217
  %4603 = vmatpush1.bf16.msra.mxu0 %v1216
  %4604 = vmatprep.subr.bf16.mxu0 %v1214
  %4605 = vmatpush1.bf16.msra.mxu0 %v1213
  %4606 = vmatprep.subr.bf16.mxu0 %v1211
  %4607 = vmatpush1.bf16.msra.mxu0 %v1210
  %4608 = vmatprep.subr.bf16.mxu0 0
  %4609 = vmatpush2.bf16.msra.mxu0 0
  %4610 = vmatprep.subr.bf16.mxu0 0
  %4611 = vmatpush2.bf16.msra.mxu0 0
  %4612 = vmatprep.subr.bf16.mxu0 0
  %4613 = vmatpush2.bf16.msra.mxu0 0
  %4614 = vmatprep.subr.bf16.mxu0 0
  %4615 = vmatpush2.bf16.msra.mxu0 0
  %4616 = vmatprep.subr.bf16.mxu0 0
  %4617 = vmatpush2.bf16.msra.mxu0 0
  %4618 = vmatprep.subr.bf16.mxu0 0
  %4619 = vmatpush2.bf16.msra.mxu0 0
  %4620 = vmatprep.subr.bf16.mxu0 0
  %4621 = vmatpush2.bf16.msra.mxu0 0
  %4622 = vmatprep.subr.bf16.mxu0 0
  %4623 = vmatpush2.bf16.msra.mxu0 0
  %4624 = vmatprep.mubr.bf16.mxu0 0
  %4625 = vmatmul.mubr.bf16.gmra.mxu0 %v4591
  %v4626 = vpop.f32.mrf.mxu0
  %v4627 = vadd.f32 0.0, %v4626
  %v4628 = vpop.f32.mrf.mxu0
  %v4629 = vadd.f32 0.0, %v4628
  %v4630 = vpop.f32.mrf.mxu0
  %v4631 = vpop.f32.mrf.mxu0
  %4632 = vdwg.mxu0
  %4633 = vmatprep.subr.bf16.mxu0 0
  %4634 = vmatpush1.bf16.msra.mxu0 %v1233
  %4635 = vmatprep.subr.bf16.mxu0 0
  %4636 = vmatpush1.bf16.msra.mxu0 %v1230
  %4637 = vmatprep.subr.bf16.mxu0 0
  %4638 = vmatpush1.bf16.msra.mxu0 %v1227
  %4639 = vmatprep.subr.bf16.mxu0 0
  %4640 = vmatpush1.bf16.msra.mxu0 %v1224
  %4641 = vmatprep.subr.bf16.mxu0 0
  %4642 = vmatpush1.bf16.msra.mxu0 %v1221
  %4643 = vmatprep.subr.bf16.mxu0 0
  %4644 = vmatpush1.bf16.msra.mxu0 %v1218
  %4645 = vmatprep.subr.bf16.mxu0 0
  %4646 = vmatpush1.bf16.msra.mxu0 %v1215
  %4647 = vmatprep.subr.bf16.mxu0 0
  %4648 = vmatpush1.bf16.msra.mxu0 %v1212
  %4649 = vmatprep.subr.bf16.mxu0 0
  %4650 = vmatpush2.bf16.msra.mxu0 0
  %4651 = vmatprep.subr.bf16.mxu0 0
  %4652 = vmatpush2.bf16.msra.mxu0 0
  %4653 = vmatprep.subr.bf16.mxu0 0
  %4654 = vmatpush2.bf16.msra.mxu0 0
  %4655 = vmatprep.subr.bf16.mxu0 0
  %4656 = vmatpush2.bf16.msra.mxu0 0
  %4657 = vmatprep.subr.bf16.mxu0 0
  %4658 = vmatpush2.bf16.msra.mxu0 0
  %4659 = vmatprep.subr.bf16.mxu0 0
  %4660 = vmatpush2.bf16.msra.mxu0 0
  %4661 = vmatprep.subr.bf16.mxu0 0
  %4662 = vmatpush2.bf16.msra.mxu0 0
  %4663 = vmatprep.subr.bf16.mxu0 0
  %4664 = vmatpush2.bf16.msra.mxu0 0
  %4665 = vmatprep.mubr.bf16.mxu0 0
  %4666 = vmatmul.mubr.bf16.gmra.mxu0 %v4591
  %v4667 = vpop.f32.mrf.mxu0
  %v4668 = vadd.f32 0.0, %v4667
  %v4669 = vpop.f32.mrf.mxu0
  %v4670 = vpop.f32.mrf.mxu0
  %v4671 = vpop.f32.mrf.mxu0
  %4672 = vdwg.mxu0
  %v4673 = vadd.f32 %v4545, %v4627
  %v4674 = vadd.f32 %v4547, %v4629
  %v4675 = vmul.f32 %v4673, 0.5
  %v4676 = vmul.f32 %v4674, 0.5
  %v4677 = vtanh.pop %v4675
  %v4678 = vtanh.pop %v4676
  %v4679 = vadd.f32 %v4677, 1.0
  %v4680 = vadd.f32 %v4678, 1.0
  %v4681 = vmul.f32 %v4679, 0.5
  %v4682 = vmul.f32 %v4680, 0.5
  %v4683 = vadd.f32 %v4668, %v419
  %v4684 = vmul.f32 %v4681, %v4683
  %v4685 = vadd.f32 %v4586, %v4684
  %v4686 = vtanh.pop %v4685
  %v4687 = vsub.f32 1.0, %v4682
  %v4688 = vmul.f32 %v4687, %v4686
  %v4689 = vmul.f32 %v4682, %v4043
  %v4690 = vadd.f32 %v4688, %v4689
  %4691 = vmatprep.subr.bf16.mxu0 %v1777
  %4692 = vmatpush1.bf16.msra.mxu0 %v1776
  %4693 = vmatprep.subr.bf16.mxu0 %v1774
  %4694 = vmatpush1.bf16.msra.mxu0 %v1773
  %4695 = vmatprep.subr.bf16.mxu0 %v1771
  %4696 = vmatpush1.bf16.msra.mxu0 %v1770
  %4697 = vmatprep.subr.bf16.mxu0 %v1768
  %4698 = vmatpush1.bf16.msra.mxu0 %v1767
  %4699 = vmatprep.subr.bf16.mxu0 %v1765
  %4700 = vmatpush1.bf16.msra.mxu0 %v1764
  %4701 = vmatprep.subr.bf16.mxu0 %v1762
  %4702 = vmatpush1.bf16.msra.mxu0 %v1761
  %4703 = vmatprep.subr.bf16.mxu0 %v1759
  %4704 = vmatpush1.bf16.msra.mxu0 %v1758
  %4705 = vmatprep.subr.bf16.mxu0 %v1756
  %4706 = vmatpush1.bf16.msra.mxu0 %v1755
  %4707 = vmatprep.subr.bf16.mxu0 0
  %4708 = vmatpush2.bf16.msra.mxu0 0
  %4709 = vmatprep.subr.bf16.mxu0 0
  %4710 = vmatpush2.bf16.msra.mxu0 0
  %4711 = vmatprep.subr.bf16.mxu0 0
  %4712 = vmatpush2.bf16.msra.mxu0 0
  %4713 = vmatprep.subr.bf16.mxu0 0
  %4714 = vmatpush2.bf16.msra.mxu0 0
  %4715 = vmatprep.subr.bf16.mxu0 0
  %4716 = vmatpush2.bf16.msra.mxu0 0
  %4717 = vmatprep.subr.bf16.mxu0 0
  %4718 = vmatpush2.bf16.msra.mxu0 0
  %4719 = vmatprep.subr.bf16.mxu0 0
  %4720 = vmatpush2.bf16.msra.mxu0 0
  %4721 = vmatprep.subr.bf16.mxu0 0
  %4722 = vmatpush2.bf16.msra.mxu0 0
  %4723 = vmatprep.mubr.bf16.mxu0 0
  %4724 = vmatmul.mubr.bf16.gmra.mxu0 %v4591
  %v4725 = vpop.f32.mrf.mxu0
  %v4726 = vadd.f32 %v454, %v4725
  %v4727 = vpop.f32.mrf.mxu0
  %v4728 = vadd.f32 %v458, %v4727
  %v4729 = vpop.f32.mrf.mxu0
  %v4730 = vpop.f32.mrf.mxu0
  %4731 = vdwg.mxu0
  %4732 = vmatprep.subr.bf16.mxu0 0
  %4733 = vmatpush1.bf16.msra.mxu0 %v1778
  %4734 = vmatprep.subr.bf16.mxu0 0
  %4735 = vmatpush1.bf16.msra.mxu0 %v1775
  %4736 = vmatprep.subr.bf16.mxu0 0
  %4737 = vmatpush1.bf16.msra.mxu0 %v1772
  %4738 = vmatprep.subr.bf16.mxu0 0
  %4739 = vmatpush1.bf16.msra.mxu0 %v1769
  %4740 = vmatprep.subr.bf16.mxu0 0
  %4741 = vmatpush1.bf16.msra.mxu0 %v1766
  %4742 = vmatprep.subr.bf16.mxu0 0
  %4743 = vmatpush1.bf16.msra.mxu0 %v1763
  %4744 = vmatprep.subr.bf16.mxu0 0
  %4745 = vmatpush1.bf16.msra.mxu0 %v1760
  %4746 = vmatprep.subr.bf16.mxu0 0
  %4747 = vmatpush1.bf16.msra.mxu0 %v1757
  %4748 = vmatprep.subr.bf16.mxu0 0
  %4749 = vmatpush2.bf16.msra.mxu0 0
  %4750 = vmatprep.subr.bf16.mxu0 0
  %4751 = vmatpush2.bf16.msra.mxu0 0
  %4752 = vmatprep.subr.bf16.mxu0 0
  %4753 = vmatpush2.bf16.msra.mxu0 0
  %4754 = vmatprep.subr.bf16.mxu0 0
  %4755 = vmatpush2.bf16.msra.mxu0 0
  %4756 = vmatprep.subr.bf16.mxu0 0
  %4757 = vmatpush2.bf16.msra.mxu0 0
  %4758 = vmatprep.subr.bf16.mxu0 0
  %4759 = vmatpush2.bf16.msra.mxu0 0
  %4760 = vmatprep.subr.bf16.mxu0 0
  %4761 = vmatpush2.bf16.msra.mxu0 0
  %4762 = vmatprep.subr.bf16.mxu0 0
  %4763 = vmatpush2.bf16.msra.mxu0 0
  %4764 = vmatprep.mubr.bf16.mxu0 0
  %4765 = vmatmul.mubr.bf16.gmra.mxu0 %v4591
  %v4766 = vpop.f32.mrf.mxu0
  %v4767 = vadd.f32 %v462, %v4766
  %v4768 = vpop.f32.mrf.mxu0
  %v4769 = vpop.f32.mrf.mxu0
  %v4770 = vpop.f32.mrf.mxu0
  %4771 = vdwg.mxu0
  %v4772 = vpack.c.bf16 %v4224, %v4224
  %4773 = vmatprep.subr.bf16.mxu0 %v2019
  %4774 = vmatpush1.bf16.msra.mxu0 %v2018
  %4775 = vmatprep.subr.bf16.mxu0 %v2016
  %4776 = vmatpush1.bf16.msra.mxu0 %v2015
  %4777 = vmatprep.subr.bf16.mxu0 %v2013
  %4778 = vmatpush1.bf16.msra.mxu0 %v2012
  %4779 = vmatprep.subr.bf16.mxu0 %v2010
  %4780 = vmatpush1.bf16.msra.mxu0 %v2009
  %4781 = vmatprep.subr.bf16.mxu0 %v2007
  %4782 = vmatpush1.bf16.msra.mxu0 %v2006
  %4783 = vmatprep.subr.bf16.mxu0 %v2004
  %4784 = vmatpush1.bf16.msra.mxu0 %v2003
  %4785 = vmatprep.subr.bf16.mxu0 %v2001
  %4786 = vmatpush1.bf16.msra.mxu0 %v2000
  %4787 = vmatprep.subr.bf16.mxu0 %v1998
  %4788 = vmatpush1.bf16.msra.mxu0 %v1997
  %4789 = vmatprep.subr.bf16.mxu0 0
  %4790 = vmatpush2.bf16.msra.mxu0 0
  %4791 = vmatprep.subr.bf16.mxu0 0
  %4792 = vmatpush2.bf16.msra.mxu0 0
  %4793 = vmatprep.subr.bf16.mxu0 0
  %4794 = vmatpush2.bf16.msra.mxu0 0
  %4795 = vmatprep.subr.bf16.mxu0 0
  %4796 = vmatpush2.bf16.msra.mxu0 0
  %4797 = vmatprep.subr.bf16.mxu0 0
  %4798 = vmatpush2.bf16.msra.mxu0 0
  %4799 = vmatprep.subr.bf16.mxu0 0
  %4800 = vmatpush2.bf16.msra.mxu0 0
  %4801 = vmatprep.subr.bf16.mxu0 0
  %4802 = vmatpush2.bf16.msra.mxu0 0
  %4803 = vmatprep.subr.bf16.mxu0 0
  %4804 = vmatpush2.bf16.msra.mxu0 0
  %4805 = vmatprep.mubr.bf16.mxu0 0
  %4806 = vmatmul.mubr.bf16.gmra.mxu0 %v4772
  %v4807 = vpop.f32.mrf.mxu0
  %v4808 = vadd.f32 0.0, %v4807
  %v4809 = vpop.f32.mrf.mxu0
  %v4810 = vadd.f32 0.0, %v4809
  %v4811 = vpop.f32.mrf.mxu0
  %v4812 = vpop.f32.mrf.mxu0
  %4813 = vdwg.mxu0
  %4814 = vmatprep.subr.bf16.mxu0 0
  %4815 = vmatpush1.bf16.msra.mxu0 %v2020
  %4816 = vmatprep.subr.bf16.mxu0 0
  %4817 = vmatpush1.bf16.msra.mxu0 %v2017
  %4818 = vmatprep.subr.bf16.mxu0 0
  %4819 = vmatpush1.bf16.msra.mxu0 %v2014
  %4820 = vmatprep.subr.bf16.mxu0 0
  %4821 = vmatpush1.bf16.msra.mxu0 %v2011
  %4822 = vmatprep.subr.bf16.mxu0 0
  %4823 = vmatpush1.bf16.msra.mxu0 %v2008
  %4824 = vmatprep.subr.bf16.mxu0 0
  %4825 = vmatpush1.bf16.msra.mxu0 %v2005
  %4826 = vmatprep.subr.bf16.mxu0 0
  %4827 = vmatpush1.bf16.msra.mxu0 %v2002
  %4828 = vmatprep.subr.bf16.mxu0 0
  %4829 = vmatpush1.bf16.msra.mxu0 %v1999
  %4830 = vmatprep.subr.bf16.mxu0 0
  %4831 = vmatpush2.bf16.msra.mxu0 0
  %4832 = vmatprep.subr.bf16.mxu0 0
  %4833 = vmatpush2.bf16.msra.mxu0 0
  %4834 = vmatprep.subr.bf16.mxu0 0
  %4835 = vmatpush2.bf16.msra.mxu0 0
  %4836 = vmatprep.subr.bf16.mxu0 0
  %4837 = vmatpush2.bf16.msra.mxu0 0
  %4838 = vmatprep.subr.bf16.mxu0 0
  %4839 = vmatpush2.bf16.msra.mxu0 0
  %4840 = vmatprep.subr.bf16.mxu0 0
  %4841 = vmatpush2.bf16.msra.mxu0 0
  %4842 = vmatprep.subr.bf16.mxu0 0
  %4843 = vmatpush2.bf16.msra.mxu0 0
  %4844 = vmatprep.subr.bf16.mxu0 0
  %4845 = vmatpush2.bf16.msra.mxu0 0
  %4846 = vmatprep.mubr.bf16.mxu0 0
  %4847 = vmatmul.mubr.bf16.gmra.mxu0 %v4772
  %v4848 = vpop.f32.mrf.mxu0
  %v4849 = vadd.f32 0.0, %v4848
  %v4850 = vpop.f32.mrf.mxu0
  %v4851 = vpop.f32.mrf.mxu0
  %v4852 = vpop.f32.mrf.mxu0
  %4853 = vdwg.mxu0
  %v4854 = vadd.f32 %v4726, %v4808
  %v4855 = vadd.f32 %v4728, %v4810
  %v4856 = vmul.f32 %v4854, 0.5
  %v4857 = vmul.f32 %v4855, 0.5
  %v4858 = vtanh.pop %v4856
  %v4859 = vtanh.pop %v4857
  %v4860 = vadd.f32 %v4858, 1.0
  %v4861 = vadd.f32 %v4859, 1.0
  %v4862 = vmul.f32 %v4860, 0.5
  %v4863 = vmul.f32 %v4861, 0.5
  %v4864 = vadd.f32 %v4849, %v424
  %v4865 = vmul.f32 %v4862, %v4864
  %v4866 = vadd.f32 %v4767, %v4865
  %v4867 = vtanh.pop %v4866
  %v4868 = vsub.f32 1.0, %v4863
  %v4869 = vmul.f32 %v4868, %v4867
  %v4870 = vmul.f32 %v4863, %v4224
  %v4871 = vadd.f32 %v4869, %v4870
  %4872 = vmatprep.subr.bf16.mxu0 %v2745
  %4873 = vmatpush1.bf16.msra.mxu0 %v2744
  %4874 = vmatprep.subr.bf16.mxu0 %v2742
  %4875 = vmatpush1.bf16.msra.mxu0 %v2741
  %4876 = vmatprep.subr.bf16.mxu0 %v2739
  %4877 = vmatpush1.bf16.msra.mxu0 %v2738
  %4878 = vmatprep.subr.bf16.mxu0 %v2736
  %4879 = vmatpush1.bf16.msra.mxu0 %v2735
  %4880 = vmatprep.subr.bf16.mxu0 %v2733
  %4881 = vmatpush1.bf16.msra.mxu0 %v2732
  %4882 = vmatprep.subr.bf16.mxu0 %v2730
  %4883 = vmatpush1.bf16.msra.mxu0 %v2729
  %4884 = vmatprep.subr.bf16.mxu0 %v2727
  %4885 = vmatpush1.bf16.msra.mxu0 %v2726
  %4886 = vmatprep.subr.bf16.mxu0 %v2724
  %4887 = vmatpush1.bf16.msra.mxu0 %v2723
  %4888 = vmatprep.subr.bf16.mxu0 0
  %4889 = vmatpush2.bf16.msra.mxu0 0
  %4890 = vmatprep.subr.bf16.mxu0 0
  %4891 = vmatpush2.bf16.msra.mxu0 0
  %4892 = vmatprep.subr.bf16.mxu0 0
  %4893 = vmatpush2.bf16.msra.mxu0 0
  %4894 = vmatprep.subr.bf16.mxu0 0
  %4895 = vmatpush2.bf16.msra.mxu0 0
  %4896 = vmatprep.subr.bf16.mxu0 0
  %4897 = vmatpush2.bf16.msra.mxu0 0
  %4898 = vmatprep.subr.bf16.mxu0 0
  %4899 = vmatpush2.bf16.msra.mxu0 0
  %4900 = vmatprep.subr.bf16.mxu0 0
  %4901 = vmatpush2.bf16.msra.mxu0 0
  %4902 = vmatprep.subr.bf16.mxu0 0
  %4903 = vmatpush2.bf16.msra.mxu0 0
  %4904 = vmatprep.mubr.bf16.mxu0 0
  %4905 = vmatmul.mubr.bf16.gmra.mxu0 %v4772
  %v4906 = vpop.f32.mrf.mxu0
  %v4907 = vadd.f32 %v472, %v4906
  %v4908 = vpop.f32.mrf.mxu0
  %v4909 = vadd.f32 %v476, %v4908
  %v4910 = vpop.f32.mrf.mxu0
  %v4911 = vpop.f32.mrf.mxu0
  %4912 = vdwg.mxu0
  %4913 = vmatprep.subr.bf16.mxu0 0
  %4914 = vmatpush1.bf16.msra.mxu0 %v2746
  %4915 = vmatprep.subr.bf16.mxu0 0
  %4916 = vmatpush1.bf16.msra.mxu0 %v2743
  %4917 = vmatprep.subr.bf16.mxu0 0
  %4918 = vmatpush1.bf16.msra.mxu0 %v2740
  %4919 = vmatprep.subr.bf16.mxu0 0
  %4920 = vmatpush1.bf16.msra.mxu0 %v2737
  %4921 = vmatprep.subr.bf16.mxu0 0
  %4922 = vmatpush1.bf16.msra.mxu0 %v2734
  %4923 = vmatprep.subr.bf16.mxu0 0
  %4924 = vmatpush1.bf16.msra.mxu0 %v2731
  %4925 = vmatprep.subr.bf16.mxu0 0
  %4926 = vmatpush1.bf16.msra.mxu0 %v2728
  %4927 = vmatprep.subr.bf16.mxu0 0
  %4928 = vmatpush1.bf16.msra.mxu0 %v2725
  %4929 = vmatprep.subr.bf16.mxu0 0
  %4930 = vmatpush2.bf16.msra.mxu0 0
  %4931 = vmatprep.subr.bf16.mxu0 0
  %4932 = vmatpush2.bf16.msra.mxu0 0
  %4933 = vmatprep.subr.bf16.mxu0 0
  %4934 = vmatpush2.bf16.msra.mxu0 0
  %4935 = vmatprep.subr.bf16.mxu0 0
  %4936 = vmatpush2.bf16.msra.mxu0 0
  %4937 = vmatprep.subr.bf16.mxu0 0
  %4938 = vmatpush2.bf16.msra.mxu0 0
  %4939 = vmatprep.subr.bf16.mxu0 0
  %4940 = vmatpush2.bf16.msra.mxu0 0
  %4941 = vmatprep.subr.bf16.mxu0 0
  %4942 = vmatpush2.bf16.msra.mxu0 0
  %4943 = vmatprep.subr.bf16.mxu0 0
  %4944 = vmatpush2.bf16.msra.mxu0 0
  %4945 = vmatprep.mubr.bf16.mxu0 0
  %4946 = vmatmul.mubr.bf16.gmra.mxu0 %v4772
  %v4947 = vpop.f32.mrf.mxu0
  %v4948 = vadd.f32 %v480, %v4947
  %v4949 = vpop.f32.mrf.mxu0
  %v4950 = vpop.f32.mrf.mxu0
  %v4951 = vpop.f32.mrf.mxu0
  %4952 = vdwg.mxu0
  %v4953 = vpack.c.bf16 %v4405, %v4405
  %4954 = vmatprep.subr.bf16.mxu0 %v2987
  %4955 = vmatpush1.bf16.msra.mxu0 %v2986
  %4956 = vmatprep.subr.bf16.mxu0 %v2984
  %4957 = vmatpush1.bf16.msra.mxu0 %v2983
  %4958 = vmatprep.subr.bf16.mxu0 %v2981
  %4959 = vmatpush1.bf16.msra.mxu0 %v2980
  %4960 = vmatprep.subr.bf16.mxu0 %v2978
  %4961 = vmatpush1.bf16.msra.mxu0 %v2977
  %4962 = vmatprep.subr.bf16.mxu0 %v2975
  %4963 = vmatpush1.bf16.msra.mxu0 %v2974
  %4964 = vmatprep.subr.bf16.mxu0 %v2972
  %4965 = vmatpush1.bf16.msra.mxu0 %v2971
  %4966 = vmatprep.subr.bf16.mxu0 %v2969
  %4967 = vmatpush1.bf16.msra.mxu0 %v2968
  %4968 = vmatprep.subr.bf16.mxu0 %v2966
  %4969 = vmatpush1.bf16.msra.mxu0 %v2965
  %4970 = vmatprep.subr.bf16.mxu0 0
  %4971 = vmatpush2.bf16.msra.mxu0 0
  %4972 = vmatprep.subr.bf16.mxu0 0
  %4973 = vmatpush2.bf16.msra.mxu0 0
  %4974 = vmatprep.subr.bf16.mxu0 0
  %4975 = vmatpush2.bf16.msra.mxu0 0
  %4976 = vmatprep.subr.bf16.mxu0 0
  %4977 = vmatpush2.bf16.msra.mxu0 0
  %4978 = vmatprep.subr.bf16.mxu0 0
  %4979 = vmatpush2.bf16.msra.mxu0 0
  %4980 = vmatprep.subr.bf16.mxu0 0
  %4981 = vmatpush2.bf16.msra.mxu0 0
  %4982 = vmatprep.subr.bf16.mxu0 0
  %4983 = vmatpush2.bf16.msra.mxu0 0
  %4984 = vmatprep.subr.bf16.mxu0 0
  %4985 = vmatpush2.bf16.msra.mxu0 0
  %4986 = vmatprep.mubr.bf16.mxu0 0
  %4987 = vmatmul.mubr.bf16.gmra.mxu0 %v4953
  %v4988 = vpop.f32.mrf.mxu0
  %v4989 = vadd.f32 0.0, %v4988
  %v4990 = vpop.f32.mrf.mxu0
  %v4991 = vadd.f32 0.0, %v4990
  %v4992 = vpop.f32.mrf.mxu0
  %v4993 = vpop.f32.mrf.mxu0
  %4994 = vdwg.mxu0
  %4995 = vmatprep.subr.bf16.mxu0 0
  %4996 = vmatpush1.bf16.msra.mxu0 %v2988
  %4997 = vmatprep.subr.bf16.mxu0 0
  %4998 = vmatpush1.bf16.msra.mxu0 %v2985
  %4999 = vmatprep.subr.bf16.mxu0 0
  %5000 = vmatpush1.bf16.msra.mxu0 %v2982
  %5001 = vmatprep.subr.bf16.mxu0 0
  %5002 = vmatpush1.bf16.msra.mxu0 %v2979
  %5003 = vmatprep.subr.bf16.mxu0 0
  %5004 = vmatpush1.bf16.msra.mxu0 %v2976
  %5005 = vmatprep.subr.bf16.mxu0 0
  %5006 = vmatpush1.bf16.msra.mxu0 %v2973
  %5007 = vmatprep.subr.bf16.mxu0 0
  %5008 = vmatpush1.bf16.msra.mxu0 %v2970
  %5009 = vmatprep.subr.bf16.mxu0 0
  %5010 = vmatpush1.bf16.msra.mxu0 %v2967
  %5011 = vmatprep.subr.bf16.mxu0 0
  %5012 = vmatpush2.bf16.msra.mxu0 0
  %5013 = vmatprep.subr.bf16.mxu0 0
  %5014 = vmatpush2.bf16.msra.mxu0 0
  %5015 = vmatprep.subr.bf16.mxu0 0
  %5016 = vmatpush2.bf16.msra.mxu0 0
  %5017 = vmatprep.subr.bf16.mxu0 0
  %5018 = vmatpush2.bf16.msra.mxu0 0
  %5019 = vmatprep.subr.bf16.mxu0 0
  %5020 = vmatpush2.bf16.msra.mxu0 0
  %5021 = vmatprep.subr.bf16.mxu0 0
  %5022 = vmatpush2.bf16.msra.mxu0 0
  %5023 = vmatprep.subr.bf16.mxu0 0
  %5024 = vmatpush2.bf16.msra.mxu0 0
  %5025 = vmatprep.subr.bf16.mxu0 0
  %5026 = vmatpush2.bf16.msra.mxu0 0
  %5027 = vmatprep.mubr.bf16.mxu0 0
  %5028 = vmatmul.mubr.bf16.gmra.mxu0 %v4953
  %v5029 = vpop.f32.mrf.mxu0
  %v5030 = vadd.f32 0.0, %v5029
  %v5031 = vpop.f32.mrf.mxu0
  %v5032 = vpop.f32.mrf.mxu0
  %v5033 = vpop.f32.mrf.mxu0
  %5034 = vdwg.mxu0
  %v5035 = vadd.f32 %v4907, %v4989
  %v5036 = vadd.f32 %v4909, %v4991
  %v5037 = vmul.f32 %v5035, 0.5
  %v5038 = vmul.f32 %v5036, 0.5
  %v5039 = vtanh.pop %v5037
  %v5040 = vtanh.pop %v5038
  %v5041 = vadd.f32 %v5039, 1.0
  %v5042 = vadd.f32 %v5040, 1.0
  %v5043 = vmul.f32 %v5041, 0.5
  %v5044 = vmul.f32 %v5042, 0.5
  %v5045 = vadd.f32 %v5030, %v429
  %v5046 = vmul.f32 %v5043, %v5045
  %v5047 = vadd.f32 %v4948, %v5046
  %v5048 = vtanh.pop %v5047
  %v5049 = vsub.f32 1.0, %v5044
  %v5050 = vmul.f32 %v5049, %v5048
  %v5051 = vmul.f32 %v5044, %v4405
  %v5052 = vadd.f32 %v5050, %v5051
  %s5053 = scalar_lea.vmem [#allocation2], 168
  %v5054 = vld [vmem:[%s5053] sm:$0xff]
  %v5055 = vld [vmem:[%s5053 + $0x8] sm:$0xff]
  %v5056 = vld [vmem:[%s5053 + $0x10] sm:$0xff]
  %v5057 = vpack.c.bf16 %v4509, %v4509
  %5058 = vmatprep.subr.bf16.mxu0 %v626
  %5059 = vmatpush1.bf16.msra.mxu0 %v625
  %5060 = vmatprep.subr.bf16.mxu0 %v623
  %5061 = vmatpush1.bf16.msra.mxu0 %v622
  %5062 = vmatprep.subr.bf16.mxu0 %v620
  %5063 = vmatpush1.bf16.msra.mxu0 %v619
  %5064 = vmatprep.subr.bf16.mxu0 %v617
  %5065 = vmatpush1.bf16.msra.mxu0 %v616
  %5066 = vmatprep.subr.bf16.mxu0 %v614
  %5067 = vmatpush1.bf16.msra.mxu0 %v613
  %5068 = vmatprep.subr.bf16.mxu0 %v611
  %5069 = vmatpush1.bf16.msra.mxu0 %v610
  %5070 = vmatprep.subr.bf16.mxu0 %v608
  %5071 = vmatpush1.bf16.msra.mxu0 %v607
  %5072 = vmatprep.subr.bf16.mxu0 %v605
  %5073 = vmatpush1.bf16.msra.mxu0 %v604
  %5074 = vmatprep.subr.bf16.mxu0 0
  %5075 = vmatpush2.bf16.msra.mxu0 0
  %5076 = vmatprep.subr.bf16.mxu0 0
  %5077 = vmatpush2.bf16.msra.mxu0 0
  %5078 = vmatprep.subr.bf16.mxu0 0
  %5079 = vmatpush2.bf16.msra.mxu0 0
  %5080 = vmatprep.subr.bf16.mxu0 0
  %5081 = vmatpush2.bf16.msra.mxu0 0
  %5082 = vmatprep.subr.bf16.mxu0 0
  %5083 = vmatpush2.bf16.msra.mxu0 0
  %5084 = vmatprep.subr.bf16.mxu0 0
  %5085 = vmatpush2.bf16.msra.mxu0 0
  %5086 = vmatprep.subr.bf16.mxu0 0
  %5087 = vmatpush2.bf16.msra.mxu0 0
  %5088 = vmatprep.subr.bf16.mxu0 0
  %5089 = vmatpush2.bf16.msra.mxu0 0
  %5090 = vmatprep.mubr.bf16.mxu0 0
  %5091 = vmatmul.mubr.bf16.gmra.mxu0 %v5057
  %v5092 = vpop.f32.mrf.mxu0
  %v5093 = vadd.f32 0.0, %v5092
  %v5094 = vpop.f32.mrf.mxu0
  %v5095 = vadd.f32 0.0, %v5094
  %v5096 = vpop.f32.mrf.mxu0
  %v5097 = vpop.f32.mrf.mxu0
  %5098 = vdwg.mxu0
  %5099 = vmatprep.subr.bf16.mxu0 0
  %5100 = vmatpush1.bf16.msra.mxu0 %v627
  %5101 = vmatprep.subr.bf16.mxu0 0
  %5102 = vmatpush1.bf16.msra.mxu0 %v624
  %5103 = vmatprep.subr.bf16.mxu0 0
  %5104 = vmatpush1.bf16.msra.mxu0 %v621
  %5105 = vmatprep.subr.bf16.mxu0 0
  %5106 = vmatpush1.bf16.msra.mxu0 %v618
  %5107 = vmatprep.subr.bf16.mxu0 0
  %5108 = vmatpush1.bf16.msra.mxu0 %v615
  %5109 = vmatprep.subr.bf16.mxu0 0
  %5110 = vmatpush1.bf16.msra.mxu0 %v612
  %5111 = vmatprep.subr.bf16.mxu0 0
  %5112 = vmatpush1.bf16.msra.mxu0 %v609
  %5113 = vmatprep.subr.bf16.mxu0 0
  %5114 = vmatpush1.bf16.msra.mxu0 %v606
  %5115 = vmatprep.subr.bf16.mxu0 0
  %5116 = vmatpush2.bf16.msra.mxu0 0
  %5117 = vmatprep.subr.bf16.mxu0 0
  %5118 = vmatpush2.bf16.msra.mxu0 0
  %5119 = vmatprep.subr.bf16.mxu0 0
  %5120 = vmatpush2.bf16.msra.mxu0 0
  %5121 = vmatprep.subr.bf16.mxu0 0
  %5122 = vmatpush2.bf16.msra.mxu0 0
  %5123 = vmatprep.subr.bf16.mxu0 0
  %5124 = vmatpush2.bf16.msra.mxu0 0
  %5125 = vmatprep.subr.bf16.mxu0 0
  %5126 = vmatpush2.bf16.msra.mxu0 0
  %5127 = vmatprep.subr.bf16.mxu0 0
  %5128 = vmatpush2.bf16.msra.mxu0 0
  %5129 = vmatprep.subr.bf16.mxu0 0
  %5130 = vmatpush2.bf16.msra.mxu0 0
  %5131 = vmatprep.mubr.bf16.mxu0 0
  %5132 = vmatmul.mubr.bf16.gmra.mxu0 %v5057
  %v5133 = vpop.f32.mrf.mxu0
  %v5134 = vadd.f32 0.0, %v5133
  %v5135 = vpop.f32.mrf.mxu0
  %v5136 = vpop.f32.mrf.mxu0
  %v5137 = vpop.f32.mrf.mxu0
  %5138 = vdwg.mxu0
  %v5139 = vadd.f32 %v5054, %v5093
  %v5140 = vadd.f32 %v5055, %v5095
  %v5141 = vmul.f32 %v5139, 0.5
  %v5142 = vmul.f32 %v5140, 0.5
  %v5143 = vtanh.pop %v5141
  %v5144 = vtanh.pop %v5142
  %v5145 = vadd.f32 %v5143, 1.0
  %v5146 = vadd.f32 %v5144, 1.0
  %v5147 = vmul.f32 %v5145, 0.5
  %v5148 = vmul.f32 %v5146, 0.5
  %v5149 = vadd.f32 %v5134, %v414
  %v5150 = vmul.f32 %v5147, %v5149
  %v5151 = vadd.f32 %v5056, %v5150
  %v5152 = vtanh.pop %v5151
  %v5153 = vsub.f32 1.0, %v5148
  %v5154 = vmul.f32 %v5153, %v5152
  %v5155 = vmul.f32 %v5148, %v4509
  %v5156 = vadd.f32 %v5154, %v5155
  %5157 = vmatprep.subr.bf16.mxu0 %v990
  %5158 = vmatpush1.bf16.msra.mxu0 %v989
  %5159 = vmatprep.subr.bf16.mxu0 %v987
  %5160 = vmatpush1.bf16.msra.mxu0 %v986
  %5161 = vmatprep.subr.bf16.mxu0 %v984
  %5162 = vmatpush1.bf16.msra.mxu0 %v983
  %5163 = vmatprep.subr.bf16.mxu0 %v981
  %5164 = vmatpush1.bf16.msra.mxu0 %v980
  %5165 = vmatprep.subr.bf16.mxu0 %v978
  %5166 = vmatpush1.bf16.msra.mxu0 %v977
  %5167 = vmatprep.subr.bf16.mxu0 %v975
  %5168 = vmatpush1.bf16.msra.mxu0 %v974
  %5169 = vmatprep.subr.bf16.mxu0 %v972
  %5170 = vmatpush1.bf16.msra.mxu0 %v971
  %5171 = vmatprep.subr.bf16.mxu0 %v969
  %5172 = vmatpush1.bf16.msra.mxu0 %v968
  %5173 = vmatprep.subr.bf16.mxu0 0
  %5174 = vmatpush2.bf16.msra.mxu0 0
  %5175 = vmatprep.subr.bf16.mxu0 0
  %5176 = vmatpush2.bf16.msra.mxu0 0
  %5177 = vmatprep.subr.bf16.mxu0 0
  %5178 = vmatpush2.bf16.msra.mxu0 0
  %5179 = vmatprep.subr.bf16.mxu0 0
  %5180 = vmatpush2.bf16.msra.mxu0 0
  %5181 = vmatprep.subr.bf16.mxu0 0
  %5182 = vmatpush2.bf16.msra.mxu0 0
  %5183 = vmatprep.subr.bf16.mxu0 0
  %5184 = vmatpush2.bf16.msra.mxu0 0
  %5185 = vmatprep.subr.bf16.mxu0 0
  %5186 = vmatpush2.bf16.msra.mxu0 0
  %5187 = vmatprep.subr.bf16.mxu0 0
  %5188 = vmatpush2.bf16.msra.mxu0 0
  %5189 = vmatprep.mubr.bf16.mxu0 0
  %5190 = vmatmul.mubr.bf16.gmra.mxu0 %v5057
  %v5191 = vpop.f32.mrf.mxu0
  %v5192 = vadd.f32 %v436, %v5191
  %v5193 = vpop.f32.mrf.mxu0
  %v5194 = vadd.f32 %v440, %v5193
  %v5195 = vpop.f32.mrf.mxu0
  %v5196 = vpop.f32.mrf.mxu0
  %5197 = vdwg.mxu0
  %5198 = vmatprep.subr.bf16.mxu0 0
  %5199 = vmatpush1.bf16.msra.mxu0 %v991
  %5200 = vmatprep.subr.bf16.mxu0 0
  %5201 = vmatpush1.bf16.msra.mxu0 %v988
  %5202 = vmatprep.subr.bf16.mxu0 0
  %5203 = vmatpush1.bf16.msra.mxu0 %v985
  %5204 = vmatprep.subr.bf16.mxu0 0
  %5205 = vmatpush1.bf16.msra.mxu0 %v982
  %5206 = vmatprep.subr.bf16.mxu0 0
  %5207 = vmatpush1.bf16.msra.mxu0 %v979
  %5208 = vmatprep.subr.bf16.mxu0 0
  %5209 = vmatpush1.bf16.msra.mxu0 %v976
  %5210 = vmatprep.subr.bf16.mxu0 0
  %5211 = vmatpush1.bf16.msra.mxu0 %v973
  %5212 = vmatprep.subr.bf16.mxu0 0
  %5213 = vmatpush1.bf16.msra.mxu0 %v970
  %5214 = vmatprep.subr.bf16.mxu0 0
  %5215 = vmatpush2.bf16.msra.mxu0 0
  %5216 = vmatprep.subr.bf16.mxu0 0
  %5217 = vmatpush2.bf16.msra.mxu0 0
  %5218 = vmatprep.subr.bf16.mxu0 0
  %5219 = vmatpush2.bf16.msra.mxu0 0
  %5220 = vmatprep.subr.bf16.mxu0 0
  %5221 = vmatpush2.bf16.msra.mxu0 0
  %5222 = vmatprep.subr.bf16.mxu0 0
  %5223 = vmatpush2.bf16.msra.mxu0 0
  %5224 = vmatprep.subr.bf16.mxu0 0
  %5225 = vmatpush2.bf16.msra.mxu0 0
  %5226 = vmatprep.subr.bf16.mxu0 0
  %5227 = vmatpush2.bf16.msra.mxu0 0
  %5228 = vmatprep.subr.bf16.mxu0 0
  %5229 = vmatpush2.bf16.msra.mxu0 0
  %5230 = vmatprep.mubr.bf16.mxu0 0
  %5231 = vmatmul.mubr.bf16.gmra.mxu0 %v5057
  %v5232 = vpop.f32.mrf.mxu0
  %v5233 = vadd.f32 %v444, %v5232
  %v5234 = vpop.f32.mrf.mxu0
  %v5235 = vpop.f32.mrf.mxu0
  %v5236 = vpop.f32.mrf.mxu0
  %5237 = vdwg.mxu0
  %v5238 = vpack.c.bf16 %v4690, %v4690
  %5239 = vmatprep.subr.bf16.mxu0 %v1232
  %5240 = vmatpush1.bf16.msra.mxu0 %v1231
  %5241 = vmatprep.subr.bf16.mxu0 %v1229
  %5242 = vmatpush1.bf16.msra.mxu0 %v1228
  %5243 = vmatprep.subr.bf16.mxu0 %v1226
  %5244 = vmatpush1.bf16.msra.mxu0 %v1225
  %5245 = vmatprep.subr.bf16.mxu0 %v1223
  %5246 = vmatpush1.bf16.msra.mxu0 %v1222
  %5247 = vmatprep.subr.bf16.mxu0 %v1220
  %5248 = vmatpush1.bf16.msra.mxu0 %v1219
  %5249 = vmatprep.subr.bf16.mxu0 %v1217
  %5250 = vmatpush1.bf16.msra.mxu0 %v1216
  %5251 = vmatprep.subr.bf16.mxu0 %v1214
  %5252 = vmatpush1.bf16.msra.mxu0 %v1213
  %5253 = vmatprep.subr.bf16.mxu0 %v1211
  %5254 = vmatpush1.bf16.msra.mxu0 %v1210
  %5255 = vmatprep.subr.bf16.mxu0 0
  %5256 = vmatpush2.bf16.msra.mxu0 0
  %5257 = vmatprep.subr.bf16.mxu0 0
  %5258 = vmatpush2.bf16.msra.mxu0 0
  %5259 = vmatprep.subr.bf16.mxu0 0
  %5260 = vmatpush2.bf16.msra.mxu0 0
  %5261 = vmatprep.subr.bf16.mxu0 0
  %5262 = vmatpush2.bf16.msra.mxu0 0
  %5263 = vmatprep.subr.bf16.mxu0 0
  %5264 = vmatpush2.bf16.msra.mxu0 0
  %5265 = vmatprep.subr.bf16.mxu0 0
  %5266 = vmatpush2.bf16.msra.mxu0 0
  %5267 = vmatprep.subr.bf16.mxu0 0
  %5268 = vmatpush2.bf16.msra.mxu0 0
  %5269 = vmatprep.subr.bf16.mxu0 0
  %5270 = vmatpush2.bf16.msra.mxu0 0
  %5271 = vmatprep.mubr.bf16.mxu0 0
  %5272 = vmatmul.mubr.bf16.gmra.mxu0 %v5238
  %v5273 = vpop.f32.mrf.mxu0
  %v5274 = vadd.f32 0.0, %v5273
  %v5275 = vpop.f32.mrf.mxu0
  %v5276 = vadd.f32 0.0, %v5275
  %v5277 = vpop.f32.mrf.mxu0
  %v5278 = vpop.f32.mrf.mxu0
  %5279 = vdwg.mxu0
  %5280 = vmatprep.subr.bf16.mxu0 0
  %5281 = vmatpush1.bf16.msra.mxu0 %v1233
  %5282 = vmatprep.subr.bf16.mxu0 0
  %5283 = vmatpush1.bf16.msra.mxu0 %v1230
  %5284 = vmatprep.subr.bf16.mxu0 0
  %5285 = vmatpush1.bf16.msra.mxu0 %v1227
  %5286 = vmatprep.subr.bf16.mxu0 0
  %5287 = vmatpush1.bf16.msra.mxu0 %v1224
  %5288 = vmatprep.subr.bf16.mxu0 0
  %5289 = vmatpush1.bf16.msra.mxu0 %v1221
  %5290 = vmatprep.subr.bf16.mxu0 0
  %5291 = vmatpush1.bf16.msra.mxu0 %v1218
  %5292 = vmatprep.subr.bf16.mxu0 0
  %5293 = vmatpush1.bf16.msra.mxu0 %v1215
  %5294 = vmatprep.subr.bf16.mxu0 0
  %5295 = vmatpush1.bf16.msra.mxu0 %v1212
  %5296 = vmatprep.subr.bf16.mxu0 0
  %5297 = vmatpush2.bf16.msra.mxu0 0
  %5298 = vmatprep.subr.bf16.mxu0 0
  %5299 = vmatpush2.bf16.msra.mxu0 0
  %5300 = vmatprep.subr.bf16.mxu0 0
  %5301 = vmatpush2.bf16.msra.mxu0 0
  %5302 = vmatprep.subr.bf16.mxu0 0
  %5303 = vmatpush2.bf16.msra.mxu0 0
  %5304 = vmatprep.subr.bf16.mxu0 0
  %5305 = vmatpush2.bf16.msra.mxu0 0
  %5306 = vmatprep.subr.bf16.mxu0 0
  %5307 = vmatpush2.bf16.msra.mxu0 0
  %5308 = vmatprep.subr.bf16.mxu0 0
  %5309 = vmatpush2.bf16.msra.mxu0 0
  %5310 = vmatprep.subr.bf16.mxu0 0
  %5311 = vmatpush2.bf16.msra.mxu0 0
  %5312 = vmatprep.mubr.bf16.mxu0 0
  %5313 = vmatmul.mubr.bf16.gmra.mxu0 %v5238
  %v5314 = vpop.f32.mrf.mxu0
  %v5315 = vadd.f32 0.0, %v5314
  %v5316 = vpop.f32.mrf.mxu0
  %v5317 = vpop.f32.mrf.mxu0
  %v5318 = vpop.f32.mrf.mxu0
  %5319 = vdwg.mxu0
  %v5320 = vadd.f32 %v5192, %v5274
  %v5321 = vadd.f32 %v5194, %v5276
  %v5322 = vmul.f32 %v5320, 0.5
  %v5323 = vmul.f32 %v5321, 0.5
  %v5324 = vtanh.pop %v5322
  %v5325 = vtanh.pop %v5323
  %v5326 = vadd.f32 %v5324, 1.0
  %v5327 = vadd.f32 %v5325, 1.0
  %v5328 = vmul.f32 %v5326, 0.5
  %v5329 = vmul.f32 %v5327, 0.5
  %v5330 = vadd.f32 %v5315, %v419
  %v5331 = vmul.f32 %v5328, %v5330
  %v5332 = vadd.f32 %v5233, %v5331
  %v5333 = vtanh.pop %v5332
  %v5334 = vsub.f32 1.0, %v5329
  %v5335 = vmul.f32 %v5334, %v5333
  %v5336 = vmul.f32 %v5329, %v4690
  %v5337 = vadd.f32 %v5335, %v5336
  %5338 = vmatprep.subr.bf16.mxu0 %v1777
  %5339 = vmatpush1.bf16.msra.mxu0 %v1776
  %5340 = vmatprep.subr.bf16.mxu0 %v1774
  %5341 = vmatpush1.bf16.msra.mxu0 %v1773
  %5342 = vmatprep.subr.bf16.mxu0 %v1771
  %5343 = vmatpush1.bf16.msra.mxu0 %v1770
  %5344 = vmatprep.subr.bf16.mxu0 %v1768
  %5345 = vmatpush1.bf16.msra.mxu0 %v1767
  %5346 = vmatprep.subr.bf16.mxu0 %v1765
  %5347 = vmatpush1.bf16.msra.mxu0 %v1764
  %5348 = vmatprep.subr.bf16.mxu0 %v1762
  %5349 = vmatpush1.bf16.msra.mxu0 %v1761
  %5350 = vmatprep.subr.bf16.mxu0 %v1759
  %5351 = vmatpush1.bf16.msra.mxu0 %v1758
  %5352 = vmatprep.subr.bf16.mxu0 %v1756
  %5353 = vmatpush1.bf16.msra.mxu0 %v1755
  %5354 = vmatprep.subr.bf16.mxu0 0
  %5355 = vmatpush2.bf16.msra.mxu0 0
  %5356 = vmatprep.subr.bf16.mxu0 0
  %5357 = vmatpush2.bf16.msra.mxu0 0
  %5358 = vmatprep.subr.bf16.mxu0 0
  %5359 = vmatpush2.bf16.msra.mxu0 0
  %5360 = vmatprep.subr.bf16.mxu0 0
  %5361 = vmatpush2.bf16.msra.mxu0 0
  %5362 = vmatprep.subr.bf16.mxu0 0
  %5363 = vmatpush2.bf16.msra.mxu0 0
  %5364 = vmatprep.subr.bf16.mxu0 0
  %5365 = vmatpush2.bf16.msra.mxu0 0
  %5366 = vmatprep.subr.bf16.mxu0 0
  %5367 = vmatpush2.bf16.msra.mxu0 0
  %5368 = vmatprep.subr.bf16.mxu0 0
  %5369 = vmatpush2.bf16.msra.mxu0 0
  %5370 = vmatprep.mubr.bf16.mxu0 0
  %5371 = vmatmul.mubr.bf16.gmra.mxu0 %v5238
  %v5372 = vpop.f32.mrf.mxu0
  %v5373 = vadd.f32 %v454, %v5372
  %v5374 = vpop.f32.mrf.mxu0
  %v5375 = vadd.f32 %v458, %v5374
  %v5376 = vpop.f32.mrf.mxu0
  %v5377 = vpop.f32.mrf.mxu0
  %5378 = vdwg.mxu0
  %5379 = vmatprep.subr.bf16.mxu0 0
  %5380 = vmatpush1.bf16.msra.mxu0 %v1778
  %5381 = vmatprep.subr.bf16.mxu0 0
  %5382 = vmatpush1.bf16.msra.mxu0 %v1775
  %5383 = vmatprep.subr.bf16.mxu0 0
  %5384 = vmatpush1.bf16.msra.mxu0 %v1772
  %5385 = vmatprep.subr.bf16.mxu0 0
  %5386 = vmatpush1.bf16.msra.mxu0 %v1769
  %5387 = vmatprep.subr.bf16.mxu0 0
  %5388 = vmatpush1.bf16.msra.mxu0 %v1766
  %5389 = vmatprep.subr.bf16.mxu0 0
  %5390 = vmatpush1.bf16.msra.mxu0 %v1763
  %5391 = vmatprep.subr.bf16.mxu0 0
  %5392 = vmatpush1.bf16.msra.mxu0 %v1760
  %5393 = vmatprep.subr.bf16.mxu0 0
  %5394 = vmatpush1.bf16.msra.mxu0 %v1757
  %5395 = vmatprep.subr.bf16.mxu0 0
  %5396 = vmatpush2.bf16.msra.mxu0 0
  %5397 = vmatprep.subr.bf16.mxu0 0
  %5398 = vmatpush2.bf16.msra.mxu0 0
  %5399 = vmatprep.subr.bf16.mxu0 0
  %5400 = vmatpush2.bf16.msra.mxu0 0
  %5401 = vmatprep.subr.bf16.mxu0 0
  %5402 = vmatpush2.bf16.msra.mxu0 0
  %5403 = vmatprep.subr.bf16.mxu0 0
  %5404 = vmatpush2.bf16.msra.mxu0 0
  %5405 = vmatprep.subr.bf16.mxu0 0
  %5406 = vmatpush2.bf16.msra.mxu0 0
  %5407 = vmatprep.subr.bf16.mxu0 0
  %5408 = vmatpush2.bf16.msra.mxu0 0
  %5409 = vmatprep.subr.bf16.mxu0 0
  %5410 = vmatpush2.bf16.msra.mxu0 0
  %5411 = vmatprep.mubr.bf16.mxu0 0
  %5412 = vmatmul.mubr.bf16.gmra.mxu0 %v5238
  %v5413 = vpop.f32.mrf.mxu0
  %v5414 = vadd.f32 %v462, %v5413
  %v5415 = vpop.f32.mrf.mxu0
  %v5416 = vpop.f32.mrf.mxu0
  %v5417 = vpop.f32.mrf.mxu0
  %5418 = vdwg.mxu0
  %v5419 = vpack.c.bf16 %v4871, %v4871
  %5420 = vmatprep.subr.bf16.mxu0 %v2019
  %5421 = vmatpush1.bf16.msra.mxu0 %v2018
  %5422 = vmatprep.subr.bf16.mxu0 %v2016
  %5423 = vmatpush1.bf16.msra.mxu0 %v2015
  %5424 = vmatprep.subr.bf16.mxu0 %v2013
  %5425 = vmatpush1.bf16.msra.mxu0 %v2012
  %5426 = vmatprep.subr.bf16.mxu0 %v2010
  %5427 = vmatpush1.bf16.msra.mxu0 %v2009
  %5428 = vmatprep.subr.bf16.mxu0 %v2007
  %5429 = vmatpush1.bf16.msra.mxu0 %v2006
  %5430 = vmatprep.subr.bf16.mxu0 %v2004
  %5431 = vmatpush1.bf16.msra.mxu0 %v2003
  %5432 = vmatprep.subr.bf16.mxu0 %v2001
  %5433 = vmatpush1.bf16.msra.mxu0 %v2000
  %5434 = vmatprep.subr.bf16.mxu0 %v1998
  %5435 = vmatpush1.bf16.msra.mxu0 %v1997
  %5436 = vmatprep.subr.bf16.mxu0 0
  %5437 = vmatpush2.bf16.msra.mxu0 0
  %5438 = vmatprep.subr.bf16.mxu0 0
  %5439 = vmatpush2.bf16.msra.mxu0 0
  %5440 = vmatprep.subr.bf16.mxu0 0
  %5441 = vmatpush2.bf16.msra.mxu0 0
  %5442 = vmatprep.subr.bf16.mxu0 0
  %5443 = vmatpush2.bf16.msra.mxu0 0
  %5444 = vmatprep.subr.bf16.mxu0 0
  %5445 = vmatpush2.bf16.msra.mxu0 0
  %5446 = vmatprep.subr.bf16.mxu0 0
  %5447 = vmatpush2.bf16.msra.mxu0 0
  %5448 = vmatprep.subr.bf16.mxu0 0
  %5449 = vmatpush2.bf16.msra.mxu0 0
  %5450 = vmatprep.subr.bf16.mxu0 0
  %5451 = vmatpush2.bf16.msra.mxu0 0
  %5452 = vmatprep.mubr.bf16.mxu0 0
  %5453 = vmatmul.mubr.bf16.gmra.mxu0 %v5419
  %v5454 = vpop.f32.mrf.mxu0
  %v5455 = vadd.f32 0.0, %v5454
  %v5456 = vpop.f32.mrf.mxu0
  %v5457 = vadd.f32 0.0, %v5456
  %v5458 = vpop.f32.mrf.mxu0
  %v5459 = vpop.f32.mrf.mxu0
  %5460 = vdwg.mxu0
  %5461 = vmatprep.subr.bf16.mxu0 0
  %5462 = vmatpush1.bf16.msra.mxu0 %v2020
  %5463 = vmatprep.subr.bf16.mxu0 0
  %5464 = vmatpush1.bf16.msra.mxu0 %v2017
  %5465 = vmatprep.subr.bf16.mxu0 0
  %5466 = vmatpush1.bf16.msra.mxu0 %v2014
  %5467 = vmatprep.subr.bf16.mxu0 0
  %5468 = vmatpush1.bf16.msra.mxu0 %v2011
  %5469 = vmatprep.subr.bf16.mxu0 0
  %5470 = vmatpush1.bf16.msra.mxu0 %v2008
  %5471 = vmatprep.subr.bf16.mxu0 0
  %5472 = vmatpush1.bf16.msra.mxu0 %v2005
  %5473 = vmatprep.subr.bf16.mxu0 0
  %5474 = vmatpush1.bf16.msra.mxu0 %v2002
  %5475 = vmatprep.subr.bf16.mxu0 0
  %5476 = vmatpush1.bf16.msra.mxu0 %v1999
  %5477 = vmatprep.subr.bf16.mxu0 0
  %5478 = vmatpush2.bf16.msra.mxu0 0
  %5479 = vmatprep.subr.bf16.mxu0 0
  %5480 = vmatpush2.bf16.msra.mxu0 0
  %5481 = vmatprep.subr.bf16.mxu0 0
  %5482 = vmatpush2.bf16.msra.mxu0 0
  %5483 = vmatprep.subr.bf16.mxu0 0
  %5484 = vmatpush2.bf16.msra.mxu0 0
  %5485 = vmatprep.subr.bf16.mxu0 0
  %5486 = vmatpush2.bf16.msra.mxu0 0
  %5487 = vmatprep.subr.bf16.mxu0 0
  %5488 = vmatpush2.bf16.msra.mxu0 0
  %5489 = vmatprep.subr.bf16.mxu0 0
  %5490 = vmatpush2.bf16.msra.mxu0 0
  %5491 = vmatprep.subr.bf16.mxu0 0
  %5492 = vmatpush2.bf16.msra.mxu0 0
  %5493 = vmatprep.mubr.bf16.mxu0 0
  %5494 = vmatmul.mubr.bf16.gmra.mxu0 %v5419
  %v5495 = vpop.f32.mrf.mxu0
  %v5496 = vadd.f32 0.0, %v5495
  %v5497 = vpop.f32.mrf.mxu0
  %v5498 = vpop.f32.mrf.mxu0
  %v5499 = vpop.f32.mrf.mxu0
  %5500 = vdwg.mxu0
  %v5501 = vadd.f32 %v5373, %v5455
  %v5502 = vadd.f32 %v5375, %v5457
  %v5503 = vmul.f32 %v5501, 0.5
  %v5504 = vmul.f32 %v5502, 0.5
  %v5505 = vtanh.pop %v5503
  %v5506 = vtanh.pop %v5504
  %v5507 = vadd.f32 %v5505, 1.0
  %v5508 = vadd.f32 %v5506, 1.0
  %v5509 = vmul.f32 %v5507, 0.5
  %v5510 = vmul.f32 %v5508, 0.5
  %v5511 = vadd.f32 %v5496, %v424
  %v5512 = vmul.f32 %v5509, %v5511
  %v5513 = vadd.f32 %v5414, %v5512
  %v5514 = vtanh.pop %v5513
  %v5515 = vsub.f32 1.0, %v5510
  %v5516 = vmul.f32 %v5515, %v5514
  %v5517 = vmul.f32 %v5510, %v4871
  %v5518 = vadd.f32 %v5516, %v5517
  %5519 = vmatprep.subr.bf16.mxu0 %v2745
  %5520 = vmatpush1.bf16.msra.mxu0 %v2744
  %5521 = vmatprep.subr.bf16.mxu0 %v2742
  %5522 = vmatpush1.bf16.msra.mxu0 %v2741
  %5523 = vmatprep.subr.bf16.mxu0 %v2739
  %5524 = vmatpush1.bf16.msra.mxu0 %v2738
  %5525 = vmatprep.subr.bf16.mxu0 %v2736
  %5526 = vmatpush1.bf16.msra.mxu0 %v2735
  %5527 = vmatprep.subr.bf16.mxu0 %v2733
  %5528 = vmatpush1.bf16.msra.mxu0 %v2732
  %5529 = vmatprep.subr.bf16.mxu0 %v2730
  %5530 = vmatpush1.bf16.msra.mxu0 %v2729
  %5531 = vmatprep.subr.bf16.mxu0 %v2727
  %5532 = vmatpush1.bf16.msra.mxu0 %v2726
  %5533 = vmatprep.subr.bf16.mxu0 %v2724
  %5534 = vmatpush1.bf16.msra.mxu0 %v2723
  %5535 = vmatprep.subr.bf16.mxu0 0
  %5536 = vmatpush2.bf16.msra.mxu0 0
  %5537 = vmatprep.subr.bf16.mxu0 0
  %5538 = vmatpush2.bf16.msra.mxu0 0
  %5539 = vmatprep.subr.bf16.mxu0 0
  %5540 = vmatpush2.bf16.msra.mxu0 0
  %5541 = vmatprep.subr.bf16.mxu0 0
  %5542 = vmatpush2.bf16.msra.mxu0 0
  %5543 = vmatprep.subr.bf16.mxu0 0
  %5544 = vmatpush2.bf16.msra.mxu0 0
  %5545 = vmatprep.subr.bf16.mxu0 0
  %5546 = vmatpush2.bf16.msra.mxu0 0
  %5547 = vmatprep.subr.bf16.mxu0 0
  %5548 = vmatpush2.bf16.msra.mxu0 0
  %5549 = vmatprep.subr.bf16.mxu0 0
  %5550 = vmatpush2.bf16.msra.mxu0 0
  %5551 = vmatprep.mubr.bf16.mxu0 0
  %5552 = vmatmul.mubr.bf16.gmra.mxu0 %v5419
  %v5553 = vpop.f32.mrf.mxu0
  %v5554 = vadd.f32 %v472, %v5553
  %v5555 = vpop.f32.mrf.mxu0
  %v5556 = vadd.f32 %v476, %v5555
  %v5557 = vpop.f32.mrf.mxu0
  %v5558 = vpop.f32.mrf.mxu0
  %5559 = vdwg.mxu0
  %5560 = vmatprep.subr.bf16.mxu0 0
  %5561 = vmatpush1.bf16.msra.mxu0 %v2746
  %5562 = vmatprep.subr.bf16.mxu0 0
  %5563 = vmatpush1.bf16.msra.mxu0 %v2743
  %5564 = vmatprep.subr.bf16.mxu0 0
  %5565 = vmatpush1.bf16.msra.mxu0 %v2740
  %5566 = vmatprep.subr.bf16.mxu0 0
  %5567 = vmatpush1.bf16.msra.mxu0 %v2737
  %5568 = vmatprep.subr.bf16.mxu0 0
  %5569 = vmatpush1.bf16.msra.mxu0 %v2734
  %5570 = vmatprep.subr.bf16.mxu0 0
  %5571 = vmatpush1.bf16.msra.mxu0 %v2731
  %5572 = vmatprep.subr.bf16.mxu0 0
  %5573 = vmatpush1.bf16.msra.mxu0 %v2728
  %5574 = vmatprep.subr.bf16.mxu0 0
  %5575 = vmatpush1.bf16.msra.mxu0 %v2725
  %5576 = vmatprep.subr.bf16.mxu0 0
  %5577 = vmatpush2.bf16.msra.mxu0 0
  %5578 = vmatprep.subr.bf16.mxu0 0
  %5579 = vmatpush2.bf16.msra.mxu0 0
  %5580 = vmatprep.subr.bf16.mxu0 0
  %5581 = vmatpush2.bf16.msra.mxu0 0
  %5582 = vmatprep.subr.bf16.mxu0 0
  %5583 = vmatpush2.bf16.msra.mxu0 0
  %5584 = vmatprep.subr.bf16.mxu0 0
  %5585 = vmatpush2.bf16.msra.mxu0 0
  %5586 = vmatprep.subr.bf16.mxu0 0
  %5587 = vmatpush2.bf16.msra.mxu0 0
  %5588 = vmatprep.subr.bf16.mxu0 0
  %5589 = vmatpush2.bf16.msra.mxu0 0
  %5590 = vmatprep.subr.bf16.mxu0 0
  %5591 = vmatpush2.bf16.msra.mxu0 0
  %5592 = vmatprep.mubr.bf16.mxu0 0
  %5593 = vmatmul.mubr.bf16.gmra.mxu0 %v5419
  %v5594 = vpop.f32.mrf.mxu0
  %v5595 = vadd.f32 %v480, %v5594
  %v5596 = vpop.f32.mrf.mxu0
  %v5597 = vpop.f32.mrf.mxu0
  %v5598 = vpop.f32.mrf.mxu0
  %5599 = vdwg.mxu0
  %v5600 = vpack.c.bf16 %v5052, %v5052
  %5601 = vmatprep.subr.bf16.mxu0 %v2987
  %5602 = vmatpush1.bf16.msra.mxu0 %v2986
  %5603 = vmatprep.subr.bf16.mxu0 %v2984
  %5604 = vmatpush1.bf16.msra.mxu0 %v2983
  %5605 = vmatprep.subr.bf16.mxu0 %v2981
  %5606 = vmatpush1.bf16.msra.mxu0 %v2980
  %5607 = vmatprep.subr.bf16.mxu0 %v2978
  %5608 = vmatpush1.bf16.msra.mxu0 %v2977
  %5609 = vmatprep.subr.bf16.mxu0 %v2975
  %5610 = vmatpush1.bf16.msra.mxu0 %v2974
  %5611 = vmatprep.subr.bf16.mxu0 %v2972
  %5612 = vmatpush1.bf16.msra.mxu0 %v2971
  %5613 = vmatprep.subr.bf16.mxu0 %v2969
  %5614 = vmatpush1.bf16.msra.mxu0 %v2968
  %5615 = vmatprep.subr.bf16.mxu0 %v2966
  %5616 = vmatpush1.bf16.msra.mxu0 %v2965
  %5617 = vmatprep.subr.bf16.mxu0 0
  %5618 = vmatpush2.bf16.msra.mxu0 0
  %5619 = vmatprep.subr.bf16.mxu0 0
  %5620 = vmatpush2.bf16.msra.mxu0 0
  %5621 = vmatprep.subr.bf16.mxu0 0
  %5622 = vmatpush2.bf16.msra.mxu0 0
  %5623 = vmatprep.subr.bf16.mxu0 0
  %5624 = vmatpush2.bf16.msra.mxu0 0
  %5625 = vmatprep.subr.bf16.mxu0 0
  %5626 = vmatpush2.bf16.msra.mxu0 0
  %5627 = vmatprep.subr.bf16.mxu0 0
  %5628 = vmatpush2.bf16.msra.mxu0 0
  %5629 = vmatprep.subr.bf16.mxu0 0
  %5630 = vmatpush2.bf16.msra.mxu0 0
  %5631 = vmatprep.subr.bf16.mxu0 0
  %5632 = vmatpush2.bf16.msra.mxu0 0
  %5633 = vmatprep.mubr.bf16.mxu0 0
  %5634 = vmatmul.mubr.bf16.gmra.mxu0 %v5600
  %v5635 = vpop.f32.mrf.mxu0
  %v5636 = vadd.f32 0.0, %v5635
  %v5637 = vpop.f32.mrf.mxu0
  %v5638 = vadd.f32 0.0, %v5637
  %v5639 = vpop.f32.mrf.mxu0
  %v5640 = vpop.f32.mrf.mxu0
  %5641 = vdwg.mxu0
  %5642 = vmatprep.subr.bf16.mxu0 0
  %5643 = vmatpush1.bf16.msra.mxu0 %v2988
  %5644 = vmatprep.subr.bf16.mxu0 0
  %5645 = vmatpush1.bf16.msra.mxu0 %v2985
  %5646 = vmatprep.subr.bf16.mxu0 0
  %5647 = vmatpush1.bf16.msra.mxu0 %v2982
  %5648 = vmatprep.subr.bf16.mxu0 0
  %5649 = vmatpush1.bf16.msra.mxu0 %v2979
  %5650 = vmatprep.subr.bf16.mxu0 0
  %5651 = vmatpush1.bf16.msra.mxu0 %v2976
  %5652 = vmatprep.subr.bf16.mxu0 0
  %5653 = vmatpush1.bf16.msra.mxu0 %v2973
  %5654 = vmatprep.subr.bf16.mxu0 0
  %5655 = vmatpush1.bf16.msra.mxu0 %v2970
  %5656 = vmatprep.subr.bf16.mxu0 0
  %5657 = vmatpush1.bf16.msra.mxu0 %v2967
  %5658 = vmatprep.subr.bf16.mxu0 0
  %5659 = vmatpush2.bf16.msra.mxu0 0
  %5660 = vmatprep.subr.bf16.mxu0 0
  %5661 = vmatpush2.bf16.msra.mxu0 0
  %5662 = vmatprep.subr.bf16.mxu0 0
  %5663 = vmatpush2.bf16.msra.mxu0 0
  %5664 = vmatprep.subr.bf16.mxu0 0
  %5665 = vmatpush2.bf16.msra.mxu0 0
  %5666 = vmatprep.subr.bf16.mxu0 0
  %5667 = vmatpush2.bf16.msra.mxu0 0
  %5668 = vmatprep.subr.bf16.mxu0 0
  %5669 = vmatpush2.bf16.msra.mxu0 0
  %5670 = vmatprep.subr.bf16.mxu0 0
  %5671 = vmatpush2.bf16.msra.mxu0 0
  %5672 = vmatprep.subr.bf16.mxu0 0
  %5673 = vmatpush2.bf16.msra.mxu0 0
  %5674 = vmatprep.mubr.bf16.mxu0 0
  %5675 = vmatmul.mubr.bf16.gmra.mxu0 %v5600
  %v5676 = vpop.f32.mrf.mxu0
  %v5677 = vadd.f32 0.0, %v5676
  %v5678 = vpop.f32.mrf.mxu0
  %v5679 = vpop.f32.mrf.mxu0
  %v5680 = vpop.f32.mrf.mxu0
  %5681 = vdwg.mxu0
  %v5682 = vadd.f32 %v5554, %v5636
  %v5683 = vadd.f32 %v5556, %v5638
  %v5684 = vmul.f32 %v5682, 0.5
  %v5685 = vmul.f32 %v5683, 0.5
  %v5686 = vtanh.pop %v5684
  %v5687 = vtanh.pop %v5685
  %v5688 = vadd.f32 %v5686, 1.0
  %v5689 = vadd.f32 %v5687, 1.0
  %v5690 = vmul.f32 %v5688, 0.5
  %v5691 = vmul.f32 %v5689, 0.5
  %v5692 = vadd.f32 %v5677, %v429
  %v5693 = vmul.f32 %v5690, %v5692
  %v5694 = vadd.f32 %v5595, %v5693
  %v5695 = vtanh.pop %v5694
  %v5696 = vsub.f32 1.0, %v5691
  %v5697 = vmul.f32 %v5696, %v5695
  %v5698 = vmul.f32 %v5691, %v5052
  %v5699 = vadd.f32 %v5697, %v5698
  %v5700 = vpack.c.bf16 %v5156, %v5156
  %5701 = vmatprep.subr.bf16.mxu0 %v990
  %5702 = vmatpush1.bf16.msra.mxu0 %v989
  %5703 = vmatprep.subr.bf16.mxu0 %v987
  %5704 = vmatpush1.bf16.msra.mxu0 %v986
  %5705 = vmatprep.subr.bf16.mxu0 %v984
  %5706 = vmatpush1.bf16.msra.mxu0 %v983
  %5707 = vmatprep.subr.bf16.mxu0 %v981
  %5708 = vmatpush1.bf16.msra.mxu0 %v980
  %5709 = vmatprep.subr.bf16.mxu0 %v978
  %5710 = vmatpush1.bf16.msra.mxu0 %v977
  %5711 = vmatprep.subr.bf16.mxu0 %v975
  %5712 = vmatpush1.bf16.msra.mxu0 %v974
  %5713 = vmatprep.subr.bf16.mxu0 %v972
  %5714 = vmatpush1.bf16.msra.mxu0 %v971
  %5715 = vmatprep.subr.bf16.mxu0 %v969
  %5716 = vmatpush1.bf16.msra.mxu0 %v968
  %5717 = vmatprep.subr.bf16.mxu0 0
  %5718 = vmatpush2.bf16.msra.mxu0 0
  %5719 = vmatprep.subr.bf16.mxu0 0
  %5720 = vmatpush2.bf16.msra.mxu0 0
  %5721 = vmatprep.subr.bf16.mxu0 0
  %5722 = vmatpush2.bf16.msra.mxu0 0
  %5723 = vmatprep.subr.bf16.mxu0 0
  %5724 = vmatpush2.bf16.msra.mxu0 0
  %5725 = vmatprep.subr.bf16.mxu0 0
  %5726 = vmatpush2.bf16.msra.mxu0 0
  %5727 = vmatprep.subr.bf16.mxu0 0
  %5728 = vmatpush2.bf16.msra.mxu0 0
  %5729 = vmatprep.subr.bf16.mxu0 0
  %5730 = vmatpush2.bf16.msra.mxu0 0
  %5731 = vmatprep.subr.bf16.mxu0 0
  %5732 = vmatpush2.bf16.msra.mxu0 0
  %5733 = vmatprep.mubr.bf16.mxu0 0
  %5734 = vmatmul.mubr.bf16.gmra.mxu0 %v5700
  %v5735 = vpop.f32.mrf.mxu0
  %v5736 = vadd.f32 %v436, %v5735
  %v5737 = vpop.f32.mrf.mxu0
  %v5738 = vadd.f32 %v440, %v5737
  %v5739 = vpop.f32.mrf.mxu0
  %v5740 = vpop.f32.mrf.mxu0
  %5741 = vdwg.mxu0
  %5742 = vmatprep.subr.bf16.mxu0 0
  %5743 = vmatpush1.bf16.msra.mxu0 %v991
  %5744 = vmatprep.subr.bf16.mxu0 0
  %5745 = vmatpush1.bf16.msra.mxu0 %v988
  %5746 = vmatprep.subr.bf16.mxu0 0
  %5747 = vmatpush1.bf16.msra.mxu0 %v985
  %5748 = vmatprep.subr.bf16.mxu0 0
  %5749 = vmatpush1.bf16.msra.mxu0 %v982
  %5750 = vmatprep.subr.bf16.mxu0 0
  %5751 = vmatpush1.bf16.msra.mxu0 %v979
  %5752 = vmatprep.subr.bf16.mxu0 0
  %5753 = vmatpush1.bf16.msra.mxu0 %v976
  %5754 = vmatprep.subr.bf16.mxu0 0
  %5755 = vmatpush1.bf16.msra.mxu0 %v973
  %5756 = vmatprep.subr.bf16.mxu0 0
  %5757 = vmatpush1.bf16.msra.mxu0 %v970
  %5758 = vmatprep.subr.bf16.mxu0 0
  %5759 = vmatpush2.bf16.msra.mxu0 0
  %5760 = vmatprep.subr.bf16.mxu0 0
  %5761 = vmatpush2.bf16.msra.mxu0 0
  %5762 = vmatprep.subr.bf16.mxu0 0
  %5763 = vmatpush2.bf16.msra.mxu0 0
  %5764 = vmatprep.subr.bf16.mxu0 0
  %5765 = vmatpush2.bf16.msra.mxu0 0
  %5766 = vmatprep.subr.bf16.mxu0 0
  %5767 = vmatpush2.bf16.msra.mxu0 0
  %5768 = vmatprep.subr.bf16.mxu0 0
  %5769 = vmatpush2.bf16.msra.mxu0 0
  %5770 = vmatprep.subr.bf16.mxu0 0
  %5771 = vmatpush2.bf16.msra.mxu0 0
  %5772 = vmatprep.subr.bf16.mxu0 0
  %5773 = vmatpush2.bf16.msra.mxu0 0
  %5774 = vmatprep.mubr.bf16.mxu0 0
  %5775 = vmatmul.mubr.bf16.gmra.mxu0 %v5700
  %v5776 = vpop.f32.mrf.mxu0
  %v5777 = vadd.f32 %v444, %v5776
  %v5778 = vpop.f32.mrf.mxu0
  %v5779 = vpop.f32.mrf.mxu0
  %v5780 = vpop.f32.mrf.mxu0
  %5781 = vdwg.mxu0
  %v5782 = vpack.c.bf16 %v5337, %v5337
  %5783 = vmatprep.subr.bf16.mxu0 %v1232
  %5784 = vmatpush1.bf16.msra.mxu0 %v1231
  %5785 = vmatprep.subr.bf16.mxu0 %v1229
  %5786 = vmatpush1.bf16.msra.mxu0 %v1228
  %5787 = vmatprep.subr.bf16.mxu0 %v1226
  %5788 = vmatpush1.bf16.msra.mxu0 %v1225
  %5789 = vmatprep.subr.bf16.mxu0 %v1223
  %5790 = vmatpush1.bf16.msra.mxu0 %v1222
  %5791 = vmatprep.subr.bf16.mxu0 %v1220
  %5792 = vmatpush1.bf16.msra.mxu0 %v1219
  %5793 = vmatprep.subr.bf16.mxu0 %v1217
  %5794 = vmatpush1.bf16.msra.mxu0 %v1216
  %5795 = vmatprep.subr.bf16.mxu0 %v1214
  %5796 = vmatpush1.bf16.msra.mxu0 %v1213
  %5797 = vmatprep.subr.bf16.mxu0 %v1211
  %5798 = vmatpush1.bf16.msra.mxu0 %v1210
  %5799 = vmatprep.subr.bf16.mxu0 0
  %5800 = vmatpush2.bf16.msra.mxu0 0
  %5801 = vmatprep.subr.bf16.mxu0 0
  %5802 = vmatpush2.bf16.msra.mxu0 0
  %5803 = vmatprep.subr.bf16.mxu0 0
  %5804 = vmatpush2.bf16.msra.mxu0 0
  %5805 = vmatprep.subr.bf16.mxu0 0
  %5806 = vmatpush2.bf16.msra.mxu0 0
  %5807 = vmatprep.subr.bf16.mxu0 0
  %5808 = vmatpush2.bf16.msra.mxu0 0
  %5809 = vmatprep.subr.bf16.mxu0 0
  %5810 = vmatpush2.bf16.msra.mxu0 0
  %5811 = vmatprep.subr.bf16.mxu0 0
  %5812 = vmatpush2.bf16.msra.mxu0 0
  %5813 = vmatprep.subr.bf16.mxu0 0
  %5814 = vmatpush2.bf16.msra.mxu0 0
  %5815 = vmatprep.mubr.bf16.mxu0 0
  %5816 = vmatmul.mubr.bf16.gmra.mxu0 %v5782
  %v5817 = vpop.f32.mrf.mxu0
  %v5818 = vadd.f32 0.0, %v5817
  %v5819 = vpop.f32.mrf.mxu0
  %v5820 = vadd.f32 0.0, %v5819
  %v5821 = vpop.f32.mrf.mxu0
  %v5822 = vpop.f32.mrf.mxu0
  %5823 = vdwg.mxu0
  %5824 = vmatprep.subr.bf16.mxu0 0
  %5825 = vmatpush1.bf16.msra.mxu0 %v1233
  %5826 = vmatprep.subr.bf16.mxu0 0
  %5827 = vmatpush1.bf16.msra.mxu0 %v1230
  %5828 = vmatprep.subr.bf16.mxu0 0
  %5829 = vmatpush1.bf16.msra.mxu0 %v1227
  %5830 = vmatprep.subr.bf16.mxu0 0
  %5831 = vmatpush1.bf16.msra.mxu0 %v1224
  %5832 = vmatprep.subr.bf16.mxu0 0
  %5833 = vmatpush1.bf16.msra.mxu0 %v1221
  %5834 = vmatprep.subr.bf16.mxu0 0
  %5835 = vmatpush1.bf16.msra.mxu0 %v1218
  %5836 = vmatprep.subr.bf16.mxu0 0
  %5837 = vmatpush1.bf16.msra.mxu0 %v1215
  %5838 = vmatprep.subr.bf16.mxu0 0
  %5839 = vmatpush1.bf16.msra.mxu0 %v1212
  %5840 = vmatprep.subr.bf16.mxu0 0
  %5841 = vmatpush2.bf16.msra.mxu0 0
  %5842 = vmatprep.subr.bf16.mxu0 0
  %5843 = vmatpush2.bf16.msra.mxu0 0
  %5844 = vmatprep.subr.bf16.mxu0 0
  %5845 = vmatpush2.bf16.msra.mxu0 0
  %5846 = vmatprep.subr.bf16.mxu0 0
  %5847 = vmatpush2.bf16.msra.mxu0 0
  %5848 = vmatprep.subr.bf16.mxu0 0
  %5849 = vmatpush2.bf16.msra.mxu0 0
  %5850 = vmatprep.subr.bf16.mxu0 0
  %5851 = vmatpush2.bf16.msra.mxu0 0
  %5852 = vmatprep.subr.bf16.mxu0 0
  %5853 = vmatpush2.bf16.msra.mxu0 0
  %5854 = vmatprep.subr.bf16.mxu0 0
  %5855 = vmatpush2.bf16.msra.mxu0 0
  %5856 = vmatprep.mubr.bf16.mxu0 0
  %5857 = vmatmul.mubr.bf16.gmra.mxu0 %v5782
  %v5858 = vpop.f32.mrf.mxu0
  %v5859 = vadd.f32 0.0, %v5858
  %v5860 = vpop.f32.mrf.mxu0
  %v5861 = vpop.f32.mrf.mxu0
  %v5862 = vpop.f32.mrf.mxu0
  %5863 = vdwg.mxu0
  %v5864 = vadd.f32 %v5736, %v5818
  %v5865 = vadd.f32 %v5738, %v5820
  %v5866 = vmul.f32 %v5864, 0.5
  %v5867 = vmul.f32 %v5865, 0.5
  %v5868 = vtanh.pop %v5866
  %v5869 = vtanh.pop %v5867
  %v5870 = vadd.f32 %v5868, 1.0
  %v5871 = vadd.f32 %v5869, 1.0
  %v5872 = vmul.f32 %v5870, 0.5
  %v5873 = vmul.f32 %v5871, 0.5
  %v5874 = vadd.f32 %v5859, %v419
  %v5875 = vmul.f32 %v5872, %v5874
  %v5876 = vadd.f32 %v5777, %v5875
  %v5877 = vtanh.pop %v5876
  %v5878 = vsub.f32 1.0, %v5873
  %v5879 = vmul.f32 %v5878, %v5877
  %v5880 = vmul.f32 %v5873, %v5337
  %v5881 = vadd.f32 %v5879, %v5880
  %5882 = vmatprep.subr.bf16.mxu0 %v1777
  %5883 = vmatpush1.bf16.msra.mxu0 %v1776
  %5884 = vmatprep.subr.bf16.mxu0 %v1774
  %5885 = vmatpush1.bf16.msra.mxu0 %v1773
  %5886 = vmatprep.subr.bf16.mxu0 %v1771
  %5887 = vmatpush1.bf16.msra.mxu0 %v1770
  %5888 = vmatprep.subr.bf16.mxu0 %v1768
  %5889 = vmatpush1.bf16.msra.mxu0 %v1767
  %5890 = vmatprep.subr.bf16.mxu0 %v1765
  %5891 = vmatpush1.bf16.msra.mxu0 %v1764
  %5892 = vmatprep.subr.bf16.mxu0 %v1762
  %5893 = vmatpush1.bf16.msra.mxu0 %v1761
  %5894 = vmatprep.subr.bf16.mxu0 %v1759
  %5895 = vmatpush1.bf16.msra.mxu0 %v1758
  %5896 = vmatprep.subr.bf16.mxu0 %v1756
  %5897 = vmatpush1.bf16.msra.mxu0 %v1755
  %5898 = vmatprep.subr.bf16.mxu0 0
  %5899 = vmatpush2.bf16.msra.mxu0 0
  %5900 = vmatprep.subr.bf16.mxu0 0
  %5901 = vmatpush2.bf16.msra.mxu0 0
  %5902 = vmatprep.subr.bf16.mxu0 0
  %5903 = vmatpush2.bf16.msra.mxu0 0
  %5904 = vmatprep.subr.bf16.mxu0 0
  %5905 = vmatpush2.bf16.msra.mxu0 0
  %5906 = vmatprep.subr.bf16.mxu0 0
  %5907 = vmatpush2.bf16.msra.mxu0 0
  %5908 = vmatprep.subr.bf16.mxu0 0
  %5909 = vmatpush2.bf16.msra.mxu0 0
  %5910 = vmatprep.subr.bf16.mxu0 0
  %5911 = vmatpush2.bf16.msra.mxu0 0
  %5912 = vmatprep.subr.bf16.mxu0 0
  %5913 = vmatpush2.bf16.msra.mxu0 0
  %5914 = vmatprep.mubr.bf16.mxu0 0
  %5915 = vmatmul.mubr.bf16.gmra.mxu0 %v5782
  %v5916 = vpop.f32.mrf.mxu0
  %v5917 = vadd.f32 %v454, %v5916
  %v5918 = vpop.f32.mrf.mxu0
  %v5919 = vadd.f32 %v458, %v5918
  %v5920 = vpop.f32.mrf.mxu0
  %v5921 = vpop.f32.mrf.mxu0
  %5922 = vdwg.mxu0
  %5923 = vmatprep.subr.bf16.mxu0 0
  %5924 = vmatpush1.bf16.msra.mxu0 %v1778
  %5925 = vmatprep.subr.bf16.mxu0 0
  %5926 = vmatpush1.bf16.msra.mxu0 %v1775
  %5927 = vmatprep.subr.bf16.mxu0 0
  %5928 = vmatpush1.bf16.msra.mxu0 %v1772
  %5929 = vmatprep.subr.bf16.mxu0 0
  %5930 = vmatpush1.bf16.msra.mxu0 %v1769
  %5931 = vmatprep.subr.bf16.mxu0 0
  %5932 = vmatpush1.bf16.msra.mxu0 %v1766
  %5933 = vmatprep.subr.bf16.mxu0 0
  %5934 = vmatpush1.bf16.msra.mxu0 %v1763
  %5935 = vmatprep.subr.bf16.mxu0 0
  %5936 = vmatpush1.bf16.msra.mxu0 %v1760
  %5937 = vmatprep.subr.bf16.mxu0 0
  %5938 = vmatpush1.bf16.msra.mxu0 %v1757
  %5939 = vmatprep.subr.bf16.mxu0 0
  %5940 = vmatpush2.bf16.msra.mxu0 0
  %5941 = vmatprep.subr.bf16.mxu0 0
  %5942 = vmatpush2.bf16.msra.mxu0 0
  %5943 = vmatprep.subr.bf16.mxu0 0
  %5944 = vmatpush2.bf16.msra.mxu0 0
  %5945 = vmatprep.subr.bf16.mxu0 0
  %5946 = vmatpush2.bf16.msra.mxu0 0
  %5947 = vmatprep.subr.bf16.mxu0 0
  %5948 = vmatpush2.bf16.msra.mxu0 0
  %5949 = vmatprep.subr.bf16.mxu0 0
  %5950 = vmatpush2.bf16.msra.mxu0 0
  %5951 = vmatprep.subr.bf16.mxu0 0
  %5952 = vmatpush2.bf16.msra.mxu0 0
  %5953 = vmatprep.subr.bf16.mxu0 0
  %5954 = vmatpush2.bf16.msra.mxu0 0
  %5955 = vmatprep.mubr.bf16.mxu0 0
  %5956 = vmatmul.mubr.bf16.gmra.mxu0 %v5782
  %v5957 = vpop.f32.mrf.mxu0
  %v5958 = vadd.f32 %v462, %v5957
  %v5959 = vpop.f32.mrf.mxu0
  %v5960 = vpop.f32.mrf.mxu0
  %v5961 = vpop.f32.mrf.mxu0
  %5962 = vdwg.mxu0
  %v5963 = vpack.c.bf16 %v5518, %v5518
  %5964 = vmatprep.subr.bf16.mxu0 %v2019
  %5965 = vmatpush1.bf16.msra.mxu0 %v2018
  %5966 = vmatprep.subr.bf16.mxu0 %v2016
  %5967 = vmatpush1.bf16.msra.mxu0 %v2015
  %5968 = vmatprep.subr.bf16.mxu0 %v2013
  %5969 = vmatpush1.bf16.msra.mxu0 %v2012
  %5970 = vmatprep.subr.bf16.mxu0 %v2010
  %5971 = vmatpush1.bf16.msra.mxu0 %v2009
  %5972 = vmatprep.subr.bf16.mxu0 %v2007
  %5973 = vmatpush1.bf16.msra.mxu0 %v2006
  %5974 = vmatprep.subr.bf16.mxu0 %v2004
  %5975 = vmatpush1.bf16.msra.mxu0 %v2003
  %5976 = vmatprep.subr.bf16.mxu0 %v2001
  %5977 = vmatpush1.bf16.msra.mxu0 %v2000
  %5978 = vmatprep.subr.bf16.mxu0 %v1998
  %5979 = vmatpush1.bf16.msra.mxu0 %v1997
  %5980 = vmatprep.subr.bf16.mxu0 0
  %5981 = vmatpush2.bf16.msra.mxu0 0
  %5982 = vmatprep.subr.bf16.mxu0 0
  %5983 = vmatpush2.bf16.msra.mxu0 0
  %5984 = vmatprep.subr.bf16.mxu0 0
  %5985 = vmatpush2.bf16.msra.mxu0 0
  %5986 = vmatprep.subr.bf16.mxu0 0
  %5987 = vmatpush2.bf16.msra.mxu0 0
  %5988 = vmatprep.subr.bf16.mxu0 0
  %5989 = vmatpush2.bf16.msra.mxu0 0
  %5990 = vmatprep.subr.bf16.mxu0 0
  %5991 = vmatpush2.bf16.msra.mxu0 0
  %5992 = vmatprep.subr.bf16.mxu0 0
  %5993 = vmatpush2.bf16.msra.mxu0 0
  %5994 = vmatprep.subr.bf16.mxu0 0
  %5995 = vmatpush2.bf16.msra.mxu0 0
  %5996 = vmatprep.mubr.bf16.mxu0 0
  %5997 = vmatmul.mubr.bf16.gmra.mxu0 %v5963
  %v5998 = vpop.f32.mrf.mxu0
  %v5999 = vadd.f32 0.0, %v5998
  %v6000 = vpop.f32.mrf.mxu0
  %v6001 = vadd.f32 0.0, %v6000
  %v6002 = vpop.f32.mrf.mxu0
  %v6003 = vpop.f32.mrf.mxu0
  %6004 = vdwg.mxu0
  %6005 = vmatprep.subr.bf16.mxu0 0
  %6006 = vmatpush1.bf16.msra.mxu0 %v2020
  %6007 = vmatprep.subr.bf16.mxu0 0
  %6008 = vmatpush1.bf16.msra.mxu0 %v2017
  %6009 = vmatprep.subr.bf16.mxu0 0
  %6010 = vmatpush1.bf16.msra.mxu0 %v2014
  %6011 = vmatprep.subr.bf16.mxu0 0
  %6012 = vmatpush1.bf16.msra.mxu0 %v2011
  %6013 = vmatprep.subr.bf16.mxu0 0
  %6014 = vmatpush1.bf16.msra.mxu0 %v2008
  %6015 = vmatprep.subr.bf16.mxu0 0
  %6016 = vmatpush1.bf16.msra.mxu0 %v2005
  %6017 = vmatprep.subr.bf16.mxu0 0
  %6018 = vmatpush1.bf16.msra.mxu0 %v2002
  %6019 = vmatprep.subr.bf16.mxu0 0
  %6020 = vmatpush1.bf16.msra.mxu0 %v1999
  %6021 = vmatprep.subr.bf16.mxu0 0
  %6022 = vmatpush2.bf16.msra.mxu0 0
  %6023 = vmatprep.subr.bf16.mxu0 0
  %6024 = vmatpush2.bf16.msra.mxu0 0
  %6025 = vmatprep.subr.bf16.mxu0 0
  %6026 = vmatpush2.bf16.msra.mxu0 0
  %6027 = vmatprep.subr.bf16.mxu0 0
  %6028 = vmatpush2.bf16.msra.mxu0 0
  %6029 = vmatprep.subr.bf16.mxu0 0
  %6030 = vmatpush2.bf16.msra.mxu0 0
  %6031 = vmatprep.subr.bf16.mxu0 0
  %6032 = vmatpush2.bf16.msra.mxu0 0
  %6033 = vmatprep.subr.bf16.mxu0 0
  %6034 = vmatpush2.bf16.msra.mxu0 0
  %6035 = vmatprep.subr.bf16.mxu0 0
  %6036 = vmatpush2.bf16.msra.mxu0 0
  %6037 = vmatprep.mubr.bf16.mxu0 0
  %6038 = vmatmul.mubr.bf16.gmra.mxu0 %v5963
  %v6039 = vpop.f32.mrf.mxu0
  %v6040 = vadd.f32 0.0, %v6039
  %v6041 = vpop.f32.mrf.mxu0
  %v6042 = vpop.f32.mrf.mxu0
  %v6043 = vpop.f32.mrf.mxu0
  %6044 = vdwg.mxu0
  %v6045 = vadd.f32 %v5917, %v5999
  %v6046 = vadd.f32 %v5919, %v6001
  %v6047 = vmul.f32 %v6045, 0.5
  %v6048 = vmul.f32 %v6046, 0.5
  %v6049 = vtanh.pop %v6047
  %v6050 = vtanh.pop %v6048
  %v6051 = vadd.f32 %v6049, 1.0
  %v6052 = vadd.f32 %v6050, 1.0
  %v6053 = vmul.f32 %v6051, 0.5
  %v6054 = vmul.f32 %v6052, 0.5
  %v6055 = vadd.f32 %v6040, %v424
  %v6056 = vmul.f32 %v6053, %v6055
  %v6057 = vadd.f32 %v5958, %v6056
  %v6058 = vtanh.pop %v6057
  %v6059 = vsub.f32 1.0, %v6054
  %v6060 = vmul.f32 %v6059, %v6058
  %v6061 = vmul.f32 %v6054, %v5518
  %v6062 = vadd.f32 %v6060, %v6061
  %6063 = vmatprep.subr.bf16.mxu0 %v2745
  %6064 = vmatpush1.bf16.msra.mxu0 %v2744
  %6065 = vmatprep.subr.bf16.mxu0 %v2742
  %6066 = vmatpush1.bf16.msra.mxu0 %v2741
  %6067 = vmatprep.subr.bf16.mxu0 %v2739
  %6068 = vmatpush1.bf16.msra.mxu0 %v2738
  %6069 = vmatprep.subr.bf16.mxu0 %v2736
  %6070 = vmatpush1.bf16.msra.mxu0 %v2735
  %6071 = vmatprep.subr.bf16.mxu0 %v2733
  %6072 = vmatpush1.bf16.msra.mxu0 %v2732
  %6073 = vmatprep.subr.bf16.mxu0 %v2730
  %6074 = vmatpush1.bf16.msra.mxu0 %v2729
  %6075 = vmatprep.subr.bf16.mxu0 %v2727
  %6076 = vmatpush1.bf16.msra.mxu0 %v2726
  %6077 = vmatprep.subr.bf16.mxu0 %v2724
  %6078 = vmatpush1.bf16.msra.mxu0 %v2723
  %6079 = vmatprep.subr.bf16.mxu0 0
  %6080 = vmatpush2.bf16.msra.mxu0 0
  %6081 = vmatprep.subr.bf16.mxu0 0
  %6082 = vmatpush2.bf16.msra.mxu0 0
  %6083 = vmatprep.subr.bf16.mxu0 0
  %6084 = vmatpush2.bf16.msra.mxu0 0
  %6085 = vmatprep.subr.bf16.mxu0 0
  %6086 = vmatpush2.bf16.msra.mxu0 0
  %6087 = vmatprep.subr.bf16.mxu0 0
  %6088 = vmatpush2.bf16.msra.mxu0 0
  %6089 = vmatprep.subr.bf16.mxu0 0
  %6090 = vmatpush2.bf16.msra.mxu0 0
  %6091 = vmatprep.subr.bf16.mxu0 0
  %6092 = vmatpush2.bf16.msra.mxu0 0
  %6093 = vmatprep.subr.bf16.mxu0 0
  %6094 = vmatpush2.bf16.msra.mxu0 0
  %6095 = vmatprep.mubr.bf16.mxu0 0
  %6096 = vmatmul.mubr.bf16.gmra.mxu0 %v5963
  %v6097 = vpop.f32.mrf.mxu0
  %v6098 = vadd.f32 %v472, %v6097
  %v6099 = vpop.f32.mrf.mxu0
  %v6100 = vadd.f32 %v476, %v6099
  %v6101 = vpop.f32.mrf.mxu0
  %v6102 = vpop.f32.mrf.mxu0
  %6103 = vdwg.mxu0
  %6104 = vmatprep.subr.bf16.mxu0 0
  %6105 = vmatpush1.bf16.msra.mxu0 %v2746
  %6106 = vmatprep.subr.bf16.mxu0 0
  %6107 = vmatpush1.bf16.msra.mxu0 %v2743
  %6108 = vmatprep.subr.bf16.mxu0 0
  %6109 = vmatpush1.bf16.msra.mxu0 %v2740
  %6110 = vmatprep.subr.bf16.mxu0 0
  %6111 = vmatpush1.bf16.msra.mxu0 %v2737
  %6112 = vmatprep.subr.bf16.mxu0 0
  %6113 = vmatpush1.bf16.msra.mxu0 %v2734
  %6114 = vmatprep.subr.bf16.mxu0 0
  %6115 = vmatpush1.bf16.msra.mxu0 %v2731
  %6116 = vmatprep.subr.bf16.mxu0 0
  %6117 = vmatpush1.bf16.msra.mxu0 %v2728
  %6118 = vmatprep.subr.bf16.mxu0 0
  %6119 = vmatpush1.bf16.msra.mxu0 %v2725
  %6120 = vmatprep.subr.bf16.mxu0 0
  %6121 = vmatpush2.bf16.msra.mxu0 0
  %6122 = vmatprep.subr.bf16.mxu0 0
  %6123 = vmatpush2.bf16.msra.mxu0 0
  %6124 = vmatprep.subr.bf16.mxu0 0
  %6125 = vmatpush2.bf16.msra.mxu0 0
  %6126 = vmatprep.subr.bf16.mxu0 0
  %6127 = vmatpush2.bf16.msra.mxu0 0
  %6128 = vmatprep.subr.bf16.mxu0 0
  %6129 = vmatpush2.bf16.msra.mxu0 0
  %6130 = vmatprep.subr.bf16.mxu0 0
  %6131 = vmatpush2.bf16.msra.mxu0 0
  %6132 = vmatprep.subr.bf16.mxu0 0
  %6133 = vmatpush2.bf16.msra.mxu0 0
  %6134 = vmatprep.subr.bf16.mxu0 0
  %6135 = vmatpush2.bf16.msra.mxu0 0
  %6136 = vmatprep.mubr.bf16.mxu0 0
  %6137 = vmatmul.mubr.bf16.gmra.mxu0 %v5963
  %v6138 = vpop.f32.mrf.mxu0
  %v6139 = vadd.f32 %v480, %v6138
  %v6140 = vpop.f32.mrf.mxu0
  %v6141 = vpop.f32.mrf.mxu0
  %v6142 = vpop.f32.mrf.mxu0
  %6143 = vdwg.mxu0
  %v6144 = vpack.c.bf16 %v5699, %v5699
  %6145 = vmatprep.subr.bf16.mxu0 %v2987
  %6146 = vmatpush1.bf16.msra.mxu0 %v2986
  %6147 = vmatprep.subr.bf16.mxu0 %v2984
  %6148 = vmatpush1.bf16.msra.mxu0 %v2983
  %6149 = vmatprep.subr.bf16.mxu0 %v2981
  %6150 = vmatpush1.bf16.msra.mxu0 %v2980
  %6151 = vmatprep.subr.bf16.mxu0 %v2978
  %6152 = vmatpush1.bf16.msra.mxu0 %v2977
  %6153 = vmatprep.subr.bf16.mxu0 %v2975
  %6154 = vmatpush1.bf16.msra.mxu0 %v2974
  %6155 = vmatprep.subr.bf16.mxu0 %v2972
  %6156 = vmatpush1.bf16.msra.mxu0 %v2971
  %6157 = vmatprep.subr.bf16.mxu0 %v2969
  %6158 = vmatpush1.bf16.msra.mxu0 %v2968
  %6159 = vmatprep.subr.bf16.mxu0 %v2966
  %6160 = vmatpush1.bf16.msra.mxu0 %v2965
  %6161 = vmatprep.subr.bf16.mxu0 0
  %6162 = vmatpush2.bf16.msra.mxu0 0
  %6163 = vmatprep.subr.bf16.mxu0 0
  %6164 = vmatpush2.bf16.msra.mxu0 0
  %6165 = vmatprep.subr.bf16.mxu0 0
  %6166 = vmatpush2.bf16.msra.mxu0 0
  %6167 = vmatprep.subr.bf16.mxu0 0
  %6168 = vmatpush2.bf16.msra.mxu0 0
  %6169 = vmatprep.subr.bf16.mxu0 0
  %6170 = vmatpush2.bf16.msra.mxu0 0
  %6171 = vmatprep.subr.bf16.mxu0 0
  %6172 = vmatpush2.bf16.msra.mxu0 0
  %6173 = vmatprep.subr.bf16.mxu0 0
  %6174 = vmatpush2.bf16.msra.mxu0 0
  %6175 = vmatprep.subr.bf16.mxu0 0
  %6176 = vmatpush2.bf16.msra.mxu0 0
  %6177 = vmatprep.mubr.bf16.mxu0 0
  %6178 = vmatmul.mubr.bf16.gmra.mxu0 %v6144
  %v6179 = vpop.f32.mrf.mxu0
  %v6180 = vadd.f32 0.0, %v6179
  %v6181 = vpop.f32.mrf.mxu0
  %v6182 = vadd.f32 0.0, %v6181
  %v6183 = vpop.f32.mrf.mxu0
  %v6184 = vpop.f32.mrf.mxu0
  %6185 = vdwg.mxu0
  %6186 = vmatprep.subr.bf16.mxu0 0
  %6187 = vmatpush1.bf16.msra.mxu0 %v2988
  %6188 = vmatprep.subr.bf16.mxu0 0
  %6189 = vmatpush1.bf16.msra.mxu0 %v2985
  %6190 = vmatprep.subr.bf16.mxu0 0
  %6191 = vmatpush1.bf16.msra.mxu0 %v2982
  %6192 = vmatprep.subr.bf16.mxu0 0
  %6193 = vmatpush1.bf16.msra.mxu0 %v2979
  %6194 = vmatprep.subr.bf16.mxu0 0
  %6195 = vmatpush1.bf16.msra.mxu0 %v2976
  %6196 = vmatprep.subr.bf16.mxu0 0
  %6197 = vmatpush1.bf16.msra.mxu0 %v2973
  %6198 = vmatprep.subr.bf16.mxu0 0
  %6199 = vmatpush1.bf16.msra.mxu0 %v2970
  %6200 = vmatprep.subr.bf16.mxu0 0
  %6201 = vmatpush1.bf16.msra.mxu0 %v2967
  %6202 = vmatprep.subr.bf16.mxu0 0
  %6203 = vmatpush2.bf16.msra.mxu0 0
  %6204 = vmatprep.subr.bf16.mxu0 0
  %6205 = vmatpush2.bf16.msra.mxu0 0
  %6206 = vmatprep.subr.bf16.mxu0 0
  %6207 = vmatpush2.bf16.msra.mxu0 0
  %6208 = vmatprep.subr.bf16.mxu0 0
  %6209 = vmatpush2.bf16.msra.mxu0 0
  %6210 = vmatprep.subr.bf16.mxu0 0
  %6211 = vmatpush2.bf16.msra.mxu0 0
  %6212 = vmatprep.subr.bf16.mxu0 0
  %6213 = vmatpush2.bf16.msra.mxu0 0
  %6214 = vmatprep.subr.bf16.mxu0 0
  %6215 = vmatpush2.bf16.msra.mxu0 0
  %6216 = vmatprep.subr.bf16.mxu0 0
  %6217 = vmatpush2.bf16.msra.mxu0 0
  %6218 = vmatprep.mubr.bf16.mxu0 0
  %6219 = vmatmul.mubr.bf16.gmra.mxu0 %v6144
  %v6220 = vpop.f32.mrf.mxu0
  %v6221 = vadd.f32 0.0, %v6220
  %v6222 = vpop.f32.mrf.mxu0
  %v6223 = vpop.f32.mrf.mxu0
  %v6224 = vpop.f32.mrf.mxu0
  %6225 = vdwg.mxu0
  %v6226 = vadd.f32 %v6098, %v6180
  %v6227 = vadd.f32 %v6100, %v6182
  %v6228 = vmul.f32 %v6226, 0.5
  %v6229 = vmul.f32 %v6227, 0.5
  %v6230 = vtanh.pop %v6228
  %v6231 = vtanh.pop %v6229
  %v6232 = vadd.f32 %v6230, 1.0
  %v6233 = vadd.f32 %v6231, 1.0
  %v6234 = vmul.f32 %v6232, 0.5
  %v6235 = vmul.f32 %v6233, 0.5
  %v6236 = vadd.f32 %v6221, %v429
  %v6237 = vmul.f32 %v6234, %v6236
  %v6238 = vadd.f32 %v6139, %v6237
  %v6239 = vtanh.pop %v6238
  %v6240 = vsub.f32 1.0, %v6235
  %v6241 = vmul.f32 %v6240, %v6239
  %v6242 = vmul.f32 %v6235, %v5699
  %v6243 = vadd.f32 %v6241, %v6242
  %v6244 = vpack.c.bf16 %v5881, %v5881
  %6245 = vmatprep.subr.bf16.mxu0 %v1777
  %6246 = vmatpush1.bf16.msra.mxu0 %v1776
  %6247 = vmatprep.subr.bf16.mxu0 %v1774
  %6248 = vmatpush1.bf16.msra.mxu0 %v1773
  %6249 = vmatprep.subr.bf16.mxu0 %v1771
  %6250 = vmatpush1.bf16.msra.mxu0 %v1770
  %6251 = vmatprep.subr.bf16.mxu0 %v1768
  %6252 = vmatpush1.bf16.msra.mxu0 %v1767
  %6253 = vmatprep.subr.bf16.mxu0 %v1765
  %6254 = vmatpush1.bf16.msra.mxu0 %v1764
  %6255 = vmatprep.subr.bf16.mxu0 %v1762
  %6256 = vmatpush1.bf16.msra.mxu0 %v1761
  %6257 = vmatprep.subr.bf16.mxu0 %v1759
  %6258 = vmatpush1.bf16.msra.mxu0 %v1758
  %6259 = vmatprep.subr.bf16.mxu0 %v1756
  %6260 = vmatpush1.bf16.msra.mxu0 %v1755
  %6261 = vmatprep.subr.bf16.mxu0 0
  %6262 = vmatpush2.bf16.msra.mxu0 0
  %6263 = vmatprep.subr.bf16.mxu0 0
  %6264 = vmatpush2.bf16.msra.mxu0 0
  %6265 = vmatprep.subr.bf16.mxu0 0
  %6266 = vmatpush2.bf16.msra.mxu0 0
  %6267 = vmatprep.subr.bf16.mxu0 0
  %6268 = vmatpush2.bf16.msra.mxu0 0
  %6269 = vmatprep.subr.bf16.mxu0 0
  %6270 = vmatpush2.bf16.msra.mxu0 0
  %6271 = vmatprep.subr.bf16.mxu0 0
  %6272 = vmatpush2.bf16.msra.mxu0 0
  %6273 = vmatprep.subr.bf16.mxu0 0
  %6274 = vmatpush2.bf16.msra.mxu0 0
  %6275 = vmatprep.subr.bf16.mxu0 0
  %6276 = vmatpush2.bf16.msra.mxu0 0
  %6277 = vmatprep.mubr.bf16.mxu0 0
  %6278 = vmatmul.mubr.bf16.gmra.mxu0 %v6244
  %v6279 = vpop.f32.mrf.mxu0
  %v6280 = vadd.f32 %v454, %v6279
  %v6281 = vpop.f32.mrf.mxu0
  %v6282 = vadd.f32 %v458, %v6281
  %v6283 = vpop.f32.mrf.mxu0
  %v6284 = vpop.f32.mrf.mxu0
  %6285 = vdwg.mxu0
  %6286 = vmatprep.subr.bf16.mxu0 0
  %6287 = vmatpush1.bf16.msra.mxu0 %v1778
  %6288 = vmatprep.subr.bf16.mxu0 0
  %6289 = vmatpush1.bf16.msra.mxu0 %v1775
  %6290 = vmatprep.subr.bf16.mxu0 0
  %6291 = vmatpush1.bf16.msra.mxu0 %v1772
  %6292 = vmatprep.subr.bf16.mxu0 0
  %6293 = vmatpush1.bf16.msra.mxu0 %v1769
  %6294 = vmatprep.subr.bf16.mxu0 0
  %6295 = vmatpush1.bf16.msra.mxu0 %v1766
  %6296 = vmatprep.subr.bf16.mxu0 0
  %6297 = vmatpush1.bf16.msra.mxu0 %v1763
  %6298 = vmatprep.subr.bf16.mxu0 0
  %6299 = vmatpush1.bf16.msra.mxu0 %v1760
  %6300 = vmatprep.subr.bf16.mxu0 0
  %6301 = vmatpush1.bf16.msra.mxu0 %v1757
  %6302 = vmatprep.subr.bf16.mxu0 0
  %6303 = vmatpush2.bf16.msra.mxu0 0
  %6304 = vmatprep.subr.bf16.mxu0 0
  %6305 = vmatpush2.bf16.msra.mxu0 0
  %6306 = vmatprep.subr.bf16.mxu0 0
  %6307 = vmatpush2.bf16.msra.mxu0 0
  %6308 = vmatprep.subr.bf16.mxu0 0
  %6309 = vmatpush2.bf16.msra.mxu0 0
  %6310 = vmatprep.subr.bf16.mxu0 0
  %6311 = vmatpush2.bf16.msra.mxu0 0
  %6312 = vmatprep.subr.bf16.mxu0 0
  %6313 = vmatpush2.bf16.msra.mxu0 0
  %6314 = vmatprep.subr.bf16.mxu0 0
  %6315 = vmatpush2.bf16.msra.mxu0 0
  %6316 = vmatprep.subr.bf16.mxu0 0
  %6317 = vmatpush2.bf16.msra.mxu0 0
  %6318 = vmatprep.mubr.bf16.mxu0 0
  %6319 = vmatmul.mubr.bf16.gmra.mxu0 %v6244
  %v6320 = vpop.f32.mrf.mxu0
  %v6321 = vadd.f32 %v462, %v6320
  %v6322 = vpop.f32.mrf.mxu0
  %v6323 = vpop.f32.mrf.mxu0
  %v6324 = vpop.f32.mrf.mxu0
  %6325 = vdwg.mxu0
  %v6326 = vpack.c.bf16 %v6062, %v6062
  %6327 = vmatprep.subr.bf16.mxu0 %v2019
  %6328 = vmatpush1.bf16.msra.mxu0 %v2018
  %6329 = vmatprep.subr.bf16.mxu0 %v2016
  %6330 = vmatpush1.bf16.msra.mxu0 %v2015
  %6331 = vmatprep.subr.bf16.mxu0 %v2013
  %6332 = vmatpush1.bf16.msra.mxu0 %v2012
  %6333 = vmatprep.subr.bf16.mxu0 %v2010
  %6334 = vmatpush1.bf16.msra.mxu0 %v2009
  %6335 = vmatprep.subr.bf16.mxu0 %v2007
  %6336 = vmatpush1.bf16.msra.mxu0 %v2006
  %6337 = vmatprep.subr.bf16.mxu0 %v2004
  %6338 = vmatpush1.bf16.msra.mxu0 %v2003
  %6339 = vmatprep.subr.bf16.mxu0 %v2001
  %6340 = vmatpush1.bf16.msra.mxu0 %v2000
  %6341 = vmatprep.subr.bf16.mxu0 %v1998
  %6342 = vmatpush1.bf16.msra.mxu0 %v1997
  %6343 = vmatprep.subr.bf16.mxu0 0
  %6344 = vmatpush2.bf16.msra.mxu0 0
  %6345 = vmatprep.subr.bf16.mxu0 0
  %6346 = vmatpush2.bf16.msra.mxu0 0
  %6347 = vmatprep.subr.bf16.mxu0 0
  %6348 = vmatpush2.bf16.msra.mxu0 0
  %6349 = vmatprep.subr.bf16.mxu0 0
  %6350 = vmatpush2.bf16.msra.mxu0 0
  %6351 = vmatprep.subr.bf16.mxu0 0
  %6352 = vmatpush2.bf16.msra.mxu0 0
  %6353 = vmatprep.subr.bf16.mxu0 0
  %6354 = vmatpush2.bf16.msra.mxu0 0
  %6355 = vmatprep.subr.bf16.mxu0 0
  %6356 = vmatpush2.bf16.msra.mxu0 0
  %6357 = vmatprep.subr.bf16.mxu0 0
  %6358 = vmatpush2.bf16.msra.mxu0 0
  %6359 = vmatprep.mubr.bf16.mxu0 0
  %6360 = vmatmul.mubr.bf16.gmra.mxu0 %v6326
  %v6361 = vpop.f32.mrf.mxu0
  %v6362 = vadd.f32 0.0, %v6361
  %v6363 = vpop.f32.mrf.mxu0
  %v6364 = vadd.f32 0.0, %v6363
  %v6365 = vpop.f32.mrf.mxu0
  %v6366 = vpop.f32.mrf.mxu0
  %6367 = vdwg.mxu0
  %6368 = vmatprep.subr.bf16.mxu0 0
  %6369 = vmatpush1.bf16.msra.mxu0 %v2020
  %6370 = vmatprep.subr.bf16.mxu0 0
  %6371 = vmatpush1.bf16.msra.mxu0 %v2017
  %6372 = vmatprep.subr.bf16.mxu0 0
  %6373 = vmatpush1.bf16.msra.mxu0 %v2014
  %6374 = vmatprep.subr.bf16.mxu0 0
  %6375 = vmatpush1.bf16.msra.mxu0 %v2011
  %6376 = vmatprep.subr.bf16.mxu0 0
  %6377 = vmatpush1.bf16.msra.mxu0 %v2008
  %6378 = vmatprep.subr.bf16.mxu0 0
  %6379 = vmatpush1.bf16.msra.mxu0 %v2005
  %6380 = vmatprep.subr.bf16.mxu0 0
  %6381 = vmatpush1.bf16.msra.mxu0 %v2002
  %6382 = vmatprep.subr.bf16.mxu0 0
  %6383 = vmatpush1.bf16.msra.mxu0 %v1999
  %6384 = vmatprep.subr.bf16.mxu0 0
  %6385 = vmatpush2.bf16.msra.mxu0 0
  %6386 = vmatprep.subr.bf16.mxu0 0
  %6387 = vmatpush2.bf16.msra.mxu0 0
  %6388 = vmatprep.subr.bf16.mxu0 0
  %6389 = vmatpush2.bf16.msra.mxu0 0
  %6390 = vmatprep.subr.bf16.mxu0 0
  %6391 = vmatpush2.bf16.msra.mxu0 0
  %6392 = vmatprep.subr.bf16.mxu0 0
  %6393 = vmatpush2.bf16.msra.mxu0 0
  %6394 = vmatprep.subr.bf16.mxu0 0
  %6395 = vmatpush2.bf16.msra.mxu0 0
  %6396 = vmatprep.subr.bf16.mxu0 0
  %6397 = vmatpush2.bf16.msra.mxu0 0
  %6398 = vmatprep.subr.bf16.mxu0 0
  %6399 = vmatpush2.bf16.msra.mxu0 0
  %6400 = vmatprep.mubr.bf16.mxu0 0
  %6401 = vmatmul.mubr.bf16.gmra.mxu0 %v6326
  %v6402 = vpop.f32.mrf.mxu0
  %v6403 = vadd.f32 0.0, %v6402
  %v6404 = vpop.f32.mrf.mxu0
  %v6405 = vpop.f32.mrf.mxu0
  %v6406 = vpop.f32.mrf.mxu0
  %6407 = vdwg.mxu0
  %v6408 = vadd.f32 %v6280, %v6362
  %v6409 = vadd.f32 %v6282, %v6364
  %v6410 = vmul.f32 %v6408, 0.5
  %v6411 = vmul.f32 %v6409, 0.5
  %v6412 = vtanh.pop %v6410
  %v6413 = vtanh.pop %v6411
  %v6414 = vadd.f32 %v6412, 1.0
  %v6415 = vadd.f32 %v6413, 1.0
  %v6416 = vmul.f32 %v6414, 0.5
  %v6417 = vmul.f32 %v6415, 0.5
  %v6418 = vadd.f32 %v6403, %v424
  %v6419 = vmul.f32 %v6416, %v6418
  %v6420 = vadd.f32 %v6321, %v6419
  %v6421 = vtanh.pop %v6420
  %v6422 = vsub.f32 1.0, %v6417
  %v6423 = vmul.f32 %v6422, %v6421
  %v6424 = vmul.f32 %v6417, %v6062
  %v6425 = vadd.f32 %v6423, %v6424
  %6426 = vmatprep.subr.bf16.mxu0 %v2745
  %6427 = vmatpush1.bf16.msra.mxu0 %v2744
  %6428 = vmatprep.subr.bf16.mxu0 %v2742
  %6429 = vmatpush1.bf16.msra.mxu0 %v2741
  %6430 = vmatprep.subr.bf16.mxu0 %v2739
  %6431 = vmatpush1.bf16.msra.mxu0 %v2738
  %6432 = vmatprep.subr.bf16.mxu0 %v2736
  %6433 = vmatpush1.bf16.msra.mxu0 %v2735
  %6434 = vmatprep.subr.bf16.mxu0 %v2733
  %6435 = vmatpush1.bf16.msra.mxu0 %v2732
  %6436 = vmatprep.subr.bf16.mxu0 %v2730
  %6437 = vmatpush1.bf16.msra.mxu0 %v2729
  %6438 = vmatprep.subr.bf16.mxu0 %v2727
  %6439 = vmatpush1.bf16.msra.mxu0 %v2726
  %6440 = vmatprep.subr.bf16.mxu0 %v2724
  %6441 = vmatpush1.bf16.msra.mxu0 %v2723
  %6442 = vmatprep.subr.bf16.mxu0 0
  %6443 = vmatpush2.bf16.msra.mxu0 0
  %6444 = vmatprep.subr.bf16.mxu0 0
  %6445 = vmatpush2.bf16.msra.mxu0 0
  %6446 = vmatprep.subr.bf16.mxu0 0
  %6447 = vmatpush2.bf16.msra.mxu0 0
  %6448 = vmatprep.subr.bf16.mxu0 0
  %6449 = vmatpush2.bf16.msra.mxu0 0
  %6450 = vmatprep.subr.bf16.mxu0 0
  %6451 = vmatpush2.bf16.msra.mxu0 0
  %6452 = vmatprep.subr.bf16.mxu0 0
  %6453 = vmatpush2.bf16.msra.mxu0 0
  %6454 = vmatprep.subr.bf16.mxu0 0
  %6455 = vmatpush2.bf16.msra.mxu0 0
  %6456 = vmatprep.subr.bf16.mxu0 0
  %6457 = vmatpush2.bf16.msra.mxu0 0
  %6458 = vmatprep.mubr.bf16.mxu0 0
  %6459 = vmatmul.mubr.bf16.gmra.mxu0 %v6326
  %v6460 = vpop.f32.mrf.mxu0
  %v6461 = vadd.f32 %v472, %v6460
  %v6462 = vpop.f32.mrf.mxu0
  %v6463 = vadd.f32 %v476, %v6462
  %v6464 = vpop.f32.mrf.mxu0
  %v6465 = vpop.f32.mrf.mxu0
  %6466 = vdwg.mxu0
  %6467 = vmatprep.subr.bf16.mxu0 0
  %6468 = vmatpush1.bf16.msra.mxu0 %v2746
  %6469 = vmatprep.subr.bf16.mxu0 0
  %6470 = vmatpush1.bf16.msra.mxu0 %v2743
  %6471 = vmatprep.subr.bf16.mxu0 0
  %6472 = vmatpush1.bf16.msra.mxu0 %v2740
  %6473 = vmatprep.subr.bf16.mxu0 0
  %6474 = vmatpush1.bf16.msra.mxu0 %v2737
  %6475 = vmatprep.subr.bf16.mxu0 0
  %6476 = vmatpush1.bf16.msra.mxu0 %v2734
  %6477 = vmatprep.subr.bf16.mxu0 0
  %6478 = vmatpush1.bf16.msra.mxu0 %v2731
  %6479 = vmatprep.subr.bf16.mxu0 0
  %6480 = vmatpush1.bf16.msra.mxu0 %v2728
  %6481 = vmatprep.subr.bf16.mxu0 0
  %6482 = vmatpush1.bf16.msra.mxu0 %v2725
  %6483 = vmatprep.subr.bf16.mxu0 0
  %6484 = vmatpush2.bf16.msra.mxu0 0
  %6485 = vmatprep.subr.bf16.mxu0 0
  %6486 = vmatpush2.bf16.msra.mxu0 0
  %6487 = vmatprep.subr.bf16.mxu0 0
  %6488 = vmatpush2.bf16.msra.mxu0 0
  %6489 = vmatprep.subr.bf16.mxu0 0
  %6490 = vmatpush2.bf16.msra.mxu0 0
  %6491 = vmatprep.subr.bf16.mxu0 0
  %6492 = vmatpush2.bf16.msra.mxu0 0
  %6493 = vmatprep.subr.bf16.mxu0 0
  %6494 = vmatpush2.bf16.msra.mxu0 0
  %6495 = vmatprep.subr.bf16.mxu0 0
  %6496 = vmatpush2.bf16.msra.mxu0 0
  %6497 = vmatprep.subr.bf16.mxu0 0
  %6498 = vmatpush2.bf16.msra.mxu0 0
  %6499 = vmatprep.mubr.bf16.mxu0 0
  %6500 = vmatmul.mubr.bf16.gmra.mxu0 %v6326
  %v6501 = vpop.f32.mrf.mxu0
  %v6502 = vadd.f32 %v480, %v6501
  %v6503 = vpop.f32.mrf.mxu0
  %v6504 = vpop.f32.mrf.mxu0
  %v6505 = vpop.f32.mrf.mxu0
  %6506 = vdwg.mxu0
  %v6507 = vpack.c.bf16 %v6243, %v6243
  %6508 = vmatprep.subr.bf16.mxu0 %v2987
  %6509 = vmatpush1.bf16.msra.mxu0 %v2986
  %6510 = vmatprep.subr.bf16.mxu0 %v2984
  %6511 = vmatpush1.bf16.msra.mxu0 %v2983
  %6512 = vmatprep.subr.bf16.mxu0 %v2981
  %6513 = vmatpush1.bf16.msra.mxu0 %v2980
  %6514 = vmatprep.subr.bf16.mxu0 %v2978
  %6515 = vmatpush1.bf16.msra.mxu0 %v2977
  %6516 = vmatprep.subr.bf16.mxu0 %v2975
  %6517 = vmatpush1.bf16.msra.mxu0 %v2974
  %6518 = vmatprep.subr.bf16.mxu0 %v2972
  %6519 = vmatpush1.bf16.msra.mxu0 %v2971
  %6520 = vmatprep.subr.bf16.mxu0 %v2969
  %6521 = vmatpush1.bf16.msra.mxu0 %v2968
  %6522 = vmatprep.subr.bf16.mxu0 %v2966
  %6523 = vmatpush1.bf16.msra.mxu0 %v2965
  %6524 = vmatprep.subr.bf16.mxu0 0
  %6525 = vmatpush2.bf16.msra.mxu0 0
  %6526 = vmatprep.subr.bf16.mxu0 0
  %6527 = vmatpush2.bf16.msra.mxu0 0
  %6528 = vmatprep.subr.bf16.mxu0 0
  %6529 = vmatpush2.bf16.msra.mxu0 0
  %6530 = vmatprep.subr.bf16.mxu0 0
  %6531 = vmatpush2.bf16.msra.mxu0 0
  %6532 = vmatprep.subr.bf16.mxu0 0
  %6533 = vmatpush2.bf16.msra.mxu0 0
  %6534 = vmatprep.subr.bf16.mxu0 0
  %6535 = vmatpush2.bf16.msra.mxu0 0
  %6536 = vmatprep.subr.bf16.mxu0 0
  %6537 = vmatpush2.bf16.msra.mxu0 0
  %6538 = vmatprep.subr.bf16.mxu0 0
  %6539 = vmatpush2.bf16.msra.mxu0 0
  %6540 = vmatprep.mubr.bf16.mxu0 0
  %6541 = vmatmul.mubr.bf16.gmra.mxu0 %v6507
  %v6542 = vpop.f32.mrf.mxu0
  %v6543 = vadd.f32 0.0, %v6542
  %v6544 = vpop.f32.mrf.mxu0
  %v6545 = vadd.f32 0.0, %v6544
  %v6546 = vpop.f32.mrf.mxu0
  %v6547 = vpop.f32.mrf.mxu0
  %6548 = vdwg.mxu0
  %6549 = vmatprep.subr.bf16.mxu0 0
  %6550 = vmatpush1.bf16.msra.mxu0 %v2988
  %6551 = vmatprep.subr.bf16.mxu0 0
  %6552 = vmatpush1.bf16.msra.mxu0 %v2985
  %6553 = vmatprep.subr.bf16.mxu0 0
  %6554 = vmatpush1.bf16.msra.mxu0 %v2982
  %6555 = vmatprep.subr.bf16.mxu0 0
  %6556 = vmatpush1.bf16.msra.mxu0 %v2979
  %6557 = vmatprep.subr.bf16.mxu0 0
  %6558 = vmatpush1.bf16.msra.mxu0 %v2976
  %6559 = vmatprep.subr.bf16.mxu0 0
  %6560 = vmatpush1.bf16.msra.mxu0 %v2973
  %6561 = vmatprep.subr.bf16.mxu0 0
  %6562 = vmatpush1.bf16.msra.mxu0 %v2970
  %6563 = vmatprep.subr.bf16.mxu0 0
  %6564 = vmatpush1.bf16.msra.mxu0 %v2967
  %6565 = vmatprep.subr.bf16.mxu0 0
  %6566 = vmatpush2.bf16.msra.mxu0 0
  %6567 = vmatprep.subr.bf16.mxu0 0
  %6568 = vmatpush2.bf16.msra.mxu0 0
  %6569 = vmatprep.subr.bf16.mxu0 0
  %6570 = vmatpush2.bf16.msra.mxu0 0
  %6571 = vmatprep.subr.bf16.mxu0 0
  %6572 = vmatpush2.bf16.msra.mxu0 0
  %6573 = vmatprep.subr.bf16.mxu0 0
  %6574 = vmatpush2.bf16.msra.mxu0 0
  %6575 = vmatprep.subr.bf16.mxu0 0
  %6576 = vmatpush2.bf16.msra.mxu0 0
  %6577 = vmatprep.subr.bf16.mxu0 0
  %6578 = vmatpush2.bf16.msra.mxu0 0
  %6579 = vmatprep.subr.bf16.mxu0 0
  %6580 = vmatpush2.bf16.msra.mxu0 0
  %6581 = vmatprep.mubr.bf16.mxu0 0
  %6582 = vmatmul.mubr.bf16.gmra.mxu0 %v6507
  %v6583 = vpop.f32.mrf.mxu0
  %v6584 = vadd.f32 0.0, %v6583
  %v6585 = vpop.f32.mrf.mxu0
  %v6586 = vpop.f32.mrf.mxu0
  %v6587 = vpop.f32.mrf.mxu0
  %6588 = vdwg.mxu0
  %v6589 = vadd.f32 %v6461, %v6543
  %v6590 = vadd.f32 %v6463, %v6545
  %v6591 = vmul.f32 %v6589, 0.5
  %v6592 = vmul.f32 %v6590, 0.5
  %v6593 = vtanh.pop %v6591
  %v6594 = vtanh.pop %v6592
  %v6595 = vadd.f32 %v6593, 1.0
  %v6596 = vadd.f32 %v6594, 1.0
  %v6597 = vmul.f32 %v6595, 0.5
  %v6598 = vmul.f32 %v6596, 0.5
  %v6599 = vadd.f32 %v6584, %v429
  %v6600 = vmul.f32 %v6597, %v6599
  %v6601 = vadd.f32 %v6502, %v6600
  %v6602 = vtanh.pop %v6601
  %v6603 = vsub.f32 1.0, %v6598
  %v6604 = vmul.f32 %v6603, %v6602
  %v6605 = vmul.f32 %v6598, %v6243
  %v6606 = vadd.f32 %v6604, %v6605
  %v6607 = vpack.c.bf16 %v6425, %v6425
  %6608 = vmatprep.subr.bf16.mxu0 %v2745
  %6609 = vmatpush1.bf16.msra.mxu0 %v2744
  %6610 = vmatprep.subr.bf16.mxu0 %v2742
  %6611 = vmatpush1.bf16.msra.mxu0 %v2741
  %6612 = vmatprep.subr.bf16.mxu0 %v2739
  %6613 = vmatpush1.bf16.msra.mxu0 %v2738
  %6614 = vmatprep.subr.bf16.mxu0 %v2736
  %6615 = vmatpush1.bf16.msra.mxu0 %v2735
  %6616 = vmatprep.subr.bf16.mxu0 %v2733
  %6617 = vmatpush1.bf16.msra.mxu0 %v2732
  %6618 = vmatprep.subr.bf16.mxu0 %v2730
  %6619 = vmatpush1.bf16.msra.mxu0 %v2729
  %6620 = vmatprep.subr.bf16.mxu0 %v2727
  %6621 = vmatpush1.bf16.msra.mxu0 %v2726
  %6622 = vmatprep.subr.bf16.mxu0 %v2724
  %6623 = vmatpush1.bf16.msra.mxu0 %v2723
  %6624 = vmatprep.subr.bf16.mxu0 0
  %6625 = vmatpush2.bf16.msra.mxu0 0
  %6626 = vmatprep.subr.bf16.mxu0 0
  %6627 = vmatpush2.bf16.msra.mxu0 0
  %6628 = vmatprep.subr.bf16.mxu0 0
  %6629 = vmatpush2.bf16.msra.mxu0 0
  %6630 = vmatprep.subr.bf16.mxu0 0
  %6631 = vmatpush2.bf16.msra.mxu0 0
  %6632 = vmatprep.subr.bf16.mxu0 0
  %6633 = vmatpush2.bf16.msra.mxu0 0
  %6634 = vmatprep.subr.bf16.mxu0 0
  %6635 = vmatpush2.bf16.msra.mxu0 0
  %6636 = vmatprep.subr.bf16.mxu0 0
  %6637 = vmatpush2.bf16.msra.mxu0 0
  %6638 = vmatprep.subr.bf16.mxu0 0
  %6639 = vmatpush2.bf16.msra.mxu0 0
  %6640 = vmatprep.mubr.bf16.mxu0 0
  %6641 = vmatmul.mubr.bf16.gmra.mxu0 %v6607
  %v6642 = vpop.f32.mrf.mxu0
  %v6643 = vadd.f32 %v472, %v6642
  %v6644 = vpop.f32.mrf.mxu0
  %v6645 = vadd.f32 %v476, %v6644
  %v6646 = vpop.f32.mrf.mxu0
  %v6647 = vpop.f32.mrf.mxu0
  %6648 = vdwg.mxu0
  %6649 = vmatprep.subr.bf16.mxu0 0
  %6650 = vmatpush1.bf16.msra.mxu0 %v2746
  %6651 = vmatprep.subr.bf16.mxu0 0
  %6652 = vmatpush1.bf16.msra.mxu0 %v2743
  %6653 = vmatprep.subr.bf16.mxu0 0
  %6654 = vmatpush1.bf16.msra.mxu0 %v2740
  %6655 = vmatprep.subr.bf16.mxu0 0
  %6656 = vmatpush1.bf16.msra.mxu0 %v2737
  %6657 = vmatprep.subr.bf16.mxu0 0
  %6658 = vmatpush1.bf16.msra.mxu0 %v2734
  %6659 = vmatprep.subr.bf16.mxu0 0
  %6660 = vmatpush1.bf16.msra.mxu0 %v2731
  %6661 = vmatprep.subr.bf16.mxu0 0
  %6662 = vmatpush1.bf16.msra.mxu0 %v2728
  %6663 = vmatprep.subr.bf16.mxu0 0
  %6664 = vmatpush1.bf16.msra.mxu0 %v2725
  %6665 = vmatprep.subr.bf16.mxu0 0
  %6666 = vmatpush2.bf16.msra.mxu0 0
  %6667 = vmatprep.subr.bf16.mxu0 0
  %6668 = vmatpush2.bf16.msra.mxu0 0
  %6669 = vmatprep.subr.bf16.mxu0 0
  %6670 = vmatpush2.bf16.msra.mxu0 0
  %6671 = vmatprep.subr.bf16.mxu0 0
  %6672 = vmatpush2.bf16.msra.mxu0 0
  %6673 = vmatprep.subr.bf16.mxu0 0
  %6674 = vmatpush2.bf16.msra.mxu0 0
  %6675 = vmatprep.subr.bf16.mxu0 0
  %6676 = vmatpush2.bf16.msra.mxu0 0
  %6677 = vmatprep.subr.bf16.mxu0 0
  %6678 = vmatpush2.bf16.msra.mxu0 0
  %6679 = vmatprep.subr.bf16.mxu0 0
  %6680 = vmatpush2.bf16.msra.mxu0 0
  %6681 = vmatprep.mubr.bf16.mxu0 0
  %6682 = vmatmul.mubr.bf16.gmra.mxu0 %v6607
  %v6683 = vpop.f32.mrf.mxu0
  %v6684 = vadd.f32 %v480, %v6683
  %v6685 = vpop.f32.mrf.mxu0
  %v6686 = vpop.f32.mrf.mxu0
  %v6687 = vpop.f32.mrf.mxu0
  %6688 = vdwg.mxu0
  %v6689 = vpack.c.bf16 %v6606, %v6606
  %6690 = vmatprep.subr.bf16.mxu0 %v2987
  %6691 = vmatpush1.bf16.msra.mxu0 %v2986
  %6692 = vmatprep.subr.bf16.mxu0 %v2984
  %6693 = vmatpush1.bf16.msra.mxu0 %v2983
  %6694 = vmatprep.subr.bf16.mxu0 %v2981
  %6695 = vmatpush1.bf16.msra.mxu0 %v2980
  %6696 = vmatprep.subr.bf16.mxu0 %v2978
  %6697 = vmatpush1.bf16.msra.mxu0 %v2977
  %6698 = vmatprep.subr.bf16.mxu0 %v2975
  %6699 = vmatpush1.bf16.msra.mxu0 %v2974
  %6700 = vmatprep.subr.bf16.mxu0 %v2972
  %6701 = vmatpush1.bf16.msra.mxu0 %v2971
  %6702 = vmatprep.subr.bf16.mxu0 %v2969
  %6703 = vmatpush1.bf16.msra.mxu0 %v2968
  %6704 = vmatprep.subr.bf16.mxu0 %v2966
  %6705 = vmatpush1.bf16.msra.mxu0 %v2965
  %6706 = vmatprep.subr.bf16.mxu0 0
  %6707 = vmatpush2.bf16.msra.mxu0 0
  %6708 = vmatprep.subr.bf16.mxu0 0
  %6709 = vmatpush2.bf16.msra.mxu0 0
  %6710 = vmatprep.subr.bf16.mxu0 0
  %6711 = vmatpush2.bf16.msra.mxu0 0
  %6712 = vmatprep.subr.bf16.mxu0 0
  %6713 = vmatpush2.bf16.msra.mxu0 0
  %6714 = vmatprep.subr.bf16.mxu0 0
  %6715 = vmatpush2.bf16.msra.mxu0 0
  %6716 = vmatprep.subr.bf16.mxu0 0
  %6717 = vmatpush2.bf16.msra.mxu0 0
  %6718 = vmatprep.subr.bf16.mxu0 0
  %6719 = vmatpush2.bf16.msra.mxu0 0
  %6720 = vmatprep.subr.bf16.mxu0 0
  %6721 = vmatpush2.bf16.msra.mxu0 0
  %6722 = vmatprep.mubr.bf16.mxu0 0
  %6723 = vmatmul.mubr.bf16.gmra.mxu0 %v6689
  %v6724 = vpop.f32.mrf.mxu0
  %v6725 = vadd.f32 0.0, %v6724
  %v6726 = vpop.f32.mrf.mxu0
  %v6727 = vadd.f32 0.0, %v6726
  %v6728 = vpop.f32.mrf.mxu0
  %v6729 = vpop.f32.mrf.mxu0
  %6730 = vdwg.mxu0
  %6731 = vmatprep.subr.bf16.mxu0 0
  %6732 = vmatpush1.bf16.msra.mxu0 %v2988
  %6733 = vmatprep.subr.bf16.mxu0 0
  %6734 = vmatpush1.bf16.msra.mxu0 %v2985
  %6735 = vmatprep.subr.bf16.mxu0 0
  %6736 = vmatpush1.bf16.msra.mxu0 %v2982
  %6737 = vmatprep.subr.bf16.mxu0 0
  %6738 = vmatpush1.bf16.msra.mxu0 %v2979
  %6739 = vmatprep.subr.bf16.mxu0 0
  %6740 = vmatpush1.bf16.msra.mxu0 %v2976
  %6741 = vmatprep.subr.bf16.mxu0 0
  %6742 = vmatpush1.bf16.msra.mxu0 %v2973
  %6743 = vmatprep.subr.bf16.mxu0 0
  %6744 = vmatpush1.bf16.msra.mxu0 %v2970
  %6745 = vmatprep.subr.bf16.mxu0 0
  %6746 = vmatpush1.bf16.msra.mxu0 %v2967
  %6747 = vmatprep.subr.bf16.mxu0 0
  %6748 = vmatpush2.bf16.msra.mxu0 0
  %6749 = vmatprep.subr.bf16.mxu0 0
  %6750 = vmatpush2.bf16.msra.mxu0 0
  %6751 = vmatprep.subr.bf16.mxu0 0
  %6752 = vmatpush2.bf16.msra.mxu0 0
  %6753 = vmatprep.subr.bf16.mxu0 0
  %6754 = vmatpush2.bf16.msra.mxu0 0
  %6755 = vmatprep.subr.bf16.mxu0 0
  %6756 = vmatpush2.bf16.msra.mxu0 0
  %6757 = vmatprep.subr.bf16.mxu0 0
  %6758 = vmatpush2.bf16.msra.mxu0 0
  %6759 = vmatprep.subr.bf16.mxu0 0
  %6760 = vmatpush2.bf16.msra.mxu0 0
  %6761 = vmatprep.subr.bf16.mxu0 0
  %6762 = vmatpush2.bf16.msra.mxu0 0
  %6763 = vmatprep.mubr.bf16.mxu0 0
  %6764 = vmatmul.mubr.bf16.gmra.mxu0 %v6689
  %v6765 = vpop.f32.mrf.mxu0
  %v6766 = vadd.f32 0.0, %v6765
  %v6767 = vpop.f32.mrf.mxu0
  %v6768 = vpop.f32.mrf.mxu0
  %v6769 = vpop.f32.mrf.mxu0
  %6770 = vdwg.mxu0
  %v6771 = vadd.f32 %v6643, %v6725
  %v6772 = vadd.f32 %v6645, %v6727
  %v6773 = vmul.f32 %v6771, 0.5
  %v6774 = vmul.f32 %v6772, 0.5
  %v6775 = vtanh.pop %v6773
  %v6776 = vtanh.pop %v6774
  %v6777 = vadd.f32 %v6775, 1.0
  %v6778 = vadd.f32 %v6776, 1.0
  %v6779 = vmul.f32 %v6777, 0.5
  %v6780 = vmul.f32 %v6778, 0.5
  %v6781 = vadd.f32 %v6766, %v429
  %v6782 = vmul.f32 %v6779, %v6781
  %v6783 = vadd.f32 %v6684, %v6782
  %v6784 = vtanh.pop %v6783
  %v6785 = vsub.f32 1.0, %v6780
  %v6786 = vmul.f32 %v6785, %v6784
  %v6787 = vmul.f32 %v6780, %v6606
  %v6788 = vadd.f32 %v6786, %v6787
  %v6789 = vld [vmem:[%s4 + $0x100] sm:$0xff]
  %v6790 = vld [vmem:[%s4 + $0x108] sm:$0xff]
  %v6791 = vld [vmem:[%s4 + $0x110] sm:$0xff]
  %v6792 = vld [vmem:[%s4 + $0x118] sm:$0xff]
  %v6793 = vld [vmem:[%s4 + $0x120] sm:$0xff]
  %v6794 = vld [vmem:[%s4 + $0x128] sm:$0xff]
  %v6795 = vld [vmem:[%s4 + $0x130] sm:$0xff]
  %v6796 = vld [vmem:[%s4 + $0x138] sm:$0xff]
  %v6797 = vld [vmem:[%s4 + $0x140] sm:$0xff]
  %v6798 = vld [vmem:[%s4 + $0x148] sm:$0xff]
  %v6799 = vld [vmem:[%s4 + $0x150] sm:$0xff]
  %v6800 = vld [vmem:[%s4 + $0x158] sm:$0xff]
  %v6801 = vld [vmem:[%s4 + $0x160] sm:$0xff]
  %v6802 = vld [vmem:[%s4 + $0x168] sm:$0xff]
  %v6803 = vld [vmem:[%s4 + $0x170] sm:$0xff]
  %v6804 = vld [vmem:[%s4 + $0x178] sm:$0xff]
  %6805 = vmatprep.subr.mxu0 0.0
  %6806 = vmatpush1.msra.mxu0 %v6804
  %6807 = vmatprep.subr.mxu0 0.0
  %6808 = vmatpush1.msra.mxu0 %v6803
  %6809 = vmatprep.subr.mxu0 0.0
  %6810 = vmatpush1.msra.mxu0 %v6802
  %6811 = vmatprep.subr.mxu0 0.0
  %6812 = vmatpush1.msra.mxu0 %v6801
  %6813 = vmatprep.subr.mxu0 0.0
  %6814 = vmatpush1.msra.mxu0 %v6800
  %6815 = vmatprep.subr.mxu0 0.0
  %6816 = vmatpush1.msra.mxu0 %v6799
  %6817 = vmatprep.subr.mxu0 0.0
  %6818 = vmatpush1.msra.mxu0 %v6798
  %6819 = vmatprep.subr.mxu0 0.0
  %6820 = vmatpush1.msra.mxu0 %v6797
  %6821 = vmatprep.subr.mxu0 0.0
  %6822 = vmatpush1.msra.mxu0 %v6796
  %6823 = vmatprep.subr.mxu0 0.0
  %6824 = vmatpush1.msra.mxu0 %v6795
  %6825 = vmatprep.subr.mxu0 0.0
  %6826 = vmatpush1.msra.mxu0 %v6794
  %6827 = vmatprep.subr.mxu0 0.0
  %6828 = vmatpush1.msra.mxu0 %v6793
  %6829 = vmatprep.subr.mxu0 0.0
  %6830 = vmatpush1.msra.mxu0 %v6792
  %6831 = vmatprep.subr.mxu0 0.0
  %6832 = vmatpush1.msra.mxu0 %v6791
  %6833 = vmatprep.subr.mxu0 0.0
  %6834 = vmatpush1.msra.mxu0 %v6790
  %6835 = vmatprep.subr.mxu0 0.0
  %6836 = vmatpush1.msra.mxu0 %v6789
  %6837 = vmatprep.subr.mxu0 0.0
  %6838 = vmatpush2.msra.mxu0 0.0
  %6839 = vmatprep.subr.mxu0 0.0
  %6840 = vmatpush2.msra.mxu0 0.0
  %6841 = vmatprep.subr.mxu0 0.0
  %6842 = vmatpush2.msra.mxu0 0.0
  %6843 = vmatprep.subr.mxu0 0.0
  %6844 = vmatpush2.msra.mxu0 0.0
  %6845 = vmatprep.subr.mxu0 0.0
  %6846 = vmatpush2.msra.mxu0 0.0
  %6847 = vmatprep.subr.mxu0 0.0
  %6848 = vmatpush2.msra.mxu0 0.0
  %6849 = vmatprep.subr.mxu0 0.0
  %6850 = vmatpush2.msra.mxu0 0.0
  %6851 = vmatprep.subr.mxu0 0.0
  %6852 = vmatpush2.msra.mxu0 0.0
  %6853 = vmatprep.subr.mxu0 0.0
  %6854 = vmatpush2.msra.mxu0 0.0
  %6855 = vmatprep.subr.mxu0 0.0
  %6856 = vmatpush2.msra.mxu0 0.0
  %6857 = vmatprep.subr.mxu0 0.0
  %6858 = vmatpush2.msra.mxu0 0.0
  %6859 = vmatprep.subr.mxu0 0.0
  %6860 = vmatpush2.msra.mxu0 0.0
  %6861 = vmatprep.subr.mxu0 0.0
  %6862 = vmatpush2.msra.mxu0 0.0
  %6863 = vmatprep.subr.mxu0 0.0
  %6864 = vmatpush2.msra.mxu0 0.0
  %6865 = vmatprep.subr.mxu0 0.0
  %6866 = vmatpush2.msra.mxu0 0.0
  %6867 = vmatprep.subr.mxu0 0.0
  %6868 = vmatpush2.msra.mxu0 0.0
  %6869 = vmatprep.mubr.f32.mxu0 0.0
  %6870 = vmatmul.mubr.f32.gmra.mxu0 %v6788
  %v6871 = vpop.f32.mrf.mxu0
  %v6872 = vadd.f32 0.0, %v6871
  %v6873 = vpop.f32.mrf.mxu0
  %6874 = vdwg.mxu0
  %v6875 = vadd.f32 %v407, %v6872
  %vm6876 = vcmask 15360
  %6877 = vst.msk [vmem:[%s9] sm:$0xff] %vm6876, %v6875
  // Predicated region
  $region38: #{tpu_custom_call.1} parent=0 // pred_check
    _
  $region39: #{tpu_custom_call.1} parent=0 // pred_check_branch
    %6879 = sbr.rel (0) target = $region41
  $region40: #{tpu_custom_call.1} parent=0 // pred_region
    _
  $region41: #{tpu_custom_call.1} parent=0 // pred_fallthru
    _
  // Predicated region
  $region42: #{tpu_custom_call.1} parent=0 // pred_check
    _
  $region43: #{tpu_custom_call.1} parent=0 // pred_check_branch
    %6881 = sbr.rel (0) target = $region45
  $region44: #{tpu_custom_call.1} parent=0 // pred_region
    _
  $region45: #{tpu_custom_call.1} parent=0 // pred_fallthru
    _
  %6882 = vsyncmov [#allocation4]
  %s6883 = vpop.sfrf %6882
  %p6884 = scmp.eq.s32.totalorder %s6883, 0
  %p6885 = pneg %p6884
  %6887 = shalt.err (%p6885)

</llo_original>
